<compile_context>
chip_gen: v7x
topology: tpu7x:2x2x1
jax: 0.10.0
libtpu: 0.0.40
codegen_flags: <defaults>
</compile_context>

<pallas_src>
import jax
import jax.numpy as jnp
import numpy as np
from jax.experimental import pallas as pl
from jax.experimental.pallas import tpu as pltpu

GRID_SIZE = 16
BN_EPS = 1e-5


# ---------------------------------------------------------------------------
# Fused Pallas kernel: the entire forward pass
# ---------------------------------------------------------------------------
def _net_kernel(x_ref, w1y_ref, b1_ref, zb0_ref, zb2_ref,
                w2y_ref, b2_ref, p2e_ref, p2o_ref,
                zs0_ref, zs2_ref, w3y_ref, b3_ref, p3e_ref, p3o_ref,
                w1blk_ref, b1f_ref, w2f_ref, b2f_ref,
                o_ref):
    """Whole network in one kernel; every operand is resident in VMEM."""

    def dot(a, b):
        return jnp.dot(a, b, preferred_element_type=jnp.float32)

    def conv_relu(act, wy_ref, b_ref, z_up, z_dn):
        # 3x3 'same' conv as 3 row-shifted matmuls against structured
        # (W*Cin, W*Cout) weights; x taps / x padding / output lane
        # permutation are baked into the weights, y taps via shift matrices.
        acc = dot(dot(z_up, act), wy_ref[0])
        acc = acc + dot(act, wy_ref[1])
        acc = acc + dot(dot(z_dn, act), wy_ref[2])
        return jnp.maximum(acc + b_ref[...], 0.0)

    def pool2x2(act, pe_ref, po_ref):
        # y direction: max of two row-selection matmuls;
        # x direction: max of the two x-parity lane halves (lane-aligned).
        m = jnp.maximum(dot(pe_ref[...], act), dot(po_ref[...], act))
        half = m.shape[1] // 2
        return jnp.maximum(m[:, :half], m[:, half:])

    zb0 = zb0_ref[...]
    zb2 = zb2_ref[...]

    a1 = conv_relu(x_ref[...], w1y_ref, b1_ref, zb0, zb2)          # (N*16, 512)
    a2 = conv_relu(a1, w2y_ref, b2_ref, zb0, zb2)                  # (N*16, 512)
    a2 = pool2x2(a2, p2e_ref, p2o_ref)                             # (N*8, 256)
    a3 = conv_relu(a2, w3y_ref, b3_ref, zs0_ref[...], zs2_ref[...])  # (N*8, 512)
    feat = pool2x2(a3, p3e_ref, p3o_ref)                           # (4*N, 256), rows (y'', n)

    # flatten + fc1(+BN folded) + relu + fc2.  The NCHW flatten permutation is
    # baked into w1blk's row order; the 4 spatial row-blocks become a 4-term sum.
    nb = o_ref.shape[0]
    z = dot(feat[0:nb, :], w1blk_ref[0])
    for t in range(1, w1blk_ref.shape[0]):
        z = z + dot(feat[t * nb:(t + 1) * nb, :], w1blk_ref[t])
    z = jnp.maximum(z + b1f_ref[...], 0.0)                         # (N, 512)
    o_ref[...] = dot(z, w2f_ref[...]) + b2f_ref[...]               # (N, 256)


# ---------------------------------------------------------------------------
# Host-side (one-time) parameter preparation
# ---------------------------------------------------------------------------
def _natural_lanes(width, ch):
    return np.arange(width * ch, dtype=np.int64).reshape(width, ch)


def _parity_lanes(width, ch):
    x = np.arange(width, dtype=np.int64)[:, None]
    c = np.arange(ch, dtype=np.int64)[None, :]
    return (x % 2) * (width // 2) * ch + (x // 2) * ch + c


def _conv_row_weights(w_oihw, b, width, in_lane, out_lane):
    """Build (3, W*Cin, W*Cout) per-dy structured row weights + bias row."""
    w = np.asarray(w_oihw, dtype=np.float32)         # (Cout, Cin, 3, 3)
    cout, cin = w.shape[0], w.shape[1]
    wy = np.zeros((3, width * cin, width * cout), np.float32)
    for ky in range(3):
        for kx in range(3):
            blk = w[:, :, ky, kx].T                  # (Cin, Cout)
            for xo in range(width):
                xi = xo + kx - 1
                if 0 <= xi < width:                  # x zero-padding
                    wy[ky][np.ix_(in_lane[xi], out_lane[xo])] += blk
    bnp = np.asarray(b, dtype=np.float32)
    brow = np.zeros((1, width * cout), np.float32)
    for xo in range(width):
        brow[0, out_lane[xo]] = bnp
    return wy, brow


def _shift_mats(nb, h):
    """Block-diagonal (per sample) row-shift matrices for the dy=0 / dy=2 taps."""
    z0 = np.zeros((nb * h, nb * h), np.float32)
    z2 = np.zeros((nb * h, nb * h), np.float32)
    for n in range(nb):
        for y in range(h):
            if y >= 1:
                z0[n * h + y, n * h + y - 1] = 1.0
            if y + 1 < h:
                z2[n * h + y, n * h + y + 1] = 1.0
    return z0, z2


def _pool_row_select(nb, h, out_order_yn):
    """Row-selection matrices picking even / odd y rows for 2x2 pooling."""
    hh = h // 2
    pe = np.zeros((nb * hh, nb * h), np.float32)
    po = np.zeros((nb * hh, nb * h), np.float32)
    for n in range(nb):
        for yp in range(hh):
            r = (yp * nb + n) if out_order_yn else (n * hh + yp)
            pe[r, n * h + 2 * yp] = 1.0
            po[r, n * h + 2 * yp + 1] = 1.0
    return pe, po


def prepare_params(p, batch):
    """One-time host-side weight munging (structured conv weights, BN fold,
    flatten permutation, fc transposes, pool/shift matrices)."""
    g = GRID_SIZE
    c1, c2, c3 = 32, 32, 64
    q = g // 4                                        # 4
    h1 = 2 * g * g                                    # 512

    w1y, b1 = _conv_row_weights(p['conv1_w'], p['conv1_b'], g,
                                _natural_lanes(g, 1), _natural_lanes(g, c1))
    w2y, b2 = _conv_row_weights(p['conv2_w'], p['conv2_b'], g,
                                _natural_lanes(g, c1), _parity_lanes(g, c2))
    w3y, b3 = _conv_row_weights(p['conv3_w'], p['conv3_b'], g // 2,
                                _natural_lanes(g // 2, c2), _parity_lanes(g // 2, c3))

    zb0, zb2 = _shift_mats(batch, g)
    zs0, zs2 = _shift_mats(batch, g // 2)
    p2e, p2o = _pool_row_select(batch, g, out_order_yn=False)
    p3e, p3o = _pool_row_select(batch, g // 2, out_order_yn=True)

    # Fold eval-mode BatchNorm into fc1, permute fc1's K rows to match the
    # in-kernel feature layout (rows = y'' blocks, lanes = x''*C3 + c3).
    scale = np.asarray(p['bn_gamma'], np.float32) / np.sqrt(
        np.asarray(p['bn_var'], np.float32) + BN_EPS)
    w1f = np.asarray(p['fc1_w'], np.float32) * scale[:, None]        # (512, 1024)
    b1f = (np.asarray(p['fc1_b'], np.float32)
           - np.asarray(p['bn_mean'], np.float32)) * scale \
        + np.asarray(p['bn_beta'], np.float32)
    # torch flatten index k = c3*(q*q) + y''*q + x''  ->  blocks over y''
    w1blk = w1f.reshape(h1, c3, q, q).transpose(2, 3, 1, 0).reshape(q, q * c3, h1)

    w2f = np.asarray(p['fc2_w'], np.float32).T                        # (512, 256)
    b2f = np.asarray(p['fc2_b'], np.float32)

    to = lambda a: jnp.asarray(np.ascontiguousarray(a), jnp.float32)
    return {
        'w1y': to(w1y), 'b1': to(b1),
        'zb0': to(zb0), 'zb2': to(zb2),
        'w2y': to(w2y), 'b2': to(b2),
        'p2e': to(p2e), 'p2o': to(p2o),
        'zs0': to(zs0), 'zs2': to(zs2),
        'w3y': to(w3y), 'b3': to(b3),
        'p3e': to(p3e), 'p3o': to(p3o),
        'w1blk': to(w1blk), 'b1f': to(b1f.reshape(1, -1)),
        'w2f': to(w2f), 'b2f': to(b2f.reshape(1, -1)),
    }


# ---------------------------------------------------------------------------
# Forward wrapper: layout only + one pallas_call
# ---------------------------------------------------------------------------
def net_forward(x_nchw, prep):
    nb = x_nchw.shape[0]
    g = GRID_SIZE
    x2d = x_nchw.reshape(nb * g, g)                   # rows (n, y), lanes x (Cin=1)
    out_shape = jax.ShapeDtypeStruct((nb, g * g), jnp.float32)
    fn = pl.pallas_call(
        _net_kernel,
        out_shape=out_shape,
        compiler_params=pltpu.CompilerParams(vmem_limit_bytes=32 * 1024 * 1024),
    )
    return fn(x2d, prep['w1y'], prep['b1'], prep['zb0'], prep['zb2'],
              prep['w2y'], prep['b2'], prep['p2e'], prep['p2o'],
              prep['zs0'], prep['zs2'], prep['w3y'], prep['b3'],
              prep['p3e'], prep['p3o'], prep['w1blk'], prep['b1f'],
              prep['w2f'], prep['b2f'])


# ---------------------------------------------------------------------------
# Pure-JAX reference (for correctness check)
# ---------------------------------------------------------------------------
def reference_forward(x_nchw, p):
    prec = jax.lax.Precision.HIGHEST

    def conv(x, w, b):
        y = jax.lax.conv_general_dilated(
            x, w, (1, 1), ((1, 1), (1, 1)),
            dimension_numbers=('NCHW', 'OIHW', 'NCHW'), precision=prec)
        return y + b[None, :, None, None]

    def pool(x):
        return jax.lax.reduce_window(x, -jnp.inf, jax.lax.max,
                                     (1, 1, 2, 2), (1, 1, 2, 2), 'VALID')

    x = jax.nn.relu(conv(x_nchw, p['conv1_w'], p['conv1_b']))
    x = jax.nn.relu(conv(x, p['conv2_w'], p['conv2_b']))
    x = pool(x)
    x = jax.nn.relu(conv(x, p['conv3_w'], p['conv3_b']))
    x = pool(x)
    x = x.reshape(x.shape[0], -1)
    z = jnp.dot(x, p['fc1_w'].T, precision=prec) + p['fc1_b']
    z = (z - p['bn_mean']) * jax.lax.rsqrt(p['bn_var'] + BN_EPS) * p['bn_gamma'] + p['bn_beta']
    z = jax.nn.relu(z)
    return jnp.dot(z, p['fc2_w'].T, precision=prec) + p['fc2_b']


# ---------------------------------------------------------------------------
if __name__ == "__main__":
    key = jax.random.PRNGKey(0)
    keys = jax.random.split(key, 12)

    def init(k, shape, scale=0.1):
        return scale * jax.random.normal(k, shape, dtype=jnp.float32)

    g = GRID_SIZE
    H1 = 2 * g * g                       # 512
    H2 = g * g                           # 256
    K_FC = 64 * (g // 4) * (g // 4)      # 1024

    params = {
        'conv1_w': init(keys[0], (32, 1, 3, 3)),
        'conv1_b': init(keys[1], (32,), 0.01),
        'conv2_w': init(keys[2], (32, 32, 3, 3)),
        'conv2_b': init(keys[3], (32,), 0.01),
        'conv3_w': init(keys[4], (64, 32, 3, 3)),
        'conv3_b': init(keys[5], (64,), 0.01),
        'fc1_w': init(keys[6], (H1, K_FC), 0.02),
        'fc1_b': init(keys[7], (H1,), 0.01),
        'fc2_w': init(keys[8], (H2, H1), 0.02),
        'fc2_b': init(keys[9], (H2,), 0.01),
        'bn_gamma': jnp.ones((H1,), jnp.float32),
        'bn_beta': jnp.zeros((H1,), jnp.float32),
        'bn_mean': jnp.zeros((H1,), jnp.float32),
        'bn_var': jnp.ones((H1,), jnp.float32),
    }

    batch = 2
    x = jax.random.normal(keys[10], (batch, 1, g, g), dtype=jnp.float32)

    prep = prepare_params(params, batch)          # one-time host-side weight prep

    fwd = jax.jit(net_forward)
    out = jax.block_until_ready(fwd(x, prep))
    ref = jax.block_until_ready(reference_forward(x, params))

    assert out.shape == (batch, g * g)
    np.testing.assert_allclose(np.asarray(out), np.asarray(ref), rtol=1e-3, atol=1e-3)
    print("KERNEL_OK")
</pallas_src>

<mosaic_0001>
module attributes {stable_mosaic.version = 11 : i64} {
  func.func @_net_kernel(%arg0: memref<32x16xf32, #tpu.memory_space<vmem>>, %arg1: memref<3x16x512xf32, #tpu.memory_space<vmem>>, %arg2: memref<1x512xf32, #tpu.memory_space<vmem>>, %arg3: memref<32x32xf32, #tpu.memory_space<vmem>>, %arg4: memref<32x32xf32, #tpu.memory_space<vmem>>, %arg5: memref<3x512x512xf32, #tpu.memory_space<vmem>>, %arg6: memref<1x512xf32, #tpu.memory_space<vmem>>, %arg7: memref<16x32xf32, #tpu.memory_space<vmem>>, %arg8: memref<16x32xf32, #tpu.memory_space<vmem>>, %arg9: memref<16x16xf32, #tpu.memory_space<vmem>>, %arg10: memref<16x16xf32, #tpu.memory_space<vmem>>, %arg11: memref<3x256x512xf32, #tpu.memory_space<vmem>>, %arg12: memref<1x512xf32, #tpu.memory_space<vmem>>, %arg13: memref<8x16xf32, #tpu.memory_space<vmem>>, %arg14: memref<8x16xf32, #tpu.memory_space<vmem>>, %arg15: memref<4x256x512xf32, #tpu.memory_space<vmem>>, %arg16: memref<1x512xf32, #tpu.memory_space<vmem>>, %arg17: memref<512x256xf32, #tpu.memory_space<vmem>>, %arg18: memref<1x256xf32, #tpu.memory_space<vmem>>, %arg19: memref<2x256xf32, #tpu.memory_space<vmem>>) attributes {dimension_semantics = [], scalar_prefetch = 0 : i64, scratch_operands = 0 : i64, tpu.core_type = #tpu.core_type<tc>} {
    %c0 = arith.constant 0 : index
    %c0_0 = arith.constant 0 : index
    %0 = vector.load %arg3[%c0, %c0_0] : memref<32x32xf32, #tpu.memory_space<vmem>>, vector<32x32xf32>
    %c0_1 = arith.constant 0 : index
    %c0_2 = arith.constant 0 : index
    %1 = vector.load %arg4[%c0_1, %c0_2] : memref<32x32xf32, #tpu.memory_space<vmem>>, vector<32x32xf32>
    %c0_3 = arith.constant 0 : index
    %c0_4 = arith.constant 0 : index
    %2 = vector.load %arg0[%c0_3, %c0_4] : memref<32x16xf32, #tpu.memory_space<vmem>>, vector<32x16xf32>
    %cst = arith.constant dense<0.000000e+00> : vector<32x16xf32>
    %3 = tpu.matmul %0, %2, %cst {dimension_numbers = #tpu.dot_dimension_numbers<[1], [0], [0], [1], [0, 0, 1, 1], [], []>} : vector<32x32xf32>, vector<32x16xf32>, vector<32x16xf32> -> vector<32x16xf32>
    %c0_5 = arith.constant 0 : index
    %c0_6 = arith.constant 0 : index
    %c0_7 = arith.constant 0 : index
    %4 = vector.load %arg1[%c0_5, %c0_6, %c0_7] : memref<3x16x512xf32, #tpu.memory_space<vmem>>, vector<1x16x512xf32>
    %5 = vector.shape_cast %4 : vector<1x16x512xf32> to vector<16x512xf32>
    %cst_8 = arith.constant dense<0.000000e+00> : vector<32x512xf32>
    %6 = tpu.matmul %3, %5, %cst_8 {dimension_numbers = #tpu.dot_dimension_numbers<[1], [0], [0], [1], [0, 0, 1, 1], [], []>} : vector<32x16xf32>, vector<16x512xf32>, vector<32x512xf32> -> vector<32x512xf32>
    %c1 = arith.constant 1 : index
    %c0_9 = arith.constant 0 : index
    %c0_10 = arith.constant 0 : index
    %7 = vector.load %arg1[%c1, %c0_9, %c0_10] : memref<3x16x512xf32, #tpu.memory_space<vmem>>, vector<1x16x512xf32>
    %8 = vector.shape_cast %7 : vector<1x16x512xf32> to vector<16x512xf32>
    %cst_11 = arith.constant dense<0.000000e+00> : vector<32x512xf32>
    %9 = tpu.matmul %2, %8, %cst_11 {dimension_numbers = #tpu.dot_dimension_numbers<[1], [0], [0], [1], [0, 0, 1, 1], [], []>} : vector<32x16xf32>, vector<16x512xf32>, vector<32x512xf32> -> vector<32x512xf32>
    %10 = arith.addf %6, %9 : vector<32x512xf32>
    %cst_12 = arith.constant dense<0.000000e+00> : vector<32x16xf32>
    %11 = tpu.matmul %1, %2, %cst_12 {dimension_numbers = #tpu.dot_dimension_numbers<[1], [0], [0], [1], [0, 0, 1, 1], [], []>} : vector<32x32xf32>, vector<32x16xf32>, vector<32x16xf32> -> vector<32x16xf32>
    %c2 = arith.constant 2 : index
    %c0_13 = arith.constant 0 : index
    %c0_14 = arith.constant 0 : index
    %12 = vector.load %arg1[%c2, %c0_13, %c0_14] : memref<3x16x512xf32, #tpu.memory_space<vmem>>, vector<1x16x512xf32>
    %13 = vector.shape_cast %12 : vector<1x16x512xf32> to vector<16x512xf32>
    %cst_15 = arith.constant dense<0.000000e+00> : vector<32x512xf32>
    %14 = tpu.matmul %11, %13, %cst_15 {dimension_numbers = #tpu.dot_dimension_numbers<[1], [0], [0], [1], [0, 0, 1, 1], [], []>} : vector<32x16xf32>, vector<16x512xf32>, vector<32x512xf32> -> vector<32x512xf32>
    %15 = arith.addf %10, %14 : vector<32x512xf32>
    %c0_16 = arith.constant 0 : index
    %c0_17 = arith.constant 0 : index
    %16 = vector.load %arg2[%c0_16, %c0_17] : memref<1x512xf32, #tpu.memory_space<vmem>>, vector<1x512xf32>
    %17 = vector.broadcast %16 : vector<1x512xf32> to vector<32x512xf32>
    %18 = arith.addf %15, %17 : vector<32x512xf32>
    %cst_18 = arith.constant 0.000000e+00 : f32
    %19 = vector.broadcast %cst_18 : f32 to vector<32x512xf32>
    %20 = arith.maximumf %18, %19 : vector<32x512xf32>
    %cst_19 = arith.constant dense<0.000000e+00> : vector<32x512xf32>
    %21 = tpu.matmul %0, %20, %cst_19 {dimension_numbers = #tpu.dot_dimension_numbers<[1], [0], [0], [1], [0, 0, 1, 1], [], []>} : vector<32x32xf32>, vector<32x512xf32>, vector<32x512xf32> -> vector<32x512xf32>
    %c0_20 = arith.constant 0 : index
    %c0_21 = arith.constant 0 : index
    %c0_22 = arith.constant 0 : index
    %22 = vector.load %arg5[%c0_20, %c0_21, %c0_22] : memref<3x512x512xf32, #tpu.memory_space<vmem>>, vector<1x512x512xf32>
    %23 = vector.shape_cast %22 : vector<1x512x512xf32> to vector<512x512xf32>
    %cst_23 = arith.constant dense<0.000000e+00> : vector<32x512xf32>
    %24 = tpu.matmul %21, %23, %cst_23 {dimension_numbers = #tpu.dot_dimension_numbers<[1], [0], [0], [1], [0, 0, 1, 1], [], []>} : vector<32x512xf32>, vector<512x512xf32>, vector<32x512xf32> -> vector<32x512xf32>
    %c1_24 = arith.constant 1 : index
    %c0_25 = arith.constant 0 : index
    %c0_26 = arith.constant 0 : index
    %25 = vector.load %arg5[%c1_24, %c0_25, %c0_26] : memref<3x512x512xf32, #tpu.memory_space<vmem>>, vector<1x512x512xf32>
    %26 = vector.shape_cast %25 : vector<1x512x512xf32> to vector<512x512xf32>
    %cst_27 = arith.constant dense<0.000000e+00> : vector<32x512xf32>
    %27 = tpu.matmul %20, %26, %cst_27 {dimension_numbers = #tpu.dot_dimension_numbers<[1], [0], [0], [1], [0, 0, 1, 1], [], []>} : vector<32x512xf32>, vector<512x512xf32>, vector<32x512xf32> -> vector<32x512xf32>
    %28 = arith.addf %24, %27 : vector<32x512xf32>
    %cst_28 = arith.constant dense<0.000000e+00> : vector<32x512xf32>
    %29 = tpu.matmul %1, %20, %cst_28 {dimension_numbers = #tpu.dot_dimension_numbers<[1], [0], [0], [1], [0, 0, 1, 1], [], []>} : vector<32x32xf32>, vector<32x512xf32>, vector<32x512xf32> -> vector<32x512xf32>
    %c2_29 = arith.constant 2 : index
    %c0_30 = arith.constant 0 : index
    %c0_31 = arith.constant 0 : index
    %30 = vector.load %arg5[%c2_29, %c0_30, %c0_31] : memref<3x512x512xf32, #tpu.memory_space<vmem>>, vector<1x512x512xf32>
    %31 = vector.shape_cast %30 : vector<1x512x512xf32> to vector<512x512xf32>
    %cst_32 = arith.constant dense<0.000000e+00> : vector<32x512xf32>
    %32 = tpu.matmul %29, %31, %cst_32 {dimension_numbers = #tpu.dot_dimension_numbers<[1], [0], [0], [1], [0, 0, 1, 1], [], []>} : vector<32x512xf32>, vector<512x512xf32>, vector<32x512xf32> -> vector<32x512xf32>
    %33 = arith.addf %28, %32 : vector<32x512xf32>
    %c0_33 = arith.constant 0 : index
    %c0_34 = arith.constant 0 : index
    %34 = vector.load %arg6[%c0_33, %c0_34] : memref<1x512xf32, #tpu.memory_space<vmem>>, vector<1x512xf32>
    %35 = vector.broadcast %34 : vector<1x512xf32> to vector<32x512xf32>
    %36 = arith.addf %33, %35 : vector<32x512xf32>
    %cst_35 = arith.constant 0.000000e+00 : f32
    %37 = vector.broadcast %cst_35 : f32 to vector<32x512xf32>
    %38 = arith.maximumf %36, %37 : vector<32x512xf32>
    %c0_36 = arith.constant 0 : index
    %c0_37 = arith.constant 0 : index
    %39 = vector.load %arg7[%c0_36, %c0_37] : memref<16x32xf32, #tpu.memory_space<vmem>>, vector<16x32xf32>
    %cst_38 = arith.constant dense<0.000000e+00> : vector<16x512xf32>
    %40 = tpu.matmul %39, %38, %cst_38 {dimension_numbers = #tpu.dot_dimension_numbers<[1], [0], [0], [1], [0, 0, 1, 1], [], []>} : vector<16x32xf32>, vector<32x512xf32>, vector<16x512xf32> -> vector<16x512xf32>
    %c0_39 = arith.constant 0 : index
    %c0_40 = arith.constant 0 : index
    %41 = vector.load %arg8[%c0_39, %c0_40] : memref<16x32xf32, #tpu.memory_space<vmem>>, vector<16x32xf32>
    %cst_41 = arith.constant dense<0.000000e+00> : vector<16x512xf32>
    %42 = tpu.matmul %41, %38, %cst_41 {dimension_numbers = #tpu.dot_dimension_numbers<[1], [0], [0], [1], [0, 0, 1, 1], [], []>} : vector<16x32xf32>, vector<32x512xf32>, vector<16x512xf32> -> vector<16x512xf32>
    %43 = arith.maximumf %40, %42 : vector<16x512xf32>
    %44 = vector.extract_strided_slice %43 {offsets = [0, 0], sizes = [16, 256], strides = [1, 1]} : vector<16x512xf32> to vector<16x256xf32>
    %45 = vector.extract_strided_slice %43 {offsets = [0, 256], sizes = [16, 256], strides = [1, 1]} : vector<16x512xf32> to vector<16x256xf32>
    %46 = arith.maximumf %44, %45 : vector<16x256xf32>
    %c0_42 = arith.constant 0 : index
    %c0_43 = arith.constant 0 : index
    %47 = vector.load %arg9[%c0_42, %c0_43] : memref<16x16xf32, #tpu.memory_space<vmem>>, vector<16x16xf32>
    %c0_44 = arith.constant 0 : index
    %c0_45 = arith.constant 0 : index
    %48 = vector.load %arg10[%c0_44, %c0_45] : memref<16x16xf32, #tpu.memory_space<vmem>>, vector<16x16xf32>
    %cst_46 = arith.constant dense<0.000000e+00> : vector<16x256xf32>
    %49 = tpu.matmul %47, %46, %cst_46 {dimension_numbers = #tpu.dot_dimension_numbers<[1], [0], [0], [1], [0, 0, 1, 1], [], []>} : vector<16x16xf32>, vector<16x256xf32>, vector<16x256xf32> -> vector<16x256xf32>
    %c0_47 = arith.constant 0 : index
    %c0_48 = arith.constant 0 : index
    %c0_49 = arith.constant 0 : index
    %50 = vector.load %arg11[%c0_47, %c0_48, %c0_49] : memref<3x256x512xf32, #tpu.memory_space<vmem>>, vector<1x256x512xf32>
    %51 = vector.shape_cast %50 : vector<1x256x512xf32> to vector<256x512xf32>
    %cst_50 = arith.constant dense<0.000000e+00> : vector<16x512xf32>
    %52 = tpu.matmul %49, %51, %cst_50 {dimension_numbers = #tpu.dot_dimension_numbers<[1], [0], [0], [1], [0, 0, 1, 1], [], []>} : vector<16x256xf32>, vector<256x512xf32>, vector<16x512xf32> -> vector<16x512xf32>
    %c1_51 = arith.constant 1 : index
    %c0_52 = arith.constant 0 : index
    %c0_53 = arith.constant 0 : index
    %53 = vector.load %arg11[%c1_51, %c0_52, %c0_53] : memref<3x256x512xf32, #tpu.memory_space<vmem>>, vector<1x256x512xf32>
    %54 = vector.shape_cast %53 : vector<1x256x512xf32> to vector<256x512xf32>
    %cst_54 = arith.constant dense<0.000000e+00> : vector<16x512xf32>
    %55 = tpu.matmul %46, %54, %cst_54 {dimension_numbers = #tpu.dot_dimension_numbers<[1], [0], [0], [1], [0, 0, 1, 1], [], []>} : vector<16x256xf32>, vector<256x512xf32>, vector<16x512xf32> -> vector<16x512xf32>
    %56 = arith.addf %52, %55 : vector<16x512xf32>
    %cst_55 = arith.constant dense<0.000000e+00> : vector<16x256xf32>
    %57 = tpu.matmul %48, %46, %cst_55 {dimension_numbers = #tpu.dot_dimension_numbers<[1], [0], [0], [1], [0, 0, 1, 1], [], []>} : vector<16x16xf32>, vector<16x256xf32>, vector<16x256xf32> -> vector<16x256xf32>
    %c2_56 = arith.constant 2 : index
    %c0_57 = arith.constant 0 : index
    %c0_58 = arith.constant 0 : index
    %58 = vector.load %arg11[%c2_56, %c0_57, %c0_58] : memref<3x256x512xf32, #tpu.memory_space<vmem>>, vector<1x256x512xf32>
    %59 = vector.shape_cast %58 : vector<1x256x512xf32> to vector<256x512xf32>
    %cst_59 = arith.constant dense<0.000000e+00> : vector<16x512xf32>
    %60 = tpu.matmul %57, %59, %cst_59 {dimension_numbers = #tpu.dot_dimension_numbers<[1], [0], [0], [1], [0, 0, 1, 1], [], []>} : vector<16x256xf32>, vector<256x512xf32>, vector<16x512xf32> -> vector<16x512xf32>
    %61 = arith.addf %56, %60 : vector<16x512xf32>
    %c0_60 = arith.constant 0 : index
    %c0_61 = arith.constant 0 : index
    %62 = vector.load %arg12[%c0_60, %c0_61] : memref<1x512xf32, #tpu.memory_space<vmem>>, vector<1x512xf32>
    %63 = vector.broadcast %62 : vector<1x512xf32> to vector<16x512xf32>
    %64 = arith.addf %61, %63 : vector<16x512xf32>
    %cst_62 = arith.constant 0.000000e+00 : f32
    %65 = vector.broadcast %cst_62 : f32 to vector<16x512xf32>
    %66 = arith.maximumf %64, %65 : vector<16x512xf32>
    %c0_63 = arith.constant 0 : index
    %c0_64 = arith.constant 0 : index
    %67 = vector.load %arg13[%c0_63, %c0_64] : memref<8x16xf32, #tpu.memory_space<vmem>>, vector<8x16xf32>
    %cst_65 = arith.constant dense<0.000000e+00> : vector<8x512xf32>
    %68 = tpu.matmul %67, %66, %cst_65 {dimension_numbers = #tpu.dot_dimension_numbers<[1], [0], [0], [1], [0, 0, 1, 1], [], []>} : vector<8x16xf32>, vector<16x512xf32>, vector<8x512xf32> -> vector<8x512xf32>
    %c0_66 = arith.constant 0 : index
    %c0_67 = arith.constant 0 : index
    %69 = vector.load %arg14[%c0_66, %c0_67] : memref<8x16xf32, #tpu.memory_space<vmem>>, vector<8x16xf32>
    %cst_68 = arith.constant dense<0.000000e+00> : vector<8x512xf32>
    %70 = tpu.matmul %69, %66, %cst_68 {dimension_numbers = #tpu.dot_dimension_numbers<[1], [0], [0], [1], [0, 0, 1, 1], [], []>} : vector<8x16xf32>, vector<16x512xf32>, vector<8x512xf32> -> vector<8x512xf32>
    %71 = arith.maximumf %68, %70 : vector<8x512xf32>
    %72 = vector.extract_strided_slice %71 {offsets = [0, 0], sizes = [8, 256], strides = [1, 1]} : vector<8x512xf32> to vector<8x256xf32>
    %73 = vector.extract_strided_slice %71 {offsets = [0, 256], sizes = [8, 256], strides = [1, 1]} : vector<8x512xf32> to vector<8x256xf32>
    %74 = arith.maximumf %72, %73 : vector<8x256xf32>
    %75 = vector.extract_strided_slice %74 {offsets = [0, 0], sizes = [2, 256], strides = [1, 1]} : vector<8x256xf32> to vector<2x256xf32>
    %c0_69 = arith.constant 0 : index
    %c0_70 = arith.constant 0 : index
    %c0_71 = arith.constant 0 : index
    %76 = vector.load %arg15[%c0_69, %c0_70, %c0_71] : memref<4x256x512xf32, #tpu.memory_space<vmem>>, vector<1x256x512xf32>
    %77 = vector.shape_cast %76 : vector<1x256x512xf32> to vector<256x512xf32>
    %cst_72 = arith.constant dense<0.000000e+00> : vector<2x512xf32>
    %78 = tpu.matmul %75, %77, %cst_72 {dimension_numbers = #tpu.dot_dimension_numbers<[1], [0], [0], [1], [0, 0, 1, 1], [], []>} : vector<2x256xf32>, vector<256x512xf32>, vector<2x512xf32> -> vector<2x512xf32>
    %79 = vector.extract_strided_slice %74 {offsets = [2, 0], sizes = [2, 256], strides = [1, 1]} : vector<8x256xf32> to vector<2x256xf32>
    %c1_73 = arith.constant 1 : index
    %c0_74 = arith.constant 0 : index
    %c0_75 = arith.constant 0 : index
    %80 = vector.load %arg15[%c1_73, %c0_74, %c0_75] : memref<4x256x512xf32, #tpu.memory_space<vmem>>, vector<1x256x512xf32>
    %81 = vector.shape_cast %80 : vector<1x256x512xf32> to vector<256x512xf32>
    %cst_76 = arith.constant dense<0.000000e+00> : vector<2x512xf32>
    %82 = tpu.matmul %79, %81, %cst_76 {dimension_numbers = #tpu.dot_dimension_numbers<[1], [0], [0], [1], [0, 0, 1, 1], [], []>} : vector<2x256xf32>, vector<256x512xf32>, vector<2x512xf32> -> vector<2x512xf32>
    %83 = arith.addf %78, %82 : vector<2x512xf32>
    %84 = vector.extract_strided_slice %74 {offsets = [4, 0], sizes = [2, 256], strides = [1, 1]} : vector<8x256xf32> to vector<2x256xf32>
    %c2_77 = arith.constant 2 : index
    %c0_78 = arith.constant 0 : index
    %c0_79 = arith.constant 0 : index
    %85 = vector.load %arg15[%c2_77, %c0_78, %c0_79] : memref<4x256x512xf32, #tpu.memory_space<vmem>>, vector<1x256x512xf32>
    %86 = vector.shape_cast %85 : vector<1x256x512xf32> to vector<256x512xf32>
    %cst_80 = arith.constant dense<0.000000e+00> : vector<2x512xf32>
    %87 = tpu.matmul %84, %86, %cst_80 {dimension_numbers = #tpu.dot_dimension_numbers<[1], [0], [0], [1], [0, 0, 1, 1], [], []>} : vector<2x256xf32>, vector<256x512xf32>, vector<2x512xf32> -> vector<2x512xf32>
    %88 = arith.addf %83, %87 : vector<2x512xf32>
    %89 = vector.extract_strided_slice %74 {offsets = [6, 0], sizes = [2, 256], strides = [1, 1]} : vector<8x256xf32> to vector<2x256xf32>
    %c3 = arith.constant 3 : index
    %c0_81 = arith.constant 0 : index
    %c0_82 = arith.constant 0 : index
    %90 = vector.load %arg15[%c3, %c0_81, %c0_82] : memref<4x256x512xf32, #tpu.memory_space<vmem>>, vector<1x256x512xf32>
    %91 = vector.shape_cast %90 : vector<1x256x512xf32> to vector<256x512xf32>
    %cst_83 = arith.constant dense<0.000000e+00> : vector<2x512xf32>
    %92 = tpu.matmul %89, %91, %cst_83 {dimension_numbers = #tpu.dot_dimension_numbers<[1], [0], [0], [1], [0, 0, 1, 1], [], []>} : vector<2x256xf32>, vector<256x512xf32>, vector<2x512xf32> -> vector<2x512xf32>
    %93 = arith.addf %88, %92 : vector<2x512xf32>
    %c0_84 = arith.constant 0 : index
    %c0_85 = arith.constant 0 : index
    %94 = vector.load %arg16[%c0_84, %c0_85] : memref<1x512xf32, #tpu.memory_space<vmem>>, vector<1x512xf32>
    %95 = vector.broadcast %94 : vector<1x512xf32> to vector<2x512xf32>
    %96 = arith.addf %93, %95 : vector<2x512xf32>
    %cst_86 = arith.constant 0.000000e+00 : f32
    %97 = vector.broadcast %cst_86 : f32 to vector<2x512xf32>
    %98 = arith.maximumf %96, %97 : vector<2x512xf32>
    %c0_87 = arith.constant 0 : index
    %c0_88 = arith.constant 0 : index
    %99 = vector.load %arg17[%c0_87, %c0_88] : memref<512x256xf32, #tpu.memory_space<vmem>>, vector<512x256xf32>
    %cst_89 = arith.constant dense<0.000000e+00> : vector<2x256xf32>
    %100 = tpu.matmul %98, %99, %cst_89 {dimension_numbers = #tpu.dot_dimension_numbers<[1], [0], [0], [1], [0, 0, 1, 1], [], []>} : vector<2x512xf32>, vector<512x256xf32>, vector<2x256xf32> -> vector<2x256xf32>
    %c0_90 = arith.constant 0 : index
    %c0_91 = arith.constant 0 : index
    %101 = vector.load %arg18[%c0_90, %c0_91] : memref<1x256xf32, #tpu.memory_space<vmem>>, vector<1x256xf32>
    %102 = vector.broadcast %101 : vector<1x256xf32> to vector<2x256xf32>
    %103 = arith.addf %100, %102 : vector<2x256xf32>
    %c0_92 = arith.constant 0 : index
    %c0_93 = arith.constant 0 : index
    %104 = vector.load %arg19[%c0_92, %c0_93] : memref<2x256xf32, #tpu.memory_space<vmem>>, vector<2x256xf32>
    tpu.vector_store %arg19[%c0_92, %c0_93], %103 {strides = array<i32>} : memref<2x256xf32, #tpu.memory_space<vmem>>, vector<2x256xf32>,
    return
  }
}

</mosaic_0001>

<llo_original>
// kernel: net_forward.1
$region0: #{net_forward.1}
  #allocation0 [shape = 'u32[]', space=smem, size = 0x4, offset = 0x4, fixed_abs, tag = 'smem constant byte address 0x4 - core index']
  #allocation1 [shape = 'u32[144,128]{1,0:T(1,128)}', space=vmem, size = 0x12000, scoped, tag = 'internal scratch']
  %s0 = inlined_call_operand.hbm [shape: f32[32,16], index: 0, kind: input, shape index: {}]
  %s1 = inlined_call_operand.hbm [shape: f32[3,16,512], index: 1, kind: input, shape index: {}]
  %s2 = inlined_call_operand.hbm [shape: f32[1,512], index: 2, kind: input, shape index: {}]
  %s3 = inlined_call_operand.hbm [shape: f32[32,32], index: 3, kind: input, shape index: {}]
  %s4 = inlined_call_operand.hbm [shape: f32[32,32], index: 4, kind: input, shape index: {}]
  %s5 = inlined_call_operand.hbm [shape: f32[3,512,512], index: 5, kind: input, shape index: {}]
  %s6 = inlined_call_operand.hbm [shape: f32[1,512], index: 6, kind: input, shape index: {}]
  %s7 = inlined_call_operand.hbm [shape: f32[16,32], index: 7, kind: input, shape index: {}]
  %s8 = inlined_call_operand.hbm [shape: f32[16,32], index: 8, kind: input, shape index: {}]
  %s9 = inlined_call_operand.hbm [shape: f32[16,16], index: 9, kind: input, shape index: {}]
  %s10 = inlined_call_operand.hbm [shape: f32[16,16], index: 10, kind: input, shape index: {}]
  %s11 = inlined_call_operand.hbm [shape: f32[3,256,512], index: 11, kind: input, shape index: {}]
  %s12 = inlined_call_operand.hbm [shape: f32[1,512], index: 12, kind: input, shape index: {}]
  %s13 = inlined_call_operand.hbm [shape: f32[8,16], index: 13, kind: input, shape index: {}]
  %s14 = inlined_call_operand.hbm [shape: f32[8,16], index: 14, kind: input, shape index: {}]
  %s15 = inlined_call_operand.hbm [shape: f32[4,256,512], index: 15, kind: input, shape index: {}]
  %s16 = inlined_call_operand.hbm [shape: f32[1,512], index: 16, kind: input, shape index: {}]
  %s17 = inlined_call_operand.hbm [shape: f32[512,256], index: 17, kind: input, shape index: {}]
  %s18 = inlined_call_operand.hbm [shape: f32[1,256], index: 18, kind: input, shape index: {}]
  %s19 = inlined_call_operand.hbm [shape: f32[2,256], index: 19, kind: output, shape index: {}]
  %s20 = sld [smem:[#allocation0]]
  $region162: #{net_forward.1} parent=0
    _
  %s22 = ssub.s32 1, %s20
  %s23 = scalar_select 0, %s22, %s20
  $region1: #{net_forward.1} parent=0
    #allocation2 [shape = 'u8[16384]{0}', space=vmem, size = 0x4000, scoped, tag = 'input window, operand 0, single buffered']
    #allocation3 [shape = 's32[1]{0}', space=sflag, size = 0x4, scoped, tag = 'scoped memory for net_forward.1']
    #allocation4 [shape = 's32[1]{0}', space=sflag, size = 0x4, scoped, tag = 'scoped memory for net_forward.1']
    #allocation5 [shape = 'u8[98304]{0}', space=vmem, size = 0x18000, scoped, tag = 'input window, operand 1, single buffered']
    #allocation6 [shape = 's32[1]{0}', space=sflag, size = 0x4, scoped, tag = 'scoped memory for net_forward.1']
    #allocation7 [shape = 'u8[2048]{0}', space=vmem, size = 0x800, scoped, tag = 'input window, operand 2, single buffered']
    #allocation8 [shape = 'u8[16384]{0}', space=vmem, size = 0x4000, scoped, tag = 'input window, operand 3, single buffered']
    #allocation9 [shape = 's32[1]{0}', space=sflag, size = 0x4, scoped, tag = 'scoped memory for net_forward.1']
    #allocation10 [shape = 'u8[16384]{0}', space=vmem, size = 0x4000, scoped, tag = 'input window, operand 4, single buffered']
    #allocation11 [shape = 'u8[3145728]{0}', space=vmem, size = 0x300000, scoped, tag = 'input window, operand 5, single buffered']
    #allocation12 [shape = 's32[1]{0}', space=sflag, size = 0x4, scoped, tag = 'scoped memory for net_forward.1']
    #allocation13 [shape = 'u8[2048]{0}', space=vmem, size = 0x800, scoped, tag = 'input window, operand 6, single buffered']
    #allocation14 [shape = 'u8[8192]{0}', space=vmem, size = 0x2000, scoped, tag = 'input window, operand 7, single buffered']
    #allocation15 [shape = 's32[1]{0}', space=sflag, size = 0x4, scoped, tag = 'scoped memory for net_forward.1']
    #allocation16 [shape = 'u8[8192]{0}', space=vmem, size = 0x2000, scoped, tag = 'input window, operand 8, single buffered']
    #allocation17 [shape = 'u8[8192]{0}', space=vmem, size = 0x2000, scoped, tag = 'input window, operand 9, single buffered']
    #allocation18 [shape = 's32[1]{0}', space=sflag, size = 0x4, scoped, tag = 'scoped memory for net_forward.1']
    #allocation19 [shape = 'u8[8192]{0}', space=vmem, size = 0x2000, scoped, tag = 'input window, operand 10, single buffered']
    #allocation20 [shape = 'u8[1572864]{0}', space=vmem, size = 0x180000, scoped, tag = 'input window, operand 11, single buffered']
    #allocation21 [shape = 's32[1]{0}', space=sflag, size = 0x4, scoped, tag = 'scoped memory for net_forward.1']
    #allocation22 [shape = 'u8[2048]{0}', space=vmem, size = 0x800, scoped, tag = 'input window, operand 12, single buffered']
    #allocation23 [shape = 'u8[4096]{0}', space=vmem, size = 0x1000, scoped, tag = 'input window, operand 13, single buffered']
    #allocation24 [shape = 's32[1]{0}', space=sflag, size = 0x4, scoped, tag = 'scoped memory for net_forward.1']
    #allocation25 [shape = 'u8[4096]{0}', space=vmem, size = 0x1000, scoped, tag = 'input window, operand 14, single buffered']
    #allocation26 [shape = 'u8[2097152]{0}', space=vmem, size = 0x200000, scoped, tag = 'input window, operand 15, single buffered']
    #allocation27 [shape = 's32[1]{0}', space=sflag, size = 0x4, scoped, tag = 'scoped memory for net_forward.1']
    #allocation28 [shape = 'u8[2048]{0}', space=vmem, size = 0x800, scoped, tag = 'input window, operand 16, single buffered']
    #allocation29 [shape = 'u8[524288]{0}', space=vmem, size = 0x80000, scoped, tag = 'input window, operand 17, single buffered']
    #allocation30 [shape = 's32[1]{0}', space=sflag, size = 0x4, scoped, tag = 'scoped memory for net_forward.1']
    #allocation31 [shape = 'u8[1024]{0}', space=vmem, size = 0x400, scoped, tag = 'input window, operand 18, single buffered']
    #allocation32 [shape = 'u8[2048]{0}', space=vmem, size = 0x800, scoped, tag = 'output window, operand 0, single buffered']
    %24 = vsyncpa [#allocation3], 0
    %25 = vsyncpa [#allocation6], 0
    %26 = vsyncpa [#allocation9], 0
    %27 = vsyncpa [#allocation12], 0
    %28 = vsyncpa [#allocation15], 0
    %29 = vsyncpa [#allocation18], 0
    %30 = vsyncpa [#allocation21], 0
    %31 = vsyncpa [#allocation24], 0
    %32 = vsyncpa [#allocation27], 0
    %33 = vsyncpa [#allocation30], 0
    %34 = vsyncpa [#allocation4], 0
    // Predicated region
    $region2: #{net_forward.1} parent=1 // pred_check
      _
    $region3: #{net_forward.1} parent=1 // pred_check_branch
      %36 = sbr.rel (0) target = $region5
    $region4: #{net_forward.1} parent=1 // pred_region
      %s38 = ssub.s32 512, 512
      %39 = vsyncadd [#allocation3], %s38
      %s40 = sshll.u32 [#allocation2], 4
      %s41 = int_to_ptr.vmem [resolvable:$true] %s40
      %46 = dma.hbm_to_vmem [thread:$0]  %s0, 512, %s41, [#allocation3], 128, 128, 8
    $region5: #{net_forward.1} parent=1 // pred_fallthru
      _
    // Predicated region
    $region6: #{net_forward.1} parent=1 // pred_check
      _
    $region7: #{net_forward.1} parent=1 // pred_check_branch
      %48 = sbr.rel (0) target = $region9
    $region8: #{net_forward.1} parent=1 // pred_region
      %s50 = ssub.s32 3072, 3072
      %51 = vsyncadd [#allocation6], %s50
      %s52 = sshll.u32 [#allocation5], 4
      %s53 = int_to_ptr.vmem [resolvable:$true] %s52
      %58 = dma.hbm_to_vmem [thread:$0]  %s1, 3072, %s53, [#allocation6], 512, 512, 32
    $region9: #{net_forward.1} parent=1 // pred_fallthru
      _
    // Predicated region
    $region10: #{net_forward.1} parent=1 // pred_check
      _
    $region11: #{net_forward.1} parent=1 // pred_check_branch
      %60 = sbr.rel (0) target = $region13
    $region12: #{net_forward.1} parent=1 // pred_region
      %s62 = ssub.s32 64, 64
      %63 = vsyncadd [#allocation6], %s62
      %s65 = sshll.u32 [#allocation7], 4
      %s66 = int_to_ptr.vmem [resolvable:$true] %s65
      %68 = dma.hbm_to_vmem [thread:$0]  %s2, 64, %s66, [#allocation6]
    $region13: #{net_forward.1} parent=1 // pred_fallthru
      _
    // Predicated region
    $region14: #{net_forward.1} parent=1 // pred_check
      _
    $region15: #{net_forward.1} parent=1 // pred_check_branch
      %70 = sbr.rel (0) target = $region17
    $region16: #{net_forward.1} parent=1 // pred_region
      %s72 = ssub.s32 512, 512
      %73 = vsyncadd [#allocation9], %s72
      %s74 = sshll.u32 [#allocation8], 4
      %s75 = int_to_ptr.vmem [resolvable:$true] %s74
      %80 = dma.hbm_to_vmem [thread:$0]  %s3, 512, %s75, [#allocation9], 128, 128, 8
    $region17: #{net_forward.1} parent=1 // pred_fallthru
      _
    // Predicated region
    $region18: #{net_forward.1} parent=1 // pred_check
      _
    $region19: #{net_forward.1} parent=1 // pred_check_branch
      %82 = sbr.rel (0) target = $region21
    $region20: #{net_forward.1} parent=1 // pred_region
      %s84 = ssub.s32 512, 512
      %85 = vsyncadd [#allocation9], %s84
      %s86 = sshll.u32 [#allocation10], 4
      %s87 = int_to_ptr.vmem [resolvable:$true] %s86
      %92 = dma.hbm_to_vmem [thread:$0]  %s4, 512, %s87, [#allocation9], 128, 128, 8
    $region21: #{net_forward.1} parent=1 // pred_fallthru
      _
    // Predicated region
    $region22: #{net_forward.1} parent=1 // pred_check
      _
    $region23: #{net_forward.1} parent=1 // pred_check_branch
      %94 = sbr.rel (0) target = $region25
    $region24: #{net_forward.1} parent=1 // pred_region
      %s96 = ssub.s32 98304, 98304
      %97 = vsyncadd [#allocation12], %s96
      %s98 = sshll.u32 [#allocation11], 4
      %s99 = int_to_ptr.vmem [resolvable:$true] %s98
      %104 = dma.hbm_to_vmem [thread:$0]  %s5, 98304, %s99, [#allocation12], 512, 512, 32
    $region25: #{net_forward.1} parent=1 // pred_fallthru
      _
    // Predicated region
    $region26: #{net_forward.1} parent=1 // pred_check
      _
    $region27: #{net_forward.1} parent=1 // pred_check_branch
      %106 = sbr.rel (0) target = $region29
    $region28: #{net_forward.1} parent=1 // pred_region
      %s108 = ssub.s32 64, 64
      %109 = vsyncadd [#allocation12], %s108
      %s111 = sshll.u32 [#allocation13], 4
      %s112 = int_to_ptr.vmem [resolvable:$true] %s111
      %114 = dma.hbm_to_vmem [thread:$0]  %s6, 64, %s112, [#allocation12]
    $region29: #{net_forward.1} parent=1 // pred_fallthru
      _
    // Predicated region
    $region30: #{net_forward.1} parent=1 // pred_check
      _
    $region31: #{net_forward.1} parent=1 // pred_check_branch
      %116 = sbr.rel (0) target = $region33
    $region32: #{net_forward.1} parent=1 // pred_region
      %s118 = ssub.s32 256, 256
      %119 = vsyncadd [#allocation15], %s118
      %s120 = sshll.u32 [#allocation14], 4
      %s121 = int_to_ptr.vmem [resolvable:$true] %s120
      %126 = dma.hbm_to_vmem [thread:$0]  %s7, 256, %s121, [#allocation15], 128, 128, 8
    $region33: #{net_forward.1} parent=1 // pred_fallthru
      _
    // Predicated region
    $region34: #{net_forward.1} parent=1 // pred_check
      _
    $region35: #{net_forward.1} parent=1 // pred_check_branch
      %128 = sbr.rel (0) target = $region37
    $region36: #{net_forward.1} parent=1 // pred_region
      %s130 = ssub.s32 256, 256
      %131 = vsyncadd [#allocation15], %s130
      %s132 = sshll.u32 [#allocation16], 4
      %s133 = int_to_ptr.vmem [resolvable:$true] %s132
      %138 = dma.hbm_to_vmem [thread:$0]  %s8, 256, %s133, [#allocation15], 128, 128, 8
    $region37: #{net_forward.1} parent=1 // pred_fallthru
      _
    // Predicated region
    $region38: #{net_forward.1} parent=1 // pred_check
      _
    $region39: #{net_forward.1} parent=1 // pred_check_branch
      %140 = sbr.rel (0) target = $region41
    $region40: #{net_forward.1} parent=1 // pred_region
      %s142 = ssub.s32 256, 256
      %143 = vsyncadd [#allocation18], %s142
      %s144 = sshll.u32 [#allocation17], 4
      %s145 = int_to_ptr.vmem [resolvable:$true] %s144
      %150 = dma.hbm_to_vmem [thread:$0]  %s9, 256, %s145, [#allocation18], 128, 128, 8
    $region41: #{net_forward.1} parent=1 // pred_fallthru
      _
    // Predicated region
    $region42: #{net_forward.1} parent=1 // pred_check
      _
    $region43: #{net_forward.1} parent=1 // pred_check_branch
      %152 = sbr.rel (0) target = $region45
    $region44: #{net_forward.1} parent=1 // pred_region
      %s154 = ssub.s32 256, 256
      %155 = vsyncadd [#allocation18], %s154
      %s156 = sshll.u32 [#allocation19], 4
      %s157 = int_to_ptr.vmem [resolvable:$true] %s156
      %162 = dma.hbm_to_vmem [thread:$0]  %s10, 256, %s157, [#allocation18], 128, 128, 8
    $region45: #{net_forward.1} parent=1 // pred_fallthru
      _
    // Predicated region
    $region46: #{net_forward.1} parent=1 // pred_check
      _
    $region47: #{net_forward.1} parent=1 // pred_check_branch
      %164 = sbr.rel (0) target = $region49
    $region48: #{net_forward.1} parent=1 // pred_region
      %s166 = ssub.s32 49152, 49152
      %167 = vsyncadd [#allocation21], %s166
      %s168 = sshll.u32 [#allocation20], 4
      %s169 = int_to_ptr.vmem [resolvable:$true] %s168
      %174 = dma.hbm_to_vmem [thread:$0]  %s11, 49152, %s169, [#allocation21], 512, 512, 32
    $region49: #{net_forward.1} parent=1 // pred_fallthru
      _
    // Predicated region
    $region50: #{net_forward.1} parent=1 // pred_check
      _
    $region51: #{net_forward.1} parent=1 // pred_check_branch
      %176 = sbr.rel (0) target = $region53
    $region52: #{net_forward.1} parent=1 // pred_region
      %s178 = ssub.s32 64, 64
      %179 = vsyncadd [#allocation21], %s178
      %s181 = sshll.u32 [#allocation22], 4
      %s182 = int_to_ptr.vmem [resolvable:$true] %s181
      %184 = dma.hbm_to_vmem [thread:$0]  %s12, 64, %s182, [#allocation21]
    $region53: #{net_forward.1} parent=1 // pred_fallthru
      _
    // Predicated region
    $region54: #{net_forward.1} parent=1 // pred_check
      _
    $region55: #{net_forward.1} parent=1 // pred_check_branch
      %186 = sbr.rel (0) target = $region57
    $region56: #{net_forward.1} parent=1 // pred_region
      %s188 = ssub.s32 128, 128
      %189 = vsyncadd [#allocation24], %s188
      %s191 = sshll.u32 [#allocation23], 4
      %s192 = int_to_ptr.vmem [resolvable:$true] %s191
      %194 = dma.hbm_to_vmem [thread:$0]  %s13, 128, %s192, [#allocation24]
    $region57: #{net_forward.1} parent=1 // pred_fallthru
      _
    // Predicated region
    $region58: #{net_forward.1} parent=1 // pred_check
      _
    $region59: #{net_forward.1} parent=1 // pred_check_branch
      %196 = sbr.rel (0) target = $region61
    $region60: #{net_forward.1} parent=1 // pred_region
      %s198 = ssub.s32 128, 128
      %199 = vsyncadd [#allocation24], %s198
      %s201 = sshll.u32 [#allocation25], 4
      %s202 = int_to_ptr.vmem [resolvable:$true] %s201
      %204 = dma.hbm_to_vmem [thread:$0]  %s14, 128, %s202, [#allocation24]
    $region61: #{net_forward.1} parent=1 // pred_fallthru
      _
    // Predicated region
    $region62: #{net_forward.1} parent=1 // pred_check
      _
    $region63: #{net_forward.1} parent=1 // pred_check_branch
      %206 = sbr.rel (0) target = $region65
    $region64: #{net_forward.1} parent=1 // pred_region
      %s208 = ssub.s32 65536, 65536
      %209 = vsyncadd [#allocation27], %s208
      %s210 = sshll.u32 [#allocation26], 4
      %s211 = int_to_ptr.vmem [resolvable:$true] %s210
      %216 = dma.hbm_to_vmem [thread:$0]  %s15, 65536, %s211, [#allocation27], 512, 512, 32
    $region65: #{net_forward.1} parent=1 // pred_fallthru
      _
    // Predicated region
    $region66: #{net_forward.1} parent=1 // pred_check
      _
    $region67: #{net_forward.1} parent=1 // pred_check_branch
      %218 = sbr.rel (0) target = $region69
    $region68: #{net_forward.1} parent=1 // pred_region
      %s220 = ssub.s32 64, 64
      %221 = vsyncadd [#allocation27], %s220
      %s223 = sshll.u32 [#allocation28], 4
      %s224 = int_to_ptr.vmem [resolvable:$true] %s223
      %226 = dma.hbm_to_vmem [thread:$0]  %s16, 64, %s224, [#allocation27]
    $region69: #{net_forward.1} parent=1 // pred_fallthru
      _
    // Predicated region
    $region70: #{net_forward.1} parent=1 // pred_check
      _
    $region71: #{net_forward.1} parent=1 // pred_check_branch
      %228 = sbr.rel (0) target = $region73
    $region72: #{net_forward.1} parent=1 // pred_region
      %s230 = ssub.s32 16384, 16384
      %231 = vsyncadd [#allocation30], %s230
      %s232 = sshll.u32 [#allocation29], 4
      %s233 = int_to_ptr.vmem [resolvable:$true] %s232
      %238 = dma.hbm_to_vmem [thread:$0]  %s17, 16384, %s233, [#allocation30], 256, 256, 16
    $region73: #{net_forward.1} parent=1 // pred_fallthru
      _
    // Predicated region
    $region74: #{net_forward.1} parent=1 // pred_check
      _
    $region75: #{net_forward.1} parent=1 // pred_check_branch
      %240 = sbr.rel (0) target = $region77
    $region76: #{net_forward.1} parent=1 // pred_region
      %s242 = ssub.s32 32, 32
      %243 = vsyncadd [#allocation30], %s242
      %s245 = sshll.u32 [#allocation31], 4
      %s246 = int_to_ptr.vmem [resolvable:$true] %s245
      %248 = dma.hbm_to_vmem [thread:$0]  %s18, 32, %s246, [#allocation30]
    $region77: #{net_forward.1} parent=1 // pred_fallthru
      _
    // Predicated region
    $region78: #{net_forward.1} parent=1 // pred_check
      _
    $region79: #{net_forward.1} parent=1 // pred_check_branch
      %250 = sbr.rel (0) target = $region81
    $region80: #{net_forward.1} parent=1 // pred_region
      %251 = dma.done [#allocation3], 512
    $region81: #{net_forward.1} parent=1 // pred_fallthru
      _
    // Predicated region
    $region82: #{net_forward.1} parent=1 // pred_check
      _
    $region83: #{net_forward.1} parent=1 // pred_check_branch
      %253 = sbr.rel (0) target = $region85
    $region84: #{net_forward.1} parent=1 // pred_region
      %254 = dma.done [#allocation6], 3072
    $region85: #{net_forward.1} parent=1 // pred_fallthru
      _
    // Predicated region
    $region86: #{net_forward.1} parent=1 // pred_check
      _
    $region87: #{net_forward.1} parent=1 // pred_check_branch
      %256 = sbr.rel (0) target = $region89
    $region88: #{net_forward.1} parent=1 // pred_region
      %257 = dma.done [#allocation6], 64
    $region89: #{net_forward.1} parent=1 // pred_fallthru
      _
    // Predicated region
    $region90: #{net_forward.1} parent=1 // pred_check
      _
    $region91: #{net_forward.1} parent=1 // pred_check_branch
      %259 = sbr.rel (0) target = $region93
    $region92: #{net_forward.1} parent=1 // pred_region
      %260 = dma.done [#allocation9], 512
    $region93: #{net_forward.1} parent=1 // pred_fallthru
      _
    // Predicated region
    $region94: #{net_forward.1} parent=1 // pred_check
      _
    $region95: #{net_forward.1} parent=1 // pred_check_branch
      %262 = sbr.rel (0) target = $region97
    $region96: #{net_forward.1} parent=1 // pred_region
      %263 = dma.done [#allocation9], 512
    $region97: #{net_forward.1} parent=1 // pred_fallthru
      _
    // Predicated region
    $region98: #{net_forward.1} parent=1 // pred_check
      _
    $region99: #{net_forward.1} parent=1 // pred_check_branch
      %265 = sbr.rel (0) target = $region101
    $region100: #{net_forward.1} parent=1 // pred_region
      %266 = dma.done [#allocation12], 98304
    $region101: #{net_forward.1} parent=1 // pred_fallthru
      _
    // Predicated region
    $region102: #{net_forward.1} parent=1 // pred_check
      _
    $region103: #{net_forward.1} parent=1 // pred_check_branch
      %268 = sbr.rel (0) target = $region105
    $region104: #{net_forward.1} parent=1 // pred_region
      %269 = dma.done [#allocation12], 64
    $region105: #{net_forward.1} parent=1 // pred_fallthru
      _
    // Predicated region
    $region106: #{net_forward.1} parent=1 // pred_check
      _
    $region107: #{net_forward.1} parent=1 // pred_check_branch
      %271 = sbr.rel (0) target = $region109
    $region108: #{net_forward.1} parent=1 // pred_region
      %272 = dma.done [#allocation15], 256
    $region109: #{net_forward.1} parent=1 // pred_fallthru
      _
    // Predicated region
    $region110: #{net_forward.1} parent=1 // pred_check
      _
    $region111: #{net_forward.1} parent=1 // pred_check_branch
      %274 = sbr.rel (0) target = $region113
    $region112: #{net_forward.1} parent=1 // pred_region
      %275 = dma.done [#allocation15], 256
    $region113: #{net_forward.1} parent=1 // pred_fallthru
      _
    // Predicated region
    $region114: #{net_forward.1} parent=1 // pred_check
      _
    $region115: #{net_forward.1} parent=1 // pred_check_branch
      %277 = sbr.rel (0) target = $region117
    $region116: #{net_forward.1} parent=1 // pred_region
      %278 = dma.done [#allocation18], 256
    $region117: #{net_forward.1} parent=1 // pred_fallthru
      _
    // Predicated region
    $region118: #{net_forward.1} parent=1 // pred_check
      _
    $region119: #{net_forward.1} parent=1 // pred_check_branch
      %280 = sbr.rel (0) target = $region121
    $region120: #{net_forward.1} parent=1 // pred_region
      %281 = dma.done [#allocation18], 256
    $region121: #{net_forward.1} parent=1 // pred_fallthru
      _
    // Predicated region
    $region122: #{net_forward.1} parent=1 // pred_check
      _
    $region123: #{net_forward.1} parent=1 // pred_check_branch
      %283 = sbr.rel (0) target = $region125
    $region124: #{net_forward.1} parent=1 // pred_region
      %284 = dma.done [#allocation21], 49152
    $region125: #{net_forward.1} parent=1 // pred_fallthru
      _
    // Predicated region
    $region126: #{net_forward.1} parent=1 // pred_check
      _
    $region127: #{net_forward.1} parent=1 // pred_check_branch
      %286 = sbr.rel (0) target = $region129
    $region128: #{net_forward.1} parent=1 // pred_region
      %287 = dma.done [#allocation21], 64
    $region129: #{net_forward.1} parent=1 // pred_fallthru
      _
    // Predicated region
    $region130: #{net_forward.1} parent=1 // pred_check
      _
    $region131: #{net_forward.1} parent=1 // pred_check_branch
      %289 = sbr.rel (0) target = $region133
    $region132: #{net_forward.1} parent=1 // pred_region
      %290 = dma.done [#allocation24], 128
    $region133: #{net_forward.1} parent=1 // pred_fallthru
      _
    // Predicated region
    $region134: #{net_forward.1} parent=1 // pred_check
      _
    $region135: #{net_forward.1} parent=1 // pred_check_branch
      %292 = sbr.rel (0) target = $region137
    $region136: #{net_forward.1} parent=1 // pred_region
      %293 = dma.done [#allocation24], 128
    $region137: #{net_forward.1} parent=1 // pred_fallthru
      _
    // Predicated region
    $region138: #{net_forward.1} parent=1 // pred_check
      _
    $region139: #{net_forward.1} parent=1 // pred_check_branch
      %295 = sbr.rel (0) target = $region141
    $region140: #{net_forward.1} parent=1 // pred_region
      %296 = dma.done [#allocation27], 65536
    $region141: #{net_forward.1} parent=1 // pred_fallthru
      _
    // Predicated region
    $region142: #{net_forward.1} parent=1 // pred_check
      _
    $region143: #{net_forward.1} parent=1 // pred_check_branch
      %298 = sbr.rel (0) target = $region145
    $region144: #{net_forward.1} parent=1 // pred_region
      %299 = dma.done [#allocation27], 64
    $region145: #{net_forward.1} parent=1 // pred_fallthru
      _
    // Predicated region
    $region146: #{net_forward.1} parent=1 // pred_check
      _
    $region147: #{net_forward.1} parent=1 // pred_check_branch
      %301 = sbr.rel (0) target = $region149
    $region148: #{net_forward.1} parent=1 // pred_region
      %302 = dma.done [#allocation30], 16384
    $region149: #{net_forward.1} parent=1 // pred_fallthru
      _
    // Predicated region
    $region150: #{net_forward.1} parent=1 // pred_check
      _
    $region151: #{net_forward.1} parent=1 // pred_check_branch
      %304 = sbr.rel (0) target = $region153
    $region152: #{net_forward.1} parent=1 // pred_region
      %305 = dma.done [#allocation30], 32
    $region153: #{net_forward.1} parent=1 // pred_fallthru
      _
    %v306 = vld [vmem:[#allocation8] sm:$0xff]
    %v307 = vld [vmem:[#allocation8 + $0x8] sm:$0xff]
    %v308 = vld [vmem:[#allocation8 + $0x10] sm:$0xff]
    %v309 = vld [vmem:[#allocation8 + $0x18] sm:$0xff]
    %v310 = vld [vmem:[#allocation10] sm:$0xff]
    %v311 = vld [vmem:[#allocation10 + $0x8] sm:$0xff]
    %v312 = vld [vmem:[#allocation10 + $0x10] sm:$0xff]
    %v313 = vld [vmem:[#allocation10 + $0x18] sm:$0xff]
    %v314 = vld [vmem:[#allocation2] sm:$0xff]
    %v315 = vld [vmem:[#allocation2 + $0x8] sm:$0xff]
    %v316 = vld [vmem:[#allocation2 + $0x10] sm:$0xff]
    %v317 = vld [vmem:[#allocation2 + $0x18] sm:$0xff]
    %vm318 = vcmask 261120
    %v320 = vsel %vm318, %v306, 0
    %v323 = vsel %vm318, %v307, 0
    %v326 = vsel %vm318, %v308, 0
    %v329 = vsel %vm318, %v309, 0
    %331 = vmatprep.subr.mxu0 0.0
    %332 = vmatpush1.msra.mxu0 %v314
    %333 = vmatprep.subr.mxu0 0.0
    %334 = vmatpush1.msra.mxu0 %v315
    %335 = vmatprep.subr.mxu0 0.0
    %336 = vmatpush1.msra.mxu0 %v316
    %337 = vmatprep.subr.mxu0 0.0
    %338 = vmatpush1.msra.mxu0 %v317
    %339 = vmatprep.subr.mxu0 0.0
    %340 = vmatpush1.msra.mxu0 0.0
    %341 = vmatprep.subr.mxu0 0.0
    %342 = vmatpush1.msra.mxu0 0.0
    %343 = vmatprep.subr.mxu0 0.0
    %344 = vmatpush1.msra.mxu0 0.0
    %345 = vmatprep.subr.mxu0 0.0
    %346 = vmatpush1.msra.mxu0 0.0
    %347 = vmatprep.subr.mxu0 0.0
    %348 = vmatpush1.msra.mxu0 0.0
    %349 = vmatprep.subr.mxu0 0.0
    %350 = vmatpush1.msra.mxu0 0.0
    %351 = vmatprep.subr.mxu0 0.0
    %352 = vmatpush1.msra.mxu0 0.0
    %353 = vmatprep.subr.mxu0 0.0
    %354 = vmatpush1.msra.mxu0 0.0
    %355 = vmatprep.subr.mxu0 0.0
    %356 = vmatpush1.msra.mxu0 0.0
    %357 = vmatprep.subr.mxu0 0.0
    %358 = vmatpush1.msra.mxu0 0.0
    %359 = vmatprep.subr.mxu0 0.0
    %360 = vmatpush1.msra.mxu0 0.0
    %361 = vmatprep.subr.mxu0 0.0
    %362 = vmatpush1.msra.mxu0 0.0
    %363 = vmatprep.subr.mxu0 0.0
    %364 = vmatpush1.msra.mxu0 0.0
    %365 = vmatprep.subr.mxu0 0.0
    %366 = vmatpush1.msra.mxu0 0.0
    %367 = vmatprep.subr.mxu0 0.0
    %368 = vmatpush1.msra.mxu0 0.0
    %369 = vmatprep.subr.mxu0 0.0
    %370 = vmatpush1.msra.mxu0 0.0
    %371 = vmatprep.subr.mxu0 0.0
    %372 = vmatpush1.msra.mxu0 0.0
    %373 = vmatprep.subr.mxu0 0.0
    %374 = vmatpush1.msra.mxu0 0.0
    %375 = vmatprep.subr.mxu0 0.0
    %376 = vmatpush1.msra.mxu0 0.0
    %377 = vmatprep.subr.mxu0 0.0
    %378 = vmatpush1.msra.mxu0 0.0
    %379 = vmatprep.subr.mxu0 0.0
    %380 = vmatpush1.msra.mxu0 0.0
    %381 = vmatprep.subr.mxu0 0.0
    %382 = vmatpush1.msra.mxu0 0.0
    %383 = vmatprep.subr.mxu0 0.0
    %384 = vmatpush1.msra.mxu0 0.0
    %385 = vmatprep.subr.mxu0 0.0
    %386 = vmatpush1.msra.mxu0 0.0
    %387 = vmatprep.subr.mxu0 0.0
    %388 = vmatpush1.msra.mxu0 0.0
    %389 = vmatprep.subr.mxu0 0.0
    %390 = vmatpush1.msra.mxu0 0.0
    %391 = vmatprep.subr.mxu0 0.0
    %392 = vmatpush1.msra.mxu0 0.0
    %393 = vmatprep.subr.mxu0 0.0
    %394 = vmatpush1.msra.mxu0 0.0
    %395 = vmatprep.mubr.f32.mxu0 0.0
    %396 = vmatmul.mubr.f32.gmra.mrb[0].mxu0 %v320
    %v397 = vpop.f32.mrb[0].mxu0
    %v398 = vadd.f32 0.0, %v397
    %v399 = vpop.f32.mrb[0].mxu0
    %400 = vmatprep.mubr.f32.mxu0 0.0
    %401 = vmatmul.mubr.f32.gmra.mrb[0].mxu0 %v323
    %v402 = vpop.f32.mrb[0].mxu0
    %v403 = vadd.f32 0.0, %v402
    %v404 = vpop.f32.mrb[0].mxu0
    %405 = vmatprep.mubr.f32.mxu0 0.0
    %406 = vmatmul.mubr.f32.gmra.mrb[0].mxu0 %v326
    %v407 = vpop.f32.mrb[0].mxu0
    %v408 = vadd.f32 0.0, %v407
    %v409 = vpop.f32.mrb[0].mxu0
    %410 = vmatprep.mubr.f32.mxu0 0.0
    %411 = vmatmul.mubr.f32.gmra.mrb[0].mxu0 %v329
    %v412 = vpop.f32.mrb[0].mxu0
    %v413 = vadd.f32 0.0, %v412
    %v414 = vpop.f32.mrb[0].mxu0
    %415 = vdwg.mxu0
    %v416 = vld [vmem:[#allocation5] sm:$0xff]
    %v417 = vld [vmem:[#allocation5 + $0x8] sm:$0xff]
    %v418 = vld [vmem:[#allocation5 + $0x10] sm:$0xff]
    %v419 = vld [vmem:[#allocation5 + $0x18] sm:$0xff]
    %v420 = vld [vmem:[#allocation5 + $0x20] sm:$0xff]
    %v421 = vld [vmem:[#allocation5 + $0x28] sm:$0xff]
    %v422 = vld [vmem:[#allocation5 + $0x30] sm:$0xff]
    %v423 = vld [vmem:[#allocation5 + $0x38] sm:$0xff]
    %s424 = scalar_lea.vmem [#allocation5], 64
    %v425 = vld [vmem:[%s424] sm:$0xff]
    %v426 = vld [vmem:[%s424 + $0x8] sm:$0xff]
    %v427 = vld [vmem:[%s424 + $0x10] sm:$0xff]
    %v428 = vld [vmem:[%s424 + $0x18] sm:$0xff]
    %v429 = vld [vmem:[%s424 + $0x20] sm:$0xff]
    %v430 = vld [vmem:[%s424 + $0x28] sm:$0xff]
    %v431 = vld [vmem:[%s424 + $0x30] sm:$0xff]
    %v432 = vld [vmem:[%s424 + $0x38] sm:$0xff]
    %vm433 = vcmask 130048
    %v435 = vsel %vm433, %v314, 0
    %v438 = vsel %vm433, %v315, 0
    %v441 = vsel %vm433, %v316, 0
    %v444 = vsel %vm433, %v317, 0
    %446 = vmatprep.subr.mxu0 %v426
    %447 = vmatpush1.msra.mxu0 %v425
    %448 = vmatprep.subr.mxu0 %v430
    %449 = vmatpush1.msra.mxu0 %v429
    %450 = vmatprep.subr.mxu0 0.0
    %451 = vmatpush1.msra.mxu0 0.0
    %452 = vmatprep.subr.mxu0 0.0
    %453 = vmatpush1.msra.mxu0 0.0
    %454 = vmatprep.subr.mxu0 0.0
    %455 = vmatpush1.msra.mxu0 0.0
    %456 = vmatprep.subr.mxu0 0.0
    %457 = vmatpush1.msra.mxu0 0.0
    %458 = vmatprep.subr.mxu0 0.0
    %459 = vmatpush1.msra.mxu0 0.0
    %460 = vmatprep.subr.mxu0 0.0
    %461 = vmatpush1.msra.mxu0 0.0
    %462 = vmatprep.subr.mxu0 0.0
    %463 = vmatpush1.msra.mxu0 0.0
    %464 = vmatprep.subr.mxu0 0.0
    %465 = vmatpush1.msra.mxu0 0.0
    %466 = vmatprep.subr.mxu0 0.0
    %467 = vmatpush1.msra.mxu0 0.0
    %468 = vmatprep.subr.mxu0 0.0
    %469 = vmatpush1.msra.mxu0 0.0
    %470 = vmatprep.subr.mxu0 0.0
    %471 = vmatpush1.msra.mxu0 0.0
    %472 = vmatprep.subr.mxu0 0.0
    %473 = vmatpush1.msra.mxu0 0.0
    %474 = vmatprep.subr.mxu0 0.0
    %475 = vmatpush1.msra.mxu0 0.0
    %476 = vmatprep.subr.mxu0 0.0
    %477 = vmatpush1.msra.mxu0 0.0
    %478 = vmatprep.subr.mxu0 0.0
    %479 = vmatpush1.msra.mxu0 0.0
    %480 = vmatprep.subr.mxu0 0.0
    %481 = vmatpush1.msra.mxu0 0.0
    %482 = vmatprep.subr.mxu0 0.0
    %483 = vmatpush1.msra.mxu0 0.0
    %484 = vmatprep.subr.mxu0 0.0
    %485 = vmatpush1.msra.mxu0 0.0
    %486 = vmatprep.subr.mxu0 0.0
    %487 = vmatpush1.msra.mxu0 0.0
    %488 = vmatprep.subr.mxu0 0.0
    %489 = vmatpush1.msra.mxu0 0.0
    %490 = vmatprep.subr.mxu0 0.0
    %491 = vmatpush1.msra.mxu0 0.0
    %492 = vmatprep.subr.mxu0 0.0
    %493 = vmatpush1.msra.mxu0 0.0
    %494 = vmatprep.subr.mxu0 0.0
    %495 = vmatpush1.msra.mxu0 0.0
    %496 = vmatprep.subr.mxu0 0.0
    %497 = vmatpush1.msra.mxu0 0.0
    %498 = vmatprep.subr.mxu0 0.0
    %499 = vmatpush1.msra.mxu0 0.0
    %500 = vmatprep.subr.mxu0 0.0
    %501 = vmatpush1.msra.mxu0 0.0
    %502 = vmatprep.subr.mxu0 0.0
    %503 = vmatpush1.msra.mxu0 0.0
    %504 = vmatprep.subr.mxu0 0.0
    %505 = vmatpush1.msra.mxu0 0.0
    %506 = vmatprep.subr.mxu0 0.0
    %507 = vmatpush1.msra.mxu0 0.0
    %508 = vmatprep.subr.mxu0 0.0
    %509 = vmatpush1.msra.mxu0 0.0
    %510 = vmatprep.mubr.f32.mxu0 0.0
    %511 = vmatmul.mubr.f32.gmra.mrb[0].mxu0 %v435
    %v512 = vpop.f32.mrb[0].mxu0
    %v513 = vadd.f32 0.0, %v512
    %v514 = vpop.f32.mrb[0].mxu0
    %v515 = vadd.f32 0.0, %v514
    %516 = vmatprep.mubr.f32.mxu0 0.0
    %517 = vmatmul.mubr.f32.gmra.mrb[0].mxu0 %v438
    %v518 = vpop.f32.mrb[0].mxu0
    %v519 = vadd.f32 0.0, %v518
    %v520 = vpop.f32.mrb[0].mxu0
    %v521 = vadd.f32 0.0, %v520
    %522 = vmatprep.mubr.f32.mxu0 0.0
    %523 = vmatmul.mubr.f32.gmra.mrb[0].mxu0 %v441
    %v524 = vpop.f32.mrb[0].mxu0
    %v525 = vadd.f32 0.0, %v524
    %v526 = vpop.f32.mrb[0].mxu0
    %v527 = vadd.f32 0.0, %v526
    %528 = vmatprep.mubr.f32.mxu0 0.0
    %529 = vmatmul.mubr.f32.gmra.mrb[0].mxu0 %v444
    %v530 = vpop.f32.mrb[0].mxu0
    %v531 = vadd.f32 0.0, %v530
    %v532 = vpop.f32.mrb[0].mxu0
    %v533 = vadd.f32 0.0, %v532
    %534 = vdwg.mxu0
    %535 = vmatprep.subr.mxu0 %v428
    %536 = vmatpush1.msra.mxu0 %v427
    %537 = vmatprep.subr.mxu0 %v432
    %538 = vmatpush1.msra.mxu0 %v431
    %539 = vmatprep.subr.mxu0 0.0
    %540 = vmatpush1.msra.mxu0 0.0
    %541 = vmatprep.subr.mxu0 0.0
    %542 = vmatpush1.msra.mxu0 0.0
    %543 = vmatprep.subr.mxu0 0.0
    %544 = vmatpush1.msra.mxu0 0.0
    %545 = vmatprep.subr.mxu0 0.0
    %546 = vmatpush1.msra.mxu0 0.0
    %547 = vmatprep.subr.mxu0 0.0
    %548 = vmatpush1.msra.mxu0 0.0
    %549 = vmatprep.subr.mxu0 0.0
    %550 = vmatpush1.msra.mxu0 0.0
    %551 = vmatprep.subr.mxu0 0.0
    %552 = vmatpush1.msra.mxu0 0.0
    %553 = vmatprep.subr.mxu0 0.0
    %554 = vmatpush1.msra.mxu0 0.0
    %555 = vmatprep.subr.mxu0 0.0
    %556 = vmatpush1.msra.mxu0 0.0
    %557 = vmatprep.subr.mxu0 0.0
    %558 = vmatpush1.msra.mxu0 0.0
    %559 = vmatprep.subr.mxu0 0.0
    %560 = vmatpush1.msra.mxu0 0.0
    %561 = vmatprep.subr.mxu0 0.0
    %562 = vmatpush1.msra.mxu0 0.0
    %563 = vmatprep.subr.mxu0 0.0
    %564 = vmatpush1.msra.mxu0 0.0
    %565 = vmatprep.subr.mxu0 0.0
    %566 = vmatpush1.msra.mxu0 0.0
    %567 = vmatprep.subr.mxu0 0.0
    %568 = vmatpush1.msra.mxu0 0.0
    %569 = vmatprep.subr.mxu0 0.0
    %570 = vmatpush1.msra.mxu0 0.0
    %571 = vmatprep.subr.mxu0 0.0
    %572 = vmatpush1.msra.mxu0 0.0
    %573 = vmatprep.subr.mxu0 0.0
    %574 = vmatpush1.msra.mxu0 0.0
    %575 = vmatprep.subr.mxu0 0.0
    %576 = vmatpush1.msra.mxu0 0.0
    %577 = vmatprep.subr.mxu0 0.0
    %578 = vmatpush1.msra.mxu0 0.0
    %579 = vmatprep.subr.mxu0 0.0
    %580 = vmatpush1.msra.mxu0 0.0
    %581 = vmatprep.subr.mxu0 0.0
    %582 = vmatpush1.msra.mxu0 0.0
    %583 = vmatprep.subr.mxu0 0.0
    %584 = vmatpush1.msra.mxu0 0.0
    %585 = vmatprep.subr.mxu0 0.0
    %586 = vmatpush1.msra.mxu0 0.0
    %587 = vmatprep.subr.mxu0 0.0
    %588 = vmatpush1.msra.mxu0 0.0
    %589 = vmatprep.subr.mxu0 0.0
    %590 = vmatpush1.msra.mxu0 0.0
    %591 = vmatprep.subr.mxu0 0.0
    %592 = vmatpush1.msra.mxu0 0.0
    %593 = vmatprep.subr.mxu0 0.0
    %594 = vmatpush1.msra.mxu0 0.0
    %595 = vmatprep.subr.mxu0 0.0
    %596 = vmatpush1.msra.mxu0 0.0
    %597 = vmatprep.subr.mxu0 0.0
    %598 = vmatpush1.msra.mxu0 0.0
    %599 = vmatprep.mubr.f32.mxu0 0.0
    %600 = vmatmul.mubr.f32.gmra.mrb[0].mxu0 %v435
    %v601 = vpop.f32.mrb[0].mxu0
    %v602 = vadd.f32 0.0, %v601
    %v603 = vpop.f32.mrb[0].mxu0
    %v604 = vadd.f32 0.0, %v603
    %605 = vmatprep.mubr.f32.mxu0 0.0
    %606 = vmatmul.mubr.f32.gmra.mrb[0].mxu0 %v438
    %v607 = vpop.f32.mrb[0].mxu0
    %v608 = vadd.f32 0.0, %v607
    %v609 = vpop.f32.mrb[0].mxu0
    %v610 = vadd.f32 0.0, %v609
    %611 = vmatprep.mubr.f32.mxu0 0.0
    %612 = vmatmul.mubr.f32.gmra.mrb[0].mxu0 %v441
    %v613 = vpop.f32.mrb[0].mxu0
    %v614 = vadd.f32 0.0, %v613
    %v615 = vpop.f32.mrb[0].mxu0
    %v616 = vadd.f32 0.0, %v615
    %617 = vmatprep.mubr.f32.mxu0 0.0
    %618 = vmatmul.mubr.f32.gmra.mrb[0].mxu0 %v444
    %v619 = vpop.f32.mrb[0].mxu0
    %v620 = vadd.f32 0.0, %v619
    %v621 = vpop.f32.mrb[0].mxu0
    %v622 = vadd.f32 0.0, %v621
    %623 = vdwg.mxu0
    %v625 = vsel %vm433, %v398, 0
    %v628 = vsel %vm433, %v403, 0
    %v631 = vsel %vm433, %v408, 0
    %v634 = vsel %vm433, %v413, 0
    %636 = vmatprep.subr.mxu0 %v417
    %637 = vmatpush1.msra.mxu0 %v416
    %638 = vmatprep.subr.mxu0 %v421
    %639 = vmatpush1.msra.mxu0 %v420
    %640 = vmatprep.subr.mxu0 0.0
    %641 = vmatpush1.msra.mxu0 0.0
    %642 = vmatprep.subr.mxu0 0.0
    %643 = vmatpush1.msra.mxu0 0.0
    %644 = vmatprep.subr.mxu0 0.0
    %645 = vmatpush1.msra.mxu0 0.0
    %646 = vmatprep.subr.mxu0 0.0
    %647 = vmatpush1.msra.mxu0 0.0
    %648 = vmatprep.subr.mxu0 0.0
    %649 = vmatpush1.msra.mxu0 0.0
    %650 = vmatprep.subr.mxu0 0.0
    %651 = vmatpush1.msra.mxu0 0.0
    %652 = vmatprep.subr.mxu0 0.0
    %653 = vmatpush1.msra.mxu0 0.0
    %654 = vmatprep.subr.mxu0 0.0
    %655 = vmatpush1.msra.mxu0 0.0
    %656 = vmatprep.subr.mxu0 0.0
    %657 = vmatpush1.msra.mxu0 0.0
    %658 = vmatprep.subr.mxu0 0.0
    %659 = vmatpush1.msra.mxu0 0.0
    %660 = vmatprep.subr.mxu0 0.0
    %661 = vmatpush1.msra.mxu0 0.0
    %662 = vmatprep.subr.mxu0 0.0
    %663 = vmatpush1.msra.mxu0 0.0
    %664 = vmatprep.subr.mxu0 0.0
    %665 = vmatpush1.msra.mxu0 0.0
    %666 = vmatprep.subr.mxu0 0.0
    %667 = vmatpush1.msra.mxu0 0.0
    %668 = vmatprep.subr.mxu0 0.0
    %669 = vmatpush1.msra.mxu0 0.0
    %670 = vmatprep.subr.mxu0 0.0
    %671 = vmatpush1.msra.mxu0 0.0
    %672 = vmatprep.subr.mxu0 0.0
    %673 = vmatpush1.msra.mxu0 0.0
    %674 = vmatprep.subr.mxu0 0.0
    %675 = vmatpush1.msra.mxu0 0.0
    %676 = vmatprep.subr.mxu0 0.0
    %677 = vmatpush1.msra.mxu0 0.0
    %678 = vmatprep.subr.mxu0 0.0
    %679 = vmatpush1.msra.mxu0 0.0
    %680 = vmatprep.subr.mxu0 0.0
    %681 = vmatpush1.msra.mxu0 0.0
    %682 = vmatprep.subr.mxu0 0.0
    %683 = vmatpush1.msra.mxu0 0.0
    %684 = vmatprep.subr.mxu0 0.0
    %685 = vmatpush1.msra.mxu0 0.0
    %686 = vmatprep.subr.mxu0 0.0
    %687 = vmatpush1.msra.mxu0 0.0
    %688 = vmatprep.subr.mxu0 0.0
    %689 = vmatpush1.msra.mxu0 0.0
    %690 = vmatprep.subr.mxu0 0.0
    %691 = vmatpush1.msra.mxu0 0.0
    %692 = vmatprep.subr.mxu0 0.0
    %693 = vmatpush1.msra.mxu0 0.0
    %694 = vmatprep.subr.mxu0 0.0
    %695 = vmatpush1.msra.mxu0 0.0
    %696 = vmatprep.subr.mxu0 0.0
    %697 = vmatpush1.msra.mxu0 0.0
    %698 = vmatprep.subr.mxu0 0.0
    %699 = vmatpush1.msra.mxu0 0.0
    %700 = vmatprep.mubr.f32.mxu0 0.0
    %701 = vmatmul.mubr.f32.gmra.mrb[0].mxu0 %v625
    %v702 = vpop.f32.mrb[0].mxu0
    %v703 = vadd.f32 %v513, %v702
    %v704 = vpop.f32.mrb[0].mxu0
    %v705 = vadd.f32 %v515, %v704
    %706 = vmatprep.mubr.f32.mxu0 0.0
    %707 = vmatmul.mubr.f32.gmra.mrb[0].mxu0 %v628
    %v708 = vpop.f32.mrb[0].mxu0
    %v709 = vadd.f32 %v519, %v708
    %v710 = vpop.f32.mrb[0].mxu0
    %v711 = vadd.f32 %v521, %v710
    %712 = vmatprep.mubr.f32.mxu0 0.0
    %713 = vmatmul.mubr.f32.gmra.mrb[0].mxu0 %v631
    %v714 = vpop.f32.mrb[0].mxu0
    %v715 = vadd.f32 %v525, %v714
    %v716 = vpop.f32.mrb[0].mxu0
    %v717 = vadd.f32 %v527, %v716
    %718 = vmatprep.mubr.f32.mxu0 0.0
    %719 = vmatmul.mubr.f32.gmra.mrb[0].mxu0 %v634
    %v720 = vpop.f32.mrb[0].mxu0
    %v721 = vadd.f32 %v531, %v720
    %v722 = vpop.f32.mrb[0].mxu0
    %v723 = vadd.f32 %v533, %v722
    %724 = vdwg.mxu0
    %725 = vmatprep.subr.mxu0 %v419
    %726 = vmatpush1.msra.mxu0 %v418
    %727 = vmatprep.subr.mxu0 %v423
    %728 = vmatpush1.msra.mxu0 %v422
    %729 = vmatprep.subr.mxu0 0.0
    %730 = vmatpush1.msra.mxu0 0.0
    %731 = vmatprep.subr.mxu0 0.0
    %732 = vmatpush1.msra.mxu0 0.0
    %733 = vmatprep.subr.mxu0 0.0
    %734 = vmatpush1.msra.mxu0 0.0
    %735 = vmatprep.subr.mxu0 0.0
    %736 = vmatpush1.msra.mxu0 0.0
    %737 = vmatprep.subr.mxu0 0.0
    %738 = vmatpush1.msra.mxu0 0.0
    %739 = vmatprep.subr.mxu0 0.0
    %740 = vmatpush1.msra.mxu0 0.0
    %741 = vmatprep.subr.mxu0 0.0
    %742 = vmatpush1.msra.mxu0 0.0
    %743 = vmatprep.subr.mxu0 0.0
    %744 = vmatpush1.msra.mxu0 0.0
    %745 = vmatprep.subr.mxu0 0.0
    %746 = vmatpush1.msra.mxu0 0.0
    %747 = vmatprep.subr.mxu0 0.0
    %748 = vmatpush1.msra.mxu0 0.0
    %749 = vmatprep.subr.mxu0 0.0
    %750 = vmatpush1.msra.mxu0 0.0
    %751 = vmatprep.subr.mxu0 0.0
    %752 = vmatpush1.msra.mxu0 0.0
    %753 = vmatprep.subr.mxu0 0.0
    %754 = vmatpush1.msra.mxu0 0.0
    %755 = vmatprep.subr.mxu0 0.0
    %756 = vmatpush1.msra.mxu0 0.0
    %757 = vmatprep.subr.mxu0 0.0
    %758 = vmatpush1.msra.mxu0 0.0
    %759 = vmatprep.subr.mxu0 0.0
    %760 = vmatpush1.msra.mxu0 0.0
    %761 = vmatprep.subr.mxu0 0.0
    %762 = vmatpush1.msra.mxu0 0.0
    %763 = vmatprep.subr.mxu0 0.0
    %764 = vmatpush1.msra.mxu0 0.0
    %765 = vmatprep.subr.mxu0 0.0
    %766 = vmatpush1.msra.mxu0 0.0
    %767 = vmatprep.subr.mxu0 0.0
    %768 = vmatpush1.msra.mxu0 0.0
    %769 = vmatprep.subr.mxu0 0.0
    %770 = vmatpush1.msra.mxu0 0.0
    %771 = vmatprep.subr.mxu0 0.0
    %772 = vmatpush1.msra.mxu0 0.0
    %773 = vmatprep.subr.mxu0 0.0
    %774 = vmatpush1.msra.mxu0 0.0
    %775 = vmatprep.subr.mxu0 0.0
    %776 = vmatpush1.msra.mxu0 0.0
    %777 = vmatprep.subr.mxu0 0.0
    %778 = vmatpush1.msra.mxu0 0.0
    %779 = vmatprep.subr.mxu0 0.0
    %780 = vmatpush1.msra.mxu0 0.0
    %781 = vmatprep.subr.mxu0 0.0
    %782 = vmatpush1.msra.mxu0 0.0
    %783 = vmatprep.subr.mxu0 0.0
    %784 = vmatpush1.msra.mxu0 0.0
    %785 = vmatprep.subr.mxu0 0.0
    %786 = vmatpush1.msra.mxu0 0.0
    %787 = vmatprep.subr.mxu0 0.0
    %788 = vmatpush1.msra.mxu0 0.0
    %789 = vmatprep.mubr.f32.mxu0 0.0
    %790 = vmatmul.mubr.f32.gmra.mrb[0].mxu0 %v625
    %v791 = vpop.f32.mrb[0].mxu0
    %v792 = vadd.f32 %v602, %v791
    %v793 = vpop.f32.mrb[0].mxu0
    %v794 = vadd.f32 %v604, %v793
    %795 = vmatprep.mubr.f32.mxu0 0.0
    %796 = vmatmul.mubr.f32.gmra.mrb[0].mxu0 %v628
    %v797 = vpop.f32.mrb[0].mxu0
    %v798 = vadd.f32 %v608, %v797
    %v799 = vpop.f32.mrb[0].mxu0
    %v800 = vadd.f32 %v610, %v799
    %801 = vmatprep.mubr.f32.mxu0 0.0
    %802 = vmatmul.mubr.f32.gmra.mrb[0].mxu0 %v631
    %v803 = vpop.f32.mrb[0].mxu0
    %v804 = vadd.f32 %v614, %v803
    %v805 = vpop.f32.mrb[0].mxu0
    %v806 = vadd.f32 %v616, %v805
    %807 = vmatprep.mubr.f32.mxu0 0.0
    %808 = vmatmul.mubr.f32.gmra.mrb[0].mxu0 %v634
    %v809 = vpop.f32.mrb[0].mxu0
    %v810 = vadd.f32 %v620, %v809
    %v811 = vpop.f32.mrb[0].mxu0
    %v812 = vadd.f32 %v622, %v811
    %813 = vdwg.mxu0
    %v815 = vsel %vm318, %v310, 0
    %v818 = vsel %vm318, %v311, 0
    %v821 = vsel %vm318, %v312, 0
    %v824 = vsel %vm318, %v313, 0
    %826 = vmatprep.subr.mxu0 0.0
    %827 = vmatpush1.msra.mxu0 %v314
    %828 = vmatprep.subr.mxu0 0.0
    %829 = vmatpush1.msra.mxu0 %v315
    %830 = vmatprep.subr.mxu0 0.0
    %831 = vmatpush1.msra.mxu0 %v316
    %832 = vmatprep.subr.mxu0 0.0
    %833 = vmatpush1.msra.mxu0 %v317
    %834 = vmatprep.subr.mxu0 0.0
    %835 = vmatpush1.msra.mxu0 0.0
    %836 = vmatprep.subr.mxu0 0.0
    %837 = vmatpush1.msra.mxu0 0.0
    %838 = vmatprep.subr.mxu0 0.0
    %839 = vmatpush1.msra.mxu0 0.0
    %840 = vmatprep.subr.mxu0 0.0
    %841 = vmatpush1.msra.mxu0 0.0
    %842 = vmatprep.subr.mxu0 0.0
    %843 = vmatpush1.msra.mxu0 0.0
    %844 = vmatprep.subr.mxu0 0.0
    %845 = vmatpush1.msra.mxu0 0.0
    %846 = vmatprep.subr.mxu0 0.0
    %847 = vmatpush1.msra.mxu0 0.0
    %848 = vmatprep.subr.mxu0 0.0
    %849 = vmatpush1.msra.mxu0 0.0
    %850 = vmatprep.subr.mxu0 0.0
    %851 = vmatpush1.msra.mxu0 0.0
    %852 = vmatprep.subr.mxu0 0.0
    %853 = vmatpush1.msra.mxu0 0.0
    %854 = vmatprep.subr.mxu0 0.0
    %855 = vmatpush1.msra.mxu0 0.0
    %856 = vmatprep.subr.mxu0 0.0
    %857 = vmatpush1.msra.mxu0 0.0
    %858 = vmatprep.subr.mxu0 0.0
    %859 = vmatpush1.msra.mxu0 0.0
    %860 = vmatprep.subr.mxu0 0.0
    %861 = vmatpush1.msra.mxu0 0.0
    %862 = vmatprep.subr.mxu0 0.0
    %863 = vmatpush1.msra.mxu0 0.0
    %864 = vmatprep.subr.mxu0 0.0
    %865 = vmatpush1.msra.mxu0 0.0
    %866 = vmatprep.subr.mxu0 0.0
    %867 = vmatpush1.msra.mxu0 0.0
    %868 = vmatprep.subr.mxu0 0.0
    %869 = vmatpush1.msra.mxu0 0.0
    %870 = vmatprep.subr.mxu0 0.0
    %871 = vmatpush1.msra.mxu0 0.0
    %872 = vmatprep.subr.mxu0 0.0
    %873 = vmatpush1.msra.mxu0 0.0
    %874 = vmatprep.subr.mxu0 0.0
    %875 = vmatpush1.msra.mxu0 0.0
    %876 = vmatprep.subr.mxu0 0.0
    %877 = vmatpush1.msra.mxu0 0.0
    %878 = vmatprep.subr.mxu0 0.0
    %879 = vmatpush1.msra.mxu0 0.0
    %880 = vmatprep.subr.mxu0 0.0
    %881 = vmatpush1.msra.mxu0 0.0
    %882 = vmatprep.subr.mxu0 0.0
    %883 = vmatpush1.msra.mxu0 0.0
    %884 = vmatprep.subr.mxu0 0.0
    %885 = vmatpush1.msra.mxu0 0.0
    %886 = vmatprep.subr.mxu0 0.0
    %887 = vmatpush1.msra.mxu0 0.0
    %888 = vmatprep.subr.mxu0 0.0
    %889 = vmatpush1.msra.mxu0 0.0
    %890 = vmatprep.mubr.f32.mxu0 0.0
    %891 = vmatmul.mubr.f32.gmra.mrb[0].mxu0 %v815
    %v892 = vpop.f32.mrb[0].mxu0
    %v893 = vadd.f32 0.0, %v892
    %v894 = vpop.f32.mrb[0].mxu0
    %895 = vmatprep.mubr.f32.mxu0 0.0
    %896 = vmatmul.mubr.f32.gmra.mrb[0].mxu0 %v818
    %v897 = vpop.f32.mrb[0].mxu0
    %v898 = vadd.f32 0.0, %v897
    %v899 = vpop.f32.mrb[0].mxu0
    %900 = vmatprep.mubr.f32.mxu0 0.0
    %901 = vmatmul.mubr.f32.gmra.mrb[0].mxu0 %v821
    %v902 = vpop.f32.mrb[0].mxu0
    %v903 = vadd.f32 0.0, %v902
    %v904 = vpop.f32.mrb[0].mxu0
    %905 = vmatprep.mubr.f32.mxu0 0.0
    %906 = vmatmul.mubr.f32.gmra.mrb[0].mxu0 %v824
    %v907 = vpop.f32.mrb[0].mxu0
    %v908 = vadd.f32 0.0, %v907
    %v909 = vpop.f32.mrb[0].mxu0
    %910 = vdwg.mxu0
    %s911 = scalar_lea.vmem [#allocation5], 128
    %v912 = vld [vmem:[%s911] sm:$0xff]
    %v913 = vld [vmem:[%s911 + $0x8] sm:$0xff]
    %v914 = vld [vmem:[%s911 + $0x10] sm:$0xff]
    %v915 = vld [vmem:[%s911 + $0x18] sm:$0xff]
    %v916 = vld [vmem:[%s911 + $0x20] sm:$0xff]
    %v917 = vld [vmem:[%s911 + $0x28] sm:$0xff]
    %v918 = vld [vmem:[%s911 + $0x30] sm:$0xff]
    %v919 = vld [vmem:[%s911 + $0x38] sm:$0xff]
    %v921 = vsel %vm433, %v893, 0
    %v924 = vsel %vm433, %v898, 0
    %v927 = vsel %vm433, %v903, 0
    %v930 = vsel %vm433, %v908, 0
    %932 = vmatprep.subr.mxu0 %v913
    %933 = vmatpush1.msra.mxu0 %v912
    %934 = vmatprep.subr.mxu0 %v917
    %935 = vmatpush1.msra.mxu0 %v916
    %936 = vmatprep.subr.mxu0 0.0
    %937 = vmatpush1.msra.mxu0 0.0
    %938 = vmatprep.subr.mxu0 0.0
    %939 = vmatpush1.msra.mxu0 0.0
    %940 = vmatprep.subr.mxu0 0.0
    %941 = vmatpush1.msra.mxu0 0.0
    %942 = vmatprep.subr.mxu0 0.0
    %943 = vmatpush1.msra.mxu0 0.0
    %944 = vmatprep.subr.mxu0 0.0
    %945 = vmatpush1.msra.mxu0 0.0
    %946 = vmatprep.subr.mxu0 0.0
    %947 = vmatpush1.msra.mxu0 0.0
    %948 = vmatprep.subr.mxu0 0.0
    %949 = vmatpush1.msra.mxu0 0.0
    %950 = vmatprep.subr.mxu0 0.0
    %951 = vmatpush1.msra.mxu0 0.0
    %952 = vmatprep.subr.mxu0 0.0
    %953 = vmatpush1.msra.mxu0 0.0
    %954 = vmatprep.subr.mxu0 0.0
    %955 = vmatpush1.msra.mxu0 0.0
    %956 = vmatprep.subr.mxu0 0.0
    %957 = vmatpush1.msra.mxu0 0.0
    %958 = vmatprep.subr.mxu0 0.0
    %959 = vmatpush1.msra.mxu0 0.0
    %960 = vmatprep.subr.mxu0 0.0
    %961 = vmatpush1.msra.mxu0 0.0
    %962 = vmatprep.subr.mxu0 0.0
    %963 = vmatpush1.msra.mxu0 0.0
    %964 = vmatprep.subr.mxu0 0.0
    %965 = vmatpush1.msra.mxu0 0.0
    %966 = vmatprep.subr.mxu0 0.0
    %967 = vmatpush1.msra.mxu0 0.0
    %968 = vmatprep.subr.mxu0 0.0
    %969 = vmatpush1.msra.mxu0 0.0
    %970 = vmatprep.subr.mxu0 0.0
    %971 = vmatpush1.msra.mxu0 0.0
    %972 = vmatprep.subr.mxu0 0.0
    %973 = vmatpush1.msra.mxu0 0.0
    %974 = vmatprep.subr.mxu0 0.0
    %975 = vmatpush1.msra.mxu0 0.0
    %976 = vmatprep.subr.mxu0 0.0
    %977 = vmatpush1.msra.mxu0 0.0
    %978 = vmatprep.subr.mxu0 0.0
    %979 = vmatpush1.msra.mxu0 0.0
    %980 = vmatprep.subr.mxu0 0.0
    %981 = vmatpush1.msra.mxu0 0.0
    %982 = vmatprep.subr.mxu0 0.0
    %983 = vmatpush1.msra.mxu0 0.0
    %984 = vmatprep.subr.mxu0 0.0
    %985 = vmatpush1.msra.mxu0 0.0
    %986 = vmatprep.subr.mxu0 0.0
    %987 = vmatpush1.msra.mxu0 0.0
    %988 = vmatprep.subr.mxu0 0.0
    %989 = vmatpush1.msra.mxu0 0.0
    %990 = vmatprep.subr.mxu0 0.0
    %991 = vmatpush1.msra.mxu0 0.0
    %992 = vmatprep.subr.mxu0 0.0
    %993 = vmatpush1.msra.mxu0 0.0
    %994 = vmatprep.subr.mxu0 0.0
    %995 = vmatpush1.msra.mxu0 0.0
    %996 = vmatprep.mubr.f32.mxu0 0.0
    %997 = vmatmul.mubr.f32.gmra.mrb[0].mxu0 %v921
    %v998 = vpop.f32.mrb[0].mxu0
    %v999 = vadd.f32 0.0, %v998
    %v1000 = vpop.f32.mrb[0].mxu0
    %v1001 = vadd.f32 0.0, %v1000
    %1002 = vmatprep.mubr.f32.mxu0 0.0
    %1003 = vmatmul.mubr.f32.gmra.mrb[0].mxu0 %v924
    %v1004 = vpop.f32.mrb[0].mxu0
    %v1005 = vadd.f32 0.0, %v1004
    %v1006 = vpop.f32.mrb[0].mxu0
    %v1007 = vadd.f32 0.0, %v1006
    %1008 = vmatprep.mubr.f32.mxu0 0.0
    %1009 = vmatmul.mubr.f32.gmra.mrb[0].mxu0 %v927
    %v1010 = vpop.f32.mrb[0].mxu0
    %v1011 = vadd.f32 0.0, %v1010
    %v1012 = vpop.f32.mrb[0].mxu0
    %v1013 = vadd.f32 0.0, %v1012
    %1014 = vmatprep.mubr.f32.mxu0 0.0
    %1015 = vmatmul.mubr.f32.gmra.mrb[0].mxu0 %v930
    %v1016 = vpop.f32.mrb[0].mxu0
    %v1017 = vadd.f32 0.0, %v1016
    %v1018 = vpop.f32.mrb[0].mxu0
    %v1019 = vadd.f32 0.0, %v1018
    %1020 = vdwg.mxu0
    %1021 = vmatprep.subr.mxu0 %v915
    %1022 = vmatpush1.msra.mxu0 %v914
    %1023 = vmatprep.subr.mxu0 %v919
    %1024 = vmatpush1.msra.mxu0 %v918
    %1025 = vmatprep.subr.mxu0 0.0
    %1026 = vmatpush1.msra.mxu0 0.0
    %1027 = vmatprep.subr.mxu0 0.0
    %1028 = vmatpush1.msra.mxu0 0.0
    %1029 = vmatprep.subr.mxu0 0.0
    %1030 = vmatpush1.msra.mxu0 0.0
    %1031 = vmatprep.subr.mxu0 0.0
    %1032 = vmatpush1.msra.mxu0 0.0
    %1033 = vmatprep.subr.mxu0 0.0
    %1034 = vmatpush1.msra.mxu0 0.0
    %1035 = vmatprep.subr.mxu0 0.0
    %1036 = vmatpush1.msra.mxu0 0.0
    %1037 = vmatprep.subr.mxu0 0.0
    %1038 = vmatpush1.msra.mxu0 0.0
    %1039 = vmatprep.subr.mxu0 0.0
    %1040 = vmatpush1.msra.mxu0 0.0
    %1041 = vmatprep.subr.mxu0 0.0
    %1042 = vmatpush1.msra.mxu0 0.0
    %1043 = vmatprep.subr.mxu0 0.0
    %1044 = vmatpush1.msra.mxu0 0.0
    %1045 = vmatprep.subr.mxu0 0.0
    %1046 = vmatpush1.msra.mxu0 0.0
    %1047 = vmatprep.subr.mxu0 0.0
    %1048 = vmatpush1.msra.mxu0 0.0
    %1049 = vmatprep.subr.mxu0 0.0
    %1050 = vmatpush1.msra.mxu0 0.0
    %1051 = vmatprep.subr.mxu0 0.0
    %1052 = vmatpush1.msra.mxu0 0.0
    %1053 = vmatprep.subr.mxu0 0.0
    %1054 = vmatpush1.msra.mxu0 0.0
    %1055 = vmatprep.subr.mxu0 0.0
    %1056 = vmatpush1.msra.mxu0 0.0
    %1057 = vmatprep.subr.mxu0 0.0
    %1058 = vmatpush1.msra.mxu0 0.0
    %1059 = vmatprep.subr.mxu0 0.0
    %1060 = vmatpush1.msra.mxu0 0.0
    %1061 = vmatprep.subr.mxu0 0.0
    %1062 = vmatpush1.msra.mxu0 0.0
    %1063 = vmatprep.subr.mxu0 0.0
    %1064 = vmatpush1.msra.mxu0 0.0
    %1065 = vmatprep.subr.mxu0 0.0
    %1066 = vmatpush1.msra.mxu0 0.0
    %1067 = vmatprep.subr.mxu0 0.0
    %1068 = vmatpush1.msra.mxu0 0.0
    %1069 = vmatprep.subr.mxu0 0.0
    %1070 = vmatpush1.msra.mxu0 0.0
    %1071 = vmatprep.subr.mxu0 0.0
    %1072 = vmatpush1.msra.mxu0 0.0
    %1073 = vmatprep.subr.mxu0 0.0
    %1074 = vmatpush1.msra.mxu0 0.0
    %1075 = vmatprep.subr.mxu0 0.0
    %1076 = vmatpush1.msra.mxu0 0.0
    %1077 = vmatprep.subr.mxu0 0.0
    %1078 = vmatpush1.msra.mxu0 0.0
    %1079 = vmatprep.subr.mxu0 0.0
    %1080 = vmatpush1.msra.mxu0 0.0
    %1081 = vmatprep.subr.mxu0 0.0
    %1082 = vmatpush1.msra.mxu0 0.0
    %1083 = vmatprep.subr.mxu0 0.0
    %1084 = vmatpush1.msra.mxu0 0.0
    %1085 = vmatprep.mubr.f32.mxu0 0.0
    %1086 = vmatmul.mubr.f32.gmra.mrb[0].mxu0 %v921
    %v1087 = vpop.f32.mrb[0].mxu0
    %v1088 = vadd.f32 0.0, %v1087
    %v1089 = vpop.f32.mrb[0].mxu0
    %v1090 = vadd.f32 0.0, %v1089
    %1091 = vmatprep.mubr.f32.mxu0 0.0
    %1092 = vmatmul.mubr.f32.gmra.mrb[0].mxu0 %v924
    %v1093 = vpop.f32.mrb[0].mxu0
    %v1094 = vadd.f32 0.0, %v1093
    %v1095 = vpop.f32.mrb[0].mxu0
    %v1096 = vadd.f32 0.0, %v1095
    %1097 = vmatprep.mubr.f32.mxu0 0.0
    %1098 = vmatmul.mubr.f32.gmra.mrb[0].mxu0 %v927
    %v1099 = vpop.f32.mrb[0].mxu0
    %v1100 = vadd.f32 0.0, %v1099
    %v1101 = vpop.f32.mrb[0].mxu0
    %v1102 = vadd.f32 0.0, %v1101
    %1103 = vmatprep.mubr.f32.mxu0 0.0
    %1104 = vmatmul.mubr.f32.gmra.mrb[0].mxu0 %v930
    %v1105 = vpop.f32.mrb[0].mxu0
    %v1106 = vadd.f32 0.0, %v1105
    %v1107 = vpop.f32.mrb[0].mxu0
    %v1108 = vadd.f32 0.0, %v1107
    %1109 = vdwg.mxu0
    %v1110 = vadd.f32 %v703, %v999
    %v1111 = vadd.f32 %v705, %v1001
    %v1112 = vadd.f32 %v792, %v1088
    %v1113 = vadd.f32 %v794, %v1090
    %v1114 = vadd.f32 %v709, %v1005
    %v1115 = vadd.f32 %v711, %v1007
    %v1116 = vadd.f32 %v798, %v1094
    %v1117 = vadd.f32 %v800, %v1096
    %v1118 = vadd.f32 %v715, %v1011
    %v1119 = vadd.f32 %v717, %v1013
    %v1120 = vadd.f32 %v804, %v1100
    %v1121 = vadd.f32 %v806, %v1102
    %v1122 = vadd.f32 %v721, %v1017
    %v1123 = vadd.f32 %v723, %v1019
    %v1124 = vadd.f32 %v810, %v1106
    %v1125 = vadd.f32 %v812, %v1108
    %v1126 = vld [vmem:[#allocation7] sm:$0xf]
    %v1128 = vlaneseq
    %v1129 = vshrl.u32 %v1128, 7
    %v1130 = vsub.s32 0, %v1129
    %v1131 = vrot.slane %v1126, %v1130
    %v1132 = vlaneseq
    %v1133 = vshrl.u32 %v1132, 7
    %v1134 = vsub.s32 1, %v1133
    %v1135 = vrot.slane %v1126, %v1134
    %v1136 = vlaneseq
    %v1137 = vshrl.u32 %v1136, 7
    %v1138 = vsub.s32 2, %v1137
    %v1139 = vrot.slane %v1126, %v1138
    %v1140 = vlaneseq
    %v1141 = vshrl.u32 %v1140, 7
    %v1142 = vsub.s32 3, %v1141
    %v1143 = vrot.slane %v1126, %v1142
    %v1148 = vadd.f32 %v1110, %v1131
    %v1149 = vadd.f32 %v1111, %v1135
    %v1150 = vadd.f32 %v1112, %v1139
    %v1151 = vadd.f32 %v1113, %v1143
    %v1152 = vadd.f32 %v1114, %v1131
    %v1153 = vadd.f32 %v1115, %v1135
    %v1154 = vadd.f32 %v1116, %v1139
    %v1155 = vadd.f32 %v1117, %v1143
    %v1156 = vadd.f32 %v1118, %v1131
    %v1157 = vadd.f32 %v1119, %v1135
    %v1158 = vadd.f32 %v1120, %v1139
    %v1159 = vadd.f32 %v1121, %v1143
    %v1160 = vadd.f32 %v1122, %v1131
    %v1161 = vadd.f32 %v1123, %v1135
    %v1162 = vadd.f32 %v1124, %v1139
    %v1163 = vadd.f32 %v1125, %v1143
    %v1164 = vmax.f32 %v1148, 0.0
    %v1165 = vmax.f32 %v1149, 0.0
    %v1166 = vmax.f32 %v1150, 0.0
    %v1167 = vmax.f32 %v1151, 0.0
    %v1168 = vmax.f32 %v1152, 0.0
    %v1169 = vmax.f32 %v1153, 0.0
    %v1170 = vmax.f32 %v1154, 0.0
    %v1171 = vmax.f32 %v1155, 0.0
    %v1172 = vmax.f32 %v1156, 0.0
    %v1173 = vmax.f32 %v1157, 0.0
    %v1174 = vmax.f32 %v1158, 0.0
    %v1175 = vmax.f32 %v1159, 0.0
    %v1176 = vmax.f32 %v1160, 0.0
    %v1177 = vmax.f32 %v1161, 0.0
    %v1178 = vmax.f32 %v1162, 0.0
    %v1179 = vmax.f32 %v1163, 0.0
    %1180 = vmatprep.subr.mxu0 %v1165
    %1181 = vmatpush1.msra.mxu0 %v1164
    %1182 = vmatprep.subr.mxu0 %v1169
    %1183 = vmatpush1.msra.mxu0 %v1168
    %1184 = vmatprep.subr.mxu0 %v1173
    %1185 = vmatpush1.msra.mxu0 %v1172
    %1186 = vmatprep.subr.mxu0 %v1177
    %1187 = vmatpush1.msra.mxu0 %v1176
    %1188 = vmatprep.subr.mxu0 0.0
    %1189 = vmatpush1.msra.mxu0 0.0
    %1190 = vmatprep.subr.mxu0 0.0
    %1191 = vmatpush1.msra.mxu0 0.0
    %1192 = vmatprep.subr.mxu0 0.0
    %1193 = vmatpush1.msra.mxu0 0.0
    %1194 = vmatprep.subr.mxu0 0.0
    %1195 = vmatpush1.msra.mxu0 0.0
    %1196 = vmatprep.subr.mxu0 0.0
    %1197 = vmatpush1.msra.mxu0 0.0
    %1198 = vmatprep.subr.mxu0 0.0
    %1199 = vmatpush1.msra.mxu0 0.0
    %1200 = vmatprep.subr.mxu0 0.0
    %1201 = vmatpush1.msra.mxu0 0.0
    %1202 = vmatprep.subr.mxu0 0.0
    %1203 = vmatpush1.msra.mxu0 0.0
    %1204 = vmatprep.subr.mxu0 0.0
    %1205 = vmatpush1.msra.mxu0 0.0
    %1206 = vmatprep.subr.mxu0 0.0
    %1207 = vmatpush1.msra.mxu0 0.0
    %1208 = vmatprep.subr.mxu0 0.0
    %1209 = vmatpush1.msra.mxu0 0.0
    %1210 = vmatprep.subr.mxu0 0.0
    %1211 = vmatpush1.msra.mxu0 0.0
    %1212 = vmatprep.subr.mxu0 0.0
    %1213 = vmatpush1.msra.mxu0 0.0
    %1214 = vmatprep.subr.mxu0 0.0
    %1215 = vmatpush1.msra.mxu0 0.0
    %1216 = vmatprep.subr.mxu0 0.0
    %1217 = vmatpush1.msra.mxu0 0.0
    %1218 = vmatprep.subr.mxu0 0.0
    %1219 = vmatpush1.msra.mxu0 0.0
    %1220 = vmatprep.subr.mxu0 0.0
    %1221 = vmatpush1.msra.mxu0 0.0
    %1222 = vmatprep.subr.mxu0 0.0
    %1223 = vmatpush1.msra.mxu0 0.0
    %1224 = vmatprep.subr.mxu0 0.0
    %1225 = vmatpush1.msra.mxu0 0.0
    %1226 = vmatprep.subr.mxu0 0.0
    %1227 = vmatpush1.msra.mxu0 0.0
    %1228 = vmatprep.subr.mxu0 0.0
    %1229 = vmatpush1.msra.mxu0 0.0
    %1230 = vmatprep.subr.mxu0 0.0
    %1231 = vmatpush1.msra.mxu0 0.0
    %1232 = vmatprep.subr.mxu0 0.0
    %1233 = vmatpush1.msra.mxu0 0.0
    %1234 = vmatprep.subr.mxu0 0.0
    %1235 = vmatpush1.msra.mxu0 0.0
    %1236 = vmatprep.subr.mxu0 0.0
    %1237 = vmatpush1.msra.mxu0 0.0
    %1238 = vmatprep.subr.mxu0 0.0
    %1239 = vmatpush1.msra.mxu0 0.0
    %1240 = vmatprep.subr.mxu0 0.0
    %1241 = vmatpush1.msra.mxu0 0.0
    %1242 = vmatprep.subr.mxu0 0.0
    %1243 = vmatpush1.msra.mxu0 0.0
    %1244 = vmatprep.mubr.f32.mxu0 0.0
    %1245 = vmatmul.mubr.f32.gmra.mrb[0].mxu0 %v320
    %v1246 = vpop.f32.mrb[0].mxu0
    %v1247 = vadd.f32 0.0, %v1246
    %v1248 = vpop.f32.mrb[0].mxu0
    %v1249 = vadd.f32 0.0, %v1248
    %1250 = vmatprep.mubr.f32.mxu0 0.0
    %1251 = vmatmul.mubr.f32.gmra.mrb[0].mxu0 %v323
    %v1252 = vpop.f32.mrb[0].mxu0
    %v1253 = vadd.f32 0.0, %v1252
    %v1254 = vpop.f32.mrb[0].mxu0
    %v1255 = vadd.f32 0.0, %v1254
    %1256 = vmatprep.mubr.f32.mxu0 0.0
    %1257 = vmatmul.mubr.f32.gmra.mrb[0].mxu0 %v326
    %v1258 = vpop.f32.mrb[0].mxu0
    %v1259 = vadd.f32 0.0, %v1258
    %v1260 = vpop.f32.mrb[0].mxu0
    %v1261 = vadd.f32 0.0, %v1260
    %1262 = vmatprep.mubr.f32.mxu0 0.0
    %1263 = vmatmul.mubr.f32.gmra.mrb[0].mxu0 %v329
    %v1264 = vpop.f32.mrb[0].mxu0
    %v1265 = vadd.f32 0.0, %v1264
    %v1266 = vpop.f32.mrb[0].mxu0
    %v1267 = vadd.f32 0.0, %v1266
    %1268 = vdwg.mxu0
    %1269 = vmatprep.subr.mxu0 %v1167
    %1270 = vmatpush1.msra.mxu0 %v1166
    %1271 = vmatprep.subr.mxu0 %v1171
    %1272 = vmatpush1.msra.mxu0 %v1170
    %1273 = vmatprep.subr.mxu0 %v1175
    %1274 = vmatpush1.msra.mxu0 %v1174
    %1275 = vmatprep.subr.mxu0 %v1179
    %1276 = vmatpush1.msra.mxu0 %v1178
    %1277 = vmatprep.subr.mxu0 0.0
    %1278 = vmatpush1.msra.mxu0 0.0
    %1279 = vmatprep.subr.mxu0 0.0
    %1280 = vmatpush1.msra.mxu0 0.0
    %1281 = vmatprep.subr.mxu0 0.0
    %1282 = vmatpush1.msra.mxu0 0.0
    %1283 = vmatprep.subr.mxu0 0.0
    %1284 = vmatpush1.msra.mxu0 0.0
    %1285 = vmatprep.subr.mxu0 0.0
    %1286 = vmatpush1.msra.mxu0 0.0
    %1287 = vmatprep.subr.mxu0 0.0
    %1288 = vmatpush1.msra.mxu0 0.0
    %1289 = vmatprep.subr.mxu0 0.0
    %1290 = vmatpush1.msra.mxu0 0.0
    %1291 = vmatprep.subr.mxu0 0.0
    %1292 = vmatpush1.msra.mxu0 0.0
    %1293 = vmatprep.subr.mxu0 0.0
    %1294 = vmatpush1.msra.mxu0 0.0
    %1295 = vmatprep.subr.mxu0 0.0
    %1296 = vmatpush1.msra.mxu0 0.0
    %1297 = vmatprep.subr.mxu0 0.0
    %1298 = vmatpush1.msra.mxu0 0.0
    %1299 = vmatprep.subr.mxu0 0.0
    %1300 = vmatpush1.msra.mxu0 0.0
    %1301 = vmatprep.subr.mxu0 0.0
    %1302 = vmatpush1.msra.mxu0 0.0
    %1303 = vmatprep.subr.mxu0 0.0
    %1304 = vmatpush1.msra.mxu0 0.0
    %1305 = vmatprep.subr.mxu0 0.0
    %1306 = vmatpush1.msra.mxu0 0.0
    %1307 = vmatprep.subr.mxu0 0.0
    %1308 = vmatpush1.msra.mxu0 0.0
    %1309 = vmatprep.subr.mxu0 0.0
    %1310 = vmatpush1.msra.mxu0 0.0
    %1311 = vmatprep.subr.mxu0 0.0
    %1312 = vmatpush1.msra.mxu0 0.0
    %1313 = vmatprep.subr.mxu0 0.0
    %1314 = vmatpush1.msra.mxu0 0.0
    %1315 = vmatprep.subr.mxu0 0.0
    %1316 = vmatpush1.msra.mxu0 0.0
    %1317 = vmatprep.subr.mxu0 0.0
    %1318 = vmatpush1.msra.mxu0 0.0
    %1319 = vmatprep.subr.mxu0 0.0
    %1320 = vmatpush1.msra.mxu0 0.0
    %1321 = vmatprep.subr.mxu0 0.0
    %1322 = vmatpush1.msra.mxu0 0.0
    %1323 = vmatprep.subr.mxu0 0.0
    %1324 = vmatpush1.msra.mxu0 0.0
    %1325 = vmatprep.subr.mxu0 0.0
    %1326 = vmatpush1.msra.mxu0 0.0
    %1327 = vmatprep.subr.mxu0 0.0
    %1328 = vmatpush1.msra.mxu0 0.0
    %1329 = vmatprep.subr.mxu0 0.0
    %1330 = vmatpush1.msra.mxu0 0.0
    %1331 = vmatprep.subr.mxu0 0.0
    %1332 = vmatpush1.msra.mxu0 0.0
    %1333 = vmatprep.mubr.f32.mxu0 0.0
    %1334 = vmatmul.mubr.f32.gmra.mrb[0].mxu0 %v320
    %v1335 = vpop.f32.mrb[0].mxu0
    %v1336 = vadd.f32 0.0, %v1335
    %v1337 = vpop.f32.mrb[0].mxu0
    %v1338 = vadd.f32 0.0, %v1337
    %1339 = vmatprep.mubr.f32.mxu0 0.0
    %1340 = vmatmul.mubr.f32.gmra.mrb[0].mxu0 %v323
    %v1341 = vpop.f32.mrb[0].mxu0
    %v1342 = vadd.f32 0.0, %v1341
    %v1343 = vpop.f32.mrb[0].mxu0
    %v1344 = vadd.f32 0.0, %v1343
    %1345 = vmatprep.mubr.f32.mxu0 0.0
    %1346 = vmatmul.mubr.f32.gmra.mrb[0].mxu0 %v326
    %v1347 = vpop.f32.mrb[0].mxu0
    %v1348 = vadd.f32 0.0, %v1347
    %v1349 = vpop.f32.mrb[0].mxu0
    %v1350 = vadd.f32 0.0, %v1349
    %1351 = vmatprep.mubr.f32.mxu0 0.0
    %1352 = vmatmul.mubr.f32.gmra.mrb[0].mxu0 %v329
    %v1353 = vpop.f32.mrb[0].mxu0
    %v1354 = vadd.f32 0.0, %v1353
    %v1355 = vpop.f32.mrb[0].mxu0
    %v1356 = vadd.f32 0.0, %v1355
    %1357 = vdwg.mxu0
    %v1358 = vld [vmem:[#allocation11] sm:$0xff]
    %v1359 = vld [vmem:[#allocation11 + $0x8] sm:$0xff]
    %v1360 = vld [vmem:[#allocation11 + $0x10] sm:$0xff]
    %v1361 = vld [vmem:[#allocation11 + $0x18] sm:$0xff]
    %v1362 = vld [vmem:[#allocation11 + $0x20] sm:$0xff]
    %v1363 = vld [vmem:[#allocation11 + $0x28] sm:$0xff]
    %v1364 = vld [vmem:[#allocation11 + $0x30] sm:$0xff]
    %v1365 = vld [vmem:[#allocation11 + $0x38] sm:$0xff]
    %v1366 = vld [vmem:[#allocation11 + $0x40] sm:$0xff]
    %v1367 = vld [vmem:[#allocation11 + $0x48] sm:$0xff]
    %v1368 = vld [vmem:[#allocation11 + $0x50] sm:$0xff]
    %v1369 = vld [vmem:[#allocation11 + $0x58] sm:$0xff]
    %v1370 = vld [vmem:[#allocation11 + $0x60] sm:$0xff]
    %v1371 = vld [vmem:[#allocation11 + $0x68] sm:$0xff]
    %v1372 = vld [vmem:[#allocation11 + $0x70] sm:$0xff]
    %v1373 = vld [vmem:[#allocation11 + $0x78] sm:$0xff]
    %v1374 = vld [vmem:[#allocation11 + $0x80] sm:$0xff]
    %v1375 = vld [vmem:[#allocation11 + $0x88] sm:$0xff]
    %v1376 = vld [vmem:[#allocation11 + $0x90] sm:$0xff]
    %v1377 = vld [vmem:[#allocation11 + $0x98] sm:$0xff]
    %v1378 = vld [vmem:[#allocation11 + $0xa0] sm:$0xff]
    %v1379 = vld [vmem:[#allocation11 + $0xa8] sm:$0xff]
    %v1380 = vld [vmem:[#allocation11 + $0xb0] sm:$0xff]
    %v1381 = vld [vmem:[#allocation11 + $0xb8] sm:$0xff]
    %v1382 = vld [vmem:[#allocation11 + $0xc0] sm:$0xff]
    %v1383 = vld [vmem:[#allocation11 + $0xc8] sm:$0xff]
    %v1384 = vld [vmem:[#allocation11 + $0xd0] sm:$0xff]
    %v1385 = vld [vmem:[#allocation11 + $0xd8] sm:$0xff]
    %v1386 = vld [vmem:[#allocation11 + $0xe0] sm:$0xff]
    %v1387 = vld [vmem:[#allocation11 + $0xe8] sm:$0xff]
    %v1388 = vld [vmem:[#allocation11 + $0xf0] sm:$0xff]
    %v1389 = vld [vmem:[#allocation11 + $0xf8] sm:$0xff]
    %v1390 = vld [vmem:[#allocation11 + $0x100] sm:$0xff]
    %v1391 = vld [vmem:[#allocation11 + $0x108] sm:$0xff]
    %v1392 = vld [vmem:[#allocation11 + $0x110] sm:$0xff]
    %v1393 = vld [vmem:[#allocation11 + $0x118] sm:$0xff]
    %v1394 = vld [vmem:[#allocation11 + $0x120] sm:$0xff]
    %v1395 = vld [vmem:[#allocation11 + $0x128] sm:$0xff]
    %v1396 = vld [vmem:[#allocation11 + $0x130] sm:$0xff]
    %v1397 = vld [vmem:[#allocation11 + $0x138] sm:$0xff]
    %v1398 = vld [vmem:[#allocation11 + $0x140] sm:$0xff]
    %v1399 = vld [vmem:[#allocation11 + $0x148] sm:$0xff]
    %v1400 = vld [vmem:[#allocation11 + $0x150] sm:$0xff]
    %v1401 = vld [vmem:[#allocation11 + $0x158] sm:$0xff]
    %v1402 = vld [vmem:[#allocation11 + $0x160] sm:$0xff]
    %v1403 = vld [vmem:[#allocation11 + $0x168] sm:$0xff]
    %v1404 = vld [vmem:[#allocation11 + $0x170] sm:$0xff]
    %v1405 = vld [vmem:[#allocation11 + $0x178] sm:$0xff]
    %v1406 = vld [vmem:[#allocation11 + $0x180] sm:$0xff]
    %v1407 = vld [vmem:[#allocation11 + $0x188] sm:$0xff]
    %v1408 = vld [vmem:[#allocation11 + $0x190] sm:$0xff]
    %v1409 = vld [vmem:[#allocation11 + $0x198] sm:$0xff]
    %v1410 = vld [vmem:[#allocation11 + $0x1a0] sm:$0xff]
    %v1411 = vld [vmem:[#allocation11 + $0x1a8] sm:$0xff]
    %v1412 = vld [vmem:[#allocation11 + $0x1b0] sm:$0xff]
    %v1413 = vld [vmem:[#allocation11 + $0x1b8] sm:$0xff]
    %v1414 = vld [vmem:[#allocation11 + $0x1c0] sm:$0xff]
    %v1415 = vld [vmem:[#allocation11 + $0x1c8] sm:$0xff]
    %v1416 = vld [vmem:[#allocation11 + $0x1d0] sm:$0xff]
    %v1417 = vld [vmem:[#allocation11 + $0x1d8] sm:$0xff]
    %v1418 = vld [vmem:[#allocation11 + $0x1e0] sm:$0xff]
    %v1419 = vld [vmem:[#allocation11 + $0x1e8] sm:$0xff]
    %v1420 = vld [vmem:[#allocation11 + $0x1f0] sm:$0xff]
    %v1421 = vld [vmem:[#allocation11 + $0x1f8] sm:$0xff]
    %v1422 = vld [vmem:[#allocation11 + $0x200] sm:$0xff]
    %v1423 = vld [vmem:[#allocation11 + $0x208] sm:$0xff]
    %v1424 = vld [vmem:[#allocation11 + $0x210] sm:$0xff]
    %v1425 = vld [vmem:[#allocation11 + $0x218] sm:$0xff]
    %v1426 = vld [vmem:[#allocation11 + $0x220] sm:$0xff]
    %v1427 = vld [vmem:[#allocation11 + $0x228] sm:$0xff]
    %v1428 = vld [vmem:[#allocation11 + $0x230] sm:$0xff]
    %v1429 = vld [vmem:[#allocation11 + $0x238] sm:$0xff]
    %v1430 = vld [vmem:[#allocation11 + $0x240] sm:$0xff]
    %v1431 = vld [vmem:[#allocation11 + $0x248] sm:$0xff]
    %v1432 = vld [vmem:[#allocation11 + $0x250] sm:$0xff]
    %v1433 = vld [vmem:[#allocation11 + $0x258] sm:$0xff]
    %v1434 = vld [vmem:[#allocation11 + $0x260] sm:$0xff]
    %v1435 = vld [vmem:[#allocation11 + $0x268] sm:$0xff]
    %v1436 = vld [vmem:[#allocation11 + $0x270] sm:$0xff]
    %v1437 = vld [vmem:[#allocation11 + $0x278] sm:$0xff]
    %v1438 = vld [vmem:[#allocation11 + $0x280] sm:$0xff]
    %v1439 = vld [vmem:[#allocation11 + $0x288] sm:$0xff]
    %v1440 = vld [vmem:[#allocation11 + $0x290] sm:$0xff]
    %v1441 = vld [vmem:[#allocation11 + $0x298] sm:$0xff]
    %v1442 = vld [vmem:[#allocation11 + $0x2a0] sm:$0xff]
    %v1443 = vld [vmem:[#allocation11 + $0x2a8] sm:$0xff]
    %v1444 = vld [vmem:[#allocation11 + $0x2b0] sm:$0xff]
    %v1445 = vld [vmem:[#allocation11 + $0x2b8] sm:$0xff]
    %v1446 = vld [vmem:[#allocation11 + $0x2c0] sm:$0xff]
    %v1447 = vld [vmem:[#allocation11 + $0x2c8] sm:$0xff]
    %v1448 = vld [vmem:[#allocation11 + $0x2d0] sm:$0xff]
    %v1449 = vld [vmem:[#allocation11 + $0x2d8] sm:$0xff]
    %v1450 = vld [vmem:[#allocation11 + $0x2e0] sm:$0xff]
    %v1451 = vld [vmem:[#allocation11 + $0x2e8] sm:$0xff]
    %v1452 = vld [vmem:[#allocation11 + $0x2f0] sm:$0xff]
    %v1453 = vld [vmem:[#allocation11 + $0x2f8] sm:$0xff]
    %v1454 = vld [vmem:[#allocation11 + $0x300] sm:$0xff]
    %v1455 = vld [vmem:[#allocation11 + $0x308] sm:$0xff]
    %v1456 = vld [vmem:[#allocation11 + $0x310] sm:$0xff]
    %v1457 = vld [vmem:[#allocation11 + $0x318] sm:$0xff]
    %v1458 = vld [vmem:[#allocation11 + $0x320] sm:$0xff]
    %v1459 = vld [vmem:[#allocation11 + $0x328] sm:$0xff]
    %v1460 = vld [vmem:[#allocation11 + $0x330] sm:$0xff]
    %v1461 = vld [vmem:[#allocation11 + $0x338] sm:$0xff]
    %v1462 = vld [vmem:[#allocation11 + $0x340] sm:$0xff]
    %v1463 = vld [vmem:[#allocation11 + $0x348] sm:$0xff]
    %v1464 = vld [vmem:[#allocation11 + $0x350] sm:$0xff]
    %v1465 = vld [vmem:[#allocation11 + $0x358] sm:$0xff]
    %v1466 = vld [vmem:[#allocation11 + $0x360] sm:$0xff]
    %v1467 = vld [vmem:[#allocation11 + $0x368] sm:$0xff]
    %v1468 = vld [vmem:[#allocation11 + $0x370] sm:$0xff]
    %v1469 = vld [vmem:[#allocation11 + $0x378] sm:$0xff]
    %v1470 = vld [vmem:[#allocation11 + $0x380] sm:$0xff]
    %v1471 = vld [vmem:[#allocation11 + $0x388] sm:$0xff]
    %v1472 = vld [vmem:[#allocation11 + $0x390] sm:$0xff]
    %v1473 = vld [vmem:[#allocation11 + $0x398] sm:$0xff]
    %v1474 = vld [vmem:[#allocation11 + $0x3a0] sm:$0xff]
    %v1475 = vld [vmem:[#allocation11 + $0x3a8] sm:$0xff]
    %v1476 = vld [vmem:[#allocation11 + $0x3b0] sm:$0xff]
    %v1477 = vld [vmem:[#allocation11 + $0x3b8] sm:$0xff]
    %v1478 = vld [vmem:[#allocation11 + $0x3c0] sm:$0xff]
    %v1479 = vld [vmem:[#allocation11 + $0x3c8] sm:$0xff]
    %v1480 = vld [vmem:[#allocation11 + $0x3d0] sm:$0xff]
    %v1481 = vld [vmem:[#allocation11 + $0x3d8] sm:$0xff]
    %v1482 = vld [vmem:[#allocation11 + $0x3e0] sm:$0xff]
    %v1483 = vld [vmem:[#allocation11 + $0x3e8] sm:$0xff]
    %v1484 = vld [vmem:[#allocation11 + $0x3f0] sm:$0xff]
    %v1485 = vld [vmem:[#allocation11 + $0x3f8] sm:$0xff]
    %v1486 = vld [vmem:[#allocation11 + $0x400] sm:$0xff]
    %v1487 = vld [vmem:[#allocation11 + $0x408] sm:$0xff]
    %v1488 = vld [vmem:[#allocation11 + $0x410] sm:$0xff]
    %v1489 = vld [vmem:[#allocation11 + $0x418] sm:$0xff]
    %v1490 = vld [vmem:[#allocation11 + $0x420] sm:$0xff]
    %v1491 = vld [vmem:[#allocation11 + $0x428] sm:$0xff]
    %v1492 = vld [vmem:[#allocation11 + $0x430] sm:$0xff]
    %v1493 = vld [vmem:[#allocation11 + $0x438] sm:$0xff]
    %v1494 = vld [vmem:[#allocation11 + $0x440] sm:$0xff]
    %v1495 = vld [vmem:[#allocation11 + $0x448] sm:$0xff]
    %v1496 = vld [vmem:[#allocation11 + $0x450] sm:$0xff]
    %v1497 = vld [vmem:[#allocation11 + $0x458] sm:$0xff]
    %v1498 = vld [vmem:[#allocation11 + $0x460] sm:$0xff]
    %v1499 = vld [vmem:[#allocation11 + $0x468] sm:$0xff]
    %v1500 = vld [vmem:[#allocation11 + $0x470] sm:$0xff]
    %v1501 = vld [vmem:[#allocation11 + $0x478] sm:$0xff]
    %v1502 = vld [vmem:[#allocation11 + $0x480] sm:$0xff]
    %v1503 = vld [vmem:[#allocation11 + $0x488] sm:$0xff]
    %v1504 = vld [vmem:[#allocation11 + $0x490] sm:$0xff]
    %v1505 = vld [vmem:[#allocation11 + $0x498] sm:$0xff]
    %v1506 = vld [vmem:[#allocation11 + $0x4a0] sm:$0xff]
    %v1507 = vld [vmem:[#allocation11 + $0x4a8] sm:$0xff]
    %v1508 = vld [vmem:[#allocation11 + $0x4b0] sm:$0xff]
    %v1509 = vld [vmem:[#allocation11 + $0x4b8] sm:$0xff]
    %v1510 = vld [vmem:[#allocation11 + $0x4c0] sm:$0xff]
    %v1511 = vld [vmem:[#allocation11 + $0x4c8] sm:$0xff]
    %v1512 = vld [vmem:[#allocation11 + $0x4d0] sm:$0xff]
    %v1513 = vld [vmem:[#allocation11 + $0x4d8] sm:$0xff]
    %v1514 = vld [vmem:[#allocation11 + $0x4e0] sm:$0xff]
    %v1515 = vld [vmem:[#allocation11 + $0x4e8] sm:$0xff]
    %v1516 = vld [vmem:[#allocation11 + $0x4f0] sm:$0xff]
    %v1517 = vld [vmem:[#allocation11 + $0x4f8] sm:$0xff]
    %v1518 = vld [vmem:[#allocation11 + $0x500] sm:$0xff]
    %v1519 = vld [vmem:[#allocation11 + $0x508] sm:$0xff]
    %v1520 = vld [vmem:[#allocation11 + $0x510] sm:$0xff]
    %v1521 = vld [vmem:[#allocation11 + $0x518] sm:$0xff]
    %v1522 = vld [vmem:[#allocation11 + $0x520] sm:$0xff]
    %v1523 = vld [vmem:[#allocation11 + $0x528] sm:$0xff]
    %v1524 = vld [vmem:[#allocation11 + $0x530] sm:$0xff]
    %v1525 = vld [vmem:[#allocation11 + $0x538] sm:$0xff]
    %v1526 = vld [vmem:[#allocation11 + $0x540] sm:$0xff]
    %v1527 = vld [vmem:[#allocation11 + $0x548] sm:$0xff]
    %v1528 = vld [vmem:[#allocation11 + $0x550] sm:$0xff]
    %v1529 = vld [vmem:[#allocation11 + $0x558] sm:$0xff]
    %v1530 = vld [vmem:[#allocation11 + $0x560] sm:$0xff]
    %v1531 = vld [vmem:[#allocation11 + $0x568] sm:$0xff]
    %v1532 = vld [vmem:[#allocation11 + $0x570] sm:$0xff]
    %v1533 = vld [vmem:[#allocation11 + $0x578] sm:$0xff]
    %v1534 = vld [vmem:[#allocation11 + $0x580] sm:$0xff]
    %v1535 = vld [vmem:[#allocation11 + $0x588] sm:$0xff]
    %v1536 = vld [vmem:[#allocation11 + $0x590] sm:$0xff]
    %v1537 = vld [vmem:[#allocation11 + $0x598] sm:$0xff]
    %v1538 = vld [vmem:[#allocation11 + $0x5a0] sm:$0xff]
    %v1539 = vld [vmem:[#allocation11 + $0x5a8] sm:$0xff]
    %v1540 = vld [vmem:[#allocation11 + $0x5b0] sm:$0xff]
    %v1541 = vld [vmem:[#allocation11 + $0x5b8] sm:$0xff]
    %v1542 = vld [vmem:[#allocation11 + $0x5c0] sm:$0xff]
    %v1543 = vld [vmem:[#allocation11 + $0x5c8] sm:$0xff]
    %v1544 = vld [vmem:[#allocation11 + $0x5d0] sm:$0xff]
    %v1545 = vld [vmem:[#allocation11 + $0x5d8] sm:$0xff]
    %v1546 = vld [vmem:[#allocation11 + $0x5e0] sm:$0xff]
    %v1547 = vld [vmem:[#allocation11 + $0x5e8] sm:$0xff]
    %v1548 = vld [vmem:[#allocation11 + $0x5f0] sm:$0xff]
    %v1549 = vld [vmem:[#allocation11 + $0x5f8] sm:$0xff]
    %v1550 = vld [vmem:[#allocation11 + $0x600] sm:$0xff]
    %v1551 = vld [vmem:[#allocation11 + $0x608] sm:$0xff]
    %v1552 = vld [vmem:[#allocation11 + $0x610] sm:$0xff]
    %v1553 = vld [vmem:[#allocation11 + $0x618] sm:$0xff]
    %v1554 = vld [vmem:[#allocation11 + $0x620] sm:$0xff]
    %v1555 = vld [vmem:[#allocation11 + $0x628] sm:$0xff]
    %v1556 = vld [vmem:[#allocation11 + $0x630] sm:$0xff]
    %v1557 = vld [vmem:[#allocation11 + $0x638] sm:$0xff]
    %v1558 = vld [vmem:[#allocation11 + $0x640] sm:$0xff]
    %v1559 = vld [vmem:[#allocation11 + $0x648] sm:$0xff]
    %v1560 = vld [vmem:[#allocation11 + $0x650] sm:$0xff]
    %v1561 = vld [vmem:[#allocation11 + $0x658] sm:$0xff]
    %v1562 = vld [vmem:[#allocation11 + $0x660] sm:$0xff]
    %v1563 = vld [vmem:[#allocation11 + $0x668] sm:$0xff]
    %v1564 = vld [vmem:[#allocation11 + $0x670] sm:$0xff]
    %v1565 = vld [vmem:[#allocation11 + $0x678] sm:$0xff]
    %v1566 = vld [vmem:[#allocation11 + $0x680] sm:$0xff]
    %v1567 = vld [vmem:[#allocation11 + $0x688] sm:$0xff]
    %v1568 = vld [vmem:[#allocation11 + $0x690] sm:$0xff]
    %v1569 = vld [vmem:[#allocation11 + $0x698] sm:$0xff]
    %v1570 = vld [vmem:[#allocation11 + $0x6a0] sm:$0xff]
    %v1571 = vld [vmem:[#allocation11 + $0x6a8] sm:$0xff]
    %v1572 = vld [vmem:[#allocation11 + $0x6b0] sm:$0xff]
    %v1573 = vld [vmem:[#allocation11 + $0x6b8] sm:$0xff]
    %v1574 = vld [vmem:[#allocation11 + $0x6c0] sm:$0xff]
    %v1575 = vld [vmem:[#allocation11 + $0x6c8] sm:$0xff]
    %v1576 = vld [vmem:[#allocation11 + $0x6d0] sm:$0xff]
    %v1577 = vld [vmem:[#allocation11 + $0x6d8] sm:$0xff]
    %v1578 = vld [vmem:[#allocation11 + $0x6e0] sm:$0xff]
    %v1579 = vld [vmem:[#allocation11 + $0x6e8] sm:$0xff]
    %v1580 = vld [vmem:[#allocation11 + $0x6f0] sm:$0xff]
    %v1581 = vld [vmem:[#allocation11 + $0x6f8] sm:$0xff]
    %v1582 = vld [vmem:[#allocation11 + $0x700] sm:$0xff]
    %v1583 = vld [vmem:[#allocation11 + $0x708] sm:$0xff]
    %v1584 = vld [vmem:[#allocation11 + $0x710] sm:$0xff]
    %v1585 = vld [vmem:[#allocation11 + $0x718] sm:$0xff]
    %v1586 = vld [vmem:[#allocation11 + $0x720] sm:$0xff]
    %v1587 = vld [vmem:[#allocation11 + $0x728] sm:$0xff]
    %v1588 = vld [vmem:[#allocation11 + $0x730] sm:$0xff]
    %v1589 = vld [vmem:[#allocation11 + $0x738] sm:$0xff]
    %v1590 = vld [vmem:[#allocation11 + $0x740] sm:$0xff]
    %v1591 = vld [vmem:[#allocation11 + $0x748] sm:$0xff]
    %v1592 = vld [vmem:[#allocation11 + $0x750] sm:$0xff]
    %v1593 = vld [vmem:[#allocation11 + $0x758] sm:$0xff]
    %v1594 = vld [vmem:[#allocation11 + $0x760] sm:$0xff]
    %v1595 = vld [vmem:[#allocation11 + $0x768] sm:$0xff]
    %v1596 = vld [vmem:[#allocation11 + $0x770] sm:$0xff]
    %v1597 = vld [vmem:[#allocation11 + $0x778] sm:$0xff]
    %v1598 = vld [vmem:[#allocation11 + $0x780] sm:$0xff]
    %v1599 = vld [vmem:[#allocation11 + $0x788] sm:$0xff]
    %v1600 = vld [vmem:[#allocation11 + $0x790] sm:$0xff]
    %v1601 = vld [vmem:[#allocation11 + $0x798] sm:$0xff]
    %v1602 = vld [vmem:[#allocation11 + $0x7a0] sm:$0xff]
    %v1603 = vld [vmem:[#allocation11 + $0x7a8] sm:$0xff]
    %v1604 = vld [vmem:[#allocation11 + $0x7b0] sm:$0xff]
    %v1605 = vld [vmem:[#allocation11 + $0x7b8] sm:$0xff]
    %v1606 = vld [vmem:[#allocation11 + $0x7c0] sm:$0xff]
    %v1607 = vld [vmem:[#allocation11 + $0x7c8] sm:$0xff]
    %v1608 = vld [vmem:[#allocation11 + $0x7d0] sm:$0xff]
    %v1609 = vld [vmem:[#allocation11 + $0x7d8] sm:$0xff]
    %v1610 = vld [vmem:[#allocation11 + $0x7e0] sm:$0xff]
    %v1611 = vld [vmem:[#allocation11 + $0x7e8] sm:$0xff]
    %v1612 = vld [vmem:[#allocation11 + $0x7f0] sm:$0xff]
    %v1613 = vld [vmem:[#allocation11 + $0x7f8] sm:$0xff]
    %s1614 = scalar_lea.vmem [#allocation11], 2048
    %v1615 = vld [vmem:[%s1614] sm:$0xff]
    %v1616 = vld [vmem:[%s1614 + $0x8] sm:$0xff]
    %v1617 = vld [vmem:[%s1614 + $0x10] sm:$0xff]
    %v1618 = vld [vmem:[%s1614 + $0x18] sm:$0xff]
    %v1619 = vld [vmem:[%s1614 + $0x20] sm:$0xff]
    %v1620 = vld [vmem:[%s1614 + $0x28] sm:$0xff]
    %v1621 = vld [vmem:[%s1614 + $0x30] sm:$0xff]
    %v1622 = vld [vmem:[%s1614 + $0x38] sm:$0xff]
    %v1623 = vld [vmem:[%s1614 + $0x40] sm:$0xff]
    %v1624 = vld [vmem:[%s1614 + $0x48] sm:$0xff]
    %v1625 = vld [vmem:[%s1614 + $0x50] sm:$0xff]
    %v1626 = vld [vmem:[%s1614 + $0x58] sm:$0xff]
    %v1627 = vld [vmem:[%s1614 + $0x60] sm:$0xff]
    %v1628 = vld [vmem:[%s1614 + $0x68] sm:$0xff]
    %v1629 = vld [vmem:[%s1614 + $0x70] sm:$0xff]
    %v1630 = vld [vmem:[%s1614 + $0x78] sm:$0xff]
    %v1631 = vld [vmem:[%s1614 + $0x80] sm:$0xff]
    %v1632 = vld [vmem:[%s1614 + $0x88] sm:$0xff]
    %v1633 = vld [vmem:[%s1614 + $0x90] sm:$0xff]
    %v1634 = vld [vmem:[%s1614 + $0x98] sm:$0xff]
    %v1635 = vld [vmem:[%s1614 + $0xa0] sm:$0xff]
    %v1636 = vld [vmem:[%s1614 + $0xa8] sm:$0xff]
    %v1637 = vld [vmem:[%s1614 + $0xb0] sm:$0xff]
    %v1638 = vld [vmem:[%s1614 + $0xb8] sm:$0xff]
    %v1639 = vld [vmem:[%s1614 + $0xc0] sm:$0xff]
    %v1640 = vld [vmem:[%s1614 + $0xc8] sm:$0xff]
    %v1641 = vld [vmem:[%s1614 + $0xd0] sm:$0xff]
    %v1642 = vld [vmem:[%s1614 + $0xd8] sm:$0xff]
    %v1643 = vld [vmem:[%s1614 + $0xe0] sm:$0xff]
    %v1644 = vld [vmem:[%s1614 + $0xe8] sm:$0xff]
    %v1645 = vld [vmem:[%s1614 + $0xf0] sm:$0xff]
    %v1646 = vld [vmem:[%s1614 + $0xf8] sm:$0xff]
    %v1647 = vld [vmem:[%s1614 + $0x100] sm:$0xff]
    %v1648 = vld [vmem:[%s1614 + $0x108] sm:$0xff]
    %v1649 = vld [vmem:[%s1614 + $0x110] sm:$0xff]
    %v1650 = vld [vmem:[%s1614 + $0x118] sm:$0xff]
    %v1651 = vld [vmem:[%s1614 + $0x120] sm:$0xff]
    %v1652 = vld [vmem:[%s1614 + $0x128] sm:$0xff]
    %v1653 = vld [vmem:[%s1614 + $0x130] sm:$0xff]
    %v1654 = vld [vmem:[%s1614 + $0x138] sm:$0xff]
    %v1655 = vld [vmem:[%s1614 + $0x140] sm:$0xff]
    %v1656 = vld [vmem:[%s1614 + $0x148] sm:$0xff]
    %v1657 = vld [vmem:[%s1614 + $0x150] sm:$0xff]
    %v1658 = vld [vmem:[%s1614 + $0x158] sm:$0xff]
    %v1659 = vld [vmem:[%s1614 + $0x160] sm:$0xff]
    %v1660 = vld [vmem:[%s1614 + $0x168] sm:$0xff]
    %v1661 = vld [vmem:[%s1614 + $0x170] sm:$0xff]
    %v1662 = vld [vmem:[%s1614 + $0x178] sm:$0xff]
    %v1663 = vld [vmem:[%s1614 + $0x180] sm:$0xff]
    %v1664 = vld [vmem:[%s1614 + $0x188] sm:$0xff]
    %v1665 = vld [vmem:[%s1614 + $0x190] sm:$0xff]
    %v1666 = vld [vmem:[%s1614 + $0x198] sm:$0xff]
    %v1667 = vld [vmem:[%s1614 + $0x1a0] sm:$0xff]
    %v1668 = vld [vmem:[%s1614 + $0x1a8] sm:$0xff]
    %v1669 = vld [vmem:[%s1614 + $0x1b0] sm:$0xff]
    %v1670 = vld [vmem:[%s1614 + $0x1b8] sm:$0xff]
    %v1671 = vld [vmem:[%s1614 + $0x1c0] sm:$0xff]
    %v1672 = vld [vmem:[%s1614 + $0x1c8] sm:$0xff]
    %v1673 = vld [vmem:[%s1614 + $0x1d0] sm:$0xff]
    %v1674 = vld [vmem:[%s1614 + $0x1d8] sm:$0xff]
    %v1675 = vld [vmem:[%s1614 + $0x1e0] sm:$0xff]
    %v1676 = vld [vmem:[%s1614 + $0x1e8] sm:$0xff]
    %v1677 = vld [vmem:[%s1614 + $0x1f0] sm:$0xff]
    %v1678 = vld [vmem:[%s1614 + $0x1f8] sm:$0xff]
    %v1679 = vld [vmem:[%s1614 + $0x200] sm:$0xff]
    %v1680 = vld [vmem:[%s1614 + $0x208] sm:$0xff]
    %v1681 = vld [vmem:[%s1614 + $0x210] sm:$0xff]
    %v1682 = vld [vmem:[%s1614 + $0x218] sm:$0xff]
    %v1683 = vld [vmem:[%s1614 + $0x220] sm:$0xff]
    %v1684 = vld [vmem:[%s1614 + $0x228] sm:$0xff]
    %v1685 = vld [vmem:[%s1614 + $0x230] sm:$0xff]
    %v1686 = vld [vmem:[%s1614 + $0x238] sm:$0xff]
    %v1687 = vld [vmem:[%s1614 + $0x240] sm:$0xff]
    %v1688 = vld [vmem:[%s1614 + $0x248] sm:$0xff]
    %v1689 = vld [vmem:[%s1614 + $0x250] sm:$0xff]
    %v1690 = vld [vmem:[%s1614 + $0x258] sm:$0xff]
    %v1691 = vld [vmem:[%s1614 + $0x260] sm:$0xff]
    %v1692 = vld [vmem:[%s1614 + $0x268] sm:$0xff]
    %v1693 = vld [vmem:[%s1614 + $0x270] sm:$0xff]
    %v1694 = vld [vmem:[%s1614 + $0x278] sm:$0xff]
    %v1695 = vld [vmem:[%s1614 + $0x280] sm:$0xff]
    %v1696 = vld [vmem:[%s1614 + $0x288] sm:$0xff]
    %v1697 = vld [vmem:[%s1614 + $0x290] sm:$0xff]
    %v1698 = vld [vmem:[%s1614 + $0x298] sm:$0xff]
    %v1699 = vld [vmem:[%s1614 + $0x2a0] sm:$0xff]
    %v1700 = vld [vmem:[%s1614 + $0x2a8] sm:$0xff]
    %v1701 = vld [vmem:[%s1614 + $0x2b0] sm:$0xff]
    %v1702 = vld [vmem:[%s1614 + $0x2b8] sm:$0xff]
    %v1703 = vld [vmem:[%s1614 + $0x2c0] sm:$0xff]
    %v1704 = vld [vmem:[%s1614 + $0x2c8] sm:$0xff]
    %v1705 = vld [vmem:[%s1614 + $0x2d0] sm:$0xff]
    %v1706 = vld [vmem:[%s1614 + $0x2d8] sm:$0xff]
    %v1707 = vld [vmem:[%s1614 + $0x2e0] sm:$0xff]
    %v1708 = vld [vmem:[%s1614 + $0x2e8] sm:$0xff]
    %v1709 = vld [vmem:[%s1614 + $0x2f0] sm:$0xff]
    %v1710 = vld [vmem:[%s1614 + $0x2f8] sm:$0xff]
    %v1711 = vld [vmem:[%s1614 + $0x300] sm:$0xff]
    %v1712 = vld [vmem:[%s1614 + $0x308] sm:$0xff]
    %v1713 = vld [vmem:[%s1614 + $0x310] sm:$0xff]
    %v1714 = vld [vmem:[%s1614 + $0x318] sm:$0xff]
    %v1715 = vld [vmem:[%s1614 + $0x320] sm:$0xff]
    %v1716 = vld [vmem:[%s1614 + $0x328] sm:$0xff]
    %v1717 = vld [vmem:[%s1614 + $0x330] sm:$0xff]
    %v1718 = vld [vmem:[%s1614 + $0x338] sm:$0xff]
    %v1719 = vld [vmem:[%s1614 + $0x340] sm:$0xff]
    %v1720 = vld [vmem:[%s1614 + $0x348] sm:$0xff]
    %v1721 = vld [vmem:[%s1614 + $0x350] sm:$0xff]
    %v1722 = vld [vmem:[%s1614 + $0x358] sm:$0xff]
    %v1723 = vld [vmem:[%s1614 + $0x360] sm:$0xff]
    %v1724 = vld [vmem:[%s1614 + $0x368] sm:$0xff]
    %v1725 = vld [vmem:[%s1614 + $0x370] sm:$0xff]
    %v1726 = vld [vmem:[%s1614 + $0x378] sm:$0xff]
    %v1727 = vld [vmem:[%s1614 + $0x380] sm:$0xff]
    %v1728 = vld [vmem:[%s1614 + $0x388] sm:$0xff]
    %v1729 = vld [vmem:[%s1614 + $0x390] sm:$0xff]
    %v1730 = vld [vmem:[%s1614 + $0x398] sm:$0xff]
    %v1731 = vld [vmem:[%s1614 + $0x3a0] sm:$0xff]
    %v1732 = vld [vmem:[%s1614 + $0x3a8] sm:$0xff]
    %v1733 = vld [vmem:[%s1614 + $0x3b0] sm:$0xff]
    %v1734 = vld [vmem:[%s1614 + $0x3b8] sm:$0xff]
    %v1735 = vld [vmem:[%s1614 + $0x3c0] sm:$0xff]
    %v1736 = vld [vmem:[%s1614 + $0x3c8] sm:$0xff]
    %v1737 = vld [vmem:[%s1614 + $0x3d0] sm:$0xff]
    %v1738 = vld [vmem:[%s1614 + $0x3d8] sm:$0xff]
    %v1739 = vld [vmem:[%s1614 + $0x3e0] sm:$0xff]
    %v1740 = vld [vmem:[%s1614 + $0x3e8] sm:$0xff]
    %v1741 = vld [vmem:[%s1614 + $0x3f0] sm:$0xff]
    %v1742 = vld [vmem:[%s1614 + $0x3f8] sm:$0xff]
    %v1743 = vld [vmem:[%s1614 + $0x400] sm:$0xff]
    %v1744 = vld [vmem:[%s1614 + $0x408] sm:$0xff]
    %v1745 = vld [vmem:[%s1614 + $0x410] sm:$0xff]
    %v1746 = vld [vmem:[%s1614 + $0x418] sm:$0xff]
    %v1747 = vld [vmem:[%s1614 + $0x420] sm:$0xff]
    %v1748 = vld [vmem:[%s1614 + $0x428] sm:$0xff]
    %v1749 = vld [vmem:[%s1614 + $0x430] sm:$0xff]
    %v1750 = vld [vmem:[%s1614 + $0x438] sm:$0xff]
    %v1751 = vld [vmem:[%s1614 + $0x440] sm:$0xff]
    %v1752 = vld [vmem:[%s1614 + $0x448] sm:$0xff]
    %v1753 = vld [vmem:[%s1614 + $0x450] sm:$0xff]
    %v1754 = vld [vmem:[%s1614 + $0x458] sm:$0xff]
    %v1755 = vld [vmem:[%s1614 + $0x460] sm:$0xff]
    %v1756 = vld [vmem:[%s1614 + $0x468] sm:$0xff]
    %v1757 = vld [vmem:[%s1614 + $0x470] sm:$0xff]
    %v1758 = vld [vmem:[%s1614 + $0x478] sm:$0xff]
    %v1759 = vld [vmem:[%s1614 + $0x480] sm:$0xff]
    %v1760 = vld [vmem:[%s1614 + $0x488] sm:$0xff]
    %v1761 = vld [vmem:[%s1614 + $0x490] sm:$0xff]
    %v1762 = vld [vmem:[%s1614 + $0x498] sm:$0xff]
    %v1763 = vld [vmem:[%s1614 + $0x4a0] sm:$0xff]
    %v1764 = vld [vmem:[%s1614 + $0x4a8] sm:$0xff]
    %v1765 = vld [vmem:[%s1614 + $0x4b0] sm:$0xff]
    %v1766 = vld [vmem:[%s1614 + $0x4b8] sm:$0xff]
    %v1767 = vld [vmem:[%s1614 + $0x4c0] sm:$0xff]
    %v1768 = vld [vmem:[%s1614 + $0x4c8] sm:$0xff]
    %v1769 = vld [vmem:[%s1614 + $0x4d0] sm:$0xff]
    %v1770 = vld [vmem:[%s1614 + $0x4d8] sm:$0xff]
    %v1771 = vld [vmem:[%s1614 + $0x4e0] sm:$0xff]
    %v1772 = vld [vmem:[%s1614 + $0x4e8] sm:$0xff]
    %v1773 = vld [vmem:[%s1614 + $0x4f0] sm:$0xff]
    %v1774 = vld [vmem:[%s1614 + $0x4f8] sm:$0xff]
    %v1775 = vld [vmem:[%s1614 + $0x500] sm:$0xff]
    %v1776 = vld [vmem:[%s1614 + $0x508] sm:$0xff]
    %v1777 = vld [vmem:[%s1614 + $0x510] sm:$0xff]
    %v1778 = vld [vmem:[%s1614 + $0x518] sm:$0xff]
    %v1779 = vld [vmem:[%s1614 + $0x520] sm:$0xff]
    %v1780 = vld [vmem:[%s1614 + $0x528] sm:$0xff]
    %v1781 = vld [vmem:[%s1614 + $0x530] sm:$0xff]
    %v1782 = vld [vmem:[%s1614 + $0x538] sm:$0xff]
    %v1783 = vld [vmem:[%s1614 + $0x540] sm:$0xff]
    %v1784 = vld [vmem:[%s1614 + $0x548] sm:$0xff]
    %v1785 = vld [vmem:[%s1614 + $0x550] sm:$0xff]
    %v1786 = vld [vmem:[%s1614 + $0x558] sm:$0xff]
    %v1787 = vld [vmem:[%s1614 + $0x560] sm:$0xff]
    %v1788 = vld [vmem:[%s1614 + $0x568] sm:$0xff]
    %v1789 = vld [vmem:[%s1614 + $0x570] sm:$0xff]
    %v1790 = vld [vmem:[%s1614 + $0x578] sm:$0xff]
    %v1791 = vld [vmem:[%s1614 + $0x580] sm:$0xff]
    %v1792 = vld [vmem:[%s1614 + $0x588] sm:$0xff]
    %v1793 = vld [vmem:[%s1614 + $0x590] sm:$0xff]
    %v1794 = vld [vmem:[%s1614 + $0x598] sm:$0xff]
    %v1795 = vld [vmem:[%s1614 + $0x5a0] sm:$0xff]
    %v1796 = vld [vmem:[%s1614 + $0x5a8] sm:$0xff]
    %v1797 = vld [vmem:[%s1614 + $0x5b0] sm:$0xff]
    %v1798 = vld [vmem:[%s1614 + $0x5b8] sm:$0xff]
    %v1799 = vld [vmem:[%s1614 + $0x5c0] sm:$0xff]
    %v1800 = vld [vmem:[%s1614 + $0x5c8] sm:$0xff]
    %v1801 = vld [vmem:[%s1614 + $0x5d0] sm:$0xff]
    %v1802 = vld [vmem:[%s1614 + $0x5d8] sm:$0xff]
    %v1803 = vld [vmem:[%s1614 + $0x5e0] sm:$0xff]
    %v1804 = vld [vmem:[%s1614 + $0x5e8] sm:$0xff]
    %v1805 = vld [vmem:[%s1614 + $0x5f0] sm:$0xff]
    %v1806 = vld [vmem:[%s1614 + $0x5f8] sm:$0xff]
    %v1807 = vld [vmem:[%s1614 + $0x600] sm:$0xff]
    %v1808 = vld [vmem:[%s1614 + $0x608] sm:$0xff]
    %v1809 = vld [vmem:[%s1614 + $0x610] sm:$0xff]
    %v1810 = vld [vmem:[%s1614 + $0x618] sm:$0xff]
    %v1811 = vld [vmem:[%s1614 + $0x620] sm:$0xff]
    %v1812 = vld [vmem:[%s1614 + $0x628] sm:$0xff]
    %v1813 = vld [vmem:[%s1614 + $0x630] sm:$0xff]
    %v1814 = vld [vmem:[%s1614 + $0x638] sm:$0xff]
    %v1815 = vld [vmem:[%s1614 + $0x640] sm:$0xff]
    %v1816 = vld [vmem:[%s1614 + $0x648] sm:$0xff]
    %v1817 = vld [vmem:[%s1614 + $0x650] sm:$0xff]
    %v1818 = vld [vmem:[%s1614 + $0x658] sm:$0xff]
    %v1819 = vld [vmem:[%s1614 + $0x660] sm:$0xff]
    %v1820 = vld [vmem:[%s1614 + $0x668] sm:$0xff]
    %v1821 = vld [vmem:[%s1614 + $0x670] sm:$0xff]
    %v1822 = vld [vmem:[%s1614 + $0x678] sm:$0xff]
    %v1823 = vld [vmem:[%s1614 + $0x680] sm:$0xff]
    %v1824 = vld [vmem:[%s1614 + $0x688] sm:$0xff]
    %v1825 = vld [vmem:[%s1614 + $0x690] sm:$0xff]
    %v1826 = vld [vmem:[%s1614 + $0x698] sm:$0xff]
    %v1827 = vld [vmem:[%s1614 + $0x6a0] sm:$0xff]
    %v1828 = vld [vmem:[%s1614 + $0x6a8] sm:$0xff]
    %v1829 = vld [vmem:[%s1614 + $0x6b0] sm:$0xff]
    %v1830 = vld [vmem:[%s1614 + $0x6b8] sm:$0xff]
    %v1831 = vld [vmem:[%s1614 + $0x6c0] sm:$0xff]
    %v1832 = vld [vmem:[%s1614 + $0x6c8] sm:$0xff]
    %v1833 = vld [vmem:[%s1614 + $0x6d0] sm:$0xff]
    %v1834 = vld [vmem:[%s1614 + $0x6d8] sm:$0xff]
    %v1835 = vld [vmem:[%s1614 + $0x6e0] sm:$0xff]
    %v1836 = vld [vmem:[%s1614 + $0x6e8] sm:$0xff]
    %v1837 = vld [vmem:[%s1614 + $0x6f0] sm:$0xff]
    %v1838 = vld [vmem:[%s1614 + $0x6f8] sm:$0xff]
    %v1839 = vld [vmem:[%s1614 + $0x700] sm:$0xff]
    %v1840 = vld [vmem:[%s1614 + $0x708] sm:$0xff]
    %v1841 = vld [vmem:[%s1614 + $0x710] sm:$0xff]
    %v1842 = vld [vmem:[%s1614 + $0x718] sm:$0xff]
    %v1843 = vld [vmem:[%s1614 + $0x720] sm:$0xff]
    %v1844 = vld [vmem:[%s1614 + $0x728] sm:$0xff]
    %v1845 = vld [vmem:[%s1614 + $0x730] sm:$0xff]
    %v1846 = vld [vmem:[%s1614 + $0x738] sm:$0xff]
    %v1847 = vld [vmem:[%s1614 + $0x740] sm:$0xff]
    %v1848 = vld [vmem:[%s1614 + $0x748] sm:$0xff]
    %v1849 = vld [vmem:[%s1614 + $0x750] sm:$0xff]
    %v1850 = vld [vmem:[%s1614 + $0x758] sm:$0xff]
    %v1851 = vld [vmem:[%s1614 + $0x760] sm:$0xff]
    %v1852 = vld [vmem:[%s1614 + $0x768] sm:$0xff]
    %v1853 = vld [vmem:[%s1614 + $0x770] sm:$0xff]
    %v1854 = vld [vmem:[%s1614 + $0x778] sm:$0xff]
    %v1855 = vld [vmem:[%s1614 + $0x780] sm:$0xff]
    %v1856 = vld [vmem:[%s1614 + $0x788] sm:$0xff]
    %v1857 = vld [vmem:[%s1614 + $0x790] sm:$0xff]
    %v1858 = vld [vmem:[%s1614 + $0x798] sm:$0xff]
    %v1859 = vld [vmem:[%s1614 + $0x7a0] sm:$0xff]
    %v1860 = vld [vmem:[%s1614 + $0x7a8] sm:$0xff]
    %v1861 = vld [vmem:[%s1614 + $0x7b0] sm:$0xff]
    %v1862 = vld [vmem:[%s1614 + $0x7b8] sm:$0xff]
    %v1863 = vld [vmem:[%s1614 + $0x7c0] sm:$0xff]
    %v1864 = vld [vmem:[%s1614 + $0x7c8] sm:$0xff]
    %v1865 = vld [vmem:[%s1614 + $0x7d0] sm:$0xff]
    %v1866 = vld [vmem:[%s1614 + $0x7d8] sm:$0xff]
    %v1867 = vld [vmem:[%s1614 + $0x7e0] sm:$0xff]
    %v1868 = vld [vmem:[%s1614 + $0x7e8] sm:$0xff]
    %v1869 = vld [vmem:[%s1614 + $0x7f0] sm:$0xff]
    %v1870 = vld [vmem:[%s1614 + $0x7f8] sm:$0xff]
    %1871 = vmatprep.subr.mxu0 %v1616
    %1872 = vmatpush1.msra.mxu0 %v1615
    %1873 = vmatprep.subr.mxu0 %v1620
    %1874 = vmatpush1.msra.mxu0 %v1619
    %1875 = vmatprep.subr.mxu0 %v1624
    %1876 = vmatpush1.msra.mxu0 %v1623
    %1877 = vmatprep.subr.mxu0 %v1628
    %1878 = vmatpush1.msra.mxu0 %v1627
    %1879 = vmatprep.subr.mxu0 %v1632
    %1880 = vmatpush1.msra.mxu0 %v1631
    %1881 = vmatprep.subr.mxu0 %v1636
    %1882 = vmatpush1.msra.mxu0 %v1635
    %1883 = vmatprep.subr.mxu0 %v1640
    %1884 = vmatpush1.msra.mxu0 %v1639
    %1885 = vmatprep.subr.mxu0 %v1644
    %1886 = vmatpush1.msra.mxu0 %v1643
    %1887 = vmatprep.subr.mxu0 %v1648
    %1888 = vmatpush1.msra.mxu0 %v1647
    %1889 = vmatprep.subr.mxu0 %v1652
    %1890 = vmatpush1.msra.mxu0 %v1651
    %1891 = vmatprep.subr.mxu0 %v1656
    %1892 = vmatpush1.msra.mxu0 %v1655
    %1893 = vmatprep.subr.mxu0 %v1660
    %1894 = vmatpush1.msra.mxu0 %v1659
    %1895 = vmatprep.subr.mxu0 %v1664
    %1896 = vmatpush1.msra.mxu0 %v1663
    %1897 = vmatprep.subr.mxu0 %v1668
    %1898 = vmatpush1.msra.mxu0 %v1667
    %1899 = vmatprep.subr.mxu0 %v1672
    %1900 = vmatpush1.msra.mxu0 %v1671
    %1901 = vmatprep.subr.mxu0 %v1676
    %1902 = vmatpush1.msra.mxu0 %v1675
    %1903 = vmatprep.subr.mxu0 %v1680
    %1904 = vmatpush1.msra.mxu0 %v1679
    %1905 = vmatprep.subr.mxu0 %v1684
    %1906 = vmatpush1.msra.mxu0 %v1683
    %1907 = vmatprep.subr.mxu0 %v1688
    %1908 = vmatpush1.msra.mxu0 %v1687
    %1909 = vmatprep.subr.mxu0 %v1692
    %1910 = vmatpush1.msra.mxu0 %v1691
    %1911 = vmatprep.subr.mxu0 %v1696
    %1912 = vmatpush1.msra.mxu0 %v1695
    %1913 = vmatprep.subr.mxu0 %v1700
    %1914 = vmatpush1.msra.mxu0 %v1699
    %1915 = vmatprep.subr.mxu0 %v1704
    %1916 = vmatpush1.msra.mxu0 %v1703
    %1917 = vmatprep.subr.mxu0 %v1708
    %1918 = vmatpush1.msra.mxu0 %v1707
    %1919 = vmatprep.subr.mxu0 %v1712
    %1920 = vmatpush1.msra.mxu0 %v1711
    %1921 = vmatprep.subr.mxu0 %v1716
    %1922 = vmatpush1.msra.mxu0 %v1715
    %1923 = vmatprep.subr.mxu0 %v1720
    %1924 = vmatpush1.msra.mxu0 %v1719
    %1925 = vmatprep.subr.mxu0 %v1724
    %1926 = vmatpush1.msra.mxu0 %v1723
    %1927 = vmatprep.subr.mxu0 %v1728
    %1928 = vmatpush1.msra.mxu0 %v1727
    %1929 = vmatprep.subr.mxu0 %v1732
    %1930 = vmatpush1.msra.mxu0 %v1731
    %1931 = vmatprep.subr.mxu0 %v1736
    %1932 = vmatpush1.msra.mxu0 %v1735
    %1933 = vmatprep.subr.mxu0 %v1740
    %1934 = vmatpush1.msra.mxu0 %v1739
    %1935 = vmatprep.mubr.f32.mxu0 %v1165
    %1936 = vmatmul.mubr.f32.gmra.mrb[0].mxu0 %v1164
    %v1937 = vpop.f32.mrb[0].mxu0
    %v1938 = vadd.f32 0.0, %v1937
    %v1939 = vpop.f32.mrb[0].mxu0
    %v1940 = vadd.f32 0.0, %v1939
    %1941 = vmatprep.mubr.f32.mxu0 %v1169
    %1942 = vmatmul.mubr.f32.gmra.mrb[0].mxu0 %v1168
    %v1943 = vpop.f32.mrb[0].mxu0
    %v1944 = vadd.f32 0.0, %v1943
    %v1945 = vpop.f32.mrb[0].mxu0
    %v1946 = vadd.f32 0.0, %v1945
    %1947 = vmatprep.mubr.f32.mxu0 %v1173
    %1948 = vmatmul.mubr.f32.gmra.mrb[0].mxu0 %v1172
    %v1949 = vpop.f32.mrb[0].mxu0
    %v1950 = vadd.f32 0.0, %v1949
    %v1951 = vpop.f32.mrb[0].mxu0
    %v1952 = vadd.f32 0.0, %v1951
    %1953 = vmatprep.mubr.f32.mxu0 %v1177
    %1954 = vmatmul.mubr.f32.gmra.mrb[0].mxu0 %v1176
    %v1955 = vpop.f32.mrb[0].mxu0
    %v1956 = vadd.f32 0.0, %v1955
    %v1957 = vpop.f32.mrb[0].mxu0
    %v1958 = vadd.f32 0.0, %v1957
    %1959 = vdwg.mxu0
    %1960 = vmatprep.subr.mxu0 %v1744
    %1961 = vmatpush1.msra.mxu0 %v1743
    %1962 = vmatprep.subr.mxu0 %v1748
    %1963 = vmatpush1.msra.mxu0 %v1747
    %1964 = vmatprep.subr.mxu0 %v1752
    %1965 = vmatpush1.msra.mxu0 %v1751
    %1966 = vmatprep.subr.mxu0 %v1756
    %1967 = vmatpush1.msra.mxu0 %v1755
    %1968 = vmatprep.subr.mxu0 %v1760
    %1969 = vmatpush1.msra.mxu0 %v1759
    %1970 = vmatprep.subr.mxu0 %v1764
    %1971 = vmatpush1.msra.mxu0 %v1763
    %1972 = vmatprep.subr.mxu0 %v1768
    %1973 = vmatpush1.msra.mxu0 %v1767
    %1974 = vmatprep.subr.mxu0 %v1772
    %1975 = vmatpush1.msra.mxu0 %v1771
    %1976 = vmatprep.subr.mxu0 %v1776
    %1977 = vmatpush1.msra.mxu0 %v1775
    %1978 = vmatprep.subr.mxu0 %v1780
    %1979 = vmatpush1.msra.mxu0 %v1779
    %1980 = vmatprep.subr.mxu0 %v1784
    %1981 = vmatpush1.msra.mxu0 %v1783
    %1982 = vmatprep.subr.mxu0 %v1788
    %1983 = vmatpush1.msra.mxu0 %v1787
    %1984 = vmatprep.subr.mxu0 %v1792
    %1985 = vmatpush1.msra.mxu0 %v1791
    %1986 = vmatprep.subr.mxu0 %v1796
    %1987 = vmatpush1.msra.mxu0 %v1795
    %1988 = vmatprep.subr.mxu0 %v1800
    %1989 = vmatpush1.msra.mxu0 %v1799
    %1990 = vmatprep.subr.mxu0 %v1804
    %1991 = vmatpush1.msra.mxu0 %v1803
    %1992 = vmatprep.subr.mxu0 %v1808
    %1993 = vmatpush1.msra.mxu0 %v1807
    %1994 = vmatprep.subr.mxu0 %v1812
    %1995 = vmatpush1.msra.mxu0 %v1811
    %1996 = vmatprep.subr.mxu0 %v1816
    %1997 = vmatpush1.msra.mxu0 %v1815
    %1998 = vmatprep.subr.mxu0 %v1820
    %1999 = vmatpush1.msra.mxu0 %v1819
    %2000 = vmatprep.subr.mxu0 %v1824
    %2001 = vmatpush1.msra.mxu0 %v1823
    %2002 = vmatprep.subr.mxu0 %v1828
    %2003 = vmatpush1.msra.mxu0 %v1827
    %2004 = vmatprep.subr.mxu0 %v1832
    %2005 = vmatpush1.msra.mxu0 %v1831
    %2006 = vmatprep.subr.mxu0 %v1836
    %2007 = vmatpush1.msra.mxu0 %v1835
    %2008 = vmatprep.subr.mxu0 %v1840
    %2009 = vmatpush1.msra.mxu0 %v1839
    %2010 = vmatprep.subr.mxu0 %v1844
    %2011 = vmatpush1.msra.mxu0 %v1843
    %2012 = vmatprep.subr.mxu0 %v1848
    %2013 = vmatpush1.msra.mxu0 %v1847
    %2014 = vmatprep.subr.mxu0 %v1852
    %2015 = vmatpush1.msra.mxu0 %v1851
    %2016 = vmatprep.subr.mxu0 %v1856
    %2017 = vmatpush1.msra.mxu0 %v1855
    %2018 = vmatprep.subr.mxu0 %v1860
    %2019 = vmatpush1.msra.mxu0 %v1859
    %2020 = vmatprep.subr.mxu0 %v1864
    %2021 = vmatpush1.msra.mxu0 %v1863
    %2022 = vmatprep.subr.mxu0 %v1868
    %2023 = vmatpush1.msra.mxu0 %v1867
    %2024 = vmatprep.mubr.f32.mxu0 %v1167
    %2025 = vmatmul.mubr.f32.gmra.mrb[0].mxu0 %v1166
    %v2026 = vpop.f32.mrb[0].mxu0
    %v2027 = vadd.f32 %v1938, %v2026
    %v2028 = vpop.f32.mrb[0].mxu0
    %v2029 = vadd.f32 %v1940, %v2028
    %2030 = vmatprep.mubr.f32.mxu0 %v1171
    %2031 = vmatmul.mubr.f32.gmra.mrb[0].mxu0 %v1170
    %v2032 = vpop.f32.mrb[0].mxu0
    %v2033 = vadd.f32 %v1944, %v2032
    %v2034 = vpop.f32.mrb[0].mxu0
    %v2035 = vadd.f32 %v1946, %v2034
    %2036 = vmatprep.mubr.f32.mxu0 %v1175
    %2037 = vmatmul.mubr.f32.gmra.mrb[0].mxu0 %v1174
    %v2038 = vpop.f32.mrb[0].mxu0
    %v2039 = vadd.f32 %v1950, %v2038
    %v2040 = vpop.f32.mrb[0].mxu0
    %v2041 = vadd.f32 %v1952, %v2040
    %2042 = vmatprep.mubr.f32.mxu0 %v1179
    %2043 = vmatmul.mubr.f32.gmra.mrb[0].mxu0 %v1178
    %v2044 = vpop.f32.mrb[0].mxu0
    %v2045 = vadd.f32 %v1956, %v2044
    %v2046 = vpop.f32.mrb[0].mxu0
    %v2047 = vadd.f32 %v1958, %v2046
    %2048 = vdwg.mxu0
    %2049 = vmatprep.subr.mxu0 %v1618
    %2050 = vmatpush1.msra.mxu0 %v1617
    %2051 = vmatprep.subr.mxu0 %v1622
    %2052 = vmatpush1.msra.mxu0 %v1621
    %2053 = vmatprep.subr.mxu0 %v1626
    %2054 = vmatpush1.msra.mxu0 %v1625
    %2055 = vmatprep.subr.mxu0 %v1630
    %2056 = vmatpush1.msra.mxu0 %v1629
    %2057 = vmatprep.subr.mxu0 %v1634
    %2058 = vmatpush1.msra.mxu0 %v1633
    %2059 = vmatprep.subr.mxu0 %v1638
    %2060 = vmatpush1.msra.mxu0 %v1637
    %2061 = vmatprep.subr.mxu0 %v1642
    %2062 = vmatpush1.msra.mxu0 %v1641
    %2063 = vmatprep.subr.mxu0 %v1646
    %2064 = vmatpush1.msra.mxu0 %v1645
    %2065 = vmatprep.subr.mxu0 %v1650
    %2066 = vmatpush1.msra.mxu0 %v1649
    %2067 = vmatprep.subr.mxu0 %v1654
    %2068 = vmatpush1.msra.mxu0 %v1653
    %2069 = vmatprep.subr.mxu0 %v1658
    %2070 = vmatpush1.msra.mxu0 %v1657
    %2071 = vmatprep.subr.mxu0 %v1662
    %2072 = vmatpush1.msra.mxu0 %v1661
    %2073 = vmatprep.subr.mxu0 %v1666
    %2074 = vmatpush1.msra.mxu0 %v1665
    %2075 = vmatprep.subr.mxu0 %v1670
    %2076 = vmatpush1.msra.mxu0 %v1669
    %2077 = vmatprep.subr.mxu0 %v1674
    %2078 = vmatpush1.msra.mxu0 %v1673
    %2079 = vmatprep.subr.mxu0 %v1678
    %2080 = vmatpush1.msra.mxu0 %v1677
    %2081 = vmatprep.subr.mxu0 %v1682
    %2082 = vmatpush1.msra.mxu0 %v1681
    %2083 = vmatprep.subr.mxu0 %v1686
    %2084 = vmatpush1.msra.mxu0 %v1685
    %2085 = vmatprep.subr.mxu0 %v1690
    %2086 = vmatpush1.msra.mxu0 %v1689
    %2087 = vmatprep.subr.mxu0 %v1694
    %2088 = vmatpush1.msra.mxu0 %v1693
    %2089 = vmatprep.subr.mxu0 %v1698
    %2090 = vmatpush1.msra.mxu0 %v1697
    %2091 = vmatprep.subr.mxu0 %v1702
    %2092 = vmatpush1.msra.mxu0 %v1701
    %2093 = vmatprep.subr.mxu0 %v1706
    %2094 = vmatpush1.msra.mxu0 %v1705
    %2095 = vmatprep.subr.mxu0 %v1710
    %2096 = vmatpush1.msra.mxu0 %v1709
    %2097 = vmatprep.subr.mxu0 %v1714
    %2098 = vmatpush1.msra.mxu0 %v1713
    %2099 = vmatprep.subr.mxu0 %v1718
    %2100 = vmatpush1.msra.mxu0 %v1717
    %2101 = vmatprep.subr.mxu0 %v1722
    %2102 = vmatpush1.msra.mxu0 %v1721
    %2103 = vmatprep.subr.mxu0 %v1726
    %2104 = vmatpush1.msra.mxu0 %v1725
    %2105 = vmatprep.subr.mxu0 %v1730
    %2106 = vmatpush1.msra.mxu0 %v1729
    %2107 = vmatprep.subr.mxu0 %v1734
    %2108 = vmatpush1.msra.mxu0 %v1733
    %2109 = vmatprep.subr.mxu0 %v1738
    %2110 = vmatpush1.msra.mxu0 %v1737
    %2111 = vmatprep.subr.mxu0 %v1742
    %2112 = vmatpush1.msra.mxu0 %v1741
    %2113 = vmatprep.mubr.f32.mxu0 %v1165
    %2114 = vmatmul.mubr.f32.gmra.mrb[0].mxu0 %v1164
    %v2115 = vpop.f32.mrb[0].mxu0
    %v2116 = vadd.f32 0.0, %v2115
    %v2117 = vpop.f32.mrb[0].mxu0
    %v2118 = vadd.f32 0.0, %v2117
    %2119 = vmatprep.mubr.f32.mxu0 %v1169
    %2120 = vmatmul.mubr.f32.gmra.mrb[0].mxu0 %v1168
    %v2121 = vpop.f32.mrb[0].mxu0
    %v2122 = vadd.f32 0.0, %v2121
    %v2123 = vpop.f32.mrb[0].mxu0
    %v2124 = vadd.f32 0.0, %v2123
    %2125 = vmatprep.mubr.f32.mxu0 %v1173
    %2126 = vmatmul.mubr.f32.gmra.mrb[0].mxu0 %v1172
    %v2127 = vpop.f32.mrb[0].mxu0
    %v2128 = vadd.f32 0.0, %v2127
    %v2129 = vpop.f32.mrb[0].mxu0
    %v2130 = vadd.f32 0.0, %v2129
    %2131 = vmatprep.mubr.f32.mxu0 %v1177
    %2132 = vmatmul.mubr.f32.gmra.mrb[0].mxu0 %v1176
    %v2133 = vpop.f32.mrb[0].mxu0
    %v2134 = vadd.f32 0.0, %v2133
    %v2135 = vpop.f32.mrb[0].mxu0
    %v2136 = vadd.f32 0.0, %v2135
    %2137 = vdwg.mxu0
    %2138 = vmatprep.subr.mxu0 %v1746
    %2139 = vmatpush1.msra.mxu0 %v1745
    %2140 = vmatprep.subr.mxu0 %v1750
    %2141 = vmatpush1.msra.mxu0 %v1749
    %2142 = vmatprep.subr.mxu0 %v1754
    %2143 = vmatpush1.msra.mxu0 %v1753
    %2144 = vmatprep.subr.mxu0 %v1758
    %2145 = vmatpush1.msra.mxu0 %v1757
    %2146 = vmatprep.subr.mxu0 %v1762
    %2147 = vmatpush1.msra.mxu0 %v1761
    %2148 = vmatprep.subr.mxu0 %v1766
    %2149 = vmatpush1.msra.mxu0 %v1765
    %2150 = vmatprep.subr.mxu0 %v1770
    %2151 = vmatpush1.msra.mxu0 %v1769
    %2152 = vmatprep.subr.mxu0 %v1774
    %2153 = vmatpush1.msra.mxu0 %v1773
    %2154 = vmatprep.subr.mxu0 %v1778
    %2155 = vmatpush1.msra.mxu0 %v1777
    %2156 = vmatprep.subr.mxu0 %v1782
    %2157 = vmatpush1.msra.mxu0 %v1781
    %2158 = vmatprep.subr.mxu0 %v1786
    %2159 = vmatpush1.msra.mxu0 %v1785
    %2160 = vmatprep.subr.mxu0 %v1790
    %2161 = vmatpush1.msra.mxu0 %v1789
    %2162 = vmatprep.subr.mxu0 %v1794
    %2163 = vmatpush1.msra.mxu0 %v1793
    %2164 = vmatprep.subr.mxu0 %v1798
    %2165 = vmatpush1.msra.mxu0 %v1797
    %2166 = vmatprep.subr.mxu0 %v1802
    %2167 = vmatpush1.msra.mxu0 %v1801
    %2168 = vmatprep.subr.mxu0 %v1806
    %2169 = vmatpush1.msra.mxu0 %v1805
    %2170 = vmatprep.subr.mxu0 %v1810
    %2171 = vmatpush1.msra.mxu0 %v1809
    %2172 = vmatprep.subr.mxu0 %v1814
    %2173 = vmatpush1.msra.mxu0 %v1813
    %2174 = vmatprep.subr.mxu0 %v1818
    %2175 = vmatpush1.msra.mxu0 %v1817
    %2176 = vmatprep.subr.mxu0 %v1822
    %2177 = vmatpush1.msra.mxu0 %v1821
    %2178 = vmatprep.subr.mxu0 %v1826
    %2179 = vmatpush1.msra.mxu0 %v1825
    %2180 = vmatprep.subr.mxu0 %v1830
    %2181 = vmatpush1.msra.mxu0 %v1829
    %2182 = vmatprep.subr.mxu0 %v1834
    %2183 = vmatpush1.msra.mxu0 %v1833
    %2184 = vmatprep.subr.mxu0 %v1838
    %2185 = vmatpush1.msra.mxu0 %v1837
    %2186 = vmatprep.subr.mxu0 %v1842
    %2187 = vmatpush1.msra.mxu0 %v1841
    %2188 = vmatprep.subr.mxu0 %v1846
    %2189 = vmatpush1.msra.mxu0 %v1845
    %2190 = vmatprep.subr.mxu0 %v1850
    %2191 = vmatpush1.msra.mxu0 %v1849
    %2192 = vmatprep.subr.mxu0 %v1854
    %2193 = vmatpush1.msra.mxu0 %v1853
    %2194 = vmatprep.subr.mxu0 %v1858
    %2195 = vmatpush1.msra.mxu0 %v1857
    %2196 = vmatprep.subr.mxu0 %v1862
    %2197 = vmatpush1.msra.mxu0 %v1861
    %2198 = vmatprep.subr.mxu0 %v1866
    %2199 = vmatpush1.msra.mxu0 %v1865
    %2200 = vmatprep.subr.mxu0 %v1870
    %2201 = vmatpush1.msra.mxu0 %v1869
    %2202 = vmatprep.mubr.f32.mxu0 %v1167
    %2203 = vmatmul.mubr.f32.gmra.mrb[0].mxu0 %v1166
    %v2204 = vpop.f32.mrb[0].mxu0
    %v2205 = vadd.f32 %v2116, %v2204
    %v2206 = vpop.f32.mrb[0].mxu0
    %v2207 = vadd.f32 %v2118, %v2206
    %2208 = vmatprep.mubr.f32.mxu0 %v1171
    %2209 = vmatmul.mubr.f32.gmra.mrb[0].mxu0 %v1170
    %v2210 = vpop.f32.mrb[0].mxu0
    %v2211 = vadd.f32 %v2122, %v2210
    %v2212 = vpop.f32.mrb[0].mxu0
    %v2213 = vadd.f32 %v2124, %v2212
    %2214 = vmatprep.mubr.f32.mxu0 %v1175
    %2215 = vmatmul.mubr.f32.gmra.mrb[0].mxu0 %v1174
    %v2216 = vpop.f32.mrb[0].mxu0
    %v2217 = vadd.f32 %v2128, %v2216
    %v2218 = vpop.f32.mrb[0].mxu0
    %v2219 = vadd.f32 %v2130, %v2218
    %2220 = vmatprep.mubr.f32.mxu0 %v1179
    %2221 = vmatmul.mubr.f32.gmra.mrb[0].mxu0 %v1178
    %v2222 = vpop.f32.mrb[0].mxu0
    %v2223 = vadd.f32 %v2134, %v2222
    %v2224 = vpop.f32.mrb[0].mxu0
    %v2225 = vadd.f32 %v2136, %v2224
    %2226 = vdwg.mxu0
    %2227 = vmatprep.subr.mxu0 %v1359
    %2228 = vmatpush1.msra.mxu0 %v1358
    %2229 = vmatprep.subr.mxu0 %v1363
    %2230 = vmatpush1.msra.mxu0 %v1362
    %2231 = vmatprep.subr.mxu0 %v1367
    %2232 = vmatpush1.msra.mxu0 %v1366
    %2233 = vmatprep.subr.mxu0 %v1371
    %2234 = vmatpush1.msra.mxu0 %v1370
    %2235 = vmatprep.subr.mxu0 %v1375
    %2236 = vmatpush1.msra.mxu0 %v1374
    %2237 = vmatprep.subr.mxu0 %v1379
    %2238 = vmatpush1.msra.mxu0 %v1378
    %2239 = vmatprep.subr.mxu0 %v1383
    %2240 = vmatpush1.msra.mxu0 %v1382
    %2241 = vmatprep.subr.mxu0 %v1387
    %2242 = vmatpush1.msra.mxu0 %v1386
    %2243 = vmatprep.subr.mxu0 %v1391
    %2244 = vmatpush1.msra.mxu0 %v1390
    %2245 = vmatprep.subr.mxu0 %v1395
    %2246 = vmatpush1.msra.mxu0 %v1394
    %2247 = vmatprep.subr.mxu0 %v1399
    %2248 = vmatpush1.msra.mxu0 %v1398
    %2249 = vmatprep.subr.mxu0 %v1403
    %2250 = vmatpush1.msra.mxu0 %v1402
    %2251 = vmatprep.subr.mxu0 %v1407
    %2252 = vmatpush1.msra.mxu0 %v1406
    %2253 = vmatprep.subr.mxu0 %v1411
    %2254 = vmatpush1.msra.mxu0 %v1410
    %2255 = vmatprep.subr.mxu0 %v1415
    %2256 = vmatpush1.msra.mxu0 %v1414
    %2257 = vmatprep.subr.mxu0 %v1419
    %2258 = vmatpush1.msra.mxu0 %v1418
    %2259 = vmatprep.subr.mxu0 %v1423
    %2260 = vmatpush1.msra.mxu0 %v1422
    %2261 = vmatprep.subr.mxu0 %v1427
    %2262 = vmatpush1.msra.mxu0 %v1426
    %2263 = vmatprep.subr.mxu0 %v1431
    %2264 = vmatpush1.msra.mxu0 %v1430
    %2265 = vmatprep.subr.mxu0 %v1435
    %2266 = vmatpush1.msra.mxu0 %v1434
    %2267 = vmatprep.subr.mxu0 %v1439
    %2268 = vmatpush1.msra.mxu0 %v1438
    %2269 = vmatprep.subr.mxu0 %v1443
    %2270 = vmatpush1.msra.mxu0 %v1442
    %2271 = vmatprep.subr.mxu0 %v1447
    %2272 = vmatpush1.msra.mxu0 %v1446
    %2273 = vmatprep.subr.mxu0 %v1451
    %2274 = vmatpush1.msra.mxu0 %v1450
    %2275 = vmatprep.subr.mxu0 %v1455
    %2276 = vmatpush1.msra.mxu0 %v1454
    %2277 = vmatprep.subr.mxu0 %v1459
    %2278 = vmatpush1.msra.mxu0 %v1458
    %2279 = vmatprep.subr.mxu0 %v1463
    %2280 = vmatpush1.msra.mxu0 %v1462
    %2281 = vmatprep.subr.mxu0 %v1467
    %2282 = vmatpush1.msra.mxu0 %v1466
    %2283 = vmatprep.subr.mxu0 %v1471
    %2284 = vmatpush1.msra.mxu0 %v1470
    %2285 = vmatprep.subr.mxu0 %v1475
    %2286 = vmatpush1.msra.mxu0 %v1474
    %2287 = vmatprep.subr.mxu0 %v1479
    %2288 = vmatpush1.msra.mxu0 %v1478
    %2289 = vmatprep.subr.mxu0 %v1483
    %2290 = vmatpush1.msra.mxu0 %v1482
    %2291 = vmatprep.mubr.f32.mxu0 %v1249
    %2292 = vmatmul.mubr.f32.gmra.mrb[0].mxu0 %v1247
    %v2293 = vpop.f32.mrb[0].mxu0
    %v2294 = vadd.f32 %v2027, %v2293
    %v2295 = vpop.f32.mrb[0].mxu0
    %v2296 = vadd.f32 %v2029, %v2295
    %2297 = vmatprep.mubr.f32.mxu0 %v1255
    %2298 = vmatmul.mubr.f32.gmra.mrb[0].mxu0 %v1253
    %v2299 = vpop.f32.mrb[0].mxu0
    %v2300 = vadd.f32 %v2033, %v2299
    %v2301 = vpop.f32.mrb[0].mxu0
    %v2302 = vadd.f32 %v2035, %v2301
    %2303 = vmatprep.mubr.f32.mxu0 %v1261
    %2304 = vmatmul.mubr.f32.gmra.mrb[0].mxu0 %v1259
    %v2305 = vpop.f32.mrb[0].mxu0
    %v2306 = vadd.f32 %v2039, %v2305
    %v2307 = vpop.f32.mrb[0].mxu0
    %v2308 = vadd.f32 %v2041, %v2307
    %2309 = vmatprep.mubr.f32.mxu0 %v1267
    %2310 = vmatmul.mubr.f32.gmra.mrb[0].mxu0 %v1265
    %v2311 = vpop.f32.mrb[0].mxu0
    %v2312 = vadd.f32 %v2045, %v2311
    %v2313 = vpop.f32.mrb[0].mxu0
    %v2314 = vadd.f32 %v2047, %v2313
    %2315 = vdwg.mxu0
    %2316 = vmatprep.subr.mxu0 %v1487
    %2317 = vmatpush1.msra.mxu0 %v1486
    %2318 = vmatprep.subr.mxu0 %v1491
    %2319 = vmatpush1.msra.mxu0 %v1490
    %2320 = vmatprep.subr.mxu0 %v1495
    %2321 = vmatpush1.msra.mxu0 %v1494
    %2322 = vmatprep.subr.mxu0 %v1499
    %2323 = vmatpush1.msra.mxu0 %v1498
    %2324 = vmatprep.subr.mxu0 %v1503
    %2325 = vmatpush1.msra.mxu0 %v1502
    %2326 = vmatprep.subr.mxu0 %v1507
    %2327 = vmatpush1.msra.mxu0 %v1506
    %2328 = vmatprep.subr.mxu0 %v1511
    %2329 = vmatpush1.msra.mxu0 %v1510
    %2330 = vmatprep.subr.mxu0 %v1515
    %2331 = vmatpush1.msra.mxu0 %v1514
    %2332 = vmatprep.subr.mxu0 %v1519
    %2333 = vmatpush1.msra.mxu0 %v1518
    %2334 = vmatprep.subr.mxu0 %v1523
    %2335 = vmatpush1.msra.mxu0 %v1522
    %2336 = vmatprep.subr.mxu0 %v1527
    %2337 = vmatpush1.msra.mxu0 %v1526
    %2338 = vmatprep.subr.mxu0 %v1531
    %2339 = vmatpush1.msra.mxu0 %v1530
    %2340 = vmatprep.subr.mxu0 %v1535
    %2341 = vmatpush1.msra.mxu0 %v1534
    %2342 = vmatprep.subr.mxu0 %v1539
    %2343 = vmatpush1.msra.mxu0 %v1538
    %2344 = vmatprep.subr.mxu0 %v1543
    %2345 = vmatpush1.msra.mxu0 %v1542
    %2346 = vmatprep.subr.mxu0 %v1547
    %2347 = vmatpush1.msra.mxu0 %v1546
    %2348 = vmatprep.subr.mxu0 %v1551
    %2349 = vmatpush1.msra.mxu0 %v1550
    %2350 = vmatprep.subr.mxu0 %v1555
    %2351 = vmatpush1.msra.mxu0 %v1554
    %2352 = vmatprep.subr.mxu0 %v1559
    %2353 = vmatpush1.msra.mxu0 %v1558
    %2354 = vmatprep.subr.mxu0 %v1563
    %2355 = vmatpush1.msra.mxu0 %v1562
    %2356 = vmatprep.subr.mxu0 %v1567
    %2357 = vmatpush1.msra.mxu0 %v1566
    %2358 = vmatprep.subr.mxu0 %v1571
    %2359 = vmatpush1.msra.mxu0 %v1570
    %2360 = vmatprep.subr.mxu0 %v1575
    %2361 = vmatpush1.msra.mxu0 %v1574
    %2362 = vmatprep.subr.mxu0 %v1579
    %2363 = vmatpush1.msra.mxu0 %v1578
    %2364 = vmatprep.subr.mxu0 %v1583
    %2365 = vmatpush1.msra.mxu0 %v1582
    %2366 = vmatprep.subr.mxu0 %v1587
    %2367 = vmatpush1.msra.mxu0 %v1586
    %2368 = vmatprep.subr.mxu0 %v1591
    %2369 = vmatpush1.msra.mxu0 %v1590
    %2370 = vmatprep.subr.mxu0 %v1595
    %2371 = vmatpush1.msra.mxu0 %v1594
    %2372 = vmatprep.subr.mxu0 %v1599
    %2373 = vmatpush1.msra.mxu0 %v1598
    %2374 = vmatprep.subr.mxu0 %v1603
    %2375 = vmatpush1.msra.mxu0 %v1602
    %2376 = vmatprep.subr.mxu0 %v1607
    %2377 = vmatpush1.msra.mxu0 %v1606
    %2378 = vmatprep.subr.mxu0 %v1611
    %2379 = vmatpush1.msra.mxu0 %v1610
    %2380 = vmatprep.mubr.f32.mxu0 %v1338
    %2381 = vmatmul.mubr.f32.gmra.mrb[0].mxu0 %v1336
    %v2382 = vpop.f32.mrb[0].mxu0
    %v2383 = vadd.f32 %v2294, %v2382
    %v2384 = vpop.f32.mrb[0].mxu0
    %v2385 = vadd.f32 %v2296, %v2384
    %2386 = vmatprep.mubr.f32.mxu0 %v1344
    %2387 = vmatmul.mubr.f32.gmra.mrb[0].mxu0 %v1342
    %v2388 = vpop.f32.mrb[0].mxu0
    %v2389 = vadd.f32 %v2300, %v2388
    %v2390 = vpop.f32.mrb[0].mxu0
    %v2391 = vadd.f32 %v2302, %v2390
    %2392 = vmatprep.mubr.f32.mxu0 %v1350
    %2393 = vmatmul.mubr.f32.gmra.mrb[0].mxu0 %v1348
    %v2394 = vpop.f32.mrb[0].mxu0
    %v2395 = vadd.f32 %v2306, %v2394
    %v2396 = vpop.f32.mrb[0].mxu0
    %v2397 = vadd.f32 %v2308, %v2396
    %2398 = vmatprep.mubr.f32.mxu0 %v1356
    %2399 = vmatmul.mubr.f32.gmra.mrb[0].mxu0 %v1354
    %v2400 = vpop.f32.mrb[0].mxu0
    %v2401 = vadd.f32 %v2312, %v2400
    %v2402 = vpop.f32.mrb[0].mxu0
    %v2403 = vadd.f32 %v2314, %v2402
    %2404 = vdwg.mxu0
    %2405 = vmatprep.subr.mxu0 %v1361
    %2406 = vmatpush1.msra.mxu0 %v1360
    %2407 = vmatprep.subr.mxu0 %v1365
    %2408 = vmatpush1.msra.mxu0 %v1364
    %2409 = vmatprep.subr.mxu0 %v1369
    %2410 = vmatpush1.msra.mxu0 %v1368
    %2411 = vmatprep.subr.mxu0 %v1373
    %2412 = vmatpush1.msra.mxu0 %v1372
    %2413 = vmatprep.subr.mxu0 %v1377
    %2414 = vmatpush1.msra.mxu0 %v1376
    %2415 = vmatprep.subr.mxu0 %v1381
    %2416 = vmatpush1.msra.mxu0 %v1380
    %2417 = vmatprep.subr.mxu0 %v1385
    %2418 = vmatpush1.msra.mxu0 %v1384
    %2419 = vmatprep.subr.mxu0 %v1389
    %2420 = vmatpush1.msra.mxu0 %v1388
    %2421 = vmatprep.subr.mxu0 %v1393
    %2422 = vmatpush1.msra.mxu0 %v1392
    %2423 = vmatprep.subr.mxu0 %v1397
    %2424 = vmatpush1.msra.mxu0 %v1396
    %2425 = vmatprep.subr.mxu0 %v1401
    %2426 = vmatpush1.msra.mxu0 %v1400
    %2427 = vmatprep.subr.mxu0 %v1405
    %2428 = vmatpush1.msra.mxu0 %v1404
    %2429 = vmatprep.subr.mxu0 %v1409
    %2430 = vmatpush1.msra.mxu0 %v1408
    %2431 = vmatprep.subr.mxu0 %v1413
    %2432 = vmatpush1.msra.mxu0 %v1412
    %2433 = vmatprep.subr.mxu0 %v1417
    %2434 = vmatpush1.msra.mxu0 %v1416
    %2435 = vmatprep.subr.mxu0 %v1421
    %2436 = vmatpush1.msra.mxu0 %v1420
    %2437 = vmatprep.subr.mxu0 %v1425
    %2438 = vmatpush1.msra.mxu0 %v1424
    %2439 = vmatprep.subr.mxu0 %v1429
    %2440 = vmatpush1.msra.mxu0 %v1428
    %2441 = vmatprep.subr.mxu0 %v1433
    %2442 = vmatpush1.msra.mxu0 %v1432
    %2443 = vmatprep.subr.mxu0 %v1437
    %2444 = vmatpush1.msra.mxu0 %v1436
    %2445 = vmatprep.subr.mxu0 %v1441
    %2446 = vmatpush1.msra.mxu0 %v1440
    %2447 = vmatprep.subr.mxu0 %v1445
    %2448 = vmatpush1.msra.mxu0 %v1444
    %2449 = vmatprep.subr.mxu0 %v1449
    %2450 = vmatpush1.msra.mxu0 %v1448
    %2451 = vmatprep.subr.mxu0 %v1453
    %2452 = vmatpush1.msra.mxu0 %v1452
    %2453 = vmatprep.subr.mxu0 %v1457
    %2454 = vmatpush1.msra.mxu0 %v1456
    %2455 = vmatprep.subr.mxu0 %v1461
    %2456 = vmatpush1.msra.mxu0 %v1460
    %2457 = vmatprep.subr.mxu0 %v1465
    %2458 = vmatpush1.msra.mxu0 %v1464
    %2459 = vmatprep.subr.mxu0 %v1469
    %2460 = vmatpush1.msra.mxu0 %v1468
    %2461 = vmatprep.subr.mxu0 %v1473
    %2462 = vmatpush1.msra.mxu0 %v1472
    %2463 = vmatprep.subr.mxu0 %v1477
    %2464 = vmatpush1.msra.mxu0 %v1476
    %2465 = vmatprep.subr.mxu0 %v1481
    %2466 = vmatpush1.msra.mxu0 %v1480
    %2467 = vmatprep.subr.mxu0 %v1485
    %2468 = vmatpush1.msra.mxu0 %v1484
    %2469 = vmatprep.mubr.f32.mxu0 %v1249
    %2470 = vmatmul.mubr.f32.gmra.mrb[0].mxu0 %v1247
    %v2471 = vpop.f32.mrb[0].mxu0
    %v2472 = vadd.f32 %v2205, %v2471
    %v2473 = vpop.f32.mrb[0].mxu0
    %v2474 = vadd.f32 %v2207, %v2473
    %2475 = vmatprep.mubr.f32.mxu0 %v1255
    %2476 = vmatmul.mubr.f32.gmra.mrb[0].mxu0 %v1253
    %v2477 = vpop.f32.mrb[0].mxu0
    %v2478 = vadd.f32 %v2211, %v2477
    %v2479 = vpop.f32.mrb[0].mxu0
    %v2480 = vadd.f32 %v2213, %v2479
    %2481 = vmatprep.mubr.f32.mxu0 %v1261
    %2482 = vmatmul.mubr.f32.gmra.mrb[0].mxu0 %v1259
    %v2483 = vpop.f32.mrb[0].mxu0
    %v2484 = vadd.f32 %v2217, %v2483
    %v2485 = vpop.f32.mrb[0].mxu0
    %v2486 = vadd.f32 %v2219, %v2485
    %2487 = vmatprep.mubr.f32.mxu0 %v1267
    %2488 = vmatmul.mubr.f32.gmra.mrb[0].mxu0 %v1265
    %v2489 = vpop.f32.mrb[0].mxu0
    %v2490 = vadd.f32 %v2223, %v2489
    %v2491 = vpop.f32.mrb[0].mxu0
    %v2492 = vadd.f32 %v2225, %v2491
    %2493 = vdwg.mxu0
    %2494 = vmatprep.subr.mxu0 %v1489
    %2495 = vmatpush1.msra.mxu0 %v1488
    %2496 = vmatprep.subr.mxu0 %v1493
    %2497 = vmatpush1.msra.mxu0 %v1492
    %2498 = vmatprep.subr.mxu0 %v1497
    %2499 = vmatpush1.msra.mxu0 %v1496
    %2500 = vmatprep.subr.mxu0 %v1501
    %2501 = vmatpush1.msra.mxu0 %v1500
    %2502 = vmatprep.subr.mxu0 %v1505
    %2503 = vmatpush1.msra.mxu0 %v1504
    %2504 = vmatprep.subr.mxu0 %v1509
    %2505 = vmatpush1.msra.mxu0 %v1508
    %2506 = vmatprep.subr.mxu0 %v1513
    %2507 = vmatpush1.msra.mxu0 %v1512
    %2508 = vmatprep.subr.mxu0 %v1517
    %2509 = vmatpush1.msra.mxu0 %v1516
    %2510 = vmatprep.subr.mxu0 %v1521
    %2511 = vmatpush1.msra.mxu0 %v1520
    %2512 = vmatprep.subr.mxu0 %v1525
    %2513 = vmatpush1.msra.mxu0 %v1524
    %2514 = vmatprep.subr.mxu0 %v1529
    %2515 = vmatpush1.msra.mxu0 %v1528
    %2516 = vmatprep.subr.mxu0 %v1533
    %2517 = vmatpush1.msra.mxu0 %v1532
    %2518 = vmatprep.subr.mxu0 %v1537
    %2519 = vmatpush1.msra.mxu0 %v1536
    %2520 = vmatprep.subr.mxu0 %v1541
    %2521 = vmatpush1.msra.mxu0 %v1540
    %2522 = vmatprep.subr.mxu0 %v1545
    %2523 = vmatpush1.msra.mxu0 %v1544
    %2524 = vmatprep.subr.mxu0 %v1549
    %2525 = vmatpush1.msra.mxu0 %v1548
    %2526 = vmatprep.subr.mxu0 %v1553
    %2527 = vmatpush1.msra.mxu0 %v1552
    %2528 = vmatprep.subr.mxu0 %v1557
    %2529 = vmatpush1.msra.mxu0 %v1556
    %2530 = vmatprep.subr.mxu0 %v1561
    %2531 = vmatpush1.msra.mxu0 %v1560
    %2532 = vmatprep.subr.mxu0 %v1565
    %2533 = vmatpush1.msra.mxu0 %v1564
    %2534 = vmatprep.subr.mxu0 %v1569
    %2535 = vmatpush1.msra.mxu0 %v1568
    %2536 = vmatprep.subr.mxu0 %v1573
    %2537 = vmatpush1.msra.mxu0 %v1572
    %2538 = vmatprep.subr.mxu0 %v1577
    %2539 = vmatpush1.msra.mxu0 %v1576
    %2540 = vmatprep.subr.mxu0 %v1581
    %2541 = vmatpush1.msra.mxu0 %v1580
    %2542 = vmatprep.subr.mxu0 %v1585
    %2543 = vmatpush1.msra.mxu0 %v1584
    %2544 = vmatprep.subr.mxu0 %v1589
    %2545 = vmatpush1.msra.mxu0 %v1588
    %2546 = vmatprep.subr.mxu0 %v1593
    %2547 = vmatpush1.msra.mxu0 %v1592
    %2548 = vmatprep.subr.mxu0 %v1597
    %2549 = vmatpush1.msra.mxu0 %v1596
    %2550 = vmatprep.subr.mxu0 %v1601
    %2551 = vmatpush1.msra.mxu0 %v1600
    %2552 = vmatprep.subr.mxu0 %v1605
    %2553 = vmatpush1.msra.mxu0 %v1604
    %2554 = vmatprep.subr.mxu0 %v1609
    %2555 = vmatpush1.msra.mxu0 %v1608
    %2556 = vmatprep.subr.mxu0 %v1613
    %2557 = vmatpush1.msra.mxu0 %v1612
    %2558 = vmatprep.mubr.f32.mxu0 %v1338
    %2559 = vmatmul.mubr.f32.gmra.mrb[0].mxu0 %v1336
    %v2560 = vpop.f32.mrb[0].mxu0
    %v2561 = vadd.f32 %v2472, %v2560
    %v2562 = vpop.f32.mrb[0].mxu0
    %v2563 = vadd.f32 %v2474, %v2562
    %2564 = vmatprep.mubr.f32.mxu0 %v1344
    %2565 = vmatmul.mubr.f32.gmra.mrb[0].mxu0 %v1342
    %v2566 = vpop.f32.mrb[0].mxu0
    %v2567 = vadd.f32 %v2478, %v2566
    %v2568 = vpop.f32.mrb[0].mxu0
    %v2569 = vadd.f32 %v2480, %v2568
    %2570 = vmatprep.mubr.f32.mxu0 %v1350
    %2571 = vmatmul.mubr.f32.gmra.mrb[0].mxu0 %v1348
    %v2572 = vpop.f32.mrb[0].mxu0
    %v2573 = vadd.f32 %v2484, %v2572
    %v2574 = vpop.f32.mrb[0].mxu0
    %v2575 = vadd.f32 %v2486, %v2574
    %2576 = vmatprep.mubr.f32.mxu0 %v1356
    %2577 = vmatmul.mubr.f32.gmra.mrb[0].mxu0 %v1354
    %v2578 = vpop.f32.mrb[0].mxu0
    %v2579 = vadd.f32 %v2490, %v2578
    %v2580 = vpop.f32.mrb[0].mxu0
    %v2581 = vadd.f32 %v2492, %v2580
    %2582 = vdwg.mxu0
    %2583 = vmatprep.subr.mxu0 %v1165
    %2584 = vmatpush1.msra.mxu0 %v1164
    %2585 = vmatprep.subr.mxu0 %v1169
    %2586 = vmatpush1.msra.mxu0 %v1168
    %2587 = vmatprep.subr.mxu0 %v1173
    %2588 = vmatpush1.msra.mxu0 %v1172
    %2589 = vmatprep.subr.mxu0 %v1177
    %2590 = vmatpush1.msra.mxu0 %v1176
    %2591 = vmatprep.subr.mxu0 0.0
    %2592 = vmatpush1.msra.mxu0 0.0
    %2593 = vmatprep.subr.mxu0 0.0
    %2594 = vmatpush1.msra.mxu0 0.0
    %2595 = vmatprep.subr.mxu0 0.0
    %2596 = vmatpush1.msra.mxu0 0.0
    %2597 = vmatprep.subr.mxu0 0.0
    %2598 = vmatpush1.msra.mxu0 0.0
    %2599 = vmatprep.subr.mxu0 0.0
    %2600 = vmatpush1.msra.mxu0 0.0
    %2601 = vmatprep.subr.mxu0 0.0
    %2602 = vmatpush1.msra.mxu0 0.0
    %2603 = vmatprep.subr.mxu0 0.0
    %2604 = vmatpush1.msra.mxu0 0.0
    %2605 = vmatprep.subr.mxu0 0.0
    %2606 = vmatpush1.msra.mxu0 0.0
    %2607 = vmatprep.subr.mxu0 0.0
    %2608 = vmatpush1.msra.mxu0 0.0
    %2609 = vmatprep.subr.mxu0 0.0
    %2610 = vmatpush1.msra.mxu0 0.0
    %2611 = vmatprep.subr.mxu0 0.0
    %2612 = vmatpush1.msra.mxu0 0.0
    %2613 = vmatprep.subr.mxu0 0.0
    %2614 = vmatpush1.msra.mxu0 0.0
    %2615 = vmatprep.subr.mxu0 0.0
    %2616 = vmatpush1.msra.mxu0 0.0
    %2617 = vmatprep.subr.mxu0 0.0
    %2618 = vmatpush1.msra.mxu0 0.0
    %2619 = vmatprep.subr.mxu0 0.0
    %2620 = vmatpush1.msra.mxu0 0.0
    %2621 = vmatprep.subr.mxu0 0.0
    %2622 = vmatpush1.msra.mxu0 0.0
    %2623 = vmatprep.subr.mxu0 0.0
    %2624 = vmatpush1.msra.mxu0 0.0
    %2625 = vmatprep.subr.mxu0 0.0
    %2626 = vmatpush1.msra.mxu0 0.0
    %2627 = vmatprep.subr.mxu0 0.0
    %2628 = vmatpush1.msra.mxu0 0.0
    %2629 = vmatprep.subr.mxu0 0.0
    %2630 = vmatpush1.msra.mxu0 0.0
    %2631 = vmatprep.subr.mxu0 0.0
    %2632 = vmatpush1.msra.mxu0 0.0
    %2633 = vmatprep.subr.mxu0 0.0
    %2634 = vmatpush1.msra.mxu0 0.0
    %2635 = vmatprep.subr.mxu0 0.0
    %2636 = vmatpush1.msra.mxu0 0.0
    %2637 = vmatprep.subr.mxu0 0.0
    %2638 = vmatpush1.msra.mxu0 0.0
    %2639 = vmatprep.subr.mxu0 0.0
    %2640 = vmatpush1.msra.mxu0 0.0
    %2641 = vmatprep.subr.mxu0 0.0
    %2642 = vmatpush1.msra.mxu0 0.0
    %2643 = vmatprep.subr.mxu0 0.0
    %2644 = vmatpush1.msra.mxu0 0.0
    %2645 = vmatprep.subr.mxu0 0.0
    %2646 = vmatpush1.msra.mxu0 0.0
    %2647 = vmatprep.mubr.f32.mxu0 0.0
    %2648 = vmatmul.mubr.f32.gmra.mrb[0].mxu0 %v815
    %v2649 = vpop.f32.mrb[0].mxu0
    %v2650 = vadd.f32 0.0, %v2649
    %v2651 = vpop.f32.mrb[0].mxu0
    %v2652 = vadd.f32 0.0, %v2651
    %2653 = vmatprep.mubr.f32.mxu0 0.0
    %2654 = vmatmul.mubr.f32.gmra.mrb[0].mxu0 %v818
    %v2655 = vpop.f32.mrb[0].mxu0
    %v2656 = vadd.f32 0.0, %v2655
    %v2657 = vpop.f32.mrb[0].mxu0
    %v2658 = vadd.f32 0.0, %v2657
    %2659 = vmatprep.mubr.f32.mxu0 0.0
    %2660 = vmatmul.mubr.f32.gmra.mrb[0].mxu0 %v821
    %v2661 = vpop.f32.mrb[0].mxu0
    %v2662 = vadd.f32 0.0, %v2661
    %v2663 = vpop.f32.mrb[0].mxu0
    %v2664 = vadd.f32 0.0, %v2663
    %2665 = vmatprep.mubr.f32.mxu0 0.0
    %2666 = vmatmul.mubr.f32.gmra.mrb[0].mxu0 %v824
    %v2667 = vpop.f32.mrb[0].mxu0
    %v2668 = vadd.f32 0.0, %v2667
    %v2669 = vpop.f32.mrb[0].mxu0
    %v2670 = vadd.f32 0.0, %v2669
    %2671 = vdwg.mxu0
    %2672 = vmatprep.subr.mxu0 %v1167
    %2673 = vmatpush1.msra.mxu0 %v1166
    %2674 = vmatprep.subr.mxu0 %v1171
    %2675 = vmatpush1.msra.mxu0 %v1170
    %2676 = vmatprep.subr.mxu0 %v1175
    %2677 = vmatpush1.msra.mxu0 %v1174
    %2678 = vmatprep.subr.mxu0 %v1179
    %2679 = vmatpush1.msra.mxu0 %v1178
    %2680 = vmatprep.subr.mxu0 0.0
    %2681 = vmatpush1.msra.mxu0 0.0
    %2682 = vmatprep.subr.mxu0 0.0
    %2683 = vmatpush1.msra.mxu0 0.0
    %2684 = vmatprep.subr.mxu0 0.0
    %2685 = vmatpush1.msra.mxu0 0.0
    %2686 = vmatprep.subr.mxu0 0.0
    %2687 = vmatpush1.msra.mxu0 0.0
    %2688 = vmatprep.subr.mxu0 0.0
    %2689 = vmatpush1.msra.mxu0 0.0
    %2690 = vmatprep.subr.mxu0 0.0
    %2691 = vmatpush1.msra.mxu0 0.0
    %2692 = vmatprep.subr.mxu0 0.0
    %2693 = vmatpush1.msra.mxu0 0.0
    %2694 = vmatprep.subr.mxu0 0.0
    %2695 = vmatpush1.msra.mxu0 0.0
    %2696 = vmatprep.subr.mxu0 0.0
    %2697 = vmatpush1.msra.mxu0 0.0
    %2698 = vmatprep.subr.mxu0 0.0
    %2699 = vmatpush1.msra.mxu0 0.0
    %2700 = vmatprep.subr.mxu0 0.0
    %2701 = vmatpush1.msra.mxu0 0.0
    %2702 = vmatprep.subr.mxu0 0.0
    %2703 = vmatpush1.msra.mxu0 0.0
    %2704 = vmatprep.subr.mxu0 0.0
    %2705 = vmatpush1.msra.mxu0 0.0
    %2706 = vmatprep.subr.mxu0 0.0
    %2707 = vmatpush1.msra.mxu0 0.0
    %2708 = vmatprep.subr.mxu0 0.0
    %2709 = vmatpush1.msra.mxu0 0.0
    %2710 = vmatprep.subr.mxu0 0.0
    %2711 = vmatpush1.msra.mxu0 0.0
    %2712 = vmatprep.subr.mxu0 0.0
    %2713 = vmatpush1.msra.mxu0 0.0
    %2714 = vmatprep.subr.mxu0 0.0
    %2715 = vmatpush1.msra.mxu0 0.0
    %2716 = vmatprep.subr.mxu0 0.0
    %2717 = vmatpush1.msra.mxu0 0.0
    %2718 = vmatprep.subr.mxu0 0.0
    %2719 = vmatpush1.msra.mxu0 0.0
    %2720 = vmatprep.subr.mxu0 0.0
    %2721 = vmatpush1.msra.mxu0 0.0
    %2722 = vmatprep.subr.mxu0 0.0
    %2723 = vmatpush1.msra.mxu0 0.0
    %2724 = vmatprep.subr.mxu0 0.0
    %2725 = vmatpush1.msra.mxu0 0.0
    %2726 = vmatprep.subr.mxu0 0.0
    %2727 = vmatpush1.msra.mxu0 0.0
    %2728 = vmatprep.subr.mxu0 0.0
    %2729 = vmatpush1.msra.mxu0 0.0
    %2730 = vmatprep.subr.mxu0 0.0
    %2731 = vmatpush1.msra.mxu0 0.0
    %2732 = vmatprep.subr.mxu0 0.0
    %2733 = vmatpush1.msra.mxu0 0.0
    %2734 = vmatprep.subr.mxu0 0.0
    %2735 = vmatpush1.msra.mxu0 0.0
    %2736 = vmatprep.mubr.f32.mxu0 0.0
    %2737 = vmatmul.mubr.f32.gmra.mrb[0].mxu0 %v815
    %v2738 = vpop.f32.mrb[0].mxu0
    %v2739 = vadd.f32 0.0, %v2738
    %v2740 = vpop.f32.mrb[0].mxu0
    %v2741 = vadd.f32 0.0, %v2740
    %2742 = vmatprep.mubr.f32.mxu0 0.0
    %2743 = vmatmul.mubr.f32.gmra.mrb[0].mxu0 %v818
    %v2744 = vpop.f32.mrb[0].mxu0
    %v2745 = vadd.f32 0.0, %v2744
    %v2746 = vpop.f32.mrb[0].mxu0
    %v2747 = vadd.f32 0.0, %v2746
    %2748 = vmatprep.mubr.f32.mxu0 0.0
    %2749 = vmatmul.mubr.f32.gmra.mrb[0].mxu0 %v821
    %v2750 = vpop.f32.mrb[0].mxu0
    %v2751 = vadd.f32 0.0, %v2750
    %v2752 = vpop.f32.mrb[0].mxu0
    %v2753 = vadd.f32 0.0, %v2752
    %2754 = vmatprep.mubr.f32.mxu0 0.0
    %2755 = vmatmul.mubr.f32.gmra.mrb[0].mxu0 %v824
    %v2756 = vpop.f32.mrb[0].mxu0
    %v2757 = vadd.f32 0.0, %v2756
    %v2758 = vpop.f32.mrb[0].mxu0
    %v2759 = vadd.f32 0.0, %v2758
    %2760 = vdwg.mxu0
    %s2761 = scalar_lea.vmem [#allocation11], 4096
    %v2762 = vld [vmem:[%s2761] sm:$0xff]
    %v2763 = vld [vmem:[%s2761 + $0x8] sm:$0xff]
    %v2764 = vld [vmem:[%s2761 + $0x10] sm:$0xff]
    %v2765 = vld [vmem:[%s2761 + $0x18] sm:$0xff]
    %v2766 = vld [vmem:[%s2761 + $0x20] sm:$0xff]
    %v2767 = vld [vmem:[%s2761 + $0x28] sm:$0xff]
    %v2768 = vld [vmem:[%s2761 + $0x30] sm:$0xff]
    %v2769 = vld [vmem:[%s2761 + $0x38] sm:$0xff]
    %v2770 = vld [vmem:[%s2761 + $0x40] sm:$0xff]
    %v2771 = vld [vmem:[%s2761 + $0x48] sm:$0xff]
    %v2772 = vld [vmem:[%s2761 + $0x50] sm:$0xff]
    %v2773 = vld [vmem:[%s2761 + $0x58] sm:$0xff]
    %v2774 = vld [vmem:[%s2761 + $0x60] sm:$0xff]
    %v2775 = vld [vmem:[%s2761 + $0x68] sm:$0xff]
    %v2776 = vld [vmem:[%s2761 + $0x70] sm:$0xff]
    %v2777 = vld [vmem:[%s2761 + $0x78] sm:$0xff]
    %v2778 = vld [vmem:[%s2761 + $0x80] sm:$0xff]
    %v2779 = vld [vmem:[%s2761 + $0x88] sm:$0xff]
    %v2780 = vld [vmem:[%s2761 + $0x90] sm:$0xff]
    %v2781 = vld [vmem:[%s2761 + $0x98] sm:$0xff]
    %v2782 = vld [vmem:[%s2761 + $0xa0] sm:$0xff]
    %v2783 = vld [vmem:[%s2761 + $0xa8] sm:$0xff]
    %v2784 = vld [vmem:[%s2761 + $0xb0] sm:$0xff]
    %v2785 = vld [vmem:[%s2761 + $0xb8] sm:$0xff]
    %v2786 = vld [vmem:[%s2761 + $0xc0] sm:$0xff]
    %v2787 = vld [vmem:[%s2761 + $0xc8] sm:$0xff]
    %v2788 = vld [vmem:[%s2761 + $0xd0] sm:$0xff]
    %v2789 = vld [vmem:[%s2761 + $0xd8] sm:$0xff]
    %v2790 = vld [vmem:[%s2761 + $0xe0] sm:$0xff]
    %v2791 = vld [vmem:[%s2761 + $0xe8] sm:$0xff]
    %v2792 = vld [vmem:[%s2761 + $0xf0] sm:$0xff]
    %v2793 = vld [vmem:[%s2761 + $0xf8] sm:$0xff]
    %v2794 = vld [vmem:[%s2761 + $0x100] sm:$0xff]
    %v2795 = vld [vmem:[%s2761 + $0x108] sm:$0xff]
    %v2796 = vld [vmem:[%s2761 + $0x110] sm:$0xff]
    %v2797 = vld [vmem:[%s2761 + $0x118] sm:$0xff]
    %v2798 = vld [vmem:[%s2761 + $0x120] sm:$0xff]
    %v2799 = vld [vmem:[%s2761 + $0x128] sm:$0xff]
    %v2800 = vld [vmem:[%s2761 + $0x130] sm:$0xff]
    %v2801 = vld [vmem:[%s2761 + $0x138] sm:$0xff]
    %v2802 = vld [vmem:[%s2761 + $0x140] sm:$0xff]
    %v2803 = vld [vmem:[%s2761 + $0x148] sm:$0xff]
    %v2804 = vld [vmem:[%s2761 + $0x150] sm:$0xff]
    %v2805 = vld [vmem:[%s2761 + $0x158] sm:$0xff]
    %v2806 = vld [vmem:[%s2761 + $0x160] sm:$0xff]
    %v2807 = vld [vmem:[%s2761 + $0x168] sm:$0xff]
    %v2808 = vld [vmem:[%s2761 + $0x170] sm:$0xff]
    %v2809 = vld [vmem:[%s2761 + $0x178] sm:$0xff]
    %v2810 = vld [vmem:[%s2761 + $0x180] sm:$0xff]
    %v2811 = vld [vmem:[%s2761 + $0x188] sm:$0xff]
    %v2812 = vld [vmem:[%s2761 + $0x190] sm:$0xff]
    %v2813 = vld [vmem:[%s2761 + $0x198] sm:$0xff]
    %v2814 = vld [vmem:[%s2761 + $0x1a0] sm:$0xff]
    %v2815 = vld [vmem:[%s2761 + $0x1a8] sm:$0xff]
    %v2816 = vld [vmem:[%s2761 + $0x1b0] sm:$0xff]
    %v2817 = vld [vmem:[%s2761 + $0x1b8] sm:$0xff]
    %v2818 = vld [vmem:[%s2761 + $0x1c0] sm:$0xff]
    %v2819 = vld [vmem:[%s2761 + $0x1c8] sm:$0xff]
    %v2820 = vld [vmem:[%s2761 + $0x1d0] sm:$0xff]
    %v2821 = vld [vmem:[%s2761 + $0x1d8] sm:$0xff]
    %v2822 = vld [vmem:[%s2761 + $0x1e0] sm:$0xff]
    %v2823 = vld [vmem:[%s2761 + $0x1e8] sm:$0xff]
    %v2824 = vld [vmem:[%s2761 + $0x1f0] sm:$0xff]
    %v2825 = vld [vmem:[%s2761 + $0x1f8] sm:$0xff]
    %v2826 = vld [vmem:[%s2761 + $0x200] sm:$0xff]
    %v2827 = vld [vmem:[%s2761 + $0x208] sm:$0xff]
    %v2828 = vld [vmem:[%s2761 + $0x210] sm:$0xff]
    %v2829 = vld [vmem:[%s2761 + $0x218] sm:$0xff]
    %v2830 = vld [vmem:[%s2761 + $0x220] sm:$0xff]
    %v2831 = vld [vmem:[%s2761 + $0x228] sm:$0xff]
    %v2832 = vld [vmem:[%s2761 + $0x230] sm:$0xff]
    %v2833 = vld [vmem:[%s2761 + $0x238] sm:$0xff]
    %v2834 = vld [vmem:[%s2761 + $0x240] sm:$0xff]
    %v2835 = vld [vmem:[%s2761 + $0x248] sm:$0xff]
    %v2836 = vld [vmem:[%s2761 + $0x250] sm:$0xff]
    %v2837 = vld [vmem:[%s2761 + $0x258] sm:$0xff]
    %v2838 = vld [vmem:[%s2761 + $0x260] sm:$0xff]
    %v2839 = vld [vmem:[%s2761 + $0x268] sm:$0xff]
    %v2840 = vld [vmem:[%s2761 + $0x270] sm:$0xff]
    %v2841 = vld [vmem:[%s2761 + $0x278] sm:$0xff]
    %v2842 = vld [vmem:[%s2761 + $0x280] sm:$0xff]
    %v2843 = vld [vmem:[%s2761 + $0x288] sm:$0xff]
    %v2844 = vld [vmem:[%s2761 + $0x290] sm:$0xff]
    %v2845 = vld [vmem:[%s2761 + $0x298] sm:$0xff]
    %v2846 = vld [vmem:[%s2761 + $0x2a0] sm:$0xff]
    %v2847 = vld [vmem:[%s2761 + $0x2a8] sm:$0xff]
    %v2848 = vld [vmem:[%s2761 + $0x2b0] sm:$0xff]
    %v2849 = vld [vmem:[%s2761 + $0x2b8] sm:$0xff]
    %v2850 = vld [vmem:[%s2761 + $0x2c0] sm:$0xff]
    %v2851 = vld [vmem:[%s2761 + $0x2c8] sm:$0xff]
    %v2852 = vld [vmem:[%s2761 + $0x2d0] sm:$0xff]
    %v2853 = vld [vmem:[%s2761 + $0x2d8] sm:$0xff]
    %v2854 = vld [vmem:[%s2761 + $0x2e0] sm:$0xff]
    %v2855 = vld [vmem:[%s2761 + $0x2e8] sm:$0xff]
    %v2856 = vld [vmem:[%s2761 + $0x2f0] sm:$0xff]
    %v2857 = vld [vmem:[%s2761 + $0x2f8] sm:$0xff]
    %v2858 = vld [vmem:[%s2761 + $0x300] sm:$0xff]
    %v2859 = vld [vmem:[%s2761 + $0x308] sm:$0xff]
    %v2860 = vld [vmem:[%s2761 + $0x310] sm:$0xff]
    %v2861 = vld [vmem:[%s2761 + $0x318] sm:$0xff]
    %v2862 = vld [vmem:[%s2761 + $0x320] sm:$0xff]
    %v2863 = vld [vmem:[%s2761 + $0x328] sm:$0xff]
    %v2864 = vld [vmem:[%s2761 + $0x330] sm:$0xff]
    %v2865 = vld [vmem:[%s2761 + $0x338] sm:$0xff]
    %v2866 = vld [vmem:[%s2761 + $0x340] sm:$0xff]
    %v2867 = vld [vmem:[%s2761 + $0x348] sm:$0xff]
    %v2868 = vld [vmem:[%s2761 + $0x350] sm:$0xff]
    %v2869 = vld [vmem:[%s2761 + $0x358] sm:$0xff]
    %v2870 = vld [vmem:[%s2761 + $0x360] sm:$0xff]
    %v2871 = vld [vmem:[%s2761 + $0x368] sm:$0xff]
    %v2872 = vld [vmem:[%s2761 + $0x370] sm:$0xff]
    %v2873 = vld [vmem:[%s2761 + $0x378] sm:$0xff]
    %v2874 = vld [vmem:[%s2761 + $0x380] sm:$0xff]
    %v2875 = vld [vmem:[%s2761 + $0x388] sm:$0xff]
    %v2876 = vld [vmem:[%s2761 + $0x390] sm:$0xff]
    %v2877 = vld [vmem:[%s2761 + $0x398] sm:$0xff]
    %v2878 = vld [vmem:[%s2761 + $0x3a0] sm:$0xff]
    %v2879 = vld [vmem:[%s2761 + $0x3a8] sm:$0xff]
    %v2880 = vld [vmem:[%s2761 + $0x3b0] sm:$0xff]
    %v2881 = vld [vmem:[%s2761 + $0x3b8] sm:$0xff]
    %v2882 = vld [vmem:[%s2761 + $0x3c0] sm:$0xff]
    %v2883 = vld [vmem:[%s2761 + $0x3c8] sm:$0xff]
    %v2884 = vld [vmem:[%s2761 + $0x3d0] sm:$0xff]
    %v2885 = vld [vmem:[%s2761 + $0x3d8] sm:$0xff]
    %v2886 = vld [vmem:[%s2761 + $0x3e0] sm:$0xff]
    %v2887 = vld [vmem:[%s2761 + $0x3e8] sm:$0xff]
    %v2888 = vld [vmem:[%s2761 + $0x3f0] sm:$0xff]
    %v2889 = vld [vmem:[%s2761 + $0x3f8] sm:$0xff]
    %v2890 = vld [vmem:[%s2761 + $0x400] sm:$0xff]
    %v2891 = vld [vmem:[%s2761 + $0x408] sm:$0xff]
    %v2892 = vld [vmem:[%s2761 + $0x410] sm:$0xff]
    %v2893 = vld [vmem:[%s2761 + $0x418] sm:$0xff]
    %v2894 = vld [vmem:[%s2761 + $0x420] sm:$0xff]
    %v2895 = vld [vmem:[%s2761 + $0x428] sm:$0xff]
    %v2896 = vld [vmem:[%s2761 + $0x430] sm:$0xff]
    %v2897 = vld [vmem:[%s2761 + $0x438] sm:$0xff]
    %v2898 = vld [vmem:[%s2761 + $0x440] sm:$0xff]
    %v2899 = vld [vmem:[%s2761 + $0x448] sm:$0xff]
    %v2900 = vld [vmem:[%s2761 + $0x450] sm:$0xff]
    %v2901 = vld [vmem:[%s2761 + $0x458] sm:$0xff]
    %v2902 = vld [vmem:[%s2761 + $0x460] sm:$0xff]
    %v2903 = vld [vmem:[%s2761 + $0x468] sm:$0xff]
    %v2904 = vld [vmem:[%s2761 + $0x470] sm:$0xff]
    %v2905 = vld [vmem:[%s2761 + $0x478] sm:$0xff]
    %v2906 = vld [vmem:[%s2761 + $0x480] sm:$0xff]
    %v2907 = vld [vmem:[%s2761 + $0x488] sm:$0xff]
    %v2908 = vld [vmem:[%s2761 + $0x490] sm:$0xff]
    %v2909 = vld [vmem:[%s2761 + $0x498] sm:$0xff]
    %v2910 = vld [vmem:[%s2761 + $0x4a0] sm:$0xff]
    %v2911 = vld [vmem:[%s2761 + $0x4a8] sm:$0xff]
    %v2912 = vld [vmem:[%s2761 + $0x4b0] sm:$0xff]
    %v2913 = vld [vmem:[%s2761 + $0x4b8] sm:$0xff]
    %v2914 = vld [vmem:[%s2761 + $0x4c0] sm:$0xff]
    %v2915 = vld [vmem:[%s2761 + $0x4c8] sm:$0xff]
    %v2916 = vld [vmem:[%s2761 + $0x4d0] sm:$0xff]
    %v2917 = vld [vmem:[%s2761 + $0x4d8] sm:$0xff]
    %v2918 = vld [vmem:[%s2761 + $0x4e0] sm:$0xff]
    %v2919 = vld [vmem:[%s2761 + $0x4e8] sm:$0xff]
    %v2920 = vld [vmem:[%s2761 + $0x4f0] sm:$0xff]
    %v2921 = vld [vmem:[%s2761 + $0x4f8] sm:$0xff]
    %v2922 = vld [vmem:[%s2761 + $0x500] sm:$0xff]
    %v2923 = vld [vmem:[%s2761 + $0x508] sm:$0xff]
    %v2924 = vld [vmem:[%s2761 + $0x510] sm:$0xff]
    %v2925 = vld [vmem:[%s2761 + $0x518] sm:$0xff]
    %v2926 = vld [vmem:[%s2761 + $0x520] sm:$0xff]
    %v2927 = vld [vmem:[%s2761 + $0x528] sm:$0xff]
    %v2928 = vld [vmem:[%s2761 + $0x530] sm:$0xff]
    %v2929 = vld [vmem:[%s2761 + $0x538] sm:$0xff]
    %v2930 = vld [vmem:[%s2761 + $0x540] sm:$0xff]
    %v2931 = vld [vmem:[%s2761 + $0x548] sm:$0xff]
    %v2932 = vld [vmem:[%s2761 + $0x550] sm:$0xff]
    %v2933 = vld [vmem:[%s2761 + $0x558] sm:$0xff]
    %v2934 = vld [vmem:[%s2761 + $0x560] sm:$0xff]
    %v2935 = vld [vmem:[%s2761 + $0x568] sm:$0xff]
    %v2936 = vld [vmem:[%s2761 + $0x570] sm:$0xff]
    %v2937 = vld [vmem:[%s2761 + $0x578] sm:$0xff]
    %v2938 = vld [vmem:[%s2761 + $0x580] sm:$0xff]
    %v2939 = vld [vmem:[%s2761 + $0x588] sm:$0xff]
    %v2940 = vld [vmem:[%s2761 + $0x590] sm:$0xff]
    %v2941 = vld [vmem:[%s2761 + $0x598] sm:$0xff]
    %v2942 = vld [vmem:[%s2761 + $0x5a0] sm:$0xff]
    %v2943 = vld [vmem:[%s2761 + $0x5a8] sm:$0xff]
    %v2944 = vld [vmem:[%s2761 + $0x5b0] sm:$0xff]
    %v2945 = vld [vmem:[%s2761 + $0x5b8] sm:$0xff]
    %v2946 = vld [vmem:[%s2761 + $0x5c0] sm:$0xff]
    %v2947 = vld [vmem:[%s2761 + $0x5c8] sm:$0xff]
    %v2948 = vld [vmem:[%s2761 + $0x5d0] sm:$0xff]
    %v2949 = vld [vmem:[%s2761 + $0x5d8] sm:$0xff]
    %v2950 = vld [vmem:[%s2761 + $0x5e0] sm:$0xff]
    %v2951 = vld [vmem:[%s2761 + $0x5e8] sm:$0xff]
    %v2952 = vld [vmem:[%s2761 + $0x5f0] sm:$0xff]
    %v2953 = vld [vmem:[%s2761 + $0x5f8] sm:$0xff]
    %v2954 = vld [vmem:[%s2761 + $0x600] sm:$0xff]
    %v2955 = vld [vmem:[%s2761 + $0x608] sm:$0xff]
    %v2956 = vld [vmem:[%s2761 + $0x610] sm:$0xff]
    %v2957 = vld [vmem:[%s2761 + $0x618] sm:$0xff]
    %v2958 = vld [vmem:[%s2761 + $0x620] sm:$0xff]
    %v2959 = vld [vmem:[%s2761 + $0x628] sm:$0xff]
    %v2960 = vld [vmem:[%s2761 + $0x630] sm:$0xff]
    %v2961 = vld [vmem:[%s2761 + $0x638] sm:$0xff]
    %v2962 = vld [vmem:[%s2761 + $0x640] sm:$0xff]
    %v2963 = vld [vmem:[%s2761 + $0x648] sm:$0xff]
    %v2964 = vld [vmem:[%s2761 + $0x650] sm:$0xff]
    %v2965 = vld [vmem:[%s2761 + $0x658] sm:$0xff]
    %v2966 = vld [vmem:[%s2761 + $0x660] sm:$0xff]
    %v2967 = vld [vmem:[%s2761 + $0x668] sm:$0xff]
    %v2968 = vld [vmem:[%s2761 + $0x670] sm:$0xff]
    %v2969 = vld [vmem:[%s2761 + $0x678] sm:$0xff]
    %v2970 = vld [vmem:[%s2761 + $0x680] sm:$0xff]
    %v2971 = vld [vmem:[%s2761 + $0x688] sm:$0xff]
    %v2972 = vld [vmem:[%s2761 + $0x690] sm:$0xff]
    %v2973 = vld [vmem:[%s2761 + $0x698] sm:$0xff]
    %v2974 = vld [vmem:[%s2761 + $0x6a0] sm:$0xff]
    %v2975 = vld [vmem:[%s2761 + $0x6a8] sm:$0xff]
    %v2976 = vld [vmem:[%s2761 + $0x6b0] sm:$0xff]
    %v2977 = vld [vmem:[%s2761 + $0x6b8] sm:$0xff]
    %v2978 = vld [vmem:[%s2761 + $0x6c0] sm:$0xff]
    %v2979 = vld [vmem:[%s2761 + $0x6c8] sm:$0xff]
    %v2980 = vld [vmem:[%s2761 + $0x6d0] sm:$0xff]
    %v2981 = vld [vmem:[%s2761 + $0x6d8] sm:$0xff]
    %v2982 = vld [vmem:[%s2761 + $0x6e0] sm:$0xff]
    %v2983 = vld [vmem:[%s2761 + $0x6e8] sm:$0xff]
    %v2984 = vld [vmem:[%s2761 + $0x6f0] sm:$0xff]
    %v2985 = vld [vmem:[%s2761 + $0x6f8] sm:$0xff]
    %v2986 = vld [vmem:[%s2761 + $0x700] sm:$0xff]
    %v2987 = vld [vmem:[%s2761 + $0x708] sm:$0xff]
    %v2988 = vld [vmem:[%s2761 + $0x710] sm:$0xff]
    %v2989 = vld [vmem:[%s2761 + $0x718] sm:$0xff]
    %v2990 = vld [vmem:[%s2761 + $0x720] sm:$0xff]
    %v2991 = vld [vmem:[%s2761 + $0x728] sm:$0xff]
    %v2992 = vld [vmem:[%s2761 + $0x730] sm:$0xff]
    %v2993 = vld [vmem:[%s2761 + $0x738] sm:$0xff]
    %v2994 = vld [vmem:[%s2761 + $0x740] sm:$0xff]
    %v2995 = vld [vmem:[%s2761 + $0x748] sm:$0xff]
    %v2996 = vld [vmem:[%s2761 + $0x750] sm:$0xff]
    %v2997 = vld [vmem:[%s2761 + $0x758] sm:$0xff]
    %v2998 = vld [vmem:[%s2761 + $0x760] sm:$0xff]
    %v2999 = vld [vmem:[%s2761 + $0x768] sm:$0xff]
    %v3000 = vld [vmem:[%s2761 + $0x770] sm:$0xff]
    %v3001 = vld [vmem:[%s2761 + $0x778] sm:$0xff]
    %v3002 = vld [vmem:[%s2761 + $0x780] sm:$0xff]
    %v3003 = vld [vmem:[%s2761 + $0x788] sm:$0xff]
    %v3004 = vld [vmem:[%s2761 + $0x790] sm:$0xff]
    %v3005 = vld [vmem:[%s2761 + $0x798] sm:$0xff]
    %v3006 = vld [vmem:[%s2761 + $0x7a0] sm:$0xff]
    %v3007 = vld [vmem:[%s2761 + $0x7a8] sm:$0xff]
    %v3008 = vld [vmem:[%s2761 + $0x7b0] sm:$0xff]
    %v3009 = vld [vmem:[%s2761 + $0x7b8] sm:$0xff]
    %v3010 = vld [vmem:[%s2761 + $0x7c0] sm:$0xff]
    %v3011 = vld [vmem:[%s2761 + $0x7c8] sm:$0xff]
    %v3012 = vld [vmem:[%s2761 + $0x7d0] sm:$0xff]
    %v3013 = vld [vmem:[%s2761 + $0x7d8] sm:$0xff]
    %v3014 = vld [vmem:[%s2761 + $0x7e0] sm:$0xff]
    %v3015 = vld [vmem:[%s2761 + $0x7e8] sm:$0xff]
    %v3016 = vld [vmem:[%s2761 + $0x7f0] sm:$0xff]
    %v3017 = vld [vmem:[%s2761 + $0x7f8] sm:$0xff]
    %3018 = vmatprep.subr.mxu0 %v2763
    %3019 = vmatpush1.msra.mxu0 %v2762
    %3020 = vmatprep.subr.mxu0 %v2767
    %3021 = vmatpush1.msra.mxu0 %v2766
    %3022 = vmatprep.subr.mxu0 %v2771
    %3023 = vmatpush1.msra.mxu0 %v2770
    %3024 = vmatprep.subr.mxu0 %v2775
    %3025 = vmatpush1.msra.mxu0 %v2774
    %3026 = vmatprep.subr.mxu0 %v2779
    %3027 = vmatpush1.msra.mxu0 %v2778
    %3028 = vmatprep.subr.mxu0 %v2783
    %3029 = vmatpush1.msra.mxu0 %v2782
    %3030 = vmatprep.subr.mxu0 %v2787
    %3031 = vmatpush1.msra.mxu0 %v2786
    %3032 = vmatprep.subr.mxu0 %v2791
    %3033 = vmatpush1.msra.mxu0 %v2790
    %3034 = vmatprep.subr.mxu0 %v2795
    %3035 = vmatpush1.msra.mxu0 %v2794
    %3036 = vmatprep.subr.mxu0 %v2799
    %3037 = vmatpush1.msra.mxu0 %v2798
    %3038 = vmatprep.subr.mxu0 %v2803
    %3039 = vmatpush1.msra.mxu0 %v2802
    %3040 = vmatprep.subr.mxu0 %v2807
    %3041 = vmatpush1.msra.mxu0 %v2806
    %3042 = vmatprep.subr.mxu0 %v2811
    %3043 = vmatpush1.msra.mxu0 %v2810
    %3044 = vmatprep.subr.mxu0 %v2815
    %3045 = vmatpush1.msra.mxu0 %v2814
    %3046 = vmatprep.subr.mxu0 %v2819
    %3047 = vmatpush1.msra.mxu0 %v2818
    %3048 = vmatprep.subr.mxu0 %v2823
    %3049 = vmatpush1.msra.mxu0 %v2822
    %3050 = vmatprep.subr.mxu0 %v2827
    %3051 = vmatpush1.msra.mxu0 %v2826
    %3052 = vmatprep.subr.mxu0 %v2831
    %3053 = vmatpush1.msra.mxu0 %v2830
    %3054 = vmatprep.subr.mxu0 %v2835
    %3055 = vmatpush1.msra.mxu0 %v2834
    %3056 = vmatprep.subr.mxu0 %v2839
    %3057 = vmatpush1.msra.mxu0 %v2838
    %3058 = vmatprep.subr.mxu0 %v2843
    %3059 = vmatpush1.msra.mxu0 %v2842
    %3060 = vmatprep.subr.mxu0 %v2847
    %3061 = vmatpush1.msra.mxu0 %v2846
    %3062 = vmatprep.subr.mxu0 %v2851
    %3063 = vmatpush1.msra.mxu0 %v2850
    %3064 = vmatprep.subr.mxu0 %v2855
    %3065 = vmatpush1.msra.mxu0 %v2854
    %3066 = vmatprep.subr.mxu0 %v2859
    %3067 = vmatpush1.msra.mxu0 %v2858
    %3068 = vmatprep.subr.mxu0 %v2863
    %3069 = vmatpush1.msra.mxu0 %v2862
    %3070 = vmatprep.subr.mxu0 %v2867
    %3071 = vmatpush1.msra.mxu0 %v2866
    %3072 = vmatprep.subr.mxu0 %v2871
    %3073 = vmatpush1.msra.mxu0 %v2870
    %3074 = vmatprep.subr.mxu0 %v2875
    %3075 = vmatpush1.msra.mxu0 %v2874
    %3076 = vmatprep.subr.mxu0 %v2879
    %3077 = vmatpush1.msra.mxu0 %v2878
    %3078 = vmatprep.subr.mxu0 %v2883
    %3079 = vmatpush1.msra.mxu0 %v2882
    %3080 = vmatprep.subr.mxu0 %v2887
    %3081 = vmatpush1.msra.mxu0 %v2886
    %3082 = vmatprep.mubr.f32.mxu0 %v2652
    %3083 = vmatmul.mubr.f32.gmra.mrb[0].mxu0 %v2650
    %v3084 = vpop.f32.mrb[0].mxu0
    %v3085 = vadd.f32 0.0, %v3084
    %v3086 = vpop.f32.mrb[0].mxu0
    %v3087 = vadd.f32 0.0, %v3086
    %3088 = vmatprep.mubr.f32.mxu0 %v2658
    %3089 = vmatmul.mubr.f32.gmra.mrb[0].mxu0 %v2656
    %v3090 = vpop.f32.mrb[0].mxu0
    %v3091 = vadd.f32 0.0, %v3090
    %v3092 = vpop.f32.mrb[0].mxu0
    %v3093 = vadd.f32 0.0, %v3092
    %3094 = vmatprep.mubr.f32.mxu0 %v2664
    %3095 = vmatmul.mubr.f32.gmra.mrb[0].mxu0 %v2662
    %v3096 = vpop.f32.mrb[0].mxu0
    %v3097 = vadd.f32 0.0, %v3096
    %v3098 = vpop.f32.mrb[0].mxu0
    %v3099 = vadd.f32 0.0, %v3098
    %3100 = vmatprep.mubr.f32.mxu0 %v2670
    %3101 = vmatmul.mubr.f32.gmra.mrb[0].mxu0 %v2668
    %v3102 = vpop.f32.mrb[0].mxu0
    %v3103 = vadd.f32 0.0, %v3102
    %v3104 = vpop.f32.mrb[0].mxu0
    %v3105 = vadd.f32 0.0, %v3104
    %3106 = vdwg.mxu0
    %3107 = vmatprep.subr.mxu0 %v2891
    %3108 = vmatpush1.msra.mxu0 %v2890
    %3109 = vmatprep.subr.mxu0 %v2895
    %3110 = vmatpush1.msra.mxu0 %v2894
    %3111 = vmatprep.subr.mxu0 %v2899
    %3112 = vmatpush1.msra.mxu0 %v2898
    %3113 = vmatprep.subr.mxu0 %v2903
    %3114 = vmatpush1.msra.mxu0 %v2902
    %3115 = vmatprep.subr.mxu0 %v2907
    %3116 = vmatpush1.msra.mxu0 %v2906
    %3117 = vmatprep.subr.mxu0 %v2911
    %3118 = vmatpush1.msra.mxu0 %v2910
    %3119 = vmatprep.subr.mxu0 %v2915
    %3120 = vmatpush1.msra.mxu0 %v2914
    %3121 = vmatprep.subr.mxu0 %v2919
    %3122 = vmatpush1.msra.mxu0 %v2918
    %3123 = vmatprep.subr.mxu0 %v2923
    %3124 = vmatpush1.msra.mxu0 %v2922
    %3125 = vmatprep.subr.mxu0 %v2927
    %3126 = vmatpush1.msra.mxu0 %v2926
    %3127 = vmatprep.subr.mxu0 %v2931
    %3128 = vmatpush1.msra.mxu0 %v2930
    %3129 = vmatprep.subr.mxu0 %v2935
    %3130 = vmatpush1.msra.mxu0 %v2934
    %3131 = vmatprep.subr.mxu0 %v2939
    %3132 = vmatpush1.msra.mxu0 %v2938
    %3133 = vmatprep.subr.mxu0 %v2943
    %3134 = vmatpush1.msra.mxu0 %v2942
    %3135 = vmatprep.subr.mxu0 %v2947
    %3136 = vmatpush1.msra.mxu0 %v2946
    %3137 = vmatprep.subr.mxu0 %v2951
    %3138 = vmatpush1.msra.mxu0 %v2950
    %3139 = vmatprep.subr.mxu0 %v2955
    %3140 = vmatpush1.msra.mxu0 %v2954
    %3141 = vmatprep.subr.mxu0 %v2959
    %3142 = vmatpush1.msra.mxu0 %v2958
    %3143 = vmatprep.subr.mxu0 %v2963
    %3144 = vmatpush1.msra.mxu0 %v2962
    %3145 = vmatprep.subr.mxu0 %v2967
    %3146 = vmatpush1.msra.mxu0 %v2966
    %3147 = vmatprep.subr.mxu0 %v2971
    %3148 = vmatpush1.msra.mxu0 %v2970
    %3149 = vmatprep.subr.mxu0 %v2975
    %3150 = vmatpush1.msra.mxu0 %v2974
    %3151 = vmatprep.subr.mxu0 %v2979
    %3152 = vmatpush1.msra.mxu0 %v2978
    %3153 = vmatprep.subr.mxu0 %v2983
    %3154 = vmatpush1.msra.mxu0 %v2982
    %3155 = vmatprep.subr.mxu0 %v2987
    %3156 = vmatpush1.msra.mxu0 %v2986
    %3157 = vmatprep.subr.mxu0 %v2991
    %3158 = vmatpush1.msra.mxu0 %v2990
    %3159 = vmatprep.subr.mxu0 %v2995
    %3160 = vmatpush1.msra.mxu0 %v2994
    %3161 = vmatprep.subr.mxu0 %v2999
    %3162 = vmatpush1.msra.mxu0 %v2998
    %3163 = vmatprep.subr.mxu0 %v3003
    %3164 = vmatpush1.msra.mxu0 %v3002
    %3165 = vmatprep.subr.mxu0 %v3007
    %3166 = vmatpush1.msra.mxu0 %v3006
    %3167 = vmatprep.subr.mxu0 %v3011
    %3168 = vmatpush1.msra.mxu0 %v3010
    %3169 = vmatprep.subr.mxu0 %v3015
    %3170 = vmatpush1.msra.mxu0 %v3014
    %3171 = vmatprep.mubr.f32.mxu0 %v2741
    %3172 = vmatmul.mubr.f32.gmra.mrb[0].mxu0 %v2739
    %v3173 = vpop.f32.mrb[0].mxu0
    %v3174 = vadd.f32 %v3085, %v3173
    %v3175 = vpop.f32.mrb[0].mxu0
    %v3176 = vadd.f32 %v3087, %v3175
    %3177 = vmatprep.mubr.f32.mxu0 %v2747
    %3178 = vmatmul.mubr.f32.gmra.mrb[0].mxu0 %v2745
    %v3179 = vpop.f32.mrb[0].mxu0
    %v3180 = vadd.f32 %v3091, %v3179
    %v3181 = vpop.f32.mrb[0].mxu0
    %v3182 = vadd.f32 %v3093, %v3181
    %3183 = vmatprep.mubr.f32.mxu0 %v2753
    %3184 = vmatmul.mubr.f32.gmra.mrb[0].mxu0 %v2751
    %v3185 = vpop.f32.mrb[0].mxu0
    %v3186 = vadd.f32 %v3097, %v3185
    %v3187 = vpop.f32.mrb[0].mxu0
    %v3188 = vadd.f32 %v3099, %v3187
    %3189 = vmatprep.mubr.f32.mxu0 %v2759
    %3190 = vmatmul.mubr.f32.gmra.mrb[0].mxu0 %v2757
    %v3191 = vpop.f32.mrb[0].mxu0
    %v3192 = vadd.f32 %v3103, %v3191
    %v3193 = vpop.f32.mrb[0].mxu0
    %v3194 = vadd.f32 %v3105, %v3193
    %3195 = vdwg.mxu0
    %3196 = vmatprep.subr.mxu0 %v2765
    %3197 = vmatpush1.msra.mxu0 %v2764
    %3198 = vmatprep.subr.mxu0 %v2769
    %3199 = vmatpush1.msra.mxu0 %v2768
    %3200 = vmatprep.subr.mxu0 %v2773
    %3201 = vmatpush1.msra.mxu0 %v2772
    %3202 = vmatprep.subr.mxu0 %v2777
    %3203 = vmatpush1.msra.mxu0 %v2776
    %3204 = vmatprep.subr.mxu0 %v2781
    %3205 = vmatpush1.msra.mxu0 %v2780
    %3206 = vmatprep.subr.mxu0 %v2785
    %3207 = vmatpush1.msra.mxu0 %v2784
    %3208 = vmatprep.subr.mxu0 %v2789
    %3209 = vmatpush1.msra.mxu0 %v2788
    %3210 = vmatprep.subr.mxu0 %v2793
    %3211 = vmatpush1.msra.mxu0 %v2792
    %3212 = vmatprep.subr.mxu0 %v2797
    %3213 = vmatpush1.msra.mxu0 %v2796
    %3214 = vmatprep.subr.mxu0 %v2801
    %3215 = vmatpush1.msra.mxu0 %v2800
    %3216 = vmatprep.subr.mxu0 %v2805
    %3217 = vmatpush1.msra.mxu0 %v2804
    %3218 = vmatprep.subr.mxu0 %v2809
    %3219 = vmatpush1.msra.mxu0 %v2808
    %3220 = vmatprep.subr.mxu0 %v2813
    %3221 = vmatpush1.msra.mxu0 %v2812
    %3222 = vmatprep.subr.mxu0 %v2817
    %3223 = vmatpush1.msra.mxu0 %v2816
    %3224 = vmatprep.subr.mxu0 %v2821
    %3225 = vmatpush1.msra.mxu0 %v2820
    %3226 = vmatprep.subr.mxu0 %v2825
    %3227 = vmatpush1.msra.mxu0 %v2824
    %3228 = vmatprep.subr.mxu0 %v2829
    %3229 = vmatpush1.msra.mxu0 %v2828
    %3230 = vmatprep.subr.mxu0 %v2833
    %3231 = vmatpush1.msra.mxu0 %v2832
    %3232 = vmatprep.subr.mxu0 %v2837
    %3233 = vmatpush1.msra.mxu0 %v2836
    %3234 = vmatprep.subr.mxu0 %v2841
    %3235 = vmatpush1.msra.mxu0 %v2840
    %3236 = vmatprep.subr.mxu0 %v2845
    %3237 = vmatpush1.msra.mxu0 %v2844
    %3238 = vmatprep.subr.mxu0 %v2849
    %3239 = vmatpush1.msra.mxu0 %v2848
    %3240 = vmatprep.subr.mxu0 %v2853
    %3241 = vmatpush1.msra.mxu0 %v2852
    %3242 = vmatprep.subr.mxu0 %v2857
    %3243 = vmatpush1.msra.mxu0 %v2856
    %3244 = vmatprep.subr.mxu0 %v2861
    %3245 = vmatpush1.msra.mxu0 %v2860
    %3246 = vmatprep.subr.mxu0 %v2865
    %3247 = vmatpush1.msra.mxu0 %v2864
    %3248 = vmatprep.subr.mxu0 %v2869
    %3249 = vmatpush1.msra.mxu0 %v2868
    %3250 = vmatprep.subr.mxu0 %v2873
    %3251 = vmatpush1.msra.mxu0 %v2872
    %3252 = vmatprep.subr.mxu0 %v2877
    %3253 = vmatpush1.msra.mxu0 %v2876
    %3254 = vmatprep.subr.mxu0 %v2881
    %3255 = vmatpush1.msra.mxu0 %v2880
    %3256 = vmatprep.subr.mxu0 %v2885
    %3257 = vmatpush1.msra.mxu0 %v2884
    %3258 = vmatprep.subr.mxu0 %v2889
    %3259 = vmatpush1.msra.mxu0 %v2888
    %3260 = vmatprep.mubr.f32.mxu0 %v2652
    %3261 = vmatmul.mubr.f32.gmra.mrb[0].mxu0 %v2650
    %v3262 = vpop.f32.mrb[0].mxu0
    %v3263 = vadd.f32 0.0, %v3262
    %v3264 = vpop.f32.mrb[0].mxu0
    %v3265 = vadd.f32 0.0, %v3264
    %3266 = vmatprep.mubr.f32.mxu0 %v2658
    %3267 = vmatmul.mubr.f32.gmra.mrb[0].mxu0 %v2656
    %v3268 = vpop.f32.mrb[0].mxu0
    %v3269 = vadd.f32 0.0, %v3268
    %v3270 = vpop.f32.mrb[0].mxu0
    %v3271 = vadd.f32 0.0, %v3270
    %3272 = vmatprep.mubr.f32.mxu0 %v2664
    %3273 = vmatmul.mubr.f32.gmra.mrb[0].mxu0 %v2662
    %v3274 = vpop.f32.mrb[0].mxu0
    %v3275 = vadd.f32 0.0, %v3274
    %v3276 = vpop.f32.mrb[0].mxu0
    %v3277 = vadd.f32 0.0, %v3276
    %3278 = vmatprep.mubr.f32.mxu0 %v2670
    %3279 = vmatmul.mubr.f32.gmra.mrb[0].mxu0 %v2668
    %v3280 = vpop.f32.mrb[0].mxu0
    %v3281 = vadd.f32 0.0, %v3280
    %v3282 = vpop.f32.mrb[0].mxu0
    %v3283 = vadd.f32 0.0, %v3282
    %3284 = vdwg.mxu0
    %3285 = vmatprep.subr.mxu0 %v2893
    %3286 = vmatpush1.msra.mxu0 %v2892
    %3287 = vmatprep.subr.mxu0 %v2897
    %3288 = vmatpush1.msra.mxu0 %v2896
    %3289 = vmatprep.subr.mxu0 %v2901
    %3290 = vmatpush1.msra.mxu0 %v2900
    %3291 = vmatprep.subr.mxu0 %v2905
    %3292 = vmatpush1.msra.mxu0 %v2904
    %3293 = vmatprep.subr.mxu0 %v2909
    %3294 = vmatpush1.msra.mxu0 %v2908
    %3295 = vmatprep.subr.mxu0 %v2913
    %3296 = vmatpush1.msra.mxu0 %v2912
    %3297 = vmatprep.subr.mxu0 %v2917
    %3298 = vmatpush1.msra.mxu0 %v2916
    %3299 = vmatprep.subr.mxu0 %v2921
    %3300 = vmatpush1.msra.mxu0 %v2920
    %3301 = vmatprep.subr.mxu0 %v2925
    %3302 = vmatpush1.msra.mxu0 %v2924
    %3303 = vmatprep.subr.mxu0 %v2929
    %3304 = vmatpush1.msra.mxu0 %v2928
    %3305 = vmatprep.subr.mxu0 %v2933
    %3306 = vmatpush1.msra.mxu0 %v2932
    %3307 = vmatprep.subr.mxu0 %v2937
    %3308 = vmatpush1.msra.mxu0 %v2936
    %3309 = vmatprep.subr.mxu0 %v2941
    %3310 = vmatpush1.msra.mxu0 %v2940
    %3311 = vmatprep.subr.mxu0 %v2945
    %3312 = vmatpush1.msra.mxu0 %v2944
    %3313 = vmatprep.subr.mxu0 %v2949
    %3314 = vmatpush1.msra.mxu0 %v2948
    %3315 = vmatprep.subr.mxu0 %v2953
    %3316 = vmatpush1.msra.mxu0 %v2952
    %3317 = vmatprep.subr.mxu0 %v2957
    %3318 = vmatpush1.msra.mxu0 %v2956
    %3319 = vmatprep.subr.mxu0 %v2961
    %3320 = vmatpush1.msra.mxu0 %v2960
    %3321 = vmatprep.subr.mxu0 %v2965
    %3322 = vmatpush1.msra.mxu0 %v2964
    %3323 = vmatprep.subr.mxu0 %v2969
    %3324 = vmatpush1.msra.mxu0 %v2968
    %3325 = vmatprep.subr.mxu0 %v2973
    %3326 = vmatpush1.msra.mxu0 %v2972
    %3327 = vmatprep.subr.mxu0 %v2977
    %3328 = vmatpush1.msra.mxu0 %v2976
    %3329 = vmatprep.subr.mxu0 %v2981
    %3330 = vmatpush1.msra.mxu0 %v2980
    %3331 = vmatprep.subr.mxu0 %v2985
    %3332 = vmatpush1.msra.mxu0 %v2984
    %3333 = vmatprep.subr.mxu0 %v2989
    %3334 = vmatpush1.msra.mxu0 %v2988
    %3335 = vmatprep.subr.mxu0 %v2993
    %3336 = vmatpush1.msra.mxu0 %v2992
    %3337 = vmatprep.subr.mxu0 %v2997
    %3338 = vmatpush1.msra.mxu0 %v2996
    %3339 = vmatprep.subr.mxu0 %v3001
    %3340 = vmatpush1.msra.mxu0 %v3000
    %3341 = vmatprep.subr.mxu0 %v3005
    %3342 = vmatpush1.msra.mxu0 %v3004
    %3343 = vmatprep.subr.mxu0 %v3009
    %3344 = vmatpush1.msra.mxu0 %v3008
    %3345 = vmatprep.subr.mxu0 %v3013
    %3346 = vmatpush1.msra.mxu0 %v3012
    %3347 = vmatprep.subr.mxu0 %v3017
    %3348 = vmatpush1.msra.mxu0 %v3016
    %3349 = vmatprep.mubr.f32.mxu0 %v2741
    %3350 = vmatmul.mubr.f32.gmra.mrb[0].mxu0 %v2739
    %v3351 = vpop.f32.mrb[0].mxu0
    %v3352 = vadd.f32 %v3263, %v3351
    %v3353 = vpop.f32.mrb[0].mxu0
    %v3354 = vadd.f32 %v3265, %v3353
    %3355 = vmatprep.mubr.f32.mxu0 %v2747
    %3356 = vmatmul.mubr.f32.gmra.mrb[0].mxu0 %v2745
    %v3357 = vpop.f32.mrb[0].mxu0
    %v3358 = vadd.f32 %v3269, %v3357
    %v3359 = vpop.f32.mrb[0].mxu0
    %v3360 = vadd.f32 %v3271, %v3359
    %3361 = vmatprep.mubr.f32.mxu0 %v2753
    %3362 = vmatmul.mubr.f32.gmra.mrb[0].mxu0 %v2751
    %v3363 = vpop.f32.mrb[0].mxu0
    %v3364 = vadd.f32 %v3275, %v3363
    %v3365 = vpop.f32.mrb[0].mxu0
    %v3366 = vadd.f32 %v3277, %v3365
    %3367 = vmatprep.mubr.f32.mxu0 %v2759
    %3368 = vmatmul.mubr.f32.gmra.mrb[0].mxu0 %v2757
    %v3369 = vpop.f32.mrb[0].mxu0
    %v3370 = vadd.f32 %v3281, %v3369
    %v3371 = vpop.f32.mrb[0].mxu0
    %v3372 = vadd.f32 %v3283, %v3371
    %3373 = vdwg.mxu0
    %v3374 = vadd.f32 %v2383, %v3174
    %v3375 = vadd.f32 %v2385, %v3176
    %v3376 = vadd.f32 %v2561, %v3352
    %v3377 = vadd.f32 %v2563, %v3354
    %v3378 = vadd.f32 %v2389, %v3180
    %v3379 = vadd.f32 %v2391, %v3182
    %v3380 = vadd.f32 %v2567, %v3358
    %v3381 = vadd.f32 %v2569, %v3360
    %v3382 = vadd.f32 %v2395, %v3186
    %v3383 = vadd.f32 %v2397, %v3188
    %v3384 = vadd.f32 %v2573, %v3364
    %v3385 = vadd.f32 %v2575, %v3366
    %v3386 = vadd.f32 %v2401, %v3192
    %v3387 = vadd.f32 %v2403, %v3194
    %v3388 = vadd.f32 %v2579, %v3370
    %v3389 = vadd.f32 %v2581, %v3372
    %v3390 = vld [vmem:[#allocation13] sm:$0xf]
    %v3392 = vlaneseq
    %v3393 = vshrl.u32 %v3392, 7
    %v3394 = vsub.s32 0, %v3393
    %v3395 = vrot.slane %v3390, %v3394
    %v3396 = vlaneseq
    %v3397 = vshrl.u32 %v3396, 7
    %v3398 = vsub.s32 1, %v3397
    %v3399 = vrot.slane %v3390, %v3398
    %v3400 = vlaneseq
    %v3401 = vshrl.u32 %v3400, 7
    %v3402 = vsub.s32 2, %v3401
    %v3403 = vrot.slane %v3390, %v3402
    %v3404 = vlaneseq
    %v3405 = vshrl.u32 %v3404, 7
    %v3406 = vsub.s32 3, %v3405
    %v3407 = vrot.slane %v3390, %v3406
    %v3412 = vadd.f32 %v3374, %v3395
    %v3413 = vadd.f32 %v3375, %v3399
    %v3414 = vadd.f32 %v3376, %v3403
    %v3415 = vadd.f32 %v3377, %v3407
    %v3416 = vadd.f32 %v3378, %v3395
    %v3417 = vadd.f32 %v3379, %v3399
    %v3418 = vadd.f32 %v3380, %v3403
    %v3419 = vadd.f32 %v3381, %v3407
    %v3420 = vadd.f32 %v3382, %v3395
    %v3421 = vadd.f32 %v3383, %v3399
    %v3422 = vadd.f32 %v3384, %v3403
    %v3423 = vadd.f32 %v3385, %v3407
    %v3424 = vadd.f32 %v3386, %v3395
    %v3425 = vadd.f32 %v3387, %v3399
    %v3426 = vadd.f32 %v3388, %v3403
    %v3427 = vadd.f32 %v3389, %v3407
    %v3428 = vmax.f32 %v3412, 0.0
    %v3429 = vmax.f32 %v3413, 0.0
    %v3430 = vmax.f32 %v3414, 0.0
    %v3431 = vmax.f32 %v3415, 0.0
    %v3432 = vmax.f32 %v3416, 0.0
    %v3433 = vmax.f32 %v3417, 0.0
    %v3434 = vmax.f32 %v3418, 0.0
    %v3435 = vmax.f32 %v3419, 0.0
    %v3436 = vmax.f32 %v3420, 0.0
    %v3437 = vmax.f32 %v3421, 0.0
    %v3438 = vmax.f32 %v3422, 0.0
    %v3439 = vmax.f32 %v3423, 0.0
    %v3440 = vmax.f32 %v3424, 0.0
    %v3441 = vmax.f32 %v3425, 0.0
    %v3442 = vmax.f32 %v3426, 0.0
    %v3443 = vmax.f32 %v3427, 0.0
    %v3444 = vld [vmem:[#allocation14] sm:$0xff]
    %v3445 = vld [vmem:[#allocation14 + $0x8] sm:$0xff]
    %v3447 = vsel %vm318, %v3444, 0
    %v3450 = vsel %vm318, %v3445, 0
    %3452 = vmatprep.subr.mxu0 %v3429
    %3453 = vmatpush1.msra.mxu0 %v3428
    %3454 = vmatprep.subr.mxu0 %v3433
    %3455 = vmatpush1.msra.mxu0 %v3432
    %3456 = vmatprep.subr.mxu0 %v3437
    %3457 = vmatpush1.msra.mxu0 %v3436
    %3458 = vmatprep.subr.mxu0 %v3441
    %3459 = vmatpush1.msra.mxu0 %v3440
    %3460 = vmatprep.subr.mxu0 0.0
    %3461 = vmatpush1.msra.mxu0 0.0
    %3462 = vmatprep.subr.mxu0 0.0
    %3463 = vmatpush1.msra.mxu0 0.0
    %3464 = vmatprep.subr.mxu0 0.0
    %3465 = vmatpush1.msra.mxu0 0.0
    %3466 = vmatprep.subr.mxu0 0.0
    %3467 = vmatpush1.msra.mxu0 0.0
    %3468 = vmatprep.subr.mxu0 0.0
    %3469 = vmatpush1.msra.mxu0 0.0
    %3470 = vmatprep.subr.mxu0 0.0
    %3471 = vmatpush1.msra.mxu0 0.0
    %3472 = vmatprep.subr.mxu0 0.0
    %3473 = vmatpush1.msra.mxu0 0.0
    %3474 = vmatprep.subr.mxu0 0.0
    %3475 = vmatpush1.msra.mxu0 0.0
    %3476 = vmatprep.subr.mxu0 0.0
    %3477 = vmatpush1.msra.mxu0 0.0
    %3478 = vmatprep.subr.mxu0 0.0
    %3479 = vmatpush1.msra.mxu0 0.0
    %3480 = vmatprep.subr.mxu0 0.0
    %3481 = vmatpush1.msra.mxu0 0.0
    %3482 = vmatprep.subr.mxu0 0.0
    %3483 = vmatpush1.msra.mxu0 0.0
    %3484 = vmatprep.subr.mxu0 0.0
    %3485 = vmatpush1.msra.mxu0 0.0
    %3486 = vmatprep.subr.mxu0 0.0
    %3487 = vmatpush1.msra.mxu0 0.0
    %3488 = vmatprep.subr.mxu0 0.0
    %3489 = vmatpush1.msra.mxu0 0.0
    %3490 = vmatprep.subr.mxu0 0.0
    %3491 = vmatpush1.msra.mxu0 0.0
    %3492 = vmatprep.subr.mxu0 0.0
    %3493 = vmatpush1.msra.mxu0 0.0
    %3494 = vmatprep.subr.mxu0 0.0
    %3495 = vmatpush1.msra.mxu0 0.0
    %3496 = vmatprep.subr.mxu0 0.0
    %3497 = vmatpush1.msra.mxu0 0.0
    %3498 = vmatprep.subr.mxu0 0.0
    %3499 = vmatpush1.msra.mxu0 0.0
    %3500 = vmatprep.subr.mxu0 0.0
    %3501 = vmatpush1.msra.mxu0 0.0
    %3502 = vmatprep.subr.mxu0 0.0
    %3503 = vmatpush1.msra.mxu0 0.0
    %3504 = vmatprep.subr.mxu0 0.0
    %3505 = vmatpush1.msra.mxu0 0.0
    %3506 = vmatprep.subr.mxu0 0.0
    %3507 = vmatpush1.msra.mxu0 0.0
    %3508 = vmatprep.subr.mxu0 0.0
    %3509 = vmatpush1.msra.mxu0 0.0
    %3510 = vmatprep.subr.mxu0 0.0
    %3511 = vmatpush1.msra.mxu0 0.0
    %3512 = vmatprep.subr.mxu0 0.0
    %3513 = vmatpush1.msra.mxu0 0.0
    %3514 = vmatprep.subr.mxu0 0.0
    %3515 = vmatpush1.msra.mxu0 0.0
    %3516 = vmatprep.mubr.f32.mxu0 0.0
    %3517 = vmatmul.mubr.f32.gmra.mrb[0].mxu0 %v3447
    %v3518 = vpop.f32.mrb[0].mxu0
    %v3519 = vadd.f32 0.0, %v3518
    %v3520 = vpop.f32.mrb[0].mxu0
    %v3521 = vadd.f32 0.0, %v3520
    %3522 = vmatprep.mubr.f32.mxu0 0.0
    %3523 = vmatmul.mubr.f32.gmra.mrb[0].mxu0 %v3450
    %v3524 = vpop.f32.mrb[0].mxu0
    %v3525 = vadd.f32 0.0, %v3524
    %v3526 = vpop.f32.mrb[0].mxu0
    %v3527 = vadd.f32 0.0, %v3526
    %3528 = vdwg.mxu0
    %3529 = vmatprep.subr.mxu0 %v3431
    %3530 = vmatpush1.msra.mxu0 %v3430
    %3531 = vmatprep.subr.mxu0 %v3435
    %3532 = vmatpush1.msra.mxu0 %v3434
    %3533 = vmatprep.subr.mxu0 %v3439
    %3534 = vmatpush1.msra.mxu0 %v3438
    %3535 = vmatprep.subr.mxu0 %v3443
    %3536 = vmatpush1.msra.mxu0 %v3442
    %3537 = vmatprep.subr.mxu0 0.0
    %3538 = vmatpush1.msra.mxu0 0.0
    %3539 = vmatprep.subr.mxu0 0.0
    %3540 = vmatpush1.msra.mxu0 0.0
    %3541 = vmatprep.subr.mxu0 0.0
    %3542 = vmatpush1.msra.mxu0 0.0
    %3543 = vmatprep.subr.mxu0 0.0
    %3544 = vmatpush1.msra.mxu0 0.0
    %3545 = vmatprep.subr.mxu0 0.0
    %3546 = vmatpush1.msra.mxu0 0.0
    %3547 = vmatprep.subr.mxu0 0.0
    %3548 = vmatpush1.msra.mxu0 0.0
    %3549 = vmatprep.subr.mxu0 0.0
    %3550 = vmatpush1.msra.mxu0 0.0
    %3551 = vmatprep.subr.mxu0 0.0
    %3552 = vmatpush1.msra.mxu0 0.0
    %3553 = vmatprep.subr.mxu0 0.0
    %3554 = vmatpush1.msra.mxu0 0.0
    %3555 = vmatprep.subr.mxu0 0.0
    %3556 = vmatpush1.msra.mxu0 0.0
    %3557 = vmatprep.subr.mxu0 0.0
    %3558 = vmatpush1.msra.mxu0 0.0
    %3559 = vmatprep.subr.mxu0 0.0
    %3560 = vmatpush1.msra.mxu0 0.0
    %3561 = vmatprep.subr.mxu0 0.0
    %3562 = vmatpush1.msra.mxu0 0.0
    %3563 = vmatprep.subr.mxu0 0.0
    %3564 = vmatpush1.msra.mxu0 0.0
    %3565 = vmatprep.subr.mxu0 0.0
    %3566 = vmatpush1.msra.mxu0 0.0
    %3567 = vmatprep.subr.mxu0 0.0
    %3568 = vmatpush1.msra.mxu0 0.0
    %3569 = vmatprep.subr.mxu0 0.0
    %3570 = vmatpush1.msra.mxu0 0.0
    %3571 = vmatprep.subr.mxu0 0.0
    %3572 = vmatpush1.msra.mxu0 0.0
    %3573 = vmatprep.subr.mxu0 0.0
    %3574 = vmatpush1.msra.mxu0 0.0
    %3575 = vmatprep.subr.mxu0 0.0
    %3576 = vmatpush1.msra.mxu0 0.0
    %3577 = vmatprep.subr.mxu0 0.0
    %3578 = vmatpush1.msra.mxu0 0.0
    %3579 = vmatprep.subr.mxu0 0.0
    %3580 = vmatpush1.msra.mxu0 0.0
    %3581 = vmatprep.subr.mxu0 0.0
    %3582 = vmatpush1.msra.mxu0 0.0
    %3583 = vmatprep.subr.mxu0 0.0
    %3584 = vmatpush1.msra.mxu0 0.0
    %3585 = vmatprep.subr.mxu0 0.0
    %3586 = vmatpush1.msra.mxu0 0.0
    %3587 = vmatprep.subr.mxu0 0.0
    %3588 = vmatpush1.msra.mxu0 0.0
    %3589 = vmatprep.subr.mxu0 0.0
    %3590 = vmatpush1.msra.mxu0 0.0
    %3591 = vmatprep.subr.mxu0 0.0
    %3592 = vmatpush1.msra.mxu0 0.0
    %3593 = vmatprep.mubr.f32.mxu0 0.0
    %3594 = vmatmul.mubr.f32.gmra.mrb[0].mxu0 %v3447
    %v3595 = vpop.f32.mrb[0].mxu0
    %v3596 = vadd.f32 0.0, %v3595
    %v3597 = vpop.f32.mrb[0].mxu0
    %v3598 = vadd.f32 0.0, %v3597
    %3599 = vmatprep.mubr.f32.mxu0 0.0
    %3600 = vmatmul.mubr.f32.gmra.mrb[0].mxu0 %v3450
    %v3601 = vpop.f32.mrb[0].mxu0
    %v3602 = vadd.f32 0.0, %v3601
    %v3603 = vpop.f32.mrb[0].mxu0
    %v3604 = vadd.f32 0.0, %v3603
    %3605 = vdwg.mxu0
    %v3606 = vld [vmem:[#allocation16] sm:$0xff]
    %v3607 = vld [vmem:[#allocation16 + $0x8] sm:$0xff]
    %v3609 = vsel %vm318, %v3606, 0
    %v3612 = vsel %vm318, %v3607, 0
    %3614 = vmatprep.subr.mxu0 %v3429
    %3615 = vmatpush1.msra.mxu0 %v3428
    %3616 = vmatprep.subr.mxu0 %v3433
    %3617 = vmatpush1.msra.mxu0 %v3432
    %3618 = vmatprep.subr.mxu0 %v3437
    %3619 = vmatpush1.msra.mxu0 %v3436
    %3620 = vmatprep.subr.mxu0 %v3441
    %3621 = vmatpush1.msra.mxu0 %v3440
    %3622 = vmatprep.subr.mxu0 0.0
    %3623 = vmatpush1.msra.mxu0 0.0
    %3624 = vmatprep.subr.mxu0 0.0
    %3625 = vmatpush1.msra.mxu0 0.0
    %3626 = vmatprep.subr.mxu0 0.0
    %3627 = vmatpush1.msra.mxu0 0.0
    %3628 = vmatprep.subr.mxu0 0.0
    %3629 = vmatpush1.msra.mxu0 0.0
    %3630 = vmatprep.subr.mxu0 0.0
    %3631 = vmatpush1.msra.mxu0 0.0
    %3632 = vmatprep.subr.mxu0 0.0
    %3633 = vmatpush1.msra.mxu0 0.0
    %3634 = vmatprep.subr.mxu0 0.0
    %3635 = vmatpush1.msra.mxu0 0.0
    %3636 = vmatprep.subr.mxu0 0.0
    %3637 = vmatpush1.msra.mxu0 0.0
    %3638 = vmatprep.subr.mxu0 0.0
    %3639 = vmatpush1.msra.mxu0 0.0
    %3640 = vmatprep.subr.mxu0 0.0
    %3641 = vmatpush1.msra.mxu0 0.0
    %3642 = vmatprep.subr.mxu0 0.0
    %3643 = vmatpush1.msra.mxu0 0.0
    %3644 = vmatprep.subr.mxu0 0.0
    %3645 = vmatpush1.msra.mxu0 0.0
    %3646 = vmatprep.subr.mxu0 0.0
    %3647 = vmatpush1.msra.mxu0 0.0
    %3648 = vmatprep.subr.mxu0 0.0
    %3649 = vmatpush1.msra.mxu0 0.0
    %3650 = vmatprep.subr.mxu0 0.0
    %3651 = vmatpush1.msra.mxu0 0.0
    %3652 = vmatprep.subr.mxu0 0.0
    %3653 = vmatpush1.msra.mxu0 0.0
    %3654 = vmatprep.subr.mxu0 0.0
    %3655 = vmatpush1.msra.mxu0 0.0
    %3656 = vmatprep.subr.mxu0 0.0
    %3657 = vmatpush1.msra.mxu0 0.0
    %3658 = vmatprep.subr.mxu0 0.0
    %3659 = vmatpush1.msra.mxu0 0.0
    %3660 = vmatprep.subr.mxu0 0.0
    %3661 = vmatpush1.msra.mxu0 0.0
    %3662 = vmatprep.subr.mxu0 0.0
    %3663 = vmatpush1.msra.mxu0 0.0
    %3664 = vmatprep.subr.mxu0 0.0
    %3665 = vmatpush1.msra.mxu0 0.0
    %3666 = vmatprep.subr.mxu0 0.0
    %3667 = vmatpush1.msra.mxu0 0.0
    %3668 = vmatprep.subr.mxu0 0.0
    %3669 = vmatpush1.msra.mxu0 0.0
    %3670 = vmatprep.subr.mxu0 0.0
    %3671 = vmatpush1.msra.mxu0 0.0
    %3672 = vmatprep.subr.mxu0 0.0
    %3673 = vmatpush1.msra.mxu0 0.0
    %3674 = vmatprep.subr.mxu0 0.0
    %3675 = vmatpush1.msra.mxu0 0.0
    %3676 = vmatprep.subr.mxu0 0.0
    %3677 = vmatpush1.msra.mxu0 0.0
    %3678 = vmatprep.mubr.f32.mxu0 0.0
    %3679 = vmatmul.mubr.f32.gmra.mrb[0].mxu0 %v3609
    %v3680 = vpop.f32.mrb[0].mxu0
    %v3681 = vadd.f32 0.0, %v3680
    %v3682 = vpop.f32.mrb[0].mxu0
    %v3683 = vadd.f32 0.0, %v3682
    %3684 = vmatprep.mubr.f32.mxu0 0.0
    %3685 = vmatmul.mubr.f32.gmra.mrb[0].mxu0 %v3612
    %v3686 = vpop.f32.mrb[0].mxu0
    %v3687 = vadd.f32 0.0, %v3686
    %v3688 = vpop.f32.mrb[0].mxu0
    %v3689 = vadd.f32 0.0, %v3688
    %3690 = vdwg.mxu0
    %3691 = vmatprep.subr.mxu0 %v3431
    %3692 = vmatpush1.msra.mxu0 %v3430
    %3693 = vmatprep.subr.mxu0 %v3435
    %3694 = vmatpush1.msra.mxu0 %v3434
    %3695 = vmatprep.subr.mxu0 %v3439
    %3696 = vmatpush1.msra.mxu0 %v3438
    %3697 = vmatprep.subr.mxu0 %v3443
    %3698 = vmatpush1.msra.mxu0 %v3442
    %3699 = vmatprep.subr.mxu0 0.0
    %3700 = vmatpush1.msra.mxu0 0.0
    %3701 = vmatprep.subr.mxu0 0.0
    %3702 = vmatpush1.msra.mxu0 0.0
    %3703 = vmatprep.subr.mxu0 0.0
    %3704 = vmatpush1.msra.mxu0 0.0
    %3705 = vmatprep.subr.mxu0 0.0
    %3706 = vmatpush1.msra.mxu0 0.0
    %3707 = vmatprep.subr.mxu0 0.0
    %3708 = vmatpush1.msra.mxu0 0.0
    %3709 = vmatprep.subr.mxu0 0.0
    %3710 = vmatpush1.msra.mxu0 0.0
    %3711 = vmatprep.subr.mxu0 0.0
    %3712 = vmatpush1.msra.mxu0 0.0
    %3713 = vmatprep.subr.mxu0 0.0
    %3714 = vmatpush1.msra.mxu0 0.0
    %3715 = vmatprep.subr.mxu0 0.0
    %3716 = vmatpush1.msra.mxu0 0.0
    %3717 = vmatprep.subr.mxu0 0.0
    %3718 = vmatpush1.msra.mxu0 0.0
    %3719 = vmatprep.subr.mxu0 0.0
    %3720 = vmatpush1.msra.mxu0 0.0
    %3721 = vmatprep.subr.mxu0 0.0
    %3722 = vmatpush1.msra.mxu0 0.0
    %3723 = vmatprep.subr.mxu0 0.0
    %3724 = vmatpush1.msra.mxu0 0.0
    %3725 = vmatprep.subr.mxu0 0.0
    %3726 = vmatpush1.msra.mxu0 0.0
    %3727 = vmatprep.subr.mxu0 0.0
    %3728 = vmatpush1.msra.mxu0 0.0
    %3729 = vmatprep.subr.mxu0 0.0
    %3730 = vmatpush1.msra.mxu0 0.0
    %3731 = vmatprep.subr.mxu0 0.0
    %3732 = vmatpush1.msra.mxu0 0.0
    %3733 = vmatprep.subr.mxu0 0.0
    %3734 = vmatpush1.msra.mxu0 0.0
    %3735 = vmatprep.subr.mxu0 0.0
    %3736 = vmatpush1.msra.mxu0 0.0
    %3737 = vmatprep.subr.mxu0 0.0
    %3738 = vmatpush1.msra.mxu0 0.0
    %3739 = vmatprep.subr.mxu0 0.0
    %3740 = vmatpush1.msra.mxu0 0.0
    %3741 = vmatprep.subr.mxu0 0.0
    %3742 = vmatpush1.msra.mxu0 0.0
    %3743 = vmatprep.subr.mxu0 0.0
    %3744 = vmatpush1.msra.mxu0 0.0
    %3745 = vmatprep.subr.mxu0 0.0
    %3746 = vmatpush1.msra.mxu0 0.0
    %3747 = vmatprep.subr.mxu0 0.0
    %3748 = vmatpush1.msra.mxu0 0.0
    %3749 = vmatprep.subr.mxu0 0.0
    %3750 = vmatpush1.msra.mxu0 0.0
    %3751 = vmatprep.subr.mxu0 0.0
    %3752 = vmatpush1.msra.mxu0 0.0
    %3753 = vmatprep.subr.mxu0 0.0
    %3754 = vmatpush1.msra.mxu0 0.0
    %3755 = vmatprep.mubr.f32.mxu0 0.0
    %3756 = vmatmul.mubr.f32.gmra.mrb[0].mxu0 %v3609
    %v3757 = vpop.f32.mrb[0].mxu0
    %v3758 = vadd.f32 0.0, %v3757
    %v3759 = vpop.f32.mrb[0].mxu0
    %v3760 = vadd.f32 0.0, %v3759
    %3761 = vmatprep.mubr.f32.mxu0 0.0
    %3762 = vmatmul.mubr.f32.gmra.mrb[0].mxu0 %v3612
    %v3763 = vpop.f32.mrb[0].mxu0
    %v3764 = vadd.f32 0.0, %v3763
    %v3765 = vpop.f32.mrb[0].mxu0
    %v3766 = vadd.f32 0.0, %v3765
    %3767 = vdwg.mxu0
    %v3768 = vmax.f32 %v3519, %v3681
    %v3769 = vmax.f32 %v3521, %v3683
    %v3770 = vmax.f32 %v3596, %v3758
    %v3771 = vmax.f32 %v3598, %v3760
    %v3772 = vmax.f32 %v3525, %v3687
    %v3773 = vmax.f32 %v3527, %v3689
    %v3774 = vmax.f32 %v3602, %v3764
    %v3775 = vmax.f32 %v3604, %v3766
    %v3776 = vmax.f32 %v3768, %v3770
    %v3777 = vmax.f32 %v3769, %v3771
    %v3778 = vmax.f32 %v3772, %v3774
    %v3779 = vmax.f32 %v3773, %v3775
    %v3780 = vld [vmem:[#allocation17] sm:$0xff]
    %v3781 = vld [vmem:[#allocation17 + $0x8] sm:$0xff]
    %v3782 = vld [vmem:[#allocation19] sm:$0xff]
    %v3783 = vld [vmem:[#allocation19 + $0x8] sm:$0xff]
    %v3785 = vsel %vm433, %v3780, 0
    %v3788 = vsel %vm433, %v3781, 0
    %3790 = vmatprep.subr.mxu0 %v3777
    %3791 = vmatpush1.msra.mxu0 %v3776
    %3792 = vmatprep.subr.mxu0 %v3779
    %3793 = vmatpush1.msra.mxu0 %v3778
    %3794 = vmatprep.subr.mxu0 0.0
    %3795 = vmatpush1.msra.mxu0 0.0
    %3796 = vmatprep.subr.mxu0 0.0
    %3797 = vmatpush1.msra.mxu0 0.0
    %3798 = vmatprep.subr.mxu0 0.0
    %3799 = vmatpush1.msra.mxu0 0.0
    %3800 = vmatprep.subr.mxu0 0.0
    %3801 = vmatpush1.msra.mxu0 0.0
    %3802 = vmatprep.subr.mxu0 0.0
    %3803 = vmatpush1.msra.mxu0 0.0
    %3804 = vmatprep.subr.mxu0 0.0
    %3805 = vmatpush1.msra.mxu0 0.0
    %3806 = vmatprep.subr.mxu0 0.0
    %3807 = vmatpush1.msra.mxu0 0.0
    %3808 = vmatprep.subr.mxu0 0.0
    %3809 = vmatpush1.msra.mxu0 0.0
    %3810 = vmatprep.subr.mxu0 0.0
    %3811 = vmatpush1.msra.mxu0 0.0
    %3812 = vmatprep.subr.mxu0 0.0
    %3813 = vmatpush1.msra.mxu0 0.0
    %3814 = vmatprep.subr.mxu0 0.0
    %3815 = vmatpush1.msra.mxu0 0.0
    %3816 = vmatprep.subr.mxu0 0.0
    %3817 = vmatpush1.msra.mxu0 0.0
    %3818 = vmatprep.subr.mxu0 0.0
    %3819 = vmatpush1.msra.mxu0 0.0
    %3820 = vmatprep.subr.mxu0 0.0
    %3821 = vmatpush1.msra.mxu0 0.0
    %3822 = vmatprep.subr.mxu0 0.0
    %3823 = vmatpush1.msra.mxu0 0.0
    %3824 = vmatprep.subr.mxu0 0.0
    %3825 = vmatpush1.msra.mxu0 0.0
    %3826 = vmatprep.subr.mxu0 0.0
    %3827 = vmatpush1.msra.mxu0 0.0
    %3828 = vmatprep.subr.mxu0 0.0
    %3829 = vmatpush1.msra.mxu0 0.0
    %3830 = vmatprep.subr.mxu0 0.0
    %3831 = vmatpush1.msra.mxu0 0.0
    %3832 = vmatprep.subr.mxu0 0.0
    %3833 = vmatpush1.msra.mxu0 0.0
    %3834 = vmatprep.subr.mxu0 0.0
    %3835 = vmatpush1.msra.mxu0 0.0
    %3836 = vmatprep.subr.mxu0 0.0
    %3837 = vmatpush1.msra.mxu0 0.0
    %3838 = vmatprep.subr.mxu0 0.0
    %3839 = vmatpush1.msra.mxu0 0.0
    %3840 = vmatprep.subr.mxu0 0.0
    %3841 = vmatpush1.msra.mxu0 0.0
    %3842 = vmatprep.subr.mxu0 0.0
    %3843 = vmatpush1.msra.mxu0 0.0
    %3844 = vmatprep.subr.mxu0 0.0
    %3845 = vmatpush1.msra.mxu0 0.0
    %3846 = vmatprep.subr.mxu0 0.0
    %3847 = vmatpush1.msra.mxu0 0.0
    %3848 = vmatprep.subr.mxu0 0.0
    %3849 = vmatpush1.msra.mxu0 0.0
    %3850 = vmatprep.subr.mxu0 0.0
    %3851 = vmatpush1.msra.mxu0 0.0
    %3852 = vmatprep.subr.mxu0 0.0
    %3853 = vmatpush1.msra.mxu0 0.0
    %3854 = vmatprep.mubr.f32.mxu0 0.0
    %3855 = vmatmul.mubr.f32.gmra.mrb[0].mxu0 %v3785
    %v3856 = vpop.f32.mrb[0].mxu0
    %v3857 = vadd.f32 0.0, %v3856
    %v3858 = vpop.f32.mrb[0].mxu0
    %v3859 = vadd.f32 0.0, %v3858
    %3860 = vmatprep.mubr.f32.mxu0 0.0
    %3861 = vmatmul.mubr.f32.gmra.mrb[0].mxu0 %v3788
    %v3862 = vpop.f32.mrb[0].mxu0
    %v3863 = vadd.f32 0.0, %v3862
    %v3864 = vpop.f32.mrb[0].mxu0
    %v3865 = vadd.f32 0.0, %v3864
    %3866 = vdwg.mxu0
    %v3867 = vld [vmem:[#allocation20] sm:$0xff]
    %v3868 = vld [vmem:[#allocation20 + $0x8] sm:$0xff]
    %v3869 = vld [vmem:[#allocation20 + $0x10] sm:$0xff]
    %v3870 = vld [vmem:[#allocation20 + $0x18] sm:$0xff]
    %v3871 = vld [vmem:[#allocation20 + $0x20] sm:$0xff]
    %v3872 = vld [vmem:[#allocation20 + $0x28] sm:$0xff]
    %v3873 = vld [vmem:[#allocation20 + $0x30] sm:$0xff]
    %v3874 = vld [vmem:[#allocation20 + $0x38] sm:$0xff]
    %v3875 = vld [vmem:[#allocation20 + $0x40] sm:$0xff]
    %v3876 = vld [vmem:[#allocation20 + $0x48] sm:$0xff]
    %v3877 = vld [vmem:[#allocation20 + $0x50] sm:$0xff]
    %v3878 = vld [vmem:[#allocation20 + $0x58] sm:$0xff]
    %v3879 = vld [vmem:[#allocation20 + $0x60] sm:$0xff]
    %v3880 = vld [vmem:[#allocation20 + $0x68] sm:$0xff]
    %v3881 = vld [vmem:[#allocation20 + $0x70] sm:$0xff]
    %v3882 = vld [vmem:[#allocation20 + $0x78] sm:$0xff]
    %v3883 = vld [vmem:[#allocation20 + $0x80] sm:$0xff]
    %v3884 = vld [vmem:[#allocation20 + $0x88] sm:$0xff]
    %v3885 = vld [vmem:[#allocation20 + $0x90] sm:$0xff]
    %v3886 = vld [vmem:[#allocation20 + $0x98] sm:$0xff]
    %v3887 = vld [vmem:[#allocation20 + $0xa0] sm:$0xff]
    %v3888 = vld [vmem:[#allocation20 + $0xa8] sm:$0xff]
    %v3889 = vld [vmem:[#allocation20 + $0xb0] sm:$0xff]
    %v3890 = vld [vmem:[#allocation20 + $0xb8] sm:$0xff]
    %v3891 = vld [vmem:[#allocation20 + $0xc0] sm:$0xff]
    %v3892 = vld [vmem:[#allocation20 + $0xc8] sm:$0xff]
    %v3893 = vld [vmem:[#allocation20 + $0xd0] sm:$0xff]
    %v3894 = vld [vmem:[#allocation20 + $0xd8] sm:$0xff]
    %v3895 = vld [vmem:[#allocation20 + $0xe0] sm:$0xff]
    %v3896 = vld [vmem:[#allocation20 + $0xe8] sm:$0xff]
    %v3897 = vld [vmem:[#allocation20 + $0xf0] sm:$0xff]
    %v3898 = vld [vmem:[#allocation20 + $0xf8] sm:$0xff]
    %v3899 = vld [vmem:[#allocation20 + $0x100] sm:$0xff]
    %v3900 = vld [vmem:[#allocation20 + $0x108] sm:$0xff]
    %v3901 = vld [vmem:[#allocation20 + $0x110] sm:$0xff]
    %v3902 = vld [vmem:[#allocation20 + $0x118] sm:$0xff]
    %v3903 = vld [vmem:[#allocation20 + $0x120] sm:$0xff]
    %v3904 = vld [vmem:[#allocation20 + $0x128] sm:$0xff]
    %v3905 = vld [vmem:[#allocation20 + $0x130] sm:$0xff]
    %v3906 = vld [vmem:[#allocation20 + $0x138] sm:$0xff]
    %v3907 = vld [vmem:[#allocation20 + $0x140] sm:$0xff]
    %v3908 = vld [vmem:[#allocation20 + $0x148] sm:$0xff]
    %v3909 = vld [vmem:[#allocation20 + $0x150] sm:$0xff]
    %v3910 = vld [vmem:[#allocation20 + $0x158] sm:$0xff]
    %v3911 = vld [vmem:[#allocation20 + $0x160] sm:$0xff]
    %v3912 = vld [vmem:[#allocation20 + $0x168] sm:$0xff]
    %v3913 = vld [vmem:[#allocation20 + $0x170] sm:$0xff]
    %v3914 = vld [vmem:[#allocation20 + $0x178] sm:$0xff]
    %v3915 = vld [vmem:[#allocation20 + $0x180] sm:$0xff]
    %v3916 = vld [vmem:[#allocation20 + $0x188] sm:$0xff]
    %v3917 = vld [vmem:[#allocation20 + $0x190] sm:$0xff]
    %v3918 = vld [vmem:[#allocation20 + $0x198] sm:$0xff]
    %v3919 = vld [vmem:[#allocation20 + $0x1a0] sm:$0xff]
    %v3920 = vld [vmem:[#allocation20 + $0x1a8] sm:$0xff]
    %v3921 = vld [vmem:[#allocation20 + $0x1b0] sm:$0xff]
    %v3922 = vld [vmem:[#allocation20 + $0x1b8] sm:$0xff]
    %v3923 = vld [vmem:[#allocation20 + $0x1c0] sm:$0xff]
    %v3924 = vld [vmem:[#allocation20 + $0x1c8] sm:$0xff]
    %v3925 = vld [vmem:[#allocation20 + $0x1d0] sm:$0xff]
    %v3926 = vld [vmem:[#allocation20 + $0x1d8] sm:$0xff]
    %v3927 = vld [vmem:[#allocation20 + $0x1e0] sm:$0xff]
    %v3928 = vld [vmem:[#allocation20 + $0x1e8] sm:$0xff]
    %v3929 = vld [vmem:[#allocation20 + $0x1f0] sm:$0xff]
    %v3930 = vld [vmem:[#allocation20 + $0x1f8] sm:$0xff]
    %v3931 = vld [vmem:[#allocation20 + $0x200] sm:$0xff]
    %v3932 = vld [vmem:[#allocation20 + $0x208] sm:$0xff]
    %v3933 = vld [vmem:[#allocation20 + $0x210] sm:$0xff]
    %v3934 = vld [vmem:[#allocation20 + $0x218] sm:$0xff]
    %v3935 = vld [vmem:[#allocation20 + $0x220] sm:$0xff]
    %v3936 = vld [vmem:[#allocation20 + $0x228] sm:$0xff]
    %v3937 = vld [vmem:[#allocation20 + $0x230] sm:$0xff]
    %v3938 = vld [vmem:[#allocation20 + $0x238] sm:$0xff]
    %v3939 = vld [vmem:[#allocation20 + $0x240] sm:$0xff]
    %v3940 = vld [vmem:[#allocation20 + $0x248] sm:$0xff]
    %v3941 = vld [vmem:[#allocation20 + $0x250] sm:$0xff]
    %v3942 = vld [vmem:[#allocation20 + $0x258] sm:$0xff]
    %v3943 = vld [vmem:[#allocation20 + $0x260] sm:$0xff]
    %v3944 = vld [vmem:[#allocation20 + $0x268] sm:$0xff]
    %v3945 = vld [vmem:[#allocation20 + $0x270] sm:$0xff]
    %v3946 = vld [vmem:[#allocation20 + $0x278] sm:$0xff]
    %v3947 = vld [vmem:[#allocation20 + $0x280] sm:$0xff]
    %v3948 = vld [vmem:[#allocation20 + $0x288] sm:$0xff]
    %v3949 = vld [vmem:[#allocation20 + $0x290] sm:$0xff]
    %v3950 = vld [vmem:[#allocation20 + $0x298] sm:$0xff]
    %v3951 = vld [vmem:[#allocation20 + $0x2a0] sm:$0xff]
    %v3952 = vld [vmem:[#allocation20 + $0x2a8] sm:$0xff]
    %v3953 = vld [vmem:[#allocation20 + $0x2b0] sm:$0xff]
    %v3954 = vld [vmem:[#allocation20 + $0x2b8] sm:$0xff]
    %v3955 = vld [vmem:[#allocation20 + $0x2c0] sm:$0xff]
    %v3956 = vld [vmem:[#allocation20 + $0x2c8] sm:$0xff]
    %v3957 = vld [vmem:[#allocation20 + $0x2d0] sm:$0xff]
    %v3958 = vld [vmem:[#allocation20 + $0x2d8] sm:$0xff]
    %v3959 = vld [vmem:[#allocation20 + $0x2e0] sm:$0xff]
    %v3960 = vld [vmem:[#allocation20 + $0x2e8] sm:$0xff]
    %v3961 = vld [vmem:[#allocation20 + $0x2f0] sm:$0xff]
    %v3962 = vld [vmem:[#allocation20 + $0x2f8] sm:$0xff]
    %v3963 = vld [vmem:[#allocation20 + $0x300] sm:$0xff]
    %v3964 = vld [vmem:[#allocation20 + $0x308] sm:$0xff]
    %v3965 = vld [vmem:[#allocation20 + $0x310] sm:$0xff]
    %v3966 = vld [vmem:[#allocation20 + $0x318] sm:$0xff]
    %v3967 = vld [vmem:[#allocation20 + $0x320] sm:$0xff]
    %v3968 = vld [vmem:[#allocation20 + $0x328] sm:$0xff]
    %v3969 = vld [vmem:[#allocation20 + $0x330] sm:$0xff]
    %v3970 = vld [vmem:[#allocation20 + $0x338] sm:$0xff]
    %v3971 = vld [vmem:[#allocation20 + $0x340] sm:$0xff]
    %v3972 = vld [vmem:[#allocation20 + $0x348] sm:$0xff]
    %v3973 = vld [vmem:[#allocation20 + $0x350] sm:$0xff]
    %v3974 = vld [vmem:[#allocation20 + $0x358] sm:$0xff]
    %v3975 = vld [vmem:[#allocation20 + $0x360] sm:$0xff]
    %v3976 = vld [vmem:[#allocation20 + $0x368] sm:$0xff]
    %v3977 = vld [vmem:[#allocation20 + $0x370] sm:$0xff]
    %v3978 = vld [vmem:[#allocation20 + $0x378] sm:$0xff]
    %v3979 = vld [vmem:[#allocation20 + $0x380] sm:$0xff]
    %v3980 = vld [vmem:[#allocation20 + $0x388] sm:$0xff]
    %v3981 = vld [vmem:[#allocation20 + $0x390] sm:$0xff]
    %v3982 = vld [vmem:[#allocation20 + $0x398] sm:$0xff]
    %v3983 = vld [vmem:[#allocation20 + $0x3a0] sm:$0xff]
    %v3984 = vld [vmem:[#allocation20 + $0x3a8] sm:$0xff]
    %v3985 = vld [vmem:[#allocation20 + $0x3b0] sm:$0xff]
    %v3986 = vld [vmem:[#allocation20 + $0x3b8] sm:$0xff]
    %v3987 = vld [vmem:[#allocation20 + $0x3c0] sm:$0xff]
    %v3988 = vld [vmem:[#allocation20 + $0x3c8] sm:$0xff]
    %v3989 = vld [vmem:[#allocation20 + $0x3d0] sm:$0xff]
    %v3990 = vld [vmem:[#allocation20 + $0x3d8] sm:$0xff]
    %v3991 = vld [vmem:[#allocation20 + $0x3e0] sm:$0xff]
    %v3992 = vld [vmem:[#allocation20 + $0x3e8] sm:$0xff]
    %v3993 = vld [vmem:[#allocation20 + $0x3f0] sm:$0xff]
    %v3994 = vld [vmem:[#allocation20 + $0x3f8] sm:$0xff]
    %s3995 = scalar_lea.vmem [#allocation20], 1024
    %v3996 = vld [vmem:[%s3995] sm:$0xff]
    %v3997 = vld [vmem:[%s3995 + $0x8] sm:$0xff]
    %v3998 = vld [vmem:[%s3995 + $0x10] sm:$0xff]
    %v3999 = vld [vmem:[%s3995 + $0x18] sm:$0xff]
    %v4000 = vld [vmem:[%s3995 + $0x20] sm:$0xff]
    %v4001 = vld [vmem:[%s3995 + $0x28] sm:$0xff]
    %v4002 = vld [vmem:[%s3995 + $0x30] sm:$0xff]
    %v4003 = vld [vmem:[%s3995 + $0x38] sm:$0xff]
    %v4004 = vld [vmem:[%s3995 + $0x40] sm:$0xff]
    %v4005 = vld [vmem:[%s3995 + $0x48] sm:$0xff]
    %v4006 = vld [vmem:[%s3995 + $0x50] sm:$0xff]
    %v4007 = vld [vmem:[%s3995 + $0x58] sm:$0xff]
    %v4008 = vld [vmem:[%s3995 + $0x60] sm:$0xff]
    %v4009 = vld [vmem:[%s3995 + $0x68] sm:$0xff]
    %v4010 = vld [vmem:[%s3995 + $0x70] sm:$0xff]
    %v4011 = vld [vmem:[%s3995 + $0x78] sm:$0xff]
    %v4012 = vld [vmem:[%s3995 + $0x80] sm:$0xff]
    %v4013 = vld [vmem:[%s3995 + $0x88] sm:$0xff]
    %v4014 = vld [vmem:[%s3995 + $0x90] sm:$0xff]
    %v4015 = vld [vmem:[%s3995 + $0x98] sm:$0xff]
    %v4016 = vld [vmem:[%s3995 + $0xa0] sm:$0xff]
    %v4017 = vld [vmem:[%s3995 + $0xa8] sm:$0xff]
    %v4018 = vld [vmem:[%s3995 + $0xb0] sm:$0xff]
    %v4019 = vld [vmem:[%s3995 + $0xb8] sm:$0xff]
    %v4020 = vld [vmem:[%s3995 + $0xc0] sm:$0xff]
    %v4021 = vld [vmem:[%s3995 + $0xc8] sm:$0xff]
    %v4022 = vld [vmem:[%s3995 + $0xd0] sm:$0xff]
    %v4023 = vld [vmem:[%s3995 + $0xd8] sm:$0xff]
    %v4024 = vld [vmem:[%s3995 + $0xe0] sm:$0xff]
    %v4025 = vld [vmem:[%s3995 + $0xe8] sm:$0xff]
    %v4026 = vld [vmem:[%s3995 + $0xf0] sm:$0xff]
    %v4027 = vld [vmem:[%s3995 + $0xf8] sm:$0xff]
    %v4028 = vld [vmem:[%s3995 + $0x100] sm:$0xff]
    %v4029 = vld [vmem:[%s3995 + $0x108] sm:$0xff]
    %v4030 = vld [vmem:[%s3995 + $0x110] sm:$0xff]
    %v4031 = vld [vmem:[%s3995 + $0x118] sm:$0xff]
    %v4032 = vld [vmem:[%s3995 + $0x120] sm:$0xff]
    %v4033 = vld [vmem:[%s3995 + $0x128] sm:$0xff]
    %v4034 = vld [vmem:[%s3995 + $0x130] sm:$0xff]
    %v4035 = vld [vmem:[%s3995 + $0x138] sm:$0xff]
    %v4036 = vld [vmem:[%s3995 + $0x140] sm:$0xff]
    %v4037 = vld [vmem:[%s3995 + $0x148] sm:$0xff]
    %v4038 = vld [vmem:[%s3995 + $0x150] sm:$0xff]
    %v4039 = vld [vmem:[%s3995 + $0x158] sm:$0xff]
    %v4040 = vld [vmem:[%s3995 + $0x160] sm:$0xff]
    %v4041 = vld [vmem:[%s3995 + $0x168] sm:$0xff]
    %v4042 = vld [vmem:[%s3995 + $0x170] sm:$0xff]
    %v4043 = vld [vmem:[%s3995 + $0x178] sm:$0xff]
    %v4044 = vld [vmem:[%s3995 + $0x180] sm:$0xff]
    %v4045 = vld [vmem:[%s3995 + $0x188] sm:$0xff]
    %v4046 = vld [vmem:[%s3995 + $0x190] sm:$0xff]
    %v4047 = vld [vmem:[%s3995 + $0x198] sm:$0xff]
    %v4048 = vld [vmem:[%s3995 + $0x1a0] sm:$0xff]
    %v4049 = vld [vmem:[%s3995 + $0x1a8] sm:$0xff]
    %v4050 = vld [vmem:[%s3995 + $0x1b0] sm:$0xff]
    %v4051 = vld [vmem:[%s3995 + $0x1b8] sm:$0xff]
    %v4052 = vld [vmem:[%s3995 + $0x1c0] sm:$0xff]
    %v4053 = vld [vmem:[%s3995 + $0x1c8] sm:$0xff]
    %v4054 = vld [vmem:[%s3995 + $0x1d0] sm:$0xff]
    %v4055 = vld [vmem:[%s3995 + $0x1d8] sm:$0xff]
    %v4056 = vld [vmem:[%s3995 + $0x1e0] sm:$0xff]
    %v4057 = vld [vmem:[%s3995 + $0x1e8] sm:$0xff]
    %v4058 = vld [vmem:[%s3995 + $0x1f0] sm:$0xff]
    %v4059 = vld [vmem:[%s3995 + $0x1f8] sm:$0xff]
    %v4060 = vld [vmem:[%s3995 + $0x200] sm:$0xff]
    %v4061 = vld [vmem:[%s3995 + $0x208] sm:$0xff]
    %v4062 = vld [vmem:[%s3995 + $0x210] sm:$0xff]
    %v4063 = vld [vmem:[%s3995 + $0x218] sm:$0xff]
    %v4064 = vld [vmem:[%s3995 + $0x220] sm:$0xff]
    %v4065 = vld [vmem:[%s3995 + $0x228] sm:$0xff]
    %v4066 = vld [vmem:[%s3995 + $0x230] sm:$0xff]
    %v4067 = vld [vmem:[%s3995 + $0x238] sm:$0xff]
    %v4068 = vld [vmem:[%s3995 + $0x240] sm:$0xff]
    %v4069 = vld [vmem:[%s3995 + $0x248] sm:$0xff]
    %v4070 = vld [vmem:[%s3995 + $0x250] sm:$0xff]
    %v4071 = vld [vmem:[%s3995 + $0x258] sm:$0xff]
    %v4072 = vld [vmem:[%s3995 + $0x260] sm:$0xff]
    %v4073 = vld [vmem:[%s3995 + $0x268] sm:$0xff]
    %v4074 = vld [vmem:[%s3995 + $0x270] sm:$0xff]
    %v4075 = vld [vmem:[%s3995 + $0x278] sm:$0xff]
    %v4076 = vld [vmem:[%s3995 + $0x280] sm:$0xff]
    %v4077 = vld [vmem:[%s3995 + $0x288] sm:$0xff]
    %v4078 = vld [vmem:[%s3995 + $0x290] sm:$0xff]
    %v4079 = vld [vmem:[%s3995 + $0x298] sm:$0xff]
    %v4080 = vld [vmem:[%s3995 + $0x2a0] sm:$0xff]
    %v4081 = vld [vmem:[%s3995 + $0x2a8] sm:$0xff]
    %v4082 = vld [vmem:[%s3995 + $0x2b0] sm:$0xff]
    %v4083 = vld [vmem:[%s3995 + $0x2b8] sm:$0xff]
    %v4084 = vld [vmem:[%s3995 + $0x2c0] sm:$0xff]
    %v4085 = vld [vmem:[%s3995 + $0x2c8] sm:$0xff]
    %v4086 = vld [vmem:[%s3995 + $0x2d0] sm:$0xff]
    %v4087 = vld [vmem:[%s3995 + $0x2d8] sm:$0xff]
    %v4088 = vld [vmem:[%s3995 + $0x2e0] sm:$0xff]
    %v4089 = vld [vmem:[%s3995 + $0x2e8] sm:$0xff]
    %v4090 = vld [vmem:[%s3995 + $0x2f0] sm:$0xff]
    %v4091 = vld [vmem:[%s3995 + $0x2f8] sm:$0xff]
    %v4092 = vld [vmem:[%s3995 + $0x300] sm:$0xff]
    %v4093 = vld [vmem:[%s3995 + $0x308] sm:$0xff]
    %v4094 = vld [vmem:[%s3995 + $0x310] sm:$0xff]
    %v4095 = vld [vmem:[%s3995 + $0x318] sm:$0xff]
    %v4096 = vld [vmem:[%s3995 + $0x320] sm:$0xff]
    %v4097 = vld [vmem:[%s3995 + $0x328] sm:$0xff]
    %v4098 = vld [vmem:[%s3995 + $0x330] sm:$0xff]
    %v4099 = vld [vmem:[%s3995 + $0x338] sm:$0xff]
    %v4100 = vld [vmem:[%s3995 + $0x340] sm:$0xff]
    %v4101 = vld [vmem:[%s3995 + $0x348] sm:$0xff]
    %v4102 = vld [vmem:[%s3995 + $0x350] sm:$0xff]
    %v4103 = vld [vmem:[%s3995 + $0x358] sm:$0xff]
    %v4104 = vld [vmem:[%s3995 + $0x360] sm:$0xff]
    %v4105 = vld [vmem:[%s3995 + $0x368] sm:$0xff]
    %v4106 = vld [vmem:[%s3995 + $0x370] sm:$0xff]
    %v4107 = vld [vmem:[%s3995 + $0x378] sm:$0xff]
    %v4108 = vld [vmem:[%s3995 + $0x380] sm:$0xff]
    %v4109 = vld [vmem:[%s3995 + $0x388] sm:$0xff]
    %v4110 = vld [vmem:[%s3995 + $0x390] sm:$0xff]
    %v4111 = vld [vmem:[%s3995 + $0x398] sm:$0xff]
    %v4112 = vld [vmem:[%s3995 + $0x3a0] sm:$0xff]
    %v4113 = vld [vmem:[%s3995 + $0x3a8] sm:$0xff]
    %v4114 = vld [vmem:[%s3995 + $0x3b0] sm:$0xff]
    %v4115 = vld [vmem:[%s3995 + $0x3b8] sm:$0xff]
    %v4116 = vld [vmem:[%s3995 + $0x3c0] sm:$0xff]
    %v4117 = vld [vmem:[%s3995 + $0x3c8] sm:$0xff]
    %v4118 = vld [vmem:[%s3995 + $0x3d0] sm:$0xff]
    %v4119 = vld [vmem:[%s3995 + $0x3d8] sm:$0xff]
    %v4120 = vld [vmem:[%s3995 + $0x3e0] sm:$0xff]
    %v4121 = vld [vmem:[%s3995 + $0x3e8] sm:$0xff]
    %v4122 = vld [vmem:[%s3995 + $0x3f0] sm:$0xff]
    %v4123 = vld [vmem:[%s3995 + $0x3f8] sm:$0xff]
    %4124 = vmatprep.subr.mxu0 %v3997
    %4125 = vmatpush1.msra.mxu0 %v3996
    %4126 = vmatprep.subr.mxu0 %v4001
    %4127 = vmatpush1.msra.mxu0 %v4000
    %4128 = vmatprep.subr.mxu0 %v4005
    %4129 = vmatpush1.msra.mxu0 %v4004
    %4130 = vmatprep.subr.mxu0 %v4009
    %4131 = vmatpush1.msra.mxu0 %v4008
    %4132 = vmatprep.subr.mxu0 %v4013
    %4133 = vmatpush1.msra.mxu0 %v4012
    %4134 = vmatprep.subr.mxu0 %v4017
    %4135 = vmatpush1.msra.mxu0 %v4016
    %4136 = vmatprep.subr.mxu0 %v4021
    %4137 = vmatpush1.msra.mxu0 %v4020
    %4138 = vmatprep.subr.mxu0 %v4025
    %4139 = vmatpush1.msra.mxu0 %v4024
    %4140 = vmatprep.subr.mxu0 %v4029
    %4141 = vmatpush1.msra.mxu0 %v4028
    %4142 = vmatprep.subr.mxu0 %v4033
    %4143 = vmatpush1.msra.mxu0 %v4032
    %4144 = vmatprep.subr.mxu0 %v4037
    %4145 = vmatpush1.msra.mxu0 %v4036
    %4146 = vmatprep.subr.mxu0 %v4041
    %4147 = vmatpush1.msra.mxu0 %v4040
    %4148 = vmatprep.subr.mxu0 %v4045
    %4149 = vmatpush1.msra.mxu0 %v4044
    %4150 = vmatprep.subr.mxu0 %v4049
    %4151 = vmatpush1.msra.mxu0 %v4048
    %4152 = vmatprep.subr.mxu0 %v4053
    %4153 = vmatpush1.msra.mxu0 %v4052
    %4154 = vmatprep.subr.mxu0 %v4057
    %4155 = vmatpush1.msra.mxu0 %v4056
    %4156 = vmatprep.subr.mxu0 %v4061
    %4157 = vmatpush1.msra.mxu0 %v4060
    %4158 = vmatprep.subr.mxu0 %v4065
    %4159 = vmatpush1.msra.mxu0 %v4064
    %4160 = vmatprep.subr.mxu0 %v4069
    %4161 = vmatpush1.msra.mxu0 %v4068
    %4162 = vmatprep.subr.mxu0 %v4073
    %4163 = vmatpush1.msra.mxu0 %v4072
    %4164 = vmatprep.subr.mxu0 %v4077
    %4165 = vmatpush1.msra.mxu0 %v4076
    %4166 = vmatprep.subr.mxu0 %v4081
    %4167 = vmatpush1.msra.mxu0 %v4080
    %4168 = vmatprep.subr.mxu0 %v4085
    %4169 = vmatpush1.msra.mxu0 %v4084
    %4170 = vmatprep.subr.mxu0 %v4089
    %4171 = vmatpush1.msra.mxu0 %v4088
    %4172 = vmatprep.subr.mxu0 %v4093
    %4173 = vmatpush1.msra.mxu0 %v4092
    %4174 = vmatprep.subr.mxu0 %v4097
    %4175 = vmatpush1.msra.mxu0 %v4096
    %4176 = vmatprep.subr.mxu0 %v4101
    %4177 = vmatpush1.msra.mxu0 %v4100
    %4178 = vmatprep.subr.mxu0 %v4105
    %4179 = vmatpush1.msra.mxu0 %v4104
    %4180 = vmatprep.subr.mxu0 %v4109
    %4181 = vmatpush1.msra.mxu0 %v4108
    %4182 = vmatprep.subr.mxu0 %v4113
    %4183 = vmatpush1.msra.mxu0 %v4112
    %4184 = vmatprep.subr.mxu0 %v4117
    %4185 = vmatpush1.msra.mxu0 %v4116
    %4186 = vmatprep.subr.mxu0 %v4121
    %4187 = vmatpush1.msra.mxu0 %v4120
    %4188 = vmatprep.mubr.f32.mxu0 %v3777
    %4189 = vmatmul.mubr.f32.gmra.mrb[0].mxu0 %v3776
    %v4190 = vpop.f32.mrb[0].mxu0
    %v4191 = vadd.f32 0.0, %v4190
    %v4192 = vpop.f32.mrb[0].mxu0
    %v4193 = vadd.f32 0.0, %v4192
    %4194 = vmatprep.mubr.f32.mxu0 %v3779
    %4195 = vmatmul.mubr.f32.gmra.mrb[0].mxu0 %v3778
    %v4196 = vpop.f32.mrb[0].mxu0
    %v4197 = vadd.f32 0.0, %v4196
    %v4198 = vpop.f32.mrb[0].mxu0
    %v4199 = vadd.f32 0.0, %v4198
    %4200 = vdwg.mxu0
    %4201 = vmatprep.subr.mxu0 %v3999
    %4202 = vmatpush1.msra.mxu0 %v3998
    %4203 = vmatprep.subr.mxu0 %v4003
    %4204 = vmatpush1.msra.mxu0 %v4002
    %4205 = vmatprep.subr.mxu0 %v4007
    %4206 = vmatpush1.msra.mxu0 %v4006
    %4207 = vmatprep.subr.mxu0 %v4011
    %4208 = vmatpush1.msra.mxu0 %v4010
    %4209 = vmatprep.subr.mxu0 %v4015
    %4210 = vmatpush1.msra.mxu0 %v4014
    %4211 = vmatprep.subr.mxu0 %v4019
    %4212 = vmatpush1.msra.mxu0 %v4018
    %4213 = vmatprep.subr.mxu0 %v4023
    %4214 = vmatpush1.msra.mxu0 %v4022
    %4215 = vmatprep.subr.mxu0 %v4027
    %4216 = vmatpush1.msra.mxu0 %v4026
    %4217 = vmatprep.subr.mxu0 %v4031
    %4218 = vmatpush1.msra.mxu0 %v4030
    %4219 = vmatprep.subr.mxu0 %v4035
    %4220 = vmatpush1.msra.mxu0 %v4034
    %4221 = vmatprep.subr.mxu0 %v4039
    %4222 = vmatpush1.msra.mxu0 %v4038
    %4223 = vmatprep.subr.mxu0 %v4043
    %4224 = vmatpush1.msra.mxu0 %v4042
    %4225 = vmatprep.subr.mxu0 %v4047
    %4226 = vmatpush1.msra.mxu0 %v4046
    %4227 = vmatprep.subr.mxu0 %v4051
    %4228 = vmatpush1.msra.mxu0 %v4050
    %4229 = vmatprep.subr.mxu0 %v4055
    %4230 = vmatpush1.msra.mxu0 %v4054
    %4231 = vmatprep.subr.mxu0 %v4059
    %4232 = vmatpush1.msra.mxu0 %v4058
    %4233 = vmatprep.subr.mxu0 %v4063
    %4234 = vmatpush1.msra.mxu0 %v4062
    %4235 = vmatprep.subr.mxu0 %v4067
    %4236 = vmatpush1.msra.mxu0 %v4066
    %4237 = vmatprep.subr.mxu0 %v4071
    %4238 = vmatpush1.msra.mxu0 %v4070
    %4239 = vmatprep.subr.mxu0 %v4075
    %4240 = vmatpush1.msra.mxu0 %v4074
    %4241 = vmatprep.subr.mxu0 %v4079
    %4242 = vmatpush1.msra.mxu0 %v4078
    %4243 = vmatprep.subr.mxu0 %v4083
    %4244 = vmatpush1.msra.mxu0 %v4082
    %4245 = vmatprep.subr.mxu0 %v4087
    %4246 = vmatpush1.msra.mxu0 %v4086
    %4247 = vmatprep.subr.mxu0 %v4091
    %4248 = vmatpush1.msra.mxu0 %v4090
    %4249 = vmatprep.subr.mxu0 %v4095
    %4250 = vmatpush1.msra.mxu0 %v4094
    %4251 = vmatprep.subr.mxu0 %v4099
    %4252 = vmatpush1.msra.mxu0 %v4098
    %4253 = vmatprep.subr.mxu0 %v4103
    %4254 = vmatpush1.msra.mxu0 %v4102
    %4255 = vmatprep.subr.mxu0 %v4107
    %4256 = vmatpush1.msra.mxu0 %v4106
    %4257 = vmatprep.subr.mxu0 %v4111
    %4258 = vmatpush1.msra.mxu0 %v4110
    %4259 = vmatprep.subr.mxu0 %v4115
    %4260 = vmatpush1.msra.mxu0 %v4114
    %4261 = vmatprep.subr.mxu0 %v4119
    %4262 = vmatpush1.msra.mxu0 %v4118
    %4263 = vmatprep.subr.mxu0 %v4123
    %4264 = vmatpush1.msra.mxu0 %v4122
    %4265 = vmatprep.mubr.f32.mxu0 %v3777
    %4266 = vmatmul.mubr.f32.gmra.mrb[0].mxu0 %v3776
    %v4267 = vpop.f32.mrb[0].mxu0
    %v4268 = vadd.f32 0.0, %v4267
    %v4269 = vpop.f32.mrb[0].mxu0
    %v4270 = vadd.f32 0.0, %v4269
    %4271 = vmatprep.mubr.f32.mxu0 %v3779
    %4272 = vmatmul.mubr.f32.gmra.mrb[0].mxu0 %v3778
    %v4273 = vpop.f32.mrb[0].mxu0
    %v4274 = vadd.f32 0.0, %v4273
    %v4275 = vpop.f32.mrb[0].mxu0
    %v4276 = vadd.f32 0.0, %v4275
    %4277 = vdwg.mxu0
    %4278 = vmatprep.subr.mxu0 %v3868
    %4279 = vmatpush1.msra.mxu0 %v3867
    %4280 = vmatprep.subr.mxu0 %v3872
    %4281 = vmatpush1.msra.mxu0 %v3871
    %4282 = vmatprep.subr.mxu0 %v3876
    %4283 = vmatpush1.msra.mxu0 %v3875
    %4284 = vmatprep.subr.mxu0 %v3880
    %4285 = vmatpush1.msra.mxu0 %v3879
    %4286 = vmatprep.subr.mxu0 %v3884
    %4287 = vmatpush1.msra.mxu0 %v3883
    %4288 = vmatprep.subr.mxu0 %v3888
    %4289 = vmatpush1.msra.mxu0 %v3887
    %4290 = vmatprep.subr.mxu0 %v3892
    %4291 = vmatpush1.msra.mxu0 %v3891
    %4292 = vmatprep.subr.mxu0 %v3896
    %4293 = vmatpush1.msra.mxu0 %v3895
    %4294 = vmatprep.subr.mxu0 %v3900
    %4295 = vmatpush1.msra.mxu0 %v3899
    %4296 = vmatprep.subr.mxu0 %v3904
    %4297 = vmatpush1.msra.mxu0 %v3903
    %4298 = vmatprep.subr.mxu0 %v3908
    %4299 = vmatpush1.msra.mxu0 %v3907
    %4300 = vmatprep.subr.mxu0 %v3912
    %4301 = vmatpush1.msra.mxu0 %v3911
    %4302 = vmatprep.subr.mxu0 %v3916
    %4303 = vmatpush1.msra.mxu0 %v3915
    %4304 = vmatprep.subr.mxu0 %v3920
    %4305 = vmatpush1.msra.mxu0 %v3919
    %4306 = vmatprep.subr.mxu0 %v3924
    %4307 = vmatpush1.msra.mxu0 %v3923
    %4308 = vmatprep.subr.mxu0 %v3928
    %4309 = vmatpush1.msra.mxu0 %v3927
    %4310 = vmatprep.subr.mxu0 %v3932
    %4311 = vmatpush1.msra.mxu0 %v3931
    %4312 = vmatprep.subr.mxu0 %v3936
    %4313 = vmatpush1.msra.mxu0 %v3935
    %4314 = vmatprep.subr.mxu0 %v3940
    %4315 = vmatpush1.msra.mxu0 %v3939
    %4316 = vmatprep.subr.mxu0 %v3944
    %4317 = vmatpush1.msra.mxu0 %v3943
    %4318 = vmatprep.subr.mxu0 %v3948
    %4319 = vmatpush1.msra.mxu0 %v3947
    %4320 = vmatprep.subr.mxu0 %v3952
    %4321 = vmatpush1.msra.mxu0 %v3951
    %4322 = vmatprep.subr.mxu0 %v3956
    %4323 = vmatpush1.msra.mxu0 %v3955
    %4324 = vmatprep.subr.mxu0 %v3960
    %4325 = vmatpush1.msra.mxu0 %v3959
    %4326 = vmatprep.subr.mxu0 %v3964
    %4327 = vmatpush1.msra.mxu0 %v3963
    %4328 = vmatprep.subr.mxu0 %v3968
    %4329 = vmatpush1.msra.mxu0 %v3967
    %4330 = vmatprep.subr.mxu0 %v3972
    %4331 = vmatpush1.msra.mxu0 %v3971
    %4332 = vmatprep.subr.mxu0 %v3976
    %4333 = vmatpush1.msra.mxu0 %v3975
    %4334 = vmatprep.subr.mxu0 %v3980
    %4335 = vmatpush1.msra.mxu0 %v3979
    %4336 = vmatprep.subr.mxu0 %v3984
    %4337 = vmatpush1.msra.mxu0 %v3983
    %4338 = vmatprep.subr.mxu0 %v3988
    %4339 = vmatpush1.msra.mxu0 %v3987
    %4340 = vmatprep.subr.mxu0 %v3992
    %4341 = vmatpush1.msra.mxu0 %v3991
    %4342 = vmatprep.mubr.f32.mxu0 %v3859
    %4343 = vmatmul.mubr.f32.gmra.mrb[0].mxu0 %v3857
    %v4344 = vpop.f32.mrb[0].mxu0
    %v4345 = vadd.f32 %v4191, %v4344
    %v4346 = vpop.f32.mrb[0].mxu0
    %v4347 = vadd.f32 %v4193, %v4346
    %4348 = vmatprep.mubr.f32.mxu0 %v3865
    %4349 = vmatmul.mubr.f32.gmra.mrb[0].mxu0 %v3863
    %v4350 = vpop.f32.mrb[0].mxu0
    %v4351 = vadd.f32 %v4197, %v4350
    %v4352 = vpop.f32.mrb[0].mxu0
    %v4353 = vadd.f32 %v4199, %v4352
    %4354 = vdwg.mxu0
    %4355 = vmatprep.subr.mxu0 %v3870
    %4356 = vmatpush1.msra.mxu0 %v3869
    %4357 = vmatprep.subr.mxu0 %v3874
    %4358 = vmatpush1.msra.mxu0 %v3873
    %4359 = vmatprep.subr.mxu0 %v3878
    %4360 = vmatpush1.msra.mxu0 %v3877
    %4361 = vmatprep.subr.mxu0 %v3882
    %4362 = vmatpush1.msra.mxu0 %v3881
    %4363 = vmatprep.subr.mxu0 %v3886
    %4364 = vmatpush1.msra.mxu0 %v3885
    %4365 = vmatprep.subr.mxu0 %v3890
    %4366 = vmatpush1.msra.mxu0 %v3889
    %4367 = vmatprep.subr.mxu0 %v3894
    %4368 = vmatpush1.msra.mxu0 %v3893
    %4369 = vmatprep.subr.mxu0 %v3898
    %4370 = vmatpush1.msra.mxu0 %v3897
    %4371 = vmatprep.subr.mxu0 %v3902
    %4372 = vmatpush1.msra.mxu0 %v3901
    %4373 = vmatprep.subr.mxu0 %v3906
    %4374 = vmatpush1.msra.mxu0 %v3905
    %4375 = vmatprep.subr.mxu0 %v3910
    %4376 = vmatpush1.msra.mxu0 %v3909
    %4377 = vmatprep.subr.mxu0 %v3914
    %4378 = vmatpush1.msra.mxu0 %v3913
    %4379 = vmatprep.subr.mxu0 %v3918
    %4380 = vmatpush1.msra.mxu0 %v3917
    %4381 = vmatprep.subr.mxu0 %v3922
    %4382 = vmatpush1.msra.mxu0 %v3921
    %4383 = vmatprep.subr.mxu0 %v3926
    %4384 = vmatpush1.msra.mxu0 %v3925
    %4385 = vmatprep.subr.mxu0 %v3930
    %4386 = vmatpush1.msra.mxu0 %v3929
    %4387 = vmatprep.subr.mxu0 %v3934
    %4388 = vmatpush1.msra.mxu0 %v3933
    %4389 = vmatprep.subr.mxu0 %v3938
    %4390 = vmatpush1.msra.mxu0 %v3937
    %4391 = vmatprep.subr.mxu0 %v3942
    %4392 = vmatpush1.msra.mxu0 %v3941
    %4393 = vmatprep.subr.mxu0 %v3946
    %4394 = vmatpush1.msra.mxu0 %v3945
    %4395 = vmatprep.subr.mxu0 %v3950
    %4396 = vmatpush1.msra.mxu0 %v3949
    %4397 = vmatprep.subr.mxu0 %v3954
    %4398 = vmatpush1.msra.mxu0 %v3953
    %4399 = vmatprep.subr.mxu0 %v3958
    %4400 = vmatpush1.msra.mxu0 %v3957
    %4401 = vmatprep.subr.mxu0 %v3962
    %4402 = vmatpush1.msra.mxu0 %v3961
    %4403 = vmatprep.subr.mxu0 %v3966
    %4404 = vmatpush1.msra.mxu0 %v3965
    %4405 = vmatprep.subr.mxu0 %v3970
    %4406 = vmatpush1.msra.mxu0 %v3969
    %4407 = vmatprep.subr.mxu0 %v3974
    %4408 = vmatpush1.msra.mxu0 %v3973
    %4409 = vmatprep.subr.mxu0 %v3978
    %4410 = vmatpush1.msra.mxu0 %v3977
    %4411 = vmatprep.subr.mxu0 %v3982
    %4412 = vmatpush1.msra.mxu0 %v3981
    %4413 = vmatprep.subr.mxu0 %v3986
    %4414 = vmatpush1.msra.mxu0 %v3985
    %4415 = vmatprep.subr.mxu0 %v3990
    %4416 = vmatpush1.msra.mxu0 %v3989
    %4417 = vmatprep.subr.mxu0 %v3994
    %4418 = vmatpush1.msra.mxu0 %v3993
    %4419 = vmatprep.mubr.f32.mxu0 %v3859
    %4420 = vmatmul.mubr.f32.gmra.mrb[0].mxu0 %v3857
    %v4421 = vpop.f32.mrb[0].mxu0
    %v4422 = vadd.f32 %v4268, %v4421
    %v4423 = vpop.f32.mrb[0].mxu0
    %v4424 = vadd.f32 %v4270, %v4423
    %4425 = vmatprep.mubr.f32.mxu0 %v3865
    %4426 = vmatmul.mubr.f32.gmra.mrb[0].mxu0 %v3863
    %v4427 = vpop.f32.mrb[0].mxu0
    %v4428 = vadd.f32 %v4274, %v4427
    %v4429 = vpop.f32.mrb[0].mxu0
    %v4430 = vadd.f32 %v4276, %v4429
    %4431 = vdwg.mxu0
    %v4433 = vsel %vm433, %v3782, 0
    %v4436 = vsel %vm433, %v3783, 0
    %4438 = vmatprep.subr.mxu0 %v3777
    %4439 = vmatpush1.msra.mxu0 %v3776
    %4440 = vmatprep.subr.mxu0 %v3779
    %4441 = vmatpush1.msra.mxu0 %v3778
    %4442 = vmatprep.subr.mxu0 0.0
    %4443 = vmatpush1.msra.mxu0 0.0
    %4444 = vmatprep.subr.mxu0 0.0
    %4445 = vmatpush1.msra.mxu0 0.0
    %4446 = vmatprep.subr.mxu0 0.0
    %4447 = vmatpush1.msra.mxu0 0.0
    %4448 = vmatprep.subr.mxu0 0.0
    %4449 = vmatpush1.msra.mxu0 0.0
    %4450 = vmatprep.subr.mxu0 0.0
    %4451 = vmatpush1.msra.mxu0 0.0
    %4452 = vmatprep.subr.mxu0 0.0
    %4453 = vmatpush1.msra.mxu0 0.0
    %4454 = vmatprep.subr.mxu0 0.0
    %4455 = vmatpush1.msra.mxu0 0.0
    %4456 = vmatprep.subr.mxu0 0.0
    %4457 = vmatpush1.msra.mxu0 0.0
    %4458 = vmatprep.subr.mxu0 0.0
    %4459 = vmatpush1.msra.mxu0 0.0
    %4460 = vmatprep.subr.mxu0 0.0
    %4461 = vmatpush1.msra.mxu0 0.0
    %4462 = vmatprep.subr.mxu0 0.0
    %4463 = vmatpush1.msra.mxu0 0.0
    %4464 = vmatprep.subr.mxu0 0.0
    %4465 = vmatpush1.msra.mxu0 0.0
    %4466 = vmatprep.subr.mxu0 0.0
    %4467 = vmatpush1.msra.mxu0 0.0
    %4468 = vmatprep.subr.mxu0 0.0
    %4469 = vmatpush1.msra.mxu0 0.0
    %4470 = vmatprep.subr.mxu0 0.0
    %4471 = vmatpush1.msra.mxu0 0.0
    %4472 = vmatprep.subr.mxu0 0.0
    %4473 = vmatpush1.msra.mxu0 0.0
    %4474 = vmatprep.subr.mxu0 0.0
    %4475 = vmatpush1.msra.mxu0 0.0
    %4476 = vmatprep.subr.mxu0 0.0
    %4477 = vmatpush1.msra.mxu0 0.0
    %4478 = vmatprep.subr.mxu0 0.0
    %4479 = vmatpush1.msra.mxu0 0.0
    %4480 = vmatprep.subr.mxu0 0.0
    %4481 = vmatpush1.msra.mxu0 0.0
    %4482 = vmatprep.subr.mxu0 0.0
    %4483 = vmatpush1.msra.mxu0 0.0
    %4484 = vmatprep.subr.mxu0 0.0
    %4485 = vmatpush1.msra.mxu0 0.0
    %4486 = vmatprep.subr.mxu0 0.0
    %4487 = vmatpush1.msra.mxu0 0.0
    %4488 = vmatprep.subr.mxu0 0.0
    %4489 = vmatpush1.msra.mxu0 0.0
    %4490 = vmatprep.subr.mxu0 0.0
    %4491 = vmatpush1.msra.mxu0 0.0
    %4492 = vmatprep.subr.mxu0 0.0
    %4493 = vmatpush1.msra.mxu0 0.0
    %4494 = vmatprep.subr.mxu0 0.0
    %4495 = vmatpush1.msra.mxu0 0.0
    %4496 = vmatprep.subr.mxu0 0.0
    %4497 = vmatpush1.msra.mxu0 0.0
    %4498 = vmatprep.subr.mxu0 0.0
    %4499 = vmatpush1.msra.mxu0 0.0
    %4500 = vmatprep.subr.mxu0 0.0
    %4501 = vmatpush1.msra.mxu0 0.0
    %4502 = vmatprep.mubr.f32.mxu0 0.0
    %4503 = vmatmul.mubr.f32.gmra.mrb[0].mxu0 %v4433
    %v4504 = vpop.f32.mrb[0].mxu0
    %v4505 = vadd.f32 0.0, %v4504
    %v4506 = vpop.f32.mrb[0].mxu0
    %v4507 = vadd.f32 0.0, %v4506
    %4508 = vmatprep.mubr.f32.mxu0 0.0
    %4509 = vmatmul.mubr.f32.gmra.mrb[0].mxu0 %v4436
    %v4510 = vpop.f32.mrb[0].mxu0
    %v4511 = vadd.f32 0.0, %v4510
    %v4512 = vpop.f32.mrb[0].mxu0
    %v4513 = vadd.f32 0.0, %v4512
    %4514 = vdwg.mxu0
    %s4515 = scalar_lea.vmem [#allocation20], 2048
    %v4516 = vld [vmem:[%s4515] sm:$0xff]
    %v4517 = vld [vmem:[%s4515 + $0x8] sm:$0xff]
    %v4518 = vld [vmem:[%s4515 + $0x10] sm:$0xff]
    %v4519 = vld [vmem:[%s4515 + $0x18] sm:$0xff]
    %v4520 = vld [vmem:[%s4515 + $0x20] sm:$0xff]
    %v4521 = vld [vmem:[%s4515 + $0x28] sm:$0xff]
    %v4522 = vld [vmem:[%s4515 + $0x30] sm:$0xff]
    %v4523 = vld [vmem:[%s4515 + $0x38] sm:$0xff]
    %v4524 = vld [vmem:[%s4515 + $0x40] sm:$0xff]
    %v4525 = vld [vmem:[%s4515 + $0x48] sm:$0xff]
    %v4526 = vld [vmem:[%s4515 + $0x50] sm:$0xff]
    %v4527 = vld [vmem:[%s4515 + $0x58] sm:$0xff]
    %v4528 = vld [vmem:[%s4515 + $0x60] sm:$0xff]
    %v4529 = vld [vmem:[%s4515 + $0x68] sm:$0xff]
    %v4530 = vld [vmem:[%s4515 + $0x70] sm:$0xff]
    %v4531 = vld [vmem:[%s4515 + $0x78] sm:$0xff]
    %v4532 = vld [vmem:[%s4515 + $0x80] sm:$0xff]
    %v4533 = vld [vmem:[%s4515 + $0x88] sm:$0xff]
    %v4534 = vld [vmem:[%s4515 + $0x90] sm:$0xff]
    %v4535 = vld [vmem:[%s4515 + $0x98] sm:$0xff]
    %v4536 = vld [vmem:[%s4515 + $0xa0] sm:$0xff]
    %v4537 = vld [vmem:[%s4515 + $0xa8] sm:$0xff]
    %v4538 = vld [vmem:[%s4515 + $0xb0] sm:$0xff]
    %v4539 = vld [vmem:[%s4515 + $0xb8] sm:$0xff]
    %v4540 = vld [vmem:[%s4515 + $0xc0] sm:$0xff]
    %v4541 = vld [vmem:[%s4515 + $0xc8] sm:$0xff]
    %v4542 = vld [vmem:[%s4515 + $0xd0] sm:$0xff]
    %v4543 = vld [vmem:[%s4515 + $0xd8] sm:$0xff]
    %v4544 = vld [vmem:[%s4515 + $0xe0] sm:$0xff]
    %v4545 = vld [vmem:[%s4515 + $0xe8] sm:$0xff]
    %v4546 = vld [vmem:[%s4515 + $0xf0] sm:$0xff]
    %v4547 = vld [vmem:[%s4515 + $0xf8] sm:$0xff]
    %v4548 = vld [vmem:[%s4515 + $0x100] sm:$0xff]
    %v4549 = vld [vmem:[%s4515 + $0x108] sm:$0xff]
    %v4550 = vld [vmem:[%s4515 + $0x110] sm:$0xff]
    %v4551 = vld [vmem:[%s4515 + $0x118] sm:$0xff]
    %v4552 = vld [vmem:[%s4515 + $0x120] sm:$0xff]
    %v4553 = vld [vmem:[%s4515 + $0x128] sm:$0xff]
    %v4554 = vld [vmem:[%s4515 + $0x130] sm:$0xff]
    %v4555 = vld [vmem:[%s4515 + $0x138] sm:$0xff]
    %v4556 = vld [vmem:[%s4515 + $0x140] sm:$0xff]
    %v4557 = vld [vmem:[%s4515 + $0x148] sm:$0xff]
    %v4558 = vld [vmem:[%s4515 + $0x150] sm:$0xff]
    %v4559 = vld [vmem:[%s4515 + $0x158] sm:$0xff]
    %v4560 = vld [vmem:[%s4515 + $0x160] sm:$0xff]
    %v4561 = vld [vmem:[%s4515 + $0x168] sm:$0xff]
    %v4562 = vld [vmem:[%s4515 + $0x170] sm:$0xff]
    %v4563 = vld [vmem:[%s4515 + $0x178] sm:$0xff]
    %v4564 = vld [vmem:[%s4515 + $0x180] sm:$0xff]
    %v4565 = vld [vmem:[%s4515 + $0x188] sm:$0xff]
    %v4566 = vld [vmem:[%s4515 + $0x190] sm:$0xff]
    %v4567 = vld [vmem:[%s4515 + $0x198] sm:$0xff]
    %v4568 = vld [vmem:[%s4515 + $0x1a0] sm:$0xff]
    %v4569 = vld [vmem:[%s4515 + $0x1a8] sm:$0xff]
    %v4570 = vld [vmem:[%s4515 + $0x1b0] sm:$0xff]
    %v4571 = vld [vmem:[%s4515 + $0x1b8] sm:$0xff]
    %v4572 = vld [vmem:[%s4515 + $0x1c0] sm:$0xff]
    %v4573 = vld [vmem:[%s4515 + $0x1c8] sm:$0xff]
    %v4574 = vld [vmem:[%s4515 + $0x1d0] sm:$0xff]
    %v4575 = vld [vmem:[%s4515 + $0x1d8] sm:$0xff]
    %v4576 = vld [vmem:[%s4515 + $0x1e0] sm:$0xff]
    %v4577 = vld [vmem:[%s4515 + $0x1e8] sm:$0xff]
    %v4578 = vld [vmem:[%s4515 + $0x1f0] sm:$0xff]
    %v4579 = vld [vmem:[%s4515 + $0x1f8] sm:$0xff]
    %v4580 = vld [vmem:[%s4515 + $0x200] sm:$0xff]
    %v4581 = vld [vmem:[%s4515 + $0x208] sm:$0xff]
    %v4582 = vld [vmem:[%s4515 + $0x210] sm:$0xff]
    %v4583 = vld [vmem:[%s4515 + $0x218] sm:$0xff]
    %v4584 = vld [vmem:[%s4515 + $0x220] sm:$0xff]
    %v4585 = vld [vmem:[%s4515 + $0x228] sm:$0xff]
    %v4586 = vld [vmem:[%s4515 + $0x230] sm:$0xff]
    %v4587 = vld [vmem:[%s4515 + $0x238] sm:$0xff]
    %v4588 = vld [vmem:[%s4515 + $0x240] sm:$0xff]
    %v4589 = vld [vmem:[%s4515 + $0x248] sm:$0xff]
    %v4590 = vld [vmem:[%s4515 + $0x250] sm:$0xff]
    %v4591 = vld [vmem:[%s4515 + $0x258] sm:$0xff]
    %v4592 = vld [vmem:[%s4515 + $0x260] sm:$0xff]
    %v4593 = vld [vmem:[%s4515 + $0x268] sm:$0xff]
    %v4594 = vld [vmem:[%s4515 + $0x270] sm:$0xff]
    %v4595 = vld [vmem:[%s4515 + $0x278] sm:$0xff]
    %v4596 = vld [vmem:[%s4515 + $0x280] sm:$0xff]
    %v4597 = vld [vmem:[%s4515 + $0x288] sm:$0xff]
    %v4598 = vld [vmem:[%s4515 + $0x290] sm:$0xff]
    %v4599 = vld [vmem:[%s4515 + $0x298] sm:$0xff]
    %v4600 = vld [vmem:[%s4515 + $0x2a0] sm:$0xff]
    %v4601 = vld [vmem:[%s4515 + $0x2a8] sm:$0xff]
    %v4602 = vld [vmem:[%s4515 + $0x2b0] sm:$0xff]
    %v4603 = vld [vmem:[%s4515 + $0x2b8] sm:$0xff]
    %v4604 = vld [vmem:[%s4515 + $0x2c0] sm:$0xff]
    %v4605 = vld [vmem:[%s4515 + $0x2c8] sm:$0xff]
    %v4606 = vld [vmem:[%s4515 + $0x2d0] sm:$0xff]
    %v4607 = vld [vmem:[%s4515 + $0x2d8] sm:$0xff]
    %v4608 = vld [vmem:[%s4515 + $0x2e0] sm:$0xff]
    %v4609 = vld [vmem:[%s4515 + $0x2e8] sm:$0xff]
    %v4610 = vld [vmem:[%s4515 + $0x2f0] sm:$0xff]
    %v4611 = vld [vmem:[%s4515 + $0x2f8] sm:$0xff]
    %v4612 = vld [vmem:[%s4515 + $0x300] sm:$0xff]
    %v4613 = vld [vmem:[%s4515 + $0x308] sm:$0xff]
    %v4614 = vld [vmem:[%s4515 + $0x310] sm:$0xff]
    %v4615 = vld [vmem:[%s4515 + $0x318] sm:$0xff]
    %v4616 = vld [vmem:[%s4515 + $0x320] sm:$0xff]
    %v4617 = vld [vmem:[%s4515 + $0x328] sm:$0xff]
    %v4618 = vld [vmem:[%s4515 + $0x330] sm:$0xff]
    %v4619 = vld [vmem:[%s4515 + $0x338] sm:$0xff]
    %v4620 = vld [vmem:[%s4515 + $0x340] sm:$0xff]
    %v4621 = vld [vmem:[%s4515 + $0x348] sm:$0xff]
    %v4622 = vld [vmem:[%s4515 + $0x350] sm:$0xff]
    %v4623 = vld [vmem:[%s4515 + $0x358] sm:$0xff]
    %v4624 = vld [vmem:[%s4515 + $0x360] sm:$0xff]
    %v4625 = vld [vmem:[%s4515 + $0x368] sm:$0xff]
    %v4626 = vld [vmem:[%s4515 + $0x370] sm:$0xff]
    %v4627 = vld [vmem:[%s4515 + $0x378] sm:$0xff]
    %v4628 = vld [vmem:[%s4515 + $0x380] sm:$0xff]
    %v4629 = vld [vmem:[%s4515 + $0x388] sm:$0xff]
    %v4630 = vld [vmem:[%s4515 + $0x390] sm:$0xff]
    %v4631 = vld [vmem:[%s4515 + $0x398] sm:$0xff]
    %v4632 = vld [vmem:[%s4515 + $0x3a0] sm:$0xff]
    %v4633 = vld [vmem:[%s4515 + $0x3a8] sm:$0xff]
    %v4634 = vld [vmem:[%s4515 + $0x3b0] sm:$0xff]
    %v4635 = vld [vmem:[%s4515 + $0x3b8] sm:$0xff]
    %v4636 = vld [vmem:[%s4515 + $0x3c0] sm:$0xff]
    %v4637 = vld [vmem:[%s4515 + $0x3c8] sm:$0xff]
    %v4638 = vld [vmem:[%s4515 + $0x3d0] sm:$0xff]
    %v4639 = vld [vmem:[%s4515 + $0x3d8] sm:$0xff]
    %v4640 = vld [vmem:[%s4515 + $0x3e0] sm:$0xff]
    %v4641 = vld [vmem:[%s4515 + $0x3e8] sm:$0xff]
    %v4642 = vld [vmem:[%s4515 + $0x3f0] sm:$0xff]
    %v4643 = vld [vmem:[%s4515 + $0x3f8] sm:$0xff]
    %4644 = vmatprep.subr.mxu0 %v4517
    %4645 = vmatpush1.msra.mxu0 %v4516
    %4646 = vmatprep.subr.mxu0 %v4521
    %4647 = vmatpush1.msra.mxu0 %v4520
    %4648 = vmatprep.subr.mxu0 %v4525
    %4649 = vmatpush1.msra.mxu0 %v4524
    %4650 = vmatprep.subr.mxu0 %v4529
    %4651 = vmatpush1.msra.mxu0 %v4528
    %4652 = vmatprep.subr.mxu0 %v4533
    %4653 = vmatpush1.msra.mxu0 %v4532
    %4654 = vmatprep.subr.mxu0 %v4537
    %4655 = vmatpush1.msra.mxu0 %v4536
    %4656 = vmatprep.subr.mxu0 %v4541
    %4657 = vmatpush1.msra.mxu0 %v4540
    %4658 = vmatprep.subr.mxu0 %v4545
    %4659 = vmatpush1.msra.mxu0 %v4544
    %4660 = vmatprep.subr.mxu0 %v4549
    %4661 = vmatpush1.msra.mxu0 %v4548
    %4662 = vmatprep.subr.mxu0 %v4553
    %4663 = vmatpush1.msra.mxu0 %v4552
    %4664 = vmatprep.subr.mxu0 %v4557
    %4665 = vmatpush1.msra.mxu0 %v4556
    %4666 = vmatprep.subr.mxu0 %v4561
    %4667 = vmatpush1.msra.mxu0 %v4560
    %4668 = vmatprep.subr.mxu0 %v4565
    %4669 = vmatpush1.msra.mxu0 %v4564
    %4670 = vmatprep.subr.mxu0 %v4569
    %4671 = vmatpush1.msra.mxu0 %v4568
    %4672 = vmatprep.subr.mxu0 %v4573
    %4673 = vmatpush1.msra.mxu0 %v4572
    %4674 = vmatprep.subr.mxu0 %v4577
    %4675 = vmatpush1.msra.mxu0 %v4576
    %4676 = vmatprep.subr.mxu0 %v4581
    %4677 = vmatpush1.msra.mxu0 %v4580
    %4678 = vmatprep.subr.mxu0 %v4585
    %4679 = vmatpush1.msra.mxu0 %v4584
    %4680 = vmatprep.subr.mxu0 %v4589
    %4681 = vmatpush1.msra.mxu0 %v4588
    %4682 = vmatprep.subr.mxu0 %v4593
    %4683 = vmatpush1.msra.mxu0 %v4592
    %4684 = vmatprep.subr.mxu0 %v4597
    %4685 = vmatpush1.msra.mxu0 %v4596
    %4686 = vmatprep.subr.mxu0 %v4601
    %4687 = vmatpush1.msra.mxu0 %v4600
    %4688 = vmatprep.subr.mxu0 %v4605
    %4689 = vmatpush1.msra.mxu0 %v4604
    %4690 = vmatprep.subr.mxu0 %v4609
    %4691 = vmatpush1.msra.mxu0 %v4608
    %4692 = vmatprep.subr.mxu0 %v4613
    %4693 = vmatpush1.msra.mxu0 %v4612
    %4694 = vmatprep.subr.mxu0 %v4617
    %4695 = vmatpush1.msra.mxu0 %v4616
    %4696 = vmatprep.subr.mxu0 %v4621
    %4697 = vmatpush1.msra.mxu0 %v4620
    %4698 = vmatprep.subr.mxu0 %v4625
    %4699 = vmatpush1.msra.mxu0 %v4624
    %4700 = vmatprep.subr.mxu0 %v4629
    %4701 = vmatpush1.msra.mxu0 %v4628
    %4702 = vmatprep.subr.mxu0 %v4633
    %4703 = vmatpush1.msra.mxu0 %v4632
    %4704 = vmatprep.subr.mxu0 %v4637
    %4705 = vmatpush1.msra.mxu0 %v4636
    %4706 = vmatprep.subr.mxu0 %v4641
    %4707 = vmatpush1.msra.mxu0 %v4640
    %4708 = vmatprep.mubr.f32.mxu0 %v4507
    %4709 = vmatmul.mubr.f32.gmra.mrb[0].mxu0 %v4505
    %v4710 = vpop.f32.mrb[0].mxu0
    %v4711 = vadd.f32 0.0, %v4710
    %v4712 = vpop.f32.mrb[0].mxu0
    %v4713 = vadd.f32 0.0, %v4712
    %4714 = vmatprep.mubr.f32.mxu0 %v4513
    %4715 = vmatmul.mubr.f32.gmra.mrb[0].mxu0 %v4511
    %v4716 = vpop.f32.mrb[0].mxu0
    %v4717 = vadd.f32 0.0, %v4716
    %v4718 = vpop.f32.mrb[0].mxu0
    %v4719 = vadd.f32 0.0, %v4718
    %4720 = vdwg.mxu0
    %4721 = vmatprep.subr.mxu0 %v4519
    %4722 = vmatpush1.msra.mxu0 %v4518
    %4723 = vmatprep.subr.mxu0 %v4523
    %4724 = vmatpush1.msra.mxu0 %v4522
    %4725 = vmatprep.subr.mxu0 %v4527
    %4726 = vmatpush1.msra.mxu0 %v4526
    %4727 = vmatprep.subr.mxu0 %v4531
    %4728 = vmatpush1.msra.mxu0 %v4530
    %4729 = vmatprep.subr.mxu0 %v4535
    %4730 = vmatpush1.msra.mxu0 %v4534
    %4731 = vmatprep.subr.mxu0 %v4539
    %4732 = vmatpush1.msra.mxu0 %v4538
    %4733 = vmatprep.subr.mxu0 %v4543
    %4734 = vmatpush1.msra.mxu0 %v4542
    %4735 = vmatprep.subr.mxu0 %v4547
    %4736 = vmatpush1.msra.mxu0 %v4546
    %4737 = vmatprep.subr.mxu0 %v4551
    %4738 = vmatpush1.msra.mxu0 %v4550
    %4739 = vmatprep.subr.mxu0 %v4555
    %4740 = vmatpush1.msra.mxu0 %v4554
    %4741 = vmatprep.subr.mxu0 %v4559
    %4742 = vmatpush1.msra.mxu0 %v4558
    %4743 = vmatprep.subr.mxu0 %v4563
    %4744 = vmatpush1.msra.mxu0 %v4562
    %4745 = vmatprep.subr.mxu0 %v4567
    %4746 = vmatpush1.msra.mxu0 %v4566
    %4747 = vmatprep.subr.mxu0 %v4571
    %4748 = vmatpush1.msra.mxu0 %v4570
    %4749 = vmatprep.subr.mxu0 %v4575
    %4750 = vmatpush1.msra.mxu0 %v4574
    %4751 = vmatprep.subr.mxu0 %v4579
    %4752 = vmatpush1.msra.mxu0 %v4578
    %4753 = vmatprep.subr.mxu0 %v4583
    %4754 = vmatpush1.msra.mxu0 %v4582
    %4755 = vmatprep.subr.mxu0 %v4587
    %4756 = vmatpush1.msra.mxu0 %v4586
    %4757 = vmatprep.subr.mxu0 %v4591
    %4758 = vmatpush1.msra.mxu0 %v4590
    %4759 = vmatprep.subr.mxu0 %v4595
    %4760 = vmatpush1.msra.mxu0 %v4594
    %4761 = vmatprep.subr.mxu0 %v4599
    %4762 = vmatpush1.msra.mxu0 %v4598
    %4763 = vmatprep.subr.mxu0 %v4603
    %4764 = vmatpush1.msra.mxu0 %v4602
    %4765 = vmatprep.subr.mxu0 %v4607
    %4766 = vmatpush1.msra.mxu0 %v4606
    %4767 = vmatprep.subr.mxu0 %v4611
    %4768 = vmatpush1.msra.mxu0 %v4610
    %4769 = vmatprep.subr.mxu0 %v4615
    %4770 = vmatpush1.msra.mxu0 %v4614
    %4771 = vmatprep.subr.mxu0 %v4619
    %4772 = vmatpush1.msra.mxu0 %v4618
    %4773 = vmatprep.subr.mxu0 %v4623
    %4774 = vmatpush1.msra.mxu0 %v4622
    %4775 = vmatprep.subr.mxu0 %v4627
    %4776 = vmatpush1.msra.mxu0 %v4626
    %4777 = vmatprep.subr.mxu0 %v4631
    %4778 = vmatpush1.msra.mxu0 %v4630
    %4779 = vmatprep.subr.mxu0 %v4635
    %4780 = vmatpush1.msra.mxu0 %v4634
    %4781 = vmatprep.subr.mxu0 %v4639
    %4782 = vmatpush1.msra.mxu0 %v4638
    %4783 = vmatprep.subr.mxu0 %v4643
    %4784 = vmatpush1.msra.mxu0 %v4642
    %4785 = vmatprep.mubr.f32.mxu0 %v4507
    %4786 = vmatmul.mubr.f32.gmra.mrb[0].mxu0 %v4505
    %v4787 = vpop.f32.mrb[0].mxu0
    %v4788 = vadd.f32 0.0, %v4787
    %v4789 = vpop.f32.mrb[0].mxu0
    %v4790 = vadd.f32 0.0, %v4789
    %4791 = vmatprep.mubr.f32.mxu0 %v4513
    %4792 = vmatmul.mubr.f32.gmra.mrb[0].mxu0 %v4511
    %v4793 = vpop.f32.mrb[0].mxu0
    %v4794 = vadd.f32 0.0, %v4793
    %v4795 = vpop.f32.mrb[0].mxu0
    %v4796 = vadd.f32 0.0, %v4795
    %4797 = vdwg.mxu0
    %v4798 = vadd.f32 %v4345, %v4711
    %v4799 = vadd.f32 %v4347, %v4713
    %v4800 = vadd.f32 %v4422, %v4788
    %v4801 = vadd.f32 %v4424, %v4790
    %v4802 = vadd.f32 %v4351, %v4717
    %v4803 = vadd.f32 %v4353, %v4719
    %v4804 = vadd.f32 %v4428, %v4794
    %v4805 = vadd.f32 %v4430, %v4796
    %v4806 = vld [vmem:[#allocation22] sm:$0xf]
    %v4808 = vlaneseq
    %v4809 = vshrl.u32 %v4808, 7
    %v4810 = vsub.s32 0, %v4809
    %v4811 = vrot.slane %v4806, %v4810
    %v4812 = vlaneseq
    %v4813 = vshrl.u32 %v4812, 7
    %v4814 = vsub.s32 1, %v4813
    %v4815 = vrot.slane %v4806, %v4814
    %v4816 = vlaneseq
    %v4817 = vshrl.u32 %v4816, 7
    %v4818 = vsub.s32 2, %v4817
    %v4819 = vrot.slane %v4806, %v4818
    %v4820 = vlaneseq
    %v4821 = vshrl.u32 %v4820, 7
    %v4822 = vsub.s32 3, %v4821
    %v4823 = vrot.slane %v4806, %v4822
    %v4828 = vadd.f32 %v4798, %v4811
    %v4829 = vadd.f32 %v4799, %v4815
    %v4830 = vadd.f32 %v4800, %v4819
    %v4831 = vadd.f32 %v4801, %v4823
    %v4832 = vadd.f32 %v4802, %v4811
    %v4833 = vadd.f32 %v4803, %v4815
    %v4834 = vadd.f32 %v4804, %v4819
    %v4835 = vadd.f32 %v4805, %v4823
    %v4836 = vmax.f32 %v4828, 0.0
    %v4837 = vmax.f32 %v4829, 0.0
    %v4838 = vmax.f32 %v4830, 0.0
    %v4839 = vmax.f32 %v4831, 0.0
    %v4840 = vmax.f32 %v4832, 0.0
    %v4841 = vmax.f32 %v4833, 0.0
    %v4842 = vmax.f32 %v4834, 0.0
    %v4843 = vmax.f32 %v4835, 0.0
    %v4844 = vld [vmem:[#allocation23] sm:$0xff]
    %v4846 = vsel %vm433, %v4844, 0
    %4848 = vmatprep.subr.mxu0 %v4837
    %4849 = vmatpush1.msra.mxu0 %v4836
    %4850 = vmatprep.subr.mxu0 %v4841
    %4851 = vmatpush1.msra.mxu0 %v4840
    %4852 = vmatprep.subr.mxu0 0.0
    %4853 = vmatpush1.msra.mxu0 0.0
    %4854 = vmatprep.subr.mxu0 0.0
    %4855 = vmatpush1.msra.mxu0 0.0
    %4856 = vmatprep.subr.mxu0 0.0
    %4857 = vmatpush1.msra.mxu0 0.0
    %4858 = vmatprep.subr.mxu0 0.0
    %4859 = vmatpush1.msra.mxu0 0.0
    %4860 = vmatprep.subr.mxu0 0.0
    %4861 = vmatpush1.msra.mxu0 0.0
    %4862 = vmatprep.subr.mxu0 0.0
    %4863 = vmatpush1.msra.mxu0 0.0
    %4864 = vmatprep.subr.mxu0 0.0
    %4865 = vmatpush1.msra.mxu0 0.0
    %4866 = vmatprep.subr.mxu0 0.0
    %4867 = vmatpush1.msra.mxu0 0.0
    %4868 = vmatprep.subr.mxu0 0.0
    %4869 = vmatpush1.msra.mxu0 0.0
    %4870 = vmatprep.subr.mxu0 0.0
    %4871 = vmatpush1.msra.mxu0 0.0
    %4872 = vmatprep.subr.mxu0 0.0
    %4873 = vmatpush1.msra.mxu0 0.0
    %4874 = vmatprep.subr.mxu0 0.0
    %4875 = vmatpush1.msra.mxu0 0.0
    %4876 = vmatprep.subr.mxu0 0.0
    %4877 = vmatpush1.msra.mxu0 0.0
    %4878 = vmatprep.subr.mxu0 0.0
    %4879 = vmatpush1.msra.mxu0 0.0
    %4880 = vmatprep.subr.mxu0 0.0
    %4881 = vmatpush1.msra.mxu0 0.0
    %4882 = vmatprep.subr.mxu0 0.0
    %4883 = vmatpush1.msra.mxu0 0.0
    %4884 = vmatprep.subr.mxu0 0.0
    %4885 = vmatpush1.msra.mxu0 0.0
    %4886 = vmatprep.subr.mxu0 0.0
    %4887 = vmatpush1.msra.mxu0 0.0
    %4888 = vmatprep.subr.mxu0 0.0
    %4889 = vmatpush1.msra.mxu0 0.0
    %4890 = vmatprep.subr.mxu0 0.0
    %4891 = vmatpush1.msra.mxu0 0.0
    %4892 = vmatprep.subr.mxu0 0.0
    %4893 = vmatpush1.msra.mxu0 0.0
    %4894 = vmatprep.subr.mxu0 0.0
    %4895 = vmatpush1.msra.mxu0 0.0
    %4896 = vmatprep.subr.mxu0 0.0
    %4897 = vmatpush1.msra.mxu0 0.0
    %4898 = vmatprep.subr.mxu0 0.0
    %4899 = vmatpush1.msra.mxu0 0.0
    %4900 = vmatprep.subr.mxu0 0.0
    %4901 = vmatpush1.msra.mxu0 0.0
    %4902 = vmatprep.subr.mxu0 0.0
    %4903 = vmatpush1.msra.mxu0 0.0
    %4904 = vmatprep.subr.mxu0 0.0
    %4905 = vmatpush1.msra.mxu0 0.0
    %4906 = vmatprep.subr.mxu0 0.0
    %4907 = vmatpush1.msra.mxu0 0.0
    %4908 = vmatprep.subr.mxu0 0.0
    %4909 = vmatpush1.msra.mxu0 0.0
    %4910 = vmatprep.subr.mxu0 0.0
    %4911 = vmatpush1.msra.mxu0 0.0
    %4912 = vmatprep.mubr.f32.mxu0 0.0
    %4913 = vmatmul.mubr.f32.gmra.mrb[0].mxu0 %v4846
    %v4914 = vpop.f32.mrb[0].mxu0
    %v4915 = vadd.f32 0.0, %v4914
    %v4916 = vpop.f32.mrb[0].mxu0
    %v4917 = vadd.f32 0.0, %v4916
    %4918 = vdwg.mxu0
    %4919 = vmatprep.subr.mxu0 %v4839
    %4920 = vmatpush1.msra.mxu0 %v4838
    %4921 = vmatprep.subr.mxu0 %v4843
    %4922 = vmatpush1.msra.mxu0 %v4842
    %4923 = vmatprep.subr.mxu0 0.0
    %4924 = vmatpush1.msra.mxu0 0.0
    %4925 = vmatprep.subr.mxu0 0.0
    %4926 = vmatpush1.msra.mxu0 0.0
    %4927 = vmatprep.subr.mxu0 0.0
    %4928 = vmatpush1.msra.mxu0 0.0
    %4929 = vmatprep.subr.mxu0 0.0
    %4930 = vmatpush1.msra.mxu0 0.0
    %4931 = vmatprep.subr.mxu0 0.0
    %4932 = vmatpush1.msra.mxu0 0.0
    %4933 = vmatprep.subr.mxu0 0.0
    %4934 = vmatpush1.msra.mxu0 0.0
    %4935 = vmatprep.subr.mxu0 0.0
    %4936 = vmatpush1.msra.mxu0 0.0
    %4937 = vmatprep.subr.mxu0 0.0
    %4938 = vmatpush1.msra.mxu0 0.0
    %4939 = vmatprep.subr.mxu0 0.0
    %4940 = vmatpush1.msra.mxu0 0.0
    %4941 = vmatprep.subr.mxu0 0.0
    %4942 = vmatpush1.msra.mxu0 0.0
    %4943 = vmatprep.subr.mxu0 0.0
    %4944 = vmatpush1.msra.mxu0 0.0
    %4945 = vmatprep.subr.mxu0 0.0
    %4946 = vmatpush1.msra.mxu0 0.0
    %4947 = vmatprep.subr.mxu0 0.0
    %4948 = vmatpush1.msra.mxu0 0.0
    %4949 = vmatprep.subr.mxu0 0.0
    %4950 = vmatpush1.msra.mxu0 0.0
    %4951 = vmatprep.subr.mxu0 0.0
    %4952 = vmatpush1.msra.mxu0 0.0
    %4953 = vmatprep.subr.mxu0 0.0
    %4954 = vmatpush1.msra.mxu0 0.0
    %4955 = vmatprep.subr.mxu0 0.0
    %4956 = vmatpush1.msra.mxu0 0.0
    %4957 = vmatprep.subr.mxu0 0.0
    %4958 = vmatpush1.msra.mxu0 0.0
    %4959 = vmatprep.subr.mxu0 0.0
    %4960 = vmatpush1.msra.mxu0 0.0
    %4961 = vmatprep.subr.mxu0 0.0
    %4962 = vmatpush1.msra.mxu0 0.0
    %4963 = vmatprep.subr.mxu0 0.0
    %4964 = vmatpush1.msra.mxu0 0.0
    %4965 = vmatprep.subr.mxu0 0.0
    %4966 = vmatpush1.msra.mxu0 0.0
    %4967 = vmatprep.subr.mxu0 0.0
    %4968 = vmatpush1.msra.mxu0 0.0
    %4969 = vmatprep.subr.mxu0 0.0
    %4970 = vmatpush1.msra.mxu0 0.0
    %4971 = vmatprep.subr.mxu0 0.0
    %4972 = vmatpush1.msra.mxu0 0.0
    %4973 = vmatprep.subr.mxu0 0.0
    %4974 = vmatpush1.msra.mxu0 0.0
    %4975 = vmatprep.subr.mxu0 0.0
    %4976 = vmatpush1.msra.mxu0 0.0
    %4977 = vmatprep.subr.mxu0 0.0
    %4978 = vmatpush1.msra.mxu0 0.0
    %4979 = vmatprep.subr.mxu0 0.0
    %4980 = vmatpush1.msra.mxu0 0.0
    %4981 = vmatprep.subr.mxu0 0.0
    %4982 = vmatpush1.msra.mxu0 0.0
    %4983 = vmatprep.mubr.f32.mxu0 0.0
    %4984 = vmatmul.mubr.f32.gmra.mrb[0].mxu0 %v4846
    %v4985 = vpop.f32.mrb[0].mxu0
    %v4986 = vadd.f32 0.0, %v4985
    %v4987 = vpop.f32.mrb[0].mxu0
    %v4988 = vadd.f32 0.0, %v4987
    %4989 = vdwg.mxu0
    %v4990 = vld [vmem:[#allocation25] sm:$0xff]
    %v4992 = vsel %vm433, %v4990, 0
    %4994 = vmatprep.subr.mxu0 %v4837
    %4995 = vmatpush1.msra.mxu0 %v4836
    %4996 = vmatprep.subr.mxu0 %v4841
    %4997 = vmatpush1.msra.mxu0 %v4840
    %4998 = vmatprep.subr.mxu0 0.0
    %4999 = vmatpush1.msra.mxu0 0.0
    %5000 = vmatprep.subr.mxu0 0.0
    %5001 = vmatpush1.msra.mxu0 0.0
    %5002 = vmatprep.subr.mxu0 0.0
    %5003 = vmatpush1.msra.mxu0 0.0
    %5004 = vmatprep.subr.mxu0 0.0
    %5005 = vmatpush1.msra.mxu0 0.0
    %5006 = vmatprep.subr.mxu0 0.0
    %5007 = vmatpush1.msra.mxu0 0.0
    %5008 = vmatprep.subr.mxu0 0.0
    %5009 = vmatpush1.msra.mxu0 0.0
    %5010 = vmatprep.subr.mxu0 0.0
    %5011 = vmatpush1.msra.mxu0 0.0
    %5012 = vmatprep.subr.mxu0 0.0
    %5013 = vmatpush1.msra.mxu0 0.0
    %5014 = vmatprep.subr.mxu0 0.0
    %5015 = vmatpush1.msra.mxu0 0.0
    %5016 = vmatprep.subr.mxu0 0.0
    %5017 = vmatpush1.msra.mxu0 0.0
    %5018 = vmatprep.subr.mxu0 0.0
    %5019 = vmatpush1.msra.mxu0 0.0
    %5020 = vmatprep.subr.mxu0 0.0
    %5021 = vmatpush1.msra.mxu0 0.0
    %5022 = vmatprep.subr.mxu0 0.0
    %5023 = vmatpush1.msra.mxu0 0.0
    %5024 = vmatprep.subr.mxu0 0.0
    %5025 = vmatpush1.msra.mxu0 0.0
    %5026 = vmatprep.subr.mxu0 0.0
    %5027 = vmatpush1.msra.mxu0 0.0
    %5028 = vmatprep.subr.mxu0 0.0
    %5029 = vmatpush1.msra.mxu0 0.0
    %5030 = vmatprep.subr.mxu0 0.0
    %5031 = vmatpush1.msra.mxu0 0.0
    %5032 = vmatprep.subr.mxu0 0.0
    %5033 = vmatpush1.msra.mxu0 0.0
    %5034 = vmatprep.subr.mxu0 0.0
    %5035 = vmatpush1.msra.mxu0 0.0
    %5036 = vmatprep.subr.mxu0 0.0
    %5037 = vmatpush1.msra.mxu0 0.0
    %5038 = vmatprep.subr.mxu0 0.0
    %5039 = vmatpush1.msra.mxu0 0.0
    %5040 = vmatprep.subr.mxu0 0.0
    %5041 = vmatpush1.msra.mxu0 0.0
    %5042 = vmatprep.subr.mxu0 0.0
    %5043 = vmatpush1.msra.mxu0 0.0
    %5044 = vmatprep.subr.mxu0 0.0
    %5045 = vmatpush1.msra.mxu0 0.0
    %5046 = vmatprep.subr.mxu0 0.0
    %5047 = vmatpush1.msra.mxu0 0.0
    %5048 = vmatprep.subr.mxu0 0.0
    %5049 = vmatpush1.msra.mxu0 0.0
    %5050 = vmatprep.subr.mxu0 0.0
    %5051 = vmatpush1.msra.mxu0 0.0
    %5052 = vmatprep.subr.mxu0 0.0
    %5053 = vmatpush1.msra.mxu0 0.0
    %5054 = vmatprep.subr.mxu0 0.0
    %5055 = vmatpush1.msra.mxu0 0.0
    %5056 = vmatprep.subr.mxu0 0.0
    %5057 = vmatpush1.msra.mxu0 0.0
    %5058 = vmatprep.mubr.f32.mxu0 0.0
    %5059 = vmatmul.mubr.f32.gmra.mrb[0].mxu0 %v4992
    %v5060 = vpop.f32.mrb[0].mxu0
    %v5061 = vadd.f32 0.0, %v5060
    %v5062 = vpop.f32.mrb[0].mxu0
    %v5063 = vadd.f32 0.0, %v5062
    %5064 = vdwg.mxu0
    %5065 = vmatprep.subr.mxu0 %v4839
    %5066 = vmatpush1.msra.mxu0 %v4838
    %5067 = vmatprep.subr.mxu0 %v4843
    %5068 = vmatpush1.msra.mxu0 %v4842
    %5069 = vmatprep.subr.mxu0 0.0
    %5070 = vmatpush1.msra.mxu0 0.0
    %5071 = vmatprep.subr.mxu0 0.0
    %5072 = vmatpush1.msra.mxu0 0.0
    %5073 = vmatprep.subr.mxu0 0.0
    %5074 = vmatpush1.msra.mxu0 0.0
    %5075 = vmatprep.subr.mxu0 0.0
    %5076 = vmatpush1.msra.mxu0 0.0
    %5077 = vmatprep.subr.mxu0 0.0
    %5078 = vmatpush1.msra.mxu0 0.0
    %5079 = vmatprep.subr.mxu0 0.0
    %5080 = vmatpush1.msra.mxu0 0.0
    %5081 = vmatprep.subr.mxu0 0.0
    %5082 = vmatpush1.msra.mxu0 0.0
    %5083 = vmatprep.subr.mxu0 0.0
    %5084 = vmatpush1.msra.mxu0 0.0
    %5085 = vmatprep.subr.mxu0 0.0
    %5086 = vmatpush1.msra.mxu0 0.0
    %5087 = vmatprep.subr.mxu0 0.0
    %5088 = vmatpush1.msra.mxu0 0.0
    %5089 = vmatprep.subr.mxu0 0.0
    %5090 = vmatpush1.msra.mxu0 0.0
    %5091 = vmatprep.subr.mxu0 0.0
    %5092 = vmatpush1.msra.mxu0 0.0
    %5093 = vmatprep.subr.mxu0 0.0
    %5094 = vmatpush1.msra.mxu0 0.0
    %5095 = vmatprep.subr.mxu0 0.0
    %5096 = vmatpush1.msra.mxu0 0.0
    %5097 = vmatprep.subr.mxu0 0.0
    %5098 = vmatpush1.msra.mxu0 0.0
    %5099 = vmatprep.subr.mxu0 0.0
    %5100 = vmatpush1.msra.mxu0 0.0
    %5101 = vmatprep.subr.mxu0 0.0
    %5102 = vmatpush1.msra.mxu0 0.0
    %5103 = vmatprep.subr.mxu0 0.0
    %5104 = vmatpush1.msra.mxu0 0.0
    %5105 = vmatprep.subr.mxu0 0.0
    %5106 = vmatpush1.msra.mxu0 0.0
    %5107 = vmatprep.subr.mxu0 0.0
    %5108 = vmatpush1.msra.mxu0 0.0
    %5109 = vmatprep.subr.mxu0 0.0
    %5110 = vmatpush1.msra.mxu0 0.0
    %5111 = vmatprep.subr.mxu0 0.0
    %5112 = vmatpush1.msra.mxu0 0.0
    %5113 = vmatprep.subr.mxu0 0.0
    %5114 = vmatpush1.msra.mxu0 0.0
    %5115 = vmatprep.subr.mxu0 0.0
    %5116 = vmatpush1.msra.mxu0 0.0
    %5117 = vmatprep.subr.mxu0 0.0
    %5118 = vmatpush1.msra.mxu0 0.0
    %5119 = vmatprep.subr.mxu0 0.0
    %5120 = vmatpush1.msra.mxu0 0.0
    %5121 = vmatprep.subr.mxu0 0.0
    %5122 = vmatpush1.msra.mxu0 0.0
    %5123 = vmatprep.subr.mxu0 0.0
    %5124 = vmatpush1.msra.mxu0 0.0
    %5125 = vmatprep.subr.mxu0 0.0
    %5126 = vmatpush1.msra.mxu0 0.0
    %5127 = vmatprep.subr.mxu0 0.0
    %5128 = vmatpush1.msra.mxu0 0.0
    %5129 = vmatprep.mubr.f32.mxu0 0.0
    %5130 = vmatmul.mubr.f32.gmra.mrb[0].mxu0 %v4992
    %v5131 = vpop.f32.mrb[0].mxu0
    %v5132 = vadd.f32 0.0, %v5131
    %v5133 = vpop.f32.mrb[0].mxu0
    %v5134 = vadd.f32 0.0, %v5133
    %5135 = vdwg.mxu0
    %v5136 = vmax.f32 %v4915, %v5061
    %v5137 = vmax.f32 %v4917, %v5063
    %v5138 = vmax.f32 %v4986, %v5132
    %v5139 = vmax.f32 %v4988, %v5134
    %v5140 = vmax.f32 %v5136, %v5138
    %v5141 = vmax.f32 %v5137, %v5139
    %v5142 = vld [vmem:[#allocation26] sm:$0xff]
    %v5143 = vld [vmem:[#allocation26 + $0x8] sm:$0xff]
    %v5144 = vld [vmem:[#allocation26 + $0x10] sm:$0xff]
    %v5145 = vld [vmem:[#allocation26 + $0x18] sm:$0xff]
    %v5146 = vld [vmem:[#allocation26 + $0x20] sm:$0xff]
    %v5147 = vld [vmem:[#allocation26 + $0x28] sm:$0xff]
    %v5148 = vld [vmem:[#allocation26 + $0x30] sm:$0xff]
    %v5149 = vld [vmem:[#allocation26 + $0x38] sm:$0xff]
    %v5150 = vld [vmem:[#allocation26 + $0x40] sm:$0xff]
    %v5151 = vld [vmem:[#allocation26 + $0x48] sm:$0xff]
    %v5152 = vld [vmem:[#allocation26 + $0x50] sm:$0xff]
    %v5153 = vld [vmem:[#allocation26 + $0x58] sm:$0xff]
    %v5154 = vld [vmem:[#allocation26 + $0x60] sm:$0xff]
    %v5155 = vld [vmem:[#allocation26 + $0x68] sm:$0xff]
    %v5156 = vld [vmem:[#allocation26 + $0x70] sm:$0xff]
    %v5157 = vld [vmem:[#allocation26 + $0x78] sm:$0xff]
    %v5158 = vld [vmem:[#allocation26 + $0x80] sm:$0xff]
    %v5159 = vld [vmem:[#allocation26 + $0x88] sm:$0xff]
    %v5160 = vld [vmem:[#allocation26 + $0x90] sm:$0xff]
    %v5161 = vld [vmem:[#allocation26 + $0x98] sm:$0xff]
    %v5162 = vld [vmem:[#allocation26 + $0xa0] sm:$0xff]
    %v5163 = vld [vmem:[#allocation26 + $0xa8] sm:$0xff]
    %v5164 = vld [vmem:[#allocation26 + $0xb0] sm:$0xff]
    %v5165 = vld [vmem:[#allocation26 + $0xb8] sm:$0xff]
    %v5166 = vld [vmem:[#allocation26 + $0xc0] sm:$0xff]
    %v5167 = vld [vmem:[#allocation26 + $0xc8] sm:$0xff]
    %v5168 = vld [vmem:[#allocation26 + $0xd0] sm:$0xff]
    %v5169 = vld [vmem:[#allocation26 + $0xd8] sm:$0xff]
    %v5170 = vld [vmem:[#allocation26 + $0xe0] sm:$0xff]
    %v5171 = vld [vmem:[#allocation26 + $0xe8] sm:$0xff]
    %v5172 = vld [vmem:[#allocation26 + $0xf0] sm:$0xff]
    %v5173 = vld [vmem:[#allocation26 + $0xf8] sm:$0xff]
    %v5174 = vld [vmem:[#allocation26 + $0x100] sm:$0xff]
    %v5175 = vld [vmem:[#allocation26 + $0x108] sm:$0xff]
    %v5176 = vld [vmem:[#allocation26 + $0x110] sm:$0xff]
    %v5177 = vld [vmem:[#allocation26 + $0x118] sm:$0xff]
    %v5178 = vld [vmem:[#allocation26 + $0x120] sm:$0xff]
    %v5179 = vld [vmem:[#allocation26 + $0x128] sm:$0xff]
    %v5180 = vld [vmem:[#allocation26 + $0x130] sm:$0xff]
    %v5181 = vld [vmem:[#allocation26 + $0x138] sm:$0xff]
    %v5182 = vld [vmem:[#allocation26 + $0x140] sm:$0xff]
    %v5183 = vld [vmem:[#allocation26 + $0x148] sm:$0xff]
    %v5184 = vld [vmem:[#allocation26 + $0x150] sm:$0xff]
    %v5185 = vld [vmem:[#allocation26 + $0x158] sm:$0xff]
    %v5186 = vld [vmem:[#allocation26 + $0x160] sm:$0xff]
    %v5187 = vld [vmem:[#allocation26 + $0x168] sm:$0xff]
    %v5188 = vld [vmem:[#allocation26 + $0x170] sm:$0xff]
    %v5189 = vld [vmem:[#allocation26 + $0x178] sm:$0xff]
    %v5190 = vld [vmem:[#allocation26 + $0x180] sm:$0xff]
    %v5191 = vld [vmem:[#allocation26 + $0x188] sm:$0xff]
    %v5192 = vld [vmem:[#allocation26 + $0x190] sm:$0xff]
    %v5193 = vld [vmem:[#allocation26 + $0x198] sm:$0xff]
    %v5194 = vld [vmem:[#allocation26 + $0x1a0] sm:$0xff]
    %v5195 = vld [vmem:[#allocation26 + $0x1a8] sm:$0xff]
    %v5196 = vld [vmem:[#allocation26 + $0x1b0] sm:$0xff]
    %v5197 = vld [vmem:[#allocation26 + $0x1b8] sm:$0xff]
    %v5198 = vld [vmem:[#allocation26 + $0x1c0] sm:$0xff]
    %v5199 = vld [vmem:[#allocation26 + $0x1c8] sm:$0xff]
    %v5200 = vld [vmem:[#allocation26 + $0x1d0] sm:$0xff]
    %v5201 = vld [vmem:[#allocation26 + $0x1d8] sm:$0xff]
    %v5202 = vld [vmem:[#allocation26 + $0x1e0] sm:$0xff]
    %v5203 = vld [vmem:[#allocation26 + $0x1e8] sm:$0xff]
    %v5204 = vld [vmem:[#allocation26 + $0x1f0] sm:$0xff]
    %v5205 = vld [vmem:[#allocation26 + $0x1f8] sm:$0xff]
    %v5206 = vld [vmem:[#allocation26 + $0x200] sm:$0xff]
    %v5207 = vld [vmem:[#allocation26 + $0x208] sm:$0xff]
    %v5208 = vld [vmem:[#allocation26 + $0x210] sm:$0xff]
    %v5209 = vld [vmem:[#allocation26 + $0x218] sm:$0xff]
    %v5210 = vld [vmem:[#allocation26 + $0x220] sm:$0xff]
    %v5211 = vld [vmem:[#allocation26 + $0x228] sm:$0xff]
    %v5212 = vld [vmem:[#allocation26 + $0x230] sm:$0xff]
    %v5213 = vld [vmem:[#allocation26 + $0x238] sm:$0xff]
    %v5214 = vld [vmem:[#allocation26 + $0x240] sm:$0xff]
    %v5215 = vld [vmem:[#allocation26 + $0x248] sm:$0xff]
    %v5216 = vld [vmem:[#allocation26 + $0x250] sm:$0xff]
    %v5217 = vld [vmem:[#allocation26 + $0x258] sm:$0xff]
    %v5218 = vld [vmem:[#allocation26 + $0x260] sm:$0xff]
    %v5219 = vld [vmem:[#allocation26 + $0x268] sm:$0xff]
    %v5220 = vld [vmem:[#allocation26 + $0x270] sm:$0xff]
    %v5221 = vld [vmem:[#allocation26 + $0x278] sm:$0xff]
    %v5222 = vld [vmem:[#allocation26 + $0x280] sm:$0xff]
    %v5223 = vld [vmem:[#allocation26 + $0x288] sm:$0xff]
    %v5224 = vld [vmem:[#allocation26 + $0x290] sm:$0xff]
    %v5225 = vld [vmem:[#allocation26 + $0x298] sm:$0xff]
    %v5226 = vld [vmem:[#allocation26 + $0x2a0] sm:$0xff]
    %v5227 = vld [vmem:[#allocation26 + $0x2a8] sm:$0xff]
    %v5228 = vld [vmem:[#allocation26 + $0x2b0] sm:$0xff]
    %v5229 = vld [vmem:[#allocation26 + $0x2b8] sm:$0xff]
    %v5230 = vld [vmem:[#allocation26 + $0x2c0] sm:$0xff]
    %v5231 = vld [vmem:[#allocation26 + $0x2c8] sm:$0xff]
    %v5232 = vld [vmem:[#allocation26 + $0x2d0] sm:$0xff]
    %v5233 = vld [vmem:[#allocation26 + $0x2d8] sm:$0xff]
    %v5234 = vld [vmem:[#allocation26 + $0x2e0] sm:$0xff]
    %v5235 = vld [vmem:[#allocation26 + $0x2e8] sm:$0xff]
    %v5236 = vld [vmem:[#allocation26 + $0x2f0] sm:$0xff]
    %v5237 = vld [vmem:[#allocation26 + $0x2f8] sm:$0xff]
    %v5238 = vld [vmem:[#allocation26 + $0x300] sm:$0xff]
    %v5239 = vld [vmem:[#allocation26 + $0x308] sm:$0xff]
    %v5240 = vld [vmem:[#allocation26 + $0x310] sm:$0xff]
    %v5241 = vld [vmem:[#allocation26 + $0x318] sm:$0xff]
    %v5242 = vld [vmem:[#allocation26 + $0x320] sm:$0xff]
    %v5243 = vld [vmem:[#allocation26 + $0x328] sm:$0xff]
    %v5244 = vld [vmem:[#allocation26 + $0x330] sm:$0xff]
    %v5245 = vld [vmem:[#allocation26 + $0x338] sm:$0xff]
    %v5246 = vld [vmem:[#allocation26 + $0x340] sm:$0xff]
    %v5247 = vld [vmem:[#allocation26 + $0x348] sm:$0xff]
    %v5248 = vld [vmem:[#allocation26 + $0x350] sm:$0xff]
    %v5249 = vld [vmem:[#allocation26 + $0x358] sm:$0xff]
    %v5250 = vld [vmem:[#allocation26 + $0x360] sm:$0xff]
    %v5251 = vld [vmem:[#allocation26 + $0x368] sm:$0xff]
    %v5252 = vld [vmem:[#allocation26 + $0x370] sm:$0xff]
    %v5253 = vld [vmem:[#allocation26 + $0x378] sm:$0xff]
    %v5254 = vld [vmem:[#allocation26 + $0x380] sm:$0xff]
    %v5255 = vld [vmem:[#allocation26 + $0x388] sm:$0xff]
    %v5256 = vld [vmem:[#allocation26 + $0x390] sm:$0xff]
    %v5257 = vld [vmem:[#allocation26 + $0x398] sm:$0xff]
    %v5258 = vld [vmem:[#allocation26 + $0x3a0] sm:$0xff]
    %v5259 = vld [vmem:[#allocation26 + $0x3a8] sm:$0xff]
    %v5260 = vld [vmem:[#allocation26 + $0x3b0] sm:$0xff]
    %v5261 = vld [vmem:[#allocation26 + $0x3b8] sm:$0xff]
    %v5262 = vld [vmem:[#allocation26 + $0x3c0] sm:$0xff]
    %v5263 = vld [vmem:[#allocation26 + $0x3c8] sm:$0xff]
    %v5264 = vld [vmem:[#allocation26 + $0x3d0] sm:$0xff]
    %v5265 = vld [vmem:[#allocation26 + $0x3d8] sm:$0xff]
    %v5266 = vld [vmem:[#allocation26 + $0x3e0] sm:$0xff]
    %v5267 = vld [vmem:[#allocation26 + $0x3e8] sm:$0xff]
    %v5268 = vld [vmem:[#allocation26 + $0x3f0] sm:$0xff]
    %v5269 = vld [vmem:[#allocation26 + $0x3f8] sm:$0xff]
    %s5270 = scalar_lea.vmem [#allocation26], 1024
    %v5271 = vld [vmem:[%s5270] sm:$0xff]
    %v5272 = vld [vmem:[%s5270 + $0x8] sm:$0xff]
    %v5273 = vld [vmem:[%s5270 + $0x10] sm:$0xff]
    %v5274 = vld [vmem:[%s5270 + $0x18] sm:$0xff]
    %v5275 = vld [vmem:[%s5270 + $0x20] sm:$0xff]
    %v5276 = vld [vmem:[%s5270 + $0x28] sm:$0xff]
    %v5277 = vld [vmem:[%s5270 + $0x30] sm:$0xff]
    %v5278 = vld [vmem:[%s5270 + $0x38] sm:$0xff]
    %v5279 = vld [vmem:[%s5270 + $0x40] sm:$0xff]
    %v5280 = vld [vmem:[%s5270 + $0x48] sm:$0xff]
    %v5281 = vld [vmem:[%s5270 + $0x50] sm:$0xff]
    %v5282 = vld [vmem:[%s5270 + $0x58] sm:$0xff]
    %v5283 = vld [vmem:[%s5270 + $0x60] sm:$0xff]
    %v5284 = vld [vmem:[%s5270 + $0x68] sm:$0xff]
    %v5285 = vld [vmem:[%s5270 + $0x70] sm:$0xff]
    %v5286 = vld [vmem:[%s5270 + $0x78] sm:$0xff]
    %v5287 = vld [vmem:[%s5270 + $0x80] sm:$0xff]
    %v5288 = vld [vmem:[%s5270 + $0x88] sm:$0xff]
    %v5289 = vld [vmem:[%s5270 + $0x90] sm:$0xff]
    %v5290 = vld [vmem:[%s5270 + $0x98] sm:$0xff]
    %v5291 = vld [vmem:[%s5270 + $0xa0] sm:$0xff]
    %v5292 = vld [vmem:[%s5270 + $0xa8] sm:$0xff]
    %v5293 = vld [vmem:[%s5270 + $0xb0] sm:$0xff]
    %v5294 = vld [vmem:[%s5270 + $0xb8] sm:$0xff]
    %v5295 = vld [vmem:[%s5270 + $0xc0] sm:$0xff]
    %v5296 = vld [vmem:[%s5270 + $0xc8] sm:$0xff]
    %v5297 = vld [vmem:[%s5270 + $0xd0] sm:$0xff]
    %v5298 = vld [vmem:[%s5270 + $0xd8] sm:$0xff]
    %v5299 = vld [vmem:[%s5270 + $0xe0] sm:$0xff]
    %v5300 = vld [vmem:[%s5270 + $0xe8] sm:$0xff]
    %v5301 = vld [vmem:[%s5270 + $0xf0] sm:$0xff]
    %v5302 = vld [vmem:[%s5270 + $0xf8] sm:$0xff]
    %v5303 = vld [vmem:[%s5270 + $0x100] sm:$0xff]
    %v5304 = vld [vmem:[%s5270 + $0x108] sm:$0xff]
    %v5305 = vld [vmem:[%s5270 + $0x110] sm:$0xff]
    %v5306 = vld [vmem:[%s5270 + $0x118] sm:$0xff]
    %v5307 = vld [vmem:[%s5270 + $0x120] sm:$0xff]
    %v5308 = vld [vmem:[%s5270 + $0x128] sm:$0xff]
    %v5309 = vld [vmem:[%s5270 + $0x130] sm:$0xff]
    %v5310 = vld [vmem:[%s5270 + $0x138] sm:$0xff]
    %v5311 = vld [vmem:[%s5270 + $0x140] sm:$0xff]
    %v5312 = vld [vmem:[%s5270 + $0x148] sm:$0xff]
    %v5313 = vld [vmem:[%s5270 + $0x150] sm:$0xff]
    %v5314 = vld [vmem:[%s5270 + $0x158] sm:$0xff]
    %v5315 = vld [vmem:[%s5270 + $0x160] sm:$0xff]
    %v5316 = vld [vmem:[%s5270 + $0x168] sm:$0xff]
    %v5317 = vld [vmem:[%s5270 + $0x170] sm:$0xff]
    %v5318 = vld [vmem:[%s5270 + $0x178] sm:$0xff]
    %v5319 = vld [vmem:[%s5270 + $0x180] sm:$0xff]
    %v5320 = vld [vmem:[%s5270 + $0x188] sm:$0xff]
    %v5321 = vld [vmem:[%s5270 + $0x190] sm:$0xff]
    %v5322 = vld [vmem:[%s5270 + $0x198] sm:$0xff]
    %v5323 = vld [vmem:[%s5270 + $0x1a0] sm:$0xff]
    %v5324 = vld [vmem:[%s5270 + $0x1a8] sm:$0xff]
    %v5325 = vld [vmem:[%s5270 + $0x1b0] sm:$0xff]
    %v5326 = vld [vmem:[%s5270 + $0x1b8] sm:$0xff]
    %v5327 = vld [vmem:[%s5270 + $0x1c0] sm:$0xff]
    %v5328 = vld [vmem:[%s5270 + $0x1c8] sm:$0xff]
    %v5329 = vld [vmem:[%s5270 + $0x1d0] sm:$0xff]
    %v5330 = vld [vmem:[%s5270 + $0x1d8] sm:$0xff]
    %v5331 = vld [vmem:[%s5270 + $0x1e0] sm:$0xff]
    %v5332 = vld [vmem:[%s5270 + $0x1e8] sm:$0xff]
    %v5333 = vld [vmem:[%s5270 + $0x1f0] sm:$0xff]
    %v5334 = vld [vmem:[%s5270 + $0x1f8] sm:$0xff]
    %v5335 = vld [vmem:[%s5270 + $0x200] sm:$0xff]
    %v5336 = vld [vmem:[%s5270 + $0x208] sm:$0xff]
    %v5337 = vld [vmem:[%s5270 + $0x210] sm:$0xff]
    %v5338 = vld [vmem:[%s5270 + $0x218] sm:$0xff]
    %v5339 = vld [vmem:[%s5270 + $0x220] sm:$0xff]
    %v5340 = vld [vmem:[%s5270 + $0x228] sm:$0xff]
    %v5341 = vld [vmem:[%s5270 + $0x230] sm:$0xff]
    %v5342 = vld [vmem:[%s5270 + $0x238] sm:$0xff]
    %v5343 = vld [vmem:[%s5270 + $0x240] sm:$0xff]
    %v5344 = vld [vmem:[%s5270 + $0x248] sm:$0xff]
    %v5345 = vld [vmem:[%s5270 + $0x250] sm:$0xff]
    %v5346 = vld [vmem:[%s5270 + $0x258] sm:$0xff]
    %v5347 = vld [vmem:[%s5270 + $0x260] sm:$0xff]
    %v5348 = vld [vmem:[%s5270 + $0x268] sm:$0xff]
    %v5349 = vld [vmem:[%s5270 + $0x270] sm:$0xff]
    %v5350 = vld [vmem:[%s5270 + $0x278] sm:$0xff]
    %v5351 = vld [vmem:[%s5270 + $0x280] sm:$0xff]
    %v5352 = vld [vmem:[%s5270 + $0x288] sm:$0xff]
    %v5353 = vld [vmem:[%s5270 + $0x290] sm:$0xff]
    %v5354 = vld [vmem:[%s5270 + $0x298] sm:$0xff]
    %v5355 = vld [vmem:[%s5270 + $0x2a0] sm:$0xff]
    %v5356 = vld [vmem:[%s5270 + $0x2a8] sm:$0xff]
    %v5357 = vld [vmem:[%s5270 + $0x2b0] sm:$0xff]
    %v5358 = vld [vmem:[%s5270 + $0x2b8] sm:$0xff]
    %v5359 = vld [vmem:[%s5270 + $0x2c0] sm:$0xff]
    %v5360 = vld [vmem:[%s5270 + $0x2c8] sm:$0xff]
    %v5361 = vld [vmem:[%s5270 + $0x2d0] sm:$0xff]
    %v5362 = vld [vmem:[%s5270 + $0x2d8] sm:$0xff]
    %v5363 = vld [vmem:[%s5270 + $0x2e0] sm:$0xff]
    %v5364 = vld [vmem:[%s5270 + $0x2e8] sm:$0xff]
    %v5365 = vld [vmem:[%s5270 + $0x2f0] sm:$0xff]
    %v5366 = vld [vmem:[%s5270 + $0x2f8] sm:$0xff]
    %v5367 = vld [vmem:[%s5270 + $0x300] sm:$0xff]
    %v5368 = vld [vmem:[%s5270 + $0x308] sm:$0xff]
    %v5369 = vld [vmem:[%s5270 + $0x310] sm:$0xff]
    %v5370 = vld [vmem:[%s5270 + $0x318] sm:$0xff]
    %v5371 = vld [vmem:[%s5270 + $0x320] sm:$0xff]
    %v5372 = vld [vmem:[%s5270 + $0x328] sm:$0xff]
    %v5373 = vld [vmem:[%s5270 + $0x330] sm:$0xff]
    %v5374 = vld [vmem:[%s5270 + $0x338] sm:$0xff]
    %v5375 = vld [vmem:[%s5270 + $0x340] sm:$0xff]
    %v5376 = vld [vmem:[%s5270 + $0x348] sm:$0xff]
    %v5377 = vld [vmem:[%s5270 + $0x350] sm:$0xff]
    %v5378 = vld [vmem:[%s5270 + $0x358] sm:$0xff]
    %v5379 = vld [vmem:[%s5270 + $0x360] sm:$0xff]
    %v5380 = vld [vmem:[%s5270 + $0x368] sm:$0xff]
    %v5381 = vld [vmem:[%s5270 + $0x370] sm:$0xff]
    %v5382 = vld [vmem:[%s5270 + $0x378] sm:$0xff]
    %v5383 = vld [vmem:[%s5270 + $0x380] sm:$0xff]
    %v5384 = vld [vmem:[%s5270 + $0x388] sm:$0xff]
    %v5385 = vld [vmem:[%s5270 + $0x390] sm:$0xff]
    %v5386 = vld [vmem:[%s5270 + $0x398] sm:$0xff]
    %v5387 = vld [vmem:[%s5270 + $0x3a0] sm:$0xff]
    %v5388 = vld [vmem:[%s5270 + $0x3a8] sm:$0xff]
    %v5389 = vld [vmem:[%s5270 + $0x3b0] sm:$0xff]
    %v5390 = vld [vmem:[%s5270 + $0x3b8] sm:$0xff]
    %v5391 = vld [vmem:[%s5270 + $0x3c0] sm:$0xff]
    %v5392 = vld [vmem:[%s5270 + $0x3c8] sm:$0xff]
    %v5393 = vld [vmem:[%s5270 + $0x3d0] sm:$0xff]
    %v5394 = vld [vmem:[%s5270 + $0x3d8] sm:$0xff]
    %v5395 = vld [vmem:[%s5270 + $0x3e0] sm:$0xff]
    %v5396 = vld [vmem:[%s5270 + $0x3e8] sm:$0xff]
    %v5397 = vld [vmem:[%s5270 + $0x3f0] sm:$0xff]
    %v5398 = vld [vmem:[%s5270 + $0x3f8] sm:$0xff]
    %v5401 = vrot.slane %v5140, 2
    %v5402 = vrot.slane %v5141, 2
    %5405 = vmatprep.subr.mxu0 %v5272
    %5406 = vmatpush1.msra.mxu0 %v5271
    %5407 = vmatprep.subr.mxu0 %v5276
    %5408 = vmatpush1.msra.mxu0 %v5275
    %5409 = vmatprep.subr.mxu0 %v5280
    %5410 = vmatpush1.msra.mxu0 %v5279
    %5411 = vmatprep.subr.mxu0 %v5284
    %5412 = vmatpush1.msra.mxu0 %v5283
    %5413 = vmatprep.subr.mxu0 %v5288
    %5414 = vmatpush1.msra.mxu0 %v5287
    %5415 = vmatprep.subr.mxu0 %v5292
    %5416 = vmatpush1.msra.mxu0 %v5291
    %5417 = vmatprep.subr.mxu0 %v5296
    %5418 = vmatpush1.msra.mxu0 %v5295
    %5419 = vmatprep.subr.mxu0 %v5300
    %5420 = vmatpush1.msra.mxu0 %v5299
    %5421 = vmatprep.subr.mxu0 %v5304
    %5422 = vmatpush1.msra.mxu0 %v5303
    %5423 = vmatprep.subr.mxu0 %v5308
    %5424 = vmatpush1.msra.mxu0 %v5307
    %5425 = vmatprep.subr.mxu0 %v5312
    %5426 = vmatpush1.msra.mxu0 %v5311
    %5427 = vmatprep.subr.mxu0 %v5316
    %5428 = vmatpush1.msra.mxu0 %v5315
    %5429 = vmatprep.subr.mxu0 %v5320
    %5430 = vmatpush1.msra.mxu0 %v5319
    %5431 = vmatprep.subr.mxu0 %v5324
    %5432 = vmatpush1.msra.mxu0 %v5323
    %5433 = vmatprep.subr.mxu0 %v5328
    %5434 = vmatpush1.msra.mxu0 %v5327
    %5435 = vmatprep.subr.mxu0 %v5332
    %5436 = vmatpush1.msra.mxu0 %v5331
    %5437 = vmatprep.subr.mxu0 %v5336
    %5438 = vmatpush1.msra.mxu0 %v5335
    %5439 = vmatprep.subr.mxu0 %v5340
    %5440 = vmatpush1.msra.mxu0 %v5339
    %5441 = vmatprep.subr.mxu0 %v5344
    %5442 = vmatpush1.msra.mxu0 %v5343
    %5443 = vmatprep.subr.mxu0 %v5348
    %5444 = vmatpush1.msra.mxu0 %v5347
    %5445 = vmatprep.subr.mxu0 %v5352
    %5446 = vmatpush1.msra.mxu0 %v5351
    %5447 = vmatprep.subr.mxu0 %v5356
    %5448 = vmatpush1.msra.mxu0 %v5355
    %5449 = vmatprep.subr.mxu0 %v5360
    %5450 = vmatpush1.msra.mxu0 %v5359
    %5451 = vmatprep.subr.mxu0 %v5364
    %5452 = vmatpush1.msra.mxu0 %v5363
    %5453 = vmatprep.subr.mxu0 %v5368
    %5454 = vmatpush1.msra.mxu0 %v5367
    %5455 = vmatprep.subr.mxu0 %v5372
    %5456 = vmatpush1.msra.mxu0 %v5371
    %5457 = vmatprep.subr.mxu0 %v5376
    %5458 = vmatpush1.msra.mxu0 %v5375
    %5459 = vmatprep.subr.mxu0 %v5380
    %5460 = vmatpush1.msra.mxu0 %v5379
    %5461 = vmatprep.subr.mxu0 %v5384
    %5462 = vmatpush1.msra.mxu0 %v5383
    %5463 = vmatprep.subr.mxu0 %v5388
    %5464 = vmatpush1.msra.mxu0 %v5387
    %5465 = vmatprep.subr.mxu0 %v5392
    %5466 = vmatpush1.msra.mxu0 %v5391
    %5467 = vmatprep.subr.mxu0 %v5396
    %5468 = vmatpush1.msra.mxu0 %v5395
    %5469 = vmatprep.mubr.f32.mxu0 %v5402
    %5470 = vmatmul.mubr.f32.gmra.mrb[0].mxu0 %v5401
    %v5471 = vpop.f32.mrb[0].mxu0
    %v5472 = vadd.f32 0.0, %v5471
    %v5473 = vpop.f32.mrb[0].mxu0
    %v5474 = vadd.f32 0.0, %v5473
    %5475 = vdwg.mxu0
    %5476 = vmatprep.subr.mxu0 %v5274
    %5477 = vmatpush1.msra.mxu0 %v5273
    %5478 = vmatprep.subr.mxu0 %v5278
    %5479 = vmatpush1.msra.mxu0 %v5277
    %5480 = vmatprep.subr.mxu0 %v5282
    %5481 = vmatpush1.msra.mxu0 %v5281
    %5482 = vmatprep.subr.mxu0 %v5286
    %5483 = vmatpush1.msra.mxu0 %v5285
    %5484 = vmatprep.subr.mxu0 %v5290
    %5485 = vmatpush1.msra.mxu0 %v5289
    %5486 = vmatprep.subr.mxu0 %v5294
    %5487 = vmatpush1.msra.mxu0 %v5293
    %5488 = vmatprep.subr.mxu0 %v5298
    %5489 = vmatpush1.msra.mxu0 %v5297
    %5490 = vmatprep.subr.mxu0 %v5302
    %5491 = vmatpush1.msra.mxu0 %v5301
    %5492 = vmatprep.subr.mxu0 %v5306
    %5493 = vmatpush1.msra.mxu0 %v5305
    %5494 = vmatprep.subr.mxu0 %v5310
    %5495 = vmatpush1.msra.mxu0 %v5309
    %5496 = vmatprep.subr.mxu0 %v5314
    %5497 = vmatpush1.msra.mxu0 %v5313
    %5498 = vmatprep.subr.mxu0 %v5318
    %5499 = vmatpush1.msra.mxu0 %v5317
    %5500 = vmatprep.subr.mxu0 %v5322
    %5501 = vmatpush1.msra.mxu0 %v5321
    %5502 = vmatprep.subr.mxu0 %v5326
    %5503 = vmatpush1.msra.mxu0 %v5325
    %5504 = vmatprep.subr.mxu0 %v5330
    %5505 = vmatpush1.msra.mxu0 %v5329
    %5506 = vmatprep.subr.mxu0 %v5334
    %5507 = vmatpush1.msra.mxu0 %v5333
    %5508 = vmatprep.subr.mxu0 %v5338
    %5509 = vmatpush1.msra.mxu0 %v5337
    %5510 = vmatprep.subr.mxu0 %v5342
    %5511 = vmatpush1.msra.mxu0 %v5341
    %5512 = vmatprep.subr.mxu0 %v5346
    %5513 = vmatpush1.msra.mxu0 %v5345
    %5514 = vmatprep.subr.mxu0 %v5350
    %5515 = vmatpush1.msra.mxu0 %v5349
    %5516 = vmatprep.subr.mxu0 %v5354
    %5517 = vmatpush1.msra.mxu0 %v5353
    %5518 = vmatprep.subr.mxu0 %v5358
    %5519 = vmatpush1.msra.mxu0 %v5357
    %5520 = vmatprep.subr.mxu0 %v5362
    %5521 = vmatpush1.msra.mxu0 %v5361
    %5522 = vmatprep.subr.mxu0 %v5366
    %5523 = vmatpush1.msra.mxu0 %v5365
    %5524 = vmatprep.subr.mxu0 %v5370
    %5525 = vmatpush1.msra.mxu0 %v5369
    %5526 = vmatprep.subr.mxu0 %v5374
    %5527 = vmatpush1.msra.mxu0 %v5373
    %5528 = vmatprep.subr.mxu0 %v5378
    %5529 = vmatpush1.msra.mxu0 %v5377
    %5530 = vmatprep.subr.mxu0 %v5382
    %5531 = vmatpush1.msra.mxu0 %v5381
    %5532 = vmatprep.subr.mxu0 %v5386
    %5533 = vmatpush1.msra.mxu0 %v5385
    %5534 = vmatprep.subr.mxu0 %v5390
    %5535 = vmatpush1.msra.mxu0 %v5389
    %5536 = vmatprep.subr.mxu0 %v5394
    %5537 = vmatpush1.msra.mxu0 %v5393
    %5538 = vmatprep.subr.mxu0 %v5398
    %5539 = vmatpush1.msra.mxu0 %v5397
    %5540 = vmatprep.mubr.f32.mxu0 %v5402
    %5541 = vmatmul.mubr.f32.gmra.mrb[0].mxu0 %v5401
    %v5542 = vpop.f32.mrb[0].mxu0
    %v5543 = vadd.f32 0.0, %v5542
    %v5544 = vpop.f32.mrb[0].mxu0
    %v5545 = vadd.f32 0.0, %v5544
    %5546 = vdwg.mxu0
    %5547 = vmatprep.subr.mxu0 %v5143
    %5548 = vmatpush1.msra.mxu0 %v5142
    %5549 = vmatprep.subr.mxu0 %v5147
    %5550 = vmatpush1.msra.mxu0 %v5146
    %5551 = vmatprep.subr.mxu0 %v5151
    %5552 = vmatpush1.msra.mxu0 %v5150
    %5553 = vmatprep.subr.mxu0 %v5155
    %5554 = vmatpush1.msra.mxu0 %v5154
    %5555 = vmatprep.subr.mxu0 %v5159
    %5556 = vmatpush1.msra.mxu0 %v5158
    %5557 = vmatprep.subr.mxu0 %v5163
    %5558 = vmatpush1.msra.mxu0 %v5162
    %5559 = vmatprep.subr.mxu0 %v5167
    %5560 = vmatpush1.msra.mxu0 %v5166
    %5561 = vmatprep.subr.mxu0 %v5171
    %5562 = vmatpush1.msra.mxu0 %v5170
    %5563 = vmatprep.subr.mxu0 %v5175
    %5564 = vmatpush1.msra.mxu0 %v5174
    %5565 = vmatprep.subr.mxu0 %v5179
    %5566 = vmatpush1.msra.mxu0 %v5178
    %5567 = vmatprep.subr.mxu0 %v5183
    %5568 = vmatpush1.msra.mxu0 %v5182
    %5569 = vmatprep.subr.mxu0 %v5187
    %5570 = vmatpush1.msra.mxu0 %v5186
    %5571 = vmatprep.subr.mxu0 %v5191
    %5572 = vmatpush1.msra.mxu0 %v5190
    %5573 = vmatprep.subr.mxu0 %v5195
    %5574 = vmatpush1.msra.mxu0 %v5194
    %5575 = vmatprep.subr.mxu0 %v5199
    %5576 = vmatpush1.msra.mxu0 %v5198
    %5577 = vmatprep.subr.mxu0 %v5203
    %5578 = vmatpush1.msra.mxu0 %v5202
    %5579 = vmatprep.subr.mxu0 %v5207
    %5580 = vmatpush1.msra.mxu0 %v5206
    %5581 = vmatprep.subr.mxu0 %v5211
    %5582 = vmatpush1.msra.mxu0 %v5210
    %5583 = vmatprep.subr.mxu0 %v5215
    %5584 = vmatpush1.msra.mxu0 %v5214
    %5585 = vmatprep.subr.mxu0 %v5219
    %5586 = vmatpush1.msra.mxu0 %v5218
    %5587 = vmatprep.subr.mxu0 %v5223
    %5588 = vmatpush1.msra.mxu0 %v5222
    %5589 = vmatprep.subr.mxu0 %v5227
    %5590 = vmatpush1.msra.mxu0 %v5226
    %5591 = vmatprep.subr.mxu0 %v5231
    %5592 = vmatpush1.msra.mxu0 %v5230
    %5593 = vmatprep.subr.mxu0 %v5235
    %5594 = vmatpush1.msra.mxu0 %v5234
    %5595 = vmatprep.subr.mxu0 %v5239
    %5596 = vmatpush1.msra.mxu0 %v5238
    %5597 = vmatprep.subr.mxu0 %v5243
    %5598 = vmatpush1.msra.mxu0 %v5242
    %5599 = vmatprep.subr.mxu0 %v5247
    %5600 = vmatpush1.msra.mxu0 %v5246
    %5601 = vmatprep.subr.mxu0 %v5251
    %5602 = vmatpush1.msra.mxu0 %v5250
    %5603 = vmatprep.subr.mxu0 %v5255
    %5604 = vmatpush1.msra.mxu0 %v5254
    %5605 = vmatprep.subr.mxu0 %v5259
    %5606 = vmatpush1.msra.mxu0 %v5258
    %5607 = vmatprep.subr.mxu0 %v5263
    %5608 = vmatpush1.msra.mxu0 %v5262
    %5609 = vmatprep.subr.mxu0 %v5267
    %5610 = vmatpush1.msra.mxu0 %v5266
    %5611 = vmatprep.mubr.f32.mxu0 %v5141
    %5612 = vmatmul.mubr.f32.gmra.mrb[0].mxu0 %v5140
    %v5613 = vpop.f32.mrb[0].mxu0
    %v5614 = vadd.f32 %v5472, %v5613
    %v5615 = vpop.f32.mrb[0].mxu0
    %v5616 = vadd.f32 %v5474, %v5615
    %5617 = vdwg.mxu0
    %5618 = vmatprep.subr.mxu0 %v5145
    %5619 = vmatpush1.msra.mxu0 %v5144
    %5620 = vmatprep.subr.mxu0 %v5149
    %5621 = vmatpush1.msra.mxu0 %v5148
    %5622 = vmatprep.subr.mxu0 %v5153
    %5623 = vmatpush1.msra.mxu0 %v5152
    %5624 = vmatprep.subr.mxu0 %v5157
    %5625 = vmatpush1.msra.mxu0 %v5156
    %5626 = vmatprep.subr.mxu0 %v5161
    %5627 = vmatpush1.msra.mxu0 %v5160
    %5628 = vmatprep.subr.mxu0 %v5165
    %5629 = vmatpush1.msra.mxu0 %v5164
    %5630 = vmatprep.subr.mxu0 %v5169
    %5631 = vmatpush1.msra.mxu0 %v5168
    %5632 = vmatprep.subr.mxu0 %v5173
    %5633 = vmatpush1.msra.mxu0 %v5172
    %5634 = vmatprep.subr.mxu0 %v5177
    %5635 = vmatpush1.msra.mxu0 %v5176
    %5636 = vmatprep.subr.mxu0 %v5181
    %5637 = vmatpush1.msra.mxu0 %v5180
    %5638 = vmatprep.subr.mxu0 %v5185
    %5639 = vmatpush1.msra.mxu0 %v5184
    %5640 = vmatprep.subr.mxu0 %v5189
    %5641 = vmatpush1.msra.mxu0 %v5188
    %5642 = vmatprep.subr.mxu0 %v5193
    %5643 = vmatpush1.msra.mxu0 %v5192
    %5644 = vmatprep.subr.mxu0 %v5197
    %5645 = vmatpush1.msra.mxu0 %v5196
    %5646 = vmatprep.subr.mxu0 %v5201
    %5647 = vmatpush1.msra.mxu0 %v5200
    %5648 = vmatprep.subr.mxu0 %v5205
    %5649 = vmatpush1.msra.mxu0 %v5204
    %5650 = vmatprep.subr.mxu0 %v5209
    %5651 = vmatpush1.msra.mxu0 %v5208
    %5652 = vmatprep.subr.mxu0 %v5213
    %5653 = vmatpush1.msra.mxu0 %v5212
    %5654 = vmatprep.subr.mxu0 %v5217
    %5655 = vmatpush1.msra.mxu0 %v5216
    %5656 = vmatprep.subr.mxu0 %v5221
    %5657 = vmatpush1.msra.mxu0 %v5220
    %5658 = vmatprep.subr.mxu0 %v5225
    %5659 = vmatpush1.msra.mxu0 %v5224
    %5660 = vmatprep.subr.mxu0 %v5229
    %5661 = vmatpush1.msra.mxu0 %v5228
    %5662 = vmatprep.subr.mxu0 %v5233
    %5663 = vmatpush1.msra.mxu0 %v5232
    %5664 = vmatprep.subr.mxu0 %v5237
    %5665 = vmatpush1.msra.mxu0 %v5236
    %5666 = vmatprep.subr.mxu0 %v5241
    %5667 = vmatpush1.msra.mxu0 %v5240
    %5668 = vmatprep.subr.mxu0 %v5245
    %5669 = vmatpush1.msra.mxu0 %v5244
    %5670 = vmatprep.subr.mxu0 %v5249
    %5671 = vmatpush1.msra.mxu0 %v5248
    %5672 = vmatprep.subr.mxu0 %v5253
    %5673 = vmatpush1.msra.mxu0 %v5252
    %5674 = vmatprep.subr.mxu0 %v5257
    %5675 = vmatpush1.msra.mxu0 %v5256
    %5676 = vmatprep.subr.mxu0 %v5261
    %5677 = vmatpush1.msra.mxu0 %v5260
    %5678 = vmatprep.subr.mxu0 %v5265
    %5679 = vmatpush1.msra.mxu0 %v5264
    %5680 = vmatprep.subr.mxu0 %v5269
    %5681 = vmatpush1.msra.mxu0 %v5268
    %5682 = vmatprep.mubr.f32.mxu0 %v5141
    %5683 = vmatmul.mubr.f32.gmra.mrb[0].mxu0 %v5140
    %v5684 = vpop.f32.mrb[0].mxu0
    %v5685 = vadd.f32 %v5543, %v5684
    %v5686 = vpop.f32.mrb[0].mxu0
    %v5687 = vadd.f32 %v5545, %v5686
    %5688 = vdwg.mxu0
    %s5689 = scalar_lea.vmem [#allocation26], 2048
    %v5690 = vld [vmem:[%s5689] sm:$0xff]
    %v5691 = vld [vmem:[%s5689 + $0x8] sm:$0xff]
    %v5692 = vld [vmem:[%s5689 + $0x10] sm:$0xff]
    %v5693 = vld [vmem:[%s5689 + $0x18] sm:$0xff]
    %v5694 = vld [vmem:[%s5689 + $0x20] sm:$0xff]
    %v5695 = vld [vmem:[%s5689 + $0x28] sm:$0xff]
    %v5696 = vld [vmem:[%s5689 + $0x30] sm:$0xff]
    %v5697 = vld [vmem:[%s5689 + $0x38] sm:$0xff]
    %v5698 = vld [vmem:[%s5689 + $0x40] sm:$0xff]
    %v5699 = vld [vmem:[%s5689 + $0x48] sm:$0xff]
    %v5700 = vld [vmem:[%s5689 + $0x50] sm:$0xff]
    %v5701 = vld [vmem:[%s5689 + $0x58] sm:$0xff]
    %v5702 = vld [vmem:[%s5689 + $0x60] sm:$0xff]
    %v5703 = vld [vmem:[%s5689 + $0x68] sm:$0xff]
    %v5704 = vld [vmem:[%s5689 + $0x70] sm:$0xff]
    %v5705 = vld [vmem:[%s5689 + $0x78] sm:$0xff]
    %v5706 = vld [vmem:[%s5689 + $0x80] sm:$0xff]
    %v5707 = vld [vmem:[%s5689 + $0x88] sm:$0xff]
    %v5708 = vld [vmem:[%s5689 + $0x90] sm:$0xff]
    %v5709 = vld [vmem:[%s5689 + $0x98] sm:$0xff]
    %v5710 = vld [vmem:[%s5689 + $0xa0] sm:$0xff]
    %v5711 = vld [vmem:[%s5689 + $0xa8] sm:$0xff]
    %v5712 = vld [vmem:[%s5689 + $0xb0] sm:$0xff]
    %v5713 = vld [vmem:[%s5689 + $0xb8] sm:$0xff]
    %v5714 = vld [vmem:[%s5689 + $0xc0] sm:$0xff]
    %v5715 = vld [vmem:[%s5689 + $0xc8] sm:$0xff]
    %v5716 = vld [vmem:[%s5689 + $0xd0] sm:$0xff]
    %v5717 = vld [vmem:[%s5689 + $0xd8] sm:$0xff]
    %v5718 = vld [vmem:[%s5689 + $0xe0] sm:$0xff]
    %v5719 = vld [vmem:[%s5689 + $0xe8] sm:$0xff]
    %v5720 = vld [vmem:[%s5689 + $0xf0] sm:$0xff]
    %v5721 = vld [vmem:[%s5689 + $0xf8] sm:$0xff]
    %v5722 = vld [vmem:[%s5689 + $0x100] sm:$0xff]
    %v5723 = vld [vmem:[%s5689 + $0x108] sm:$0xff]
    %v5724 = vld [vmem:[%s5689 + $0x110] sm:$0xff]
    %v5725 = vld [vmem:[%s5689 + $0x118] sm:$0xff]
    %v5726 = vld [vmem:[%s5689 + $0x120] sm:$0xff]
    %v5727 = vld [vmem:[%s5689 + $0x128] sm:$0xff]
    %v5728 = vld [vmem:[%s5689 + $0x130] sm:$0xff]
    %v5729 = vld [vmem:[%s5689 + $0x138] sm:$0xff]
    %v5730 = vld [vmem:[%s5689 + $0x140] sm:$0xff]
    %v5731 = vld [vmem:[%s5689 + $0x148] sm:$0xff]
    %v5732 = vld [vmem:[%s5689 + $0x150] sm:$0xff]
    %v5733 = vld [vmem:[%s5689 + $0x158] sm:$0xff]
    %v5734 = vld [vmem:[%s5689 + $0x160] sm:$0xff]
    %v5735 = vld [vmem:[%s5689 + $0x168] sm:$0xff]
    %v5736 = vld [vmem:[%s5689 + $0x170] sm:$0xff]
    %v5737 = vld [vmem:[%s5689 + $0x178] sm:$0xff]
    %v5738 = vld [vmem:[%s5689 + $0x180] sm:$0xff]
    %v5739 = vld [vmem:[%s5689 + $0x188] sm:$0xff]
    %v5740 = vld [vmem:[%s5689 + $0x190] sm:$0xff]
    %v5741 = vld [vmem:[%s5689 + $0x198] sm:$0xff]
    %v5742 = vld [vmem:[%s5689 + $0x1a0] sm:$0xff]
    %v5743 = vld [vmem:[%s5689 + $0x1a8] sm:$0xff]
    %v5744 = vld [vmem:[%s5689 + $0x1b0] sm:$0xff]
    %v5745 = vld [vmem:[%s5689 + $0x1b8] sm:$0xff]
    %v5746 = vld [vmem:[%s5689 + $0x1c0] sm:$0xff]
    %v5747 = vld [vmem:[%s5689 + $0x1c8] sm:$0xff]
    %v5748 = vld [vmem:[%s5689 + $0x1d0] sm:$0xff]
    %v5749 = vld [vmem:[%s5689 + $0x1d8] sm:$0xff]
    %v5750 = vld [vmem:[%s5689 + $0x1e0] sm:$0xff]
    %v5751 = vld [vmem:[%s5689 + $0x1e8] sm:$0xff]
    %v5752 = vld [vmem:[%s5689 + $0x1f0] sm:$0xff]
    %v5753 = vld [vmem:[%s5689 + $0x1f8] sm:$0xff]
    %v5754 = vld [vmem:[%s5689 + $0x200] sm:$0xff]
    %v5755 = vld [vmem:[%s5689 + $0x208] sm:$0xff]
    %v5756 = vld [vmem:[%s5689 + $0x210] sm:$0xff]
    %v5757 = vld [vmem:[%s5689 + $0x218] sm:$0xff]
    %v5758 = vld [vmem:[%s5689 + $0x220] sm:$0xff]
    %v5759 = vld [vmem:[%s5689 + $0x228] sm:$0xff]
    %v5760 = vld [vmem:[%s5689 + $0x230] sm:$0xff]
    %v5761 = vld [vmem:[%s5689 + $0x238] sm:$0xff]
    %v5762 = vld [vmem:[%s5689 + $0x240] sm:$0xff]
    %v5763 = vld [vmem:[%s5689 + $0x248] sm:$0xff]
    %v5764 = vld [vmem:[%s5689 + $0x250] sm:$0xff]
    %v5765 = vld [vmem:[%s5689 + $0x258] sm:$0xff]
    %v5766 = vld [vmem:[%s5689 + $0x260] sm:$0xff]
    %v5767 = vld [vmem:[%s5689 + $0x268] sm:$0xff]
    %v5768 = vld [vmem:[%s5689 + $0x270] sm:$0xff]
    %v5769 = vld [vmem:[%s5689 + $0x278] sm:$0xff]
    %v5770 = vld [vmem:[%s5689 + $0x280] sm:$0xff]
    %v5771 = vld [vmem:[%s5689 + $0x288] sm:$0xff]
    %v5772 = vld [vmem:[%s5689 + $0x290] sm:$0xff]
    %v5773 = vld [vmem:[%s5689 + $0x298] sm:$0xff]
    %v5774 = vld [vmem:[%s5689 + $0x2a0] sm:$0xff]
    %v5775 = vld [vmem:[%s5689 + $0x2a8] sm:$0xff]
    %v5776 = vld [vmem:[%s5689 + $0x2b0] sm:$0xff]
    %v5777 = vld [vmem:[%s5689 + $0x2b8] sm:$0xff]
    %v5778 = vld [vmem:[%s5689 + $0x2c0] sm:$0xff]
    %v5779 = vld [vmem:[%s5689 + $0x2c8] sm:$0xff]
    %v5780 = vld [vmem:[%s5689 + $0x2d0] sm:$0xff]
    %v5781 = vld [vmem:[%s5689 + $0x2d8] sm:$0xff]
    %v5782 = vld [vmem:[%s5689 + $0x2e0] sm:$0xff]
    %v5783 = vld [vmem:[%s5689 + $0x2e8] sm:$0xff]
    %v5784 = vld [vmem:[%s5689 + $0x2f0] sm:$0xff]
    %v5785 = vld [vmem:[%s5689 + $0x2f8] sm:$0xff]
    %v5786 = vld [vmem:[%s5689 + $0x300] sm:$0xff]
    %v5787 = vld [vmem:[%s5689 + $0x308] sm:$0xff]
    %v5788 = vld [vmem:[%s5689 + $0x310] sm:$0xff]
    %v5789 = vld [vmem:[%s5689 + $0x318] sm:$0xff]
    %v5790 = vld [vmem:[%s5689 + $0x320] sm:$0xff]
    %v5791 = vld [vmem:[%s5689 + $0x328] sm:$0xff]
    %v5792 = vld [vmem:[%s5689 + $0x330] sm:$0xff]
    %v5793 = vld [vmem:[%s5689 + $0x338] sm:$0xff]
    %v5794 = vld [vmem:[%s5689 + $0x340] sm:$0xff]
    %v5795 = vld [vmem:[%s5689 + $0x348] sm:$0xff]
    %v5796 = vld [vmem:[%s5689 + $0x350] sm:$0xff]
    %v5797 = vld [vmem:[%s5689 + $0x358] sm:$0xff]
    %v5798 = vld [vmem:[%s5689 + $0x360] sm:$0xff]
    %v5799 = vld [vmem:[%s5689 + $0x368] sm:$0xff]
    %v5800 = vld [vmem:[%s5689 + $0x370] sm:$0xff]
    %v5801 = vld [vmem:[%s5689 + $0x378] sm:$0xff]
    %v5802 = vld [vmem:[%s5689 + $0x380] sm:$0xff]
    %v5803 = vld [vmem:[%s5689 + $0x388] sm:$0xff]
    %v5804 = vld [vmem:[%s5689 + $0x390] sm:$0xff]
    %v5805 = vld [vmem:[%s5689 + $0x398] sm:$0xff]
    %v5806 = vld [vmem:[%s5689 + $0x3a0] sm:$0xff]
    %v5807 = vld [vmem:[%s5689 + $0x3a8] sm:$0xff]
    %v5808 = vld [vmem:[%s5689 + $0x3b0] sm:$0xff]
    %v5809 = vld [vmem:[%s5689 + $0x3b8] sm:$0xff]
    %v5810 = vld [vmem:[%s5689 + $0x3c0] sm:$0xff]
    %v5811 = vld [vmem:[%s5689 + $0x3c8] sm:$0xff]
    %v5812 = vld [vmem:[%s5689 + $0x3d0] sm:$0xff]
    %v5813 = vld [vmem:[%s5689 + $0x3d8] sm:$0xff]
    %v5814 = vld [vmem:[%s5689 + $0x3e0] sm:$0xff]
    %v5815 = vld [vmem:[%s5689 + $0x3e8] sm:$0xff]
    %v5816 = vld [vmem:[%s5689 + $0x3f0] sm:$0xff]
    %v5817 = vld [vmem:[%s5689 + $0x3f8] sm:$0xff]
    %v5818 = vrot.slane %v5140, 4
    %v5819 = vrot.slane %v5141, 4
    %5822 = vmatprep.subr.mxu0 %v5691
    %5823 = vmatpush1.msra.mxu0 %v5690
    %5824 = vmatprep.subr.mxu0 %v5695
    %5825 = vmatpush1.msra.mxu0 %v5694
    %5826 = vmatprep.subr.mxu0 %v5699
    %5827 = vmatpush1.msra.mxu0 %v5698
    %5828 = vmatprep.subr.mxu0 %v5703
    %5829 = vmatpush1.msra.mxu0 %v5702
    %5830 = vmatprep.subr.mxu0 %v5707
    %5831 = vmatpush1.msra.mxu0 %v5706
    %5832 = vmatprep.subr.mxu0 %v5711
    %5833 = vmatpush1.msra.mxu0 %v5710
    %5834 = vmatprep.subr.mxu0 %v5715
    %5835 = vmatpush1.msra.mxu0 %v5714
    %5836 = vmatprep.subr.mxu0 %v5719
    %5837 = vmatpush1.msra.mxu0 %v5718
    %5838 = vmatprep.subr.mxu0 %v5723
    %5839 = vmatpush1.msra.mxu0 %v5722
    %5840 = vmatprep.subr.mxu0 %v5727
    %5841 = vmatpush1.msra.mxu0 %v5726
    %5842 = vmatprep.subr.mxu0 %v5731
    %5843 = vmatpush1.msra.mxu0 %v5730
    %5844 = vmatprep.subr.mxu0 %v5735
    %5845 = vmatpush1.msra.mxu0 %v5734
    %5846 = vmatprep.subr.mxu0 %v5739
    %5847 = vmatpush1.msra.mxu0 %v5738
    %5848 = vmatprep.subr.mxu0 %v5743
    %5849 = vmatpush1.msra.mxu0 %v5742
    %5850 = vmatprep.subr.mxu0 %v5747
    %5851 = vmatpush1.msra.mxu0 %v5746
    %5852 = vmatprep.subr.mxu0 %v5751
    %5853 = vmatpush1.msra.mxu0 %v5750
    %5854 = vmatprep.subr.mxu0 %v5755
    %5855 = vmatpush1.msra.mxu0 %v5754
    %5856 = vmatprep.subr.mxu0 %v5759
    %5857 = vmatpush1.msra.mxu0 %v5758
    %5858 = vmatprep.subr.mxu0 %v5763
    %5859 = vmatpush1.msra.mxu0 %v5762
    %5860 = vmatprep.subr.mxu0 %v5767
    %5861 = vmatpush1.msra.mxu0 %v5766
    %5862 = vmatprep.subr.mxu0 %v5771
    %5863 = vmatpush1.msra.mxu0 %v5770
    %5864 = vmatprep.subr.mxu0 %v5775
    %5865 = vmatpush1.msra.mxu0 %v5774
    %5866 = vmatprep.subr.mxu0 %v5779
    %5867 = vmatpush1.msra.mxu0 %v5778
    %5868 = vmatprep.subr.mxu0 %v5783
    %5869 = vmatpush1.msra.mxu0 %v5782
    %5870 = vmatprep.subr.mxu0 %v5787
    %5871 = vmatpush1.msra.mxu0 %v5786
    %5872 = vmatprep.subr.mxu0 %v5791
    %5873 = vmatpush1.msra.mxu0 %v5790
    %5874 = vmatprep.subr.mxu0 %v5795
    %5875 = vmatpush1.msra.mxu0 %v5794
    %5876 = vmatprep.subr.mxu0 %v5799
    %5877 = vmatpush1.msra.mxu0 %v5798
    %5878 = vmatprep.subr.mxu0 %v5803
    %5879 = vmatpush1.msra.mxu0 %v5802
    %5880 = vmatprep.subr.mxu0 %v5807
    %5881 = vmatpush1.msra.mxu0 %v5806
    %5882 = vmatprep.subr.mxu0 %v5811
    %5883 = vmatpush1.msra.mxu0 %v5810
    %5884 = vmatprep.subr.mxu0 %v5815
    %5885 = vmatpush1.msra.mxu0 %v5814
    %5886 = vmatprep.mubr.f32.mxu0 %v5819
    %5887 = vmatmul.mubr.f32.gmra.mrb[0].mxu0 %v5818
    %v5888 = vpop.f32.mrb[0].mxu0
    %v5889 = vadd.f32 0.0, %v5888
    %v5890 = vpop.f32.mrb[0].mxu0
    %v5891 = vadd.f32 0.0, %v5890
    %5892 = vdwg.mxu0
    %5893 = vmatprep.subr.mxu0 %v5693
    %5894 = vmatpush1.msra.mxu0 %v5692
    %5895 = vmatprep.subr.mxu0 %v5697
    %5896 = vmatpush1.msra.mxu0 %v5696
    %5897 = vmatprep.subr.mxu0 %v5701
    %5898 = vmatpush1.msra.mxu0 %v5700
    %5899 = vmatprep.subr.mxu0 %v5705
    %5900 = vmatpush1.msra.mxu0 %v5704
    %5901 = vmatprep.subr.mxu0 %v5709
    %5902 = vmatpush1.msra.mxu0 %v5708
    %5903 = vmatprep.subr.mxu0 %v5713
    %5904 = vmatpush1.msra.mxu0 %v5712
    %5905 = vmatprep.subr.mxu0 %v5717
    %5906 = vmatpush1.msra.mxu0 %v5716
    %5907 = vmatprep.subr.mxu0 %v5721
    %5908 = vmatpush1.msra.mxu0 %v5720
    %5909 = vmatprep.subr.mxu0 %v5725
    %5910 = vmatpush1.msra.mxu0 %v5724
    %5911 = vmatprep.subr.mxu0 %v5729
    %5912 = vmatpush1.msra.mxu0 %v5728
    %5913 = vmatprep.subr.mxu0 %v5733
    %5914 = vmatpush1.msra.mxu0 %v5732
    %5915 = vmatprep.subr.mxu0 %v5737
    %5916 = vmatpush1.msra.mxu0 %v5736
    %5917 = vmatprep.subr.mxu0 %v5741
    %5918 = vmatpush1.msra.mxu0 %v5740
    %5919 = vmatprep.subr.mxu0 %v5745
    %5920 = vmatpush1.msra.mxu0 %v5744
    %5921 = vmatprep.subr.mxu0 %v5749
    %5922 = vmatpush1.msra.mxu0 %v5748
    %5923 = vmatprep.subr.mxu0 %v5753
    %5924 = vmatpush1.msra.mxu0 %v5752
    %5925 = vmatprep.subr.mxu0 %v5757
    %5926 = vmatpush1.msra.mxu0 %v5756
    %5927 = vmatprep.subr.mxu0 %v5761
    %5928 = vmatpush1.msra.mxu0 %v5760
    %5929 = vmatprep.subr.mxu0 %v5765
    %5930 = vmatpush1.msra.mxu0 %v5764
    %5931 = vmatprep.subr.mxu0 %v5769
    %5932 = vmatpush1.msra.mxu0 %v5768
    %5933 = vmatprep.subr.mxu0 %v5773
    %5934 = vmatpush1.msra.mxu0 %v5772
    %5935 = vmatprep.subr.mxu0 %v5777
    %5936 = vmatpush1.msra.mxu0 %v5776
    %5937 = vmatprep.subr.mxu0 %v5781
    %5938 = vmatpush1.msra.mxu0 %v5780
    %5939 = vmatprep.subr.mxu0 %v5785
    %5940 = vmatpush1.msra.mxu0 %v5784
    %5941 = vmatprep.subr.mxu0 %v5789
    %5942 = vmatpush1.msra.mxu0 %v5788
    %5943 = vmatprep.subr.mxu0 %v5793
    %5944 = vmatpush1.msra.mxu0 %v5792
    %5945 = vmatprep.subr.mxu0 %v5797
    %5946 = vmatpush1.msra.mxu0 %v5796
    %5947 = vmatprep.subr.mxu0 %v5801
    %5948 = vmatpush1.msra.mxu0 %v5800
    %5949 = vmatprep.subr.mxu0 %v5805
    %5950 = vmatpush1.msra.mxu0 %v5804
    %5951 = vmatprep.subr.mxu0 %v5809
    %5952 = vmatpush1.msra.mxu0 %v5808
    %5953 = vmatprep.subr.mxu0 %v5813
    %5954 = vmatpush1.msra.mxu0 %v5812
    %5955 = vmatprep.subr.mxu0 %v5817
    %5956 = vmatpush1.msra.mxu0 %v5816
    %5957 = vmatprep.mubr.f32.mxu0 %v5819
    %5958 = vmatmul.mubr.f32.gmra.mrb[0].mxu0 %v5818
    %v5959 = vpop.f32.mrb[0].mxu0
    %v5960 = vadd.f32 0.0, %v5959
    %v5961 = vpop.f32.mrb[0].mxu0
    %v5962 = vadd.f32 0.0, %v5961
    %5963 = vdwg.mxu0
    %v5964 = vadd.f32 %v5614, %v5889
    %v5965 = vadd.f32 %v5616, %v5891
    %v5966 = vadd.f32 %v5685, %v5960
    %v5967 = vadd.f32 %v5687, %v5962
    %s5968 = scalar_lea.vmem [#allocation26], 3072
    %v5969 = vld [vmem:[%s5968] sm:$0xff]
    %v5970 = vld [vmem:[%s5968 + $0x8] sm:$0xff]
    %v5971 = vld [vmem:[%s5968 + $0x10] sm:$0xff]
    %v5972 = vld [vmem:[%s5968 + $0x18] sm:$0xff]
    %v5973 = vld [vmem:[%s5968 + $0x20] sm:$0xff]
    %v5974 = vld [vmem:[%s5968 + $0x28] sm:$0xff]
    %v5975 = vld [vmem:[%s5968 + $0x30] sm:$0xff]
    %v5976 = vld [vmem:[%s5968 + $0x38] sm:$0xff]
    %v5977 = vld [vmem:[%s5968 + $0x40] sm:$0xff]
    %v5978 = vld [vmem:[%s5968 + $0x48] sm:$0xff]
    %v5979 = vld [vmem:[%s5968 + $0x50] sm:$0xff]
    %v5980 = vld [vmem:[%s5968 + $0x58] sm:$0xff]
    %v5981 = vld [vmem:[%s5968 + $0x60] sm:$0xff]
    %v5982 = vld [vmem:[%s5968 + $0x68] sm:$0xff]
    %v5983 = vld [vmem:[%s5968 + $0x70] sm:$0xff]
    %v5984 = vld [vmem:[%s5968 + $0x78] sm:$0xff]
    %v5985 = vld [vmem:[%s5968 + $0x80] sm:$0xff]
    %v5986 = vld [vmem:[%s5968 + $0x88] sm:$0xff]
    %v5987 = vld [vmem:[%s5968 + $0x90] sm:$0xff]
    %v5988 = vld [vmem:[%s5968 + $0x98] sm:$0xff]
    %v5989 = vld [vmem:[%s5968 + $0xa0] sm:$0xff]
    %v5990 = vld [vmem:[%s5968 + $0xa8] sm:$0xff]
    %v5991 = vld [vmem:[%s5968 + $0xb0] sm:$0xff]
    %v5992 = vld [vmem:[%s5968 + $0xb8] sm:$0xff]
    %v5993 = vld [vmem:[%s5968 + $0xc0] sm:$0xff]
    %v5994 = vld [vmem:[%s5968 + $0xc8] sm:$0xff]
    %v5995 = vld [vmem:[%s5968 + $0xd0] sm:$0xff]
    %v5996 = vld [vmem:[%s5968 + $0xd8] sm:$0xff]
    %v5997 = vld [vmem:[%s5968 + $0xe0] sm:$0xff]
    %v5998 = vld [vmem:[%s5968 + $0xe8] sm:$0xff]
    %v5999 = vld [vmem:[%s5968 + $0xf0] sm:$0xff]
    %v6000 = vld [vmem:[%s5968 + $0xf8] sm:$0xff]
    %v6001 = vld [vmem:[%s5968 + $0x100] sm:$0xff]
    %v6002 = vld [vmem:[%s5968 + $0x108] sm:$0xff]
    %v6003 = vld [vmem:[%s5968 + $0x110] sm:$0xff]
    %v6004 = vld [vmem:[%s5968 + $0x118] sm:$0xff]
    %v6005 = vld [vmem:[%s5968 + $0x120] sm:$0xff]
    %v6006 = vld [vmem:[%s5968 + $0x128] sm:$0xff]
    %v6007 = vld [vmem:[%s5968 + $0x130] sm:$0xff]
    %v6008 = vld [vmem:[%s5968 + $0x138] sm:$0xff]
    %v6009 = vld [vmem:[%s5968 + $0x140] sm:$0xff]
    %v6010 = vld [vmem:[%s5968 + $0x148] sm:$0xff]
    %v6011 = vld [vmem:[%s5968 + $0x150] sm:$0xff]
    %v6012 = vld [vmem:[%s5968 + $0x158] sm:$0xff]
    %v6013 = vld [vmem:[%s5968 + $0x160] sm:$0xff]
    %v6014 = vld [vmem:[%s5968 + $0x168] sm:$0xff]
    %v6015 = vld [vmem:[%s5968 + $0x170] sm:$0xff]
    %v6016 = vld [vmem:[%s5968 + $0x178] sm:$0xff]
    %v6017 = vld [vmem:[%s5968 + $0x180] sm:$0xff]
    %v6018 = vld [vmem:[%s5968 + $0x188] sm:$0xff]
    %v6019 = vld [vmem:[%s5968 + $0x190] sm:$0xff]
    %v6020 = vld [vmem:[%s5968 + $0x198] sm:$0xff]
    %v6021 = vld [vmem:[%s5968 + $0x1a0] sm:$0xff]
    %v6022 = vld [vmem:[%s5968 + $0x1a8] sm:$0xff]
    %v6023 = vld [vmem:[%s5968 + $0x1b0] sm:$0xff]
    %v6024 = vld [vmem:[%s5968 + $0x1b8] sm:$0xff]
    %v6025 = vld [vmem:[%s5968 + $0x1c0] sm:$0xff]
    %v6026 = vld [vmem:[%s5968 + $0x1c8] sm:$0xff]
    %v6027 = vld [vmem:[%s5968 + $0x1d0] sm:$0xff]
    %v6028 = vld [vmem:[%s5968 + $0x1d8] sm:$0xff]
    %v6029 = vld [vmem:[%s5968 + $0x1e0] sm:$0xff]
    %v6030 = vld [vmem:[%s5968 + $0x1e8] sm:$0xff]
    %v6031 = vld [vmem:[%s5968 + $0x1f0] sm:$0xff]
    %v6032 = vld [vmem:[%s5968 + $0x1f8] sm:$0xff]
    %v6033 = vld [vmem:[%s5968 + $0x200] sm:$0xff]
    %v6034 = vld [vmem:[%s5968 + $0x208] sm:$0xff]
    %v6035 = vld [vmem:[%s5968 + $0x210] sm:$0xff]
    %v6036 = vld [vmem:[%s5968 + $0x218] sm:$0xff]
    %v6037 = vld [vmem:[%s5968 + $0x220] sm:$0xff]
    %v6038 = vld [vmem:[%s5968 + $0x228] sm:$0xff]
    %v6039 = vld [vmem:[%s5968 + $0x230] sm:$0xff]
    %v6040 = vld [vmem:[%s5968 + $0x238] sm:$0xff]
    %v6041 = vld [vmem:[%s5968 + $0x240] sm:$0xff]
    %v6042 = vld [vmem:[%s5968 + $0x248] sm:$0xff]
    %v6043 = vld [vmem:[%s5968 + $0x250] sm:$0xff]
    %v6044 = vld [vmem:[%s5968 + $0x258] sm:$0xff]
    %v6045 = vld [vmem:[%s5968 + $0x260] sm:$0xff]
    %v6046 = vld [vmem:[%s5968 + $0x268] sm:$0xff]
    %v6047 = vld [vmem:[%s5968 + $0x270] sm:$0xff]
    %v6048 = vld [vmem:[%s5968 + $0x278] sm:$0xff]
    %v6049 = vld [vmem:[%s5968 + $0x280] sm:$0xff]
    %v6050 = vld [vmem:[%s5968 + $0x288] sm:$0xff]
    %v6051 = vld [vmem:[%s5968 + $0x290] sm:$0xff]
    %v6052 = vld [vmem:[%s5968 + $0x298] sm:$0xff]
    %v6053 = vld [vmem:[%s5968 + $0x2a0] sm:$0xff]
    %v6054 = vld [vmem:[%s5968 + $0x2a8] sm:$0xff]
    %v6055 = vld [vmem:[%s5968 + $0x2b0] sm:$0xff]
    %v6056 = vld [vmem:[%s5968 + $0x2b8] sm:$0xff]
    %v6057 = vld [vmem:[%s5968 + $0x2c0] sm:$0xff]
    %v6058 = vld [vmem:[%s5968 + $0x2c8] sm:$0xff]
    %v6059 = vld [vmem:[%s5968 + $0x2d0] sm:$0xff]
    %v6060 = vld [vmem:[%s5968 + $0x2d8] sm:$0xff]
    %v6061 = vld [vmem:[%s5968 + $0x2e0] sm:$0xff]
    %v6062 = vld [vmem:[%s5968 + $0x2e8] sm:$0xff]
    %v6063 = vld [vmem:[%s5968 + $0x2f0] sm:$0xff]
    %v6064 = vld [vmem:[%s5968 + $0x2f8] sm:$0xff]
    %v6065 = vld [vmem:[%s5968 + $0x300] sm:$0xff]
    %v6066 = vld [vmem:[%s5968 + $0x308] sm:$0xff]
    %v6067 = vld [vmem:[%s5968 + $0x310] sm:$0xff]
    %v6068 = vld [vmem:[%s5968 + $0x318] sm:$0xff]
    %v6069 = vld [vmem:[%s5968 + $0x320] sm:$0xff]
    %v6070 = vld [vmem:[%s5968 + $0x328] sm:$0xff]
    %v6071 = vld [vmem:[%s5968 + $0x330] sm:$0xff]
    %v6072 = vld [vmem:[%s5968 + $0x338] sm:$0xff]
    %v6073 = vld [vmem:[%s5968 + $0x340] sm:$0xff]
    %v6074 = vld [vmem:[%s5968 + $0x348] sm:$0xff]
    %v6075 = vld [vmem:[%s5968 + $0x350] sm:$0xff]
    %v6076 = vld [vmem:[%s5968 + $0x358] sm:$0xff]
    %v6077 = vld [vmem:[%s5968 + $0x360] sm:$0xff]
    %v6078 = vld [vmem:[%s5968 + $0x368] sm:$0xff]
    %v6079 = vld [vmem:[%s5968 + $0x370] sm:$0xff]
    %v6080 = vld [vmem:[%s5968 + $0x378] sm:$0xff]
    %v6081 = vld [vmem:[%s5968 + $0x380] sm:$0xff]
    %v6082 = vld [vmem:[%s5968 + $0x388] sm:$0xff]
    %v6083 = vld [vmem:[%s5968 + $0x390] sm:$0xff]
    %v6084 = vld [vmem:[%s5968 + $0x398] sm:$0xff]
    %v6085 = vld [vmem:[%s5968 + $0x3a0] sm:$0xff]
    %v6086 = vld [vmem:[%s5968 + $0x3a8] sm:$0xff]
    %v6087 = vld [vmem:[%s5968 + $0x3b0] sm:$0xff]
    %v6088 = vld [vmem:[%s5968 + $0x3b8] sm:$0xff]
    %v6089 = vld [vmem:[%s5968 + $0x3c0] sm:$0xff]
    %v6090 = vld [vmem:[%s5968 + $0x3c8] sm:$0xff]
    %v6091 = vld [vmem:[%s5968 + $0x3d0] sm:$0xff]
    %v6092 = vld [vmem:[%s5968 + $0x3d8] sm:$0xff]
    %v6093 = vld [vmem:[%s5968 + $0x3e0] sm:$0xff]
    %v6094 = vld [vmem:[%s5968 + $0x3e8] sm:$0xff]
    %v6095 = vld [vmem:[%s5968 + $0x3f0] sm:$0xff]
    %v6096 = vld [vmem:[%s5968 + $0x3f8] sm:$0xff]
    %v6097 = vrot.slane %v5140, 6
    %v6098 = vrot.slane %v5141, 6
    %6101 = vmatprep.subr.mxu0 %v5970
    %6102 = vmatpush1.msra.mxu0 %v5969
    %6103 = vmatprep.subr.mxu0 %v5974
    %6104 = vmatpush1.msra.mxu0 %v5973
    %6105 = vmatprep.subr.mxu0 %v5978
    %6106 = vmatpush1.msra.mxu0 %v5977
    %6107 = vmatprep.subr.mxu0 %v5982
    %6108 = vmatpush1.msra.mxu0 %v5981
    %6109 = vmatprep.subr.mxu0 %v5986
    %6110 = vmatpush1.msra.mxu0 %v5985
    %6111 = vmatprep.subr.mxu0 %v5990
    %6112 = vmatpush1.msra.mxu0 %v5989
    %6113 = vmatprep.subr.mxu0 %v5994
    %6114 = vmatpush1.msra.mxu0 %v5993
    %6115 = vmatprep.subr.mxu0 %v5998
    %6116 = vmatpush1.msra.mxu0 %v5997
    %6117 = vmatprep.subr.mxu0 %v6002
    %6118 = vmatpush1.msra.mxu0 %v6001
    %6119 = vmatprep.subr.mxu0 %v6006
    %6120 = vmatpush1.msra.mxu0 %v6005
    %6121 = vmatprep.subr.mxu0 %v6010
    %6122 = vmatpush1.msra.mxu0 %v6009
    %6123 = vmatprep.subr.mxu0 %v6014
    %6124 = vmatpush1.msra.mxu0 %v6013
    %6125 = vmatprep.subr.mxu0 %v6018
    %6126 = vmatpush1.msra.mxu0 %v6017
    %6127 = vmatprep.subr.mxu0 %v6022
    %6128 = vmatpush1.msra.mxu0 %v6021
    %6129 = vmatprep.subr.mxu0 %v6026
    %6130 = vmatpush1.msra.mxu0 %v6025
    %6131 = vmatprep.subr.mxu0 %v6030
    %6132 = vmatpush1.msra.mxu0 %v6029
    %6133 = vmatprep.subr.mxu0 %v6034
    %6134 = vmatpush1.msra.mxu0 %v6033
    %6135 = vmatprep.subr.mxu0 %v6038
    %6136 = vmatpush1.msra.mxu0 %v6037
    %6137 = vmatprep.subr.mxu0 %v6042
    %6138 = vmatpush1.msra.mxu0 %v6041
    %6139 = vmatprep.subr.mxu0 %v6046
    %6140 = vmatpush1.msra.mxu0 %v6045
    %6141 = vmatprep.subr.mxu0 %v6050
    %6142 = vmatpush1.msra.mxu0 %v6049
    %6143 = vmatprep.subr.mxu0 %v6054
    %6144 = vmatpush1.msra.mxu0 %v6053
    %6145 = vmatprep.subr.mxu0 %v6058
    %6146 = vmatpush1.msra.mxu0 %v6057
    %6147 = vmatprep.subr.mxu0 %v6062
    %6148 = vmatpush1.msra.mxu0 %v6061
    %6149 = vmatprep.subr.mxu0 %v6066
    %6150 = vmatpush1.msra.mxu0 %v6065
    %6151 = vmatprep.subr.mxu0 %v6070
    %6152 = vmatpush1.msra.mxu0 %v6069
    %6153 = vmatprep.subr.mxu0 %v6074
    %6154 = vmatpush1.msra.mxu0 %v6073
    %6155 = vmatprep.subr.mxu0 %v6078
    %6156 = vmatpush1.msra.mxu0 %v6077
    %6157 = vmatprep.subr.mxu0 %v6082
    %6158 = vmatpush1.msra.mxu0 %v6081
    %6159 = vmatprep.subr.mxu0 %v6086
    %6160 = vmatpush1.msra.mxu0 %v6085
    %6161 = vmatprep.subr.mxu0 %v6090
    %6162 = vmatpush1.msra.mxu0 %v6089
    %6163 = vmatprep.subr.mxu0 %v6094
    %6164 = vmatpush1.msra.mxu0 %v6093
    %6165 = vmatprep.mubr.f32.mxu0 %v6098
    %6166 = vmatmul.mubr.f32.gmra.mrb[0].mxu0 %v6097
    %v6167 = vpop.f32.mrb[0].mxu0
    %v6168 = vadd.f32 0.0, %v6167
    %v6169 = vpop.f32.mrb[0].mxu0
    %v6170 = vadd.f32 0.0, %v6169
    %6171 = vdwg.mxu0
    %6172 = vmatprep.subr.mxu0 %v5972
    %6173 = vmatpush1.msra.mxu0 %v5971
    %6174 = vmatprep.subr.mxu0 %v5976
    %6175 = vmatpush1.msra.mxu0 %v5975
    %6176 = vmatprep.subr.mxu0 %v5980
    %6177 = vmatpush1.msra.mxu0 %v5979
    %6178 = vmatprep.subr.mxu0 %v5984
    %6179 = vmatpush1.msra.mxu0 %v5983
    %6180 = vmatprep.subr.mxu0 %v5988
    %6181 = vmatpush1.msra.mxu0 %v5987
    %6182 = vmatprep.subr.mxu0 %v5992
    %6183 = vmatpush1.msra.mxu0 %v5991
    %6184 = vmatprep.subr.mxu0 %v5996
    %6185 = vmatpush1.msra.mxu0 %v5995
    %6186 = vmatprep.subr.mxu0 %v6000
    %6187 = vmatpush1.msra.mxu0 %v5999
    %6188 = vmatprep.subr.mxu0 %v6004
    %6189 = vmatpush1.msra.mxu0 %v6003
    %6190 = vmatprep.subr.mxu0 %v6008
    %6191 = vmatpush1.msra.mxu0 %v6007
    %6192 = vmatprep.subr.mxu0 %v6012
    %6193 = vmatpush1.msra.mxu0 %v6011
    %6194 = vmatprep.subr.mxu0 %v6016
    %6195 = vmatpush1.msra.mxu0 %v6015
    %6196 = vmatprep.subr.mxu0 %v6020
    %6197 = vmatpush1.msra.mxu0 %v6019
    %6198 = vmatprep.subr.mxu0 %v6024
    %6199 = vmatpush1.msra.mxu0 %v6023
    %6200 = vmatprep.subr.mxu0 %v6028
    %6201 = vmatpush1.msra.mxu0 %v6027
    %6202 = vmatprep.subr.mxu0 %v6032
    %6203 = vmatpush1.msra.mxu0 %v6031
    %6204 = vmatprep.subr.mxu0 %v6036
    %6205 = vmatpush1.msra.mxu0 %v6035
    %6206 = vmatprep.subr.mxu0 %v6040
    %6207 = vmatpush1.msra.mxu0 %v6039
    %6208 = vmatprep.subr.mxu0 %v6044
    %6209 = vmatpush1.msra.mxu0 %v6043
    %6210 = vmatprep.subr.mxu0 %v6048
    %6211 = vmatpush1.msra.mxu0 %v6047
    %6212 = vmatprep.subr.mxu0 %v6052
    %6213 = vmatpush1.msra.mxu0 %v6051
    %6214 = vmatprep.subr.mxu0 %v6056
    %6215 = vmatpush1.msra.mxu0 %v6055
    %6216 = vmatprep.subr.mxu0 %v6060
    %6217 = vmatpush1.msra.mxu0 %v6059
    %6218 = vmatprep.subr.mxu0 %v6064
    %6219 = vmatpush1.msra.mxu0 %v6063
    %6220 = vmatprep.subr.mxu0 %v6068
    %6221 = vmatpush1.msra.mxu0 %v6067
    %6222 = vmatprep.subr.mxu0 %v6072
    %6223 = vmatpush1.msra.mxu0 %v6071
    %6224 = vmatprep.subr.mxu0 %v6076
    %6225 = vmatpush1.msra.mxu0 %v6075
    %6226 = vmatprep.subr.mxu0 %v6080
    %6227 = vmatpush1.msra.mxu0 %v6079
    %6228 = vmatprep.subr.mxu0 %v6084
    %6229 = vmatpush1.msra.mxu0 %v6083
    %6230 = vmatprep.subr.mxu0 %v6088
    %6231 = vmatpush1.msra.mxu0 %v6087
    %6232 = vmatprep.subr.mxu0 %v6092
    %6233 = vmatpush1.msra.mxu0 %v6091
    %6234 = vmatprep.subr.mxu0 %v6096
    %6235 = vmatpush1.msra.mxu0 %v6095
    %6236 = vmatprep.mubr.f32.mxu0 %v6098
    %6237 = vmatmul.mubr.f32.gmra.mrb[0].mxu0 %v6097
    %v6238 = vpop.f32.mrb[0].mxu0
    %v6239 = vadd.f32 0.0, %v6238
    %v6240 = vpop.f32.mrb[0].mxu0
    %v6241 = vadd.f32 0.0, %v6240
    %6242 = vdwg.mxu0
    %v6243 = vadd.f32 %v5964, %v6168
    %v6244 = vadd.f32 %v5965, %v6170
    %v6245 = vadd.f32 %v5966, %v6239
    %v6246 = vadd.f32 %v5967, %v6241
    %v6247 = vld [vmem:[#allocation28] sm:$0xf]
    %v6249 = vlaneseq
    %v6250 = vshrl.u32 %v6249, 7
    %v6251 = vsub.s32 0, %v6250
    %v6252 = vrot.slane %v6247, %v6251
    %v6253 = vlaneseq
    %v6254 = vshrl.u32 %v6253, 7
    %v6255 = vsub.s32 1, %v6254
    %v6256 = vrot.slane %v6247, %v6255
    %v6257 = vlaneseq
    %v6258 = vshrl.u32 %v6257, 7
    %v6259 = vsub.s32 2, %v6258
    %v6260 = vrot.slane %v6247, %v6259
    %v6261 = vlaneseq
    %v6262 = vshrl.u32 %v6261, 7
    %v6263 = vsub.s32 3, %v6262
    %v6264 = vrot.slane %v6247, %v6263
    %v6269 = vadd.f32 %v6243, %v6252
    %v6270 = vadd.f32 %v6244, %v6256
    %v6271 = vadd.f32 %v6245, %v6260
    %v6272 = vadd.f32 %v6246, %v6264
    %v6273 = vmax.f32 %v6269, 0.0
    %v6274 = vmax.f32 %v6270, 0.0
    %v6275 = vmax.f32 %v6271, 0.0
    %v6276 = vmax.f32 %v6272, 0.0
    %v6277 = vld [vmem:[#allocation29] sm:$0xff]
    %v6278 = vld [vmem:[#allocation29 + $0x8] sm:$0xff]
    %v6279 = vld [vmem:[#allocation29 + $0x10] sm:$0xff]
    %v6280 = vld [vmem:[#allocation29 + $0x18] sm:$0xff]
    %v6281 = vld [vmem:[#allocation29 + $0x20] sm:$0xff]
    %v6282 = vld [vmem:[#allocation29 + $0x28] sm:$0xff]
    %v6283 = vld [vmem:[#allocation29 + $0x30] sm:$0xff]
    %v6284 = vld [vmem:[#allocation29 + $0x38] sm:$0xff]
    %v6285 = vld [vmem:[#allocation29 + $0x40] sm:$0xff]
    %v6286 = vld [vmem:[#allocation29 + $0x48] sm:$0xff]
    %v6287 = vld [vmem:[#allocation29 + $0x50] sm:$0xff]
    %v6288 = vld [vmem:[#allocation29 + $0x58] sm:$0xff]
    %v6289 = vld [vmem:[#allocation29 + $0x60] sm:$0xff]
    %v6290 = vld [vmem:[#allocation29 + $0x68] sm:$0xff]
    %v6291 = vld [vmem:[#allocation29 + $0x70] sm:$0xff]
    %v6292 = vld [vmem:[#allocation29 + $0x78] sm:$0xff]
    %v6293 = vld [vmem:[#allocation29 + $0x80] sm:$0xff]
    %v6294 = vld [vmem:[#allocation29 + $0x88] sm:$0xff]
    %v6295 = vld [vmem:[#allocation29 + $0x90] sm:$0xff]
    %v6296 = vld [vmem:[#allocation29 + $0x98] sm:$0xff]
    %v6297 = vld [vmem:[#allocation29 + $0xa0] sm:$0xff]
    %v6298 = vld [vmem:[#allocation29 + $0xa8] sm:$0xff]
    %v6299 = vld [vmem:[#allocation29 + $0xb0] sm:$0xff]
    %v6300 = vld [vmem:[#allocation29 + $0xb8] sm:$0xff]
    %v6301 = vld [vmem:[#allocation29 + $0xc0] sm:$0xff]
    %v6302 = vld [vmem:[#allocation29 + $0xc8] sm:$0xff]
    %v6303 = vld [vmem:[#allocation29 + $0xd0] sm:$0xff]
    %v6304 = vld [vmem:[#allocation29 + $0xd8] sm:$0xff]
    %v6305 = vld [vmem:[#allocation29 + $0xe0] sm:$0xff]
    %v6306 = vld [vmem:[#allocation29 + $0xe8] sm:$0xff]
    %v6307 = vld [vmem:[#allocation29 + $0xf0] sm:$0xff]
    %v6308 = vld [vmem:[#allocation29 + $0xf8] sm:$0xff]
    %v6309 = vld [vmem:[#allocation29 + $0x100] sm:$0xff]
    %v6310 = vld [vmem:[#allocation29 + $0x108] sm:$0xff]
    %v6311 = vld [vmem:[#allocation29 + $0x110] sm:$0xff]
    %v6312 = vld [vmem:[#allocation29 + $0x118] sm:$0xff]
    %v6313 = vld [vmem:[#allocation29 + $0x120] sm:$0xff]
    %v6314 = vld [vmem:[#allocation29 + $0x128] sm:$0xff]
    %v6315 = vld [vmem:[#allocation29 + $0x130] sm:$0xff]
    %v6316 = vld [vmem:[#allocation29 + $0x138] sm:$0xff]
    %v6317 = vld [vmem:[#allocation29 + $0x140] sm:$0xff]
    %v6318 = vld [vmem:[#allocation29 + $0x148] sm:$0xff]
    %v6319 = vld [vmem:[#allocation29 + $0x150] sm:$0xff]
    %v6320 = vld [vmem:[#allocation29 + $0x158] sm:$0xff]
    %v6321 = vld [vmem:[#allocation29 + $0x160] sm:$0xff]
    %v6322 = vld [vmem:[#allocation29 + $0x168] sm:$0xff]
    %v6323 = vld [vmem:[#allocation29 + $0x170] sm:$0xff]
    %v6324 = vld [vmem:[#allocation29 + $0x178] sm:$0xff]
    %v6325 = vld [vmem:[#allocation29 + $0x180] sm:$0xff]
    %v6326 = vld [vmem:[#allocation29 + $0x188] sm:$0xff]
    %v6327 = vld [vmem:[#allocation29 + $0x190] sm:$0xff]
    %v6328 = vld [vmem:[#allocation29 + $0x198] sm:$0xff]
    %v6329 = vld [vmem:[#allocation29 + $0x1a0] sm:$0xff]
    %v6330 = vld [vmem:[#allocation29 + $0x1a8] sm:$0xff]
    %v6331 = vld [vmem:[#allocation29 + $0x1b0] sm:$0xff]
    %v6332 = vld [vmem:[#allocation29 + $0x1b8] sm:$0xff]
    %v6333 = vld [vmem:[#allocation29 + $0x1c0] sm:$0xff]
    %v6334 = vld [vmem:[#allocation29 + $0x1c8] sm:$0xff]
    %v6335 = vld [vmem:[#allocation29 + $0x1d0] sm:$0xff]
    %v6336 = vld [vmem:[#allocation29 + $0x1d8] sm:$0xff]
    %v6337 = vld [vmem:[#allocation29 + $0x1e0] sm:$0xff]
    %v6338 = vld [vmem:[#allocation29 + $0x1e8] sm:$0xff]
    %v6339 = vld [vmem:[#allocation29 + $0x1f0] sm:$0xff]
    %v6340 = vld [vmem:[#allocation29 + $0x1f8] sm:$0xff]
    %v6341 = vld [vmem:[#allocation29 + $0x200] sm:$0xff]
    %v6342 = vld [vmem:[#allocation29 + $0x208] sm:$0xff]
    %v6343 = vld [vmem:[#allocation29 + $0x210] sm:$0xff]
    %v6344 = vld [vmem:[#allocation29 + $0x218] sm:$0xff]
    %v6345 = vld [vmem:[#allocation29 + $0x220] sm:$0xff]
    %v6346 = vld [vmem:[#allocation29 + $0x228] sm:$0xff]
    %v6347 = vld [vmem:[#allocation29 + $0x230] sm:$0xff]
    %v6348 = vld [vmem:[#allocation29 + $0x238] sm:$0xff]
    %v6349 = vld [vmem:[#allocation29 + $0x240] sm:$0xff]
    %v6350 = vld [vmem:[#allocation29 + $0x248] sm:$0xff]
    %v6351 = vld [vmem:[#allocation29 + $0x250] sm:$0xff]
    %v6352 = vld [vmem:[#allocation29 + $0x258] sm:$0xff]
    %v6353 = vld [vmem:[#allocation29 + $0x260] sm:$0xff]
    %v6354 = vld [vmem:[#allocation29 + $0x268] sm:$0xff]
    %v6355 = vld [vmem:[#allocation29 + $0x270] sm:$0xff]
    %v6356 = vld [vmem:[#allocation29 + $0x278] sm:$0xff]
    %v6357 = vld [vmem:[#allocation29 + $0x280] sm:$0xff]
    %v6358 = vld [vmem:[#allocation29 + $0x288] sm:$0xff]
    %v6359 = vld [vmem:[#allocation29 + $0x290] sm:$0xff]
    %v6360 = vld [vmem:[#allocation29 + $0x298] sm:$0xff]
    %v6361 = vld [vmem:[#allocation29 + $0x2a0] sm:$0xff]
    %v6362 = vld [vmem:[#allocation29 + $0x2a8] sm:$0xff]
    %v6363 = vld [vmem:[#allocation29 + $0x2b0] sm:$0xff]
    %v6364 = vld [vmem:[#allocation29 + $0x2b8] sm:$0xff]
    %v6365 = vld [vmem:[#allocation29 + $0x2c0] sm:$0xff]
    %v6366 = vld [vmem:[#allocation29 + $0x2c8] sm:$0xff]
    %v6367 = vld [vmem:[#allocation29 + $0x2d0] sm:$0xff]
    %v6368 = vld [vmem:[#allocation29 + $0x2d8] sm:$0xff]
    %v6369 = vld [vmem:[#allocation29 + $0x2e0] sm:$0xff]
    %v6370 = vld [vmem:[#allocation29 + $0x2e8] sm:$0xff]
    %v6371 = vld [vmem:[#allocation29 + $0x2f0] sm:$0xff]
    %v6372 = vld [vmem:[#allocation29 + $0x2f8] sm:$0xff]
    %v6373 = vld [vmem:[#allocation29 + $0x300] sm:$0xff]
    %v6374 = vld [vmem:[#allocation29 + $0x308] sm:$0xff]
    %v6375 = vld [vmem:[#allocation29 + $0x310] sm:$0xff]
    %v6376 = vld [vmem:[#allocation29 + $0x318] sm:$0xff]
    %v6377 = vld [vmem:[#allocation29 + $0x320] sm:$0xff]
    %v6378 = vld [vmem:[#allocation29 + $0x328] sm:$0xff]
    %v6379 = vld [vmem:[#allocation29 + $0x330] sm:$0xff]
    %v6380 = vld [vmem:[#allocation29 + $0x338] sm:$0xff]
    %v6381 = vld [vmem:[#allocation29 + $0x340] sm:$0xff]
    %v6382 = vld [vmem:[#allocation29 + $0x348] sm:$0xff]
    %v6383 = vld [vmem:[#allocation29 + $0x350] sm:$0xff]
    %v6384 = vld [vmem:[#allocation29 + $0x358] sm:$0xff]
    %v6385 = vld [vmem:[#allocation29 + $0x360] sm:$0xff]
    %v6386 = vld [vmem:[#allocation29 + $0x368] sm:$0xff]
    %v6387 = vld [vmem:[#allocation29 + $0x370] sm:$0xff]
    %v6388 = vld [vmem:[#allocation29 + $0x378] sm:$0xff]
    %v6389 = vld [vmem:[#allocation29 + $0x380] sm:$0xff]
    %v6390 = vld [vmem:[#allocation29 + $0x388] sm:$0xff]
    %v6391 = vld [vmem:[#allocation29 + $0x390] sm:$0xff]
    %v6392 = vld [vmem:[#allocation29 + $0x398] sm:$0xff]
    %v6393 = vld [vmem:[#allocation29 + $0x3a0] sm:$0xff]
    %v6394 = vld [vmem:[#allocation29 + $0x3a8] sm:$0xff]
    %v6395 = vld [vmem:[#allocation29 + $0x3b0] sm:$0xff]
    %v6396 = vld [vmem:[#allocation29 + $0x3b8] sm:$0xff]
    %v6397 = vld [vmem:[#allocation29 + $0x3c0] sm:$0xff]
    %v6398 = vld [vmem:[#allocation29 + $0x3c8] sm:$0xff]
    %v6399 = vld [vmem:[#allocation29 + $0x3d0] sm:$0xff]
    %v6400 = vld [vmem:[#allocation29 + $0x3d8] sm:$0xff]
    %v6401 = vld [vmem:[#allocation29 + $0x3e0] sm:$0xff]
    %v6402 = vld [vmem:[#allocation29 + $0x3e8] sm:$0xff]
    %v6403 = vld [vmem:[#allocation29 + $0x3f0] sm:$0xff]
    %v6404 = vld [vmem:[#allocation29 + $0x3f8] sm:$0xff]
    %v6405 = vld [vmem:[#allocation31] sm:$0x3]
    %v6407 = vlaneseq
    %v6408 = vshrl.u32 %v6407, 7
    %v6409 = vsub.s32 0, %v6408
    %v6410 = vrot.slane %v6405, %v6409
    %v6411 = vlaneseq
    %v6412 = vshrl.u32 %v6411, 7
    %v6413 = vsub.s32 1, %v6412
    %v6414 = vrot.slane %v6405, %v6413
    %6417 = vmatprep.subr.mxu0 %v6278
    %6418 = vmatpush1.msra.mxu0 %v6277
    %6419 = vmatprep.subr.mxu0 %v6280
    %6420 = vmatpush1.msra.mxu0 %v6279
    %6421 = vmatprep.subr.mxu0 %v6282
    %6422 = vmatpush1.msra.mxu0 %v6281
    %6423 = vmatprep.subr.mxu0 %v6284
    %6424 = vmatpush1.msra.mxu0 %v6283
    %6425 = vmatprep.subr.mxu0 %v6286
    %6426 = vmatpush1.msra.mxu0 %v6285
    %6427 = vmatprep.subr.mxu0 %v6288
    %6428 = vmatpush1.msra.mxu0 %v6287
    %6429 = vmatprep.subr.mxu0 %v6290
    %6430 = vmatpush1.msra.mxu0 %v6289
    %6431 = vmatprep.subr.mxu0 %v6292
    %6432 = vmatpush1.msra.mxu0 %v6291
    %6433 = vmatprep.subr.mxu0 %v6294
    %6434 = vmatpush1.msra.mxu0 %v6293
    %6435 = vmatprep.subr.mxu0 %v6296
    %6436 = vmatpush1.msra.mxu0 %v6295
    %6437 = vmatprep.subr.mxu0 %v6298
    %6438 = vmatpush1.msra.mxu0 %v6297
    %6439 = vmatprep.subr.mxu0 %v6300
    %6440 = vmatpush1.msra.mxu0 %v6299
    %6441 = vmatprep.subr.mxu0 %v6302
    %6442 = vmatpush1.msra.mxu0 %v6301
    %6443 = vmatprep.subr.mxu0 %v6304
    %6444 = vmatpush1.msra.mxu0 %v6303
    %6445 = vmatprep.subr.mxu0 %v6306
    %6446 = vmatpush1.msra.mxu0 %v6305
    %6447 = vmatprep.subr.mxu0 %v6308
    %6448 = vmatpush1.msra.mxu0 %v6307
    %6449 = vmatprep.subr.mxu0 %v6310
    %6450 = vmatpush1.msra.mxu0 %v6309
    %6451 = vmatprep.subr.mxu0 %v6312
    %6452 = vmatpush1.msra.mxu0 %v6311
    %6453 = vmatprep.subr.mxu0 %v6314
    %6454 = vmatpush1.msra.mxu0 %v6313
    %6455 = vmatprep.subr.mxu0 %v6316
    %6456 = vmatpush1.msra.mxu0 %v6315
    %6457 = vmatprep.subr.mxu0 %v6318
    %6458 = vmatpush1.msra.mxu0 %v6317
    %6459 = vmatprep.subr.mxu0 %v6320
    %6460 = vmatpush1.msra.mxu0 %v6319
    %6461 = vmatprep.subr.mxu0 %v6322
    %6462 = vmatpush1.msra.mxu0 %v6321
    %6463 = vmatprep.subr.mxu0 %v6324
    %6464 = vmatpush1.msra.mxu0 %v6323
    %6465 = vmatprep.subr.mxu0 %v6326
    %6466 = vmatpush1.msra.mxu0 %v6325
    %6467 = vmatprep.subr.mxu0 %v6328
    %6468 = vmatpush1.msra.mxu0 %v6327
    %6469 = vmatprep.subr.mxu0 %v6330
    %6470 = vmatpush1.msra.mxu0 %v6329
    %6471 = vmatprep.subr.mxu0 %v6332
    %6472 = vmatpush1.msra.mxu0 %v6331
    %6473 = vmatprep.subr.mxu0 %v6334
    %6474 = vmatpush1.msra.mxu0 %v6333
    %6475 = vmatprep.subr.mxu0 %v6336
    %6476 = vmatpush1.msra.mxu0 %v6335
    %6477 = vmatprep.subr.mxu0 %v6338
    %6478 = vmatpush1.msra.mxu0 %v6337
    %6479 = vmatprep.subr.mxu0 %v6340
    %6480 = vmatpush1.msra.mxu0 %v6339
    %6481 = vmatprep.mubr.f32.mxu0 %v6274
    %6482 = vmatmul.mubr.f32.gmra.mrb[0].mxu0 %v6273
    %v6483 = vpop.f32.mrb[0].mxu0
    %v6484 = vadd.f32 %v6410, %v6483
    %v6485 = vpop.f32.mrb[0].mxu0
    %v6486 = vadd.f32 %v6414, %v6485
    %6487 = vdwg.mxu0
    %6488 = vmatprep.subr.mxu0 %v6342
    %6489 = vmatpush1.msra.mxu0 %v6341
    %6490 = vmatprep.subr.mxu0 %v6344
    %6491 = vmatpush1.msra.mxu0 %v6343
    %6492 = vmatprep.subr.mxu0 %v6346
    %6493 = vmatpush1.msra.mxu0 %v6345
    %6494 = vmatprep.subr.mxu0 %v6348
    %6495 = vmatpush1.msra.mxu0 %v6347
    %6496 = vmatprep.subr.mxu0 %v6350
    %6497 = vmatpush1.msra.mxu0 %v6349
    %6498 = vmatprep.subr.mxu0 %v6352
    %6499 = vmatpush1.msra.mxu0 %v6351
    %6500 = vmatprep.subr.mxu0 %v6354
    %6501 = vmatpush1.msra.mxu0 %v6353
    %6502 = vmatprep.subr.mxu0 %v6356
    %6503 = vmatpush1.msra.mxu0 %v6355
    %6504 = vmatprep.subr.mxu0 %v6358
    %6505 = vmatpush1.msra.mxu0 %v6357
    %6506 = vmatprep.subr.mxu0 %v6360
    %6507 = vmatpush1.msra.mxu0 %v6359
    %6508 = vmatprep.subr.mxu0 %v6362
    %6509 = vmatpush1.msra.mxu0 %v6361
    %6510 = vmatprep.subr.mxu0 %v6364
    %6511 = vmatpush1.msra.mxu0 %v6363
    %6512 = vmatprep.subr.mxu0 %v6366
    %6513 = vmatpush1.msra.mxu0 %v6365
    %6514 = vmatprep.subr.mxu0 %v6368
    %6515 = vmatpush1.msra.mxu0 %v6367
    %6516 = vmatprep.subr.mxu0 %v6370
    %6517 = vmatpush1.msra.mxu0 %v6369
    %6518 = vmatprep.subr.mxu0 %v6372
    %6519 = vmatpush1.msra.mxu0 %v6371
    %6520 = vmatprep.subr.mxu0 %v6374
    %6521 = vmatpush1.msra.mxu0 %v6373
    %6522 = vmatprep.subr.mxu0 %v6376
    %6523 = vmatpush1.msra.mxu0 %v6375
    %6524 = vmatprep.subr.mxu0 %v6378
    %6525 = vmatpush1.msra.mxu0 %v6377
    %6526 = vmatprep.subr.mxu0 %v6380
    %6527 = vmatpush1.msra.mxu0 %v6379
    %6528 = vmatprep.subr.mxu0 %v6382
    %6529 = vmatpush1.msra.mxu0 %v6381
    %6530 = vmatprep.subr.mxu0 %v6384
    %6531 = vmatpush1.msra.mxu0 %v6383
    %6532 = vmatprep.subr.mxu0 %v6386
    %6533 = vmatpush1.msra.mxu0 %v6385
    %6534 = vmatprep.subr.mxu0 %v6388
    %6535 = vmatpush1.msra.mxu0 %v6387
    %6536 = vmatprep.subr.mxu0 %v6390
    %6537 = vmatpush1.msra.mxu0 %v6389
    %6538 = vmatprep.subr.mxu0 %v6392
    %6539 = vmatpush1.msra.mxu0 %v6391
    %6540 = vmatprep.subr.mxu0 %v6394
    %6541 = vmatpush1.msra.mxu0 %v6393
    %6542 = vmatprep.subr.mxu0 %v6396
    %6543 = vmatpush1.msra.mxu0 %v6395
    %6544 = vmatprep.subr.mxu0 %v6398
    %6545 = vmatpush1.msra.mxu0 %v6397
    %6546 = vmatprep.subr.mxu0 %v6400
    %6547 = vmatpush1.msra.mxu0 %v6399
    %6548 = vmatprep.subr.mxu0 %v6402
    %6549 = vmatpush1.msra.mxu0 %v6401
    %6550 = vmatprep.subr.mxu0 %v6404
    %6551 = vmatpush1.msra.mxu0 %v6403
    %6552 = vmatprep.mubr.f32.mxu0 %v6276
    %6553 = vmatmul.mubr.f32.gmra.mrb[0].mxu0 %v6275
    %v6554 = vpop.f32.mrb[0].mxu0
    %v6555 = vadd.f32 %v6484, %v6554
    %v6556 = vpop.f32.mrb[0].mxu0
    %v6557 = vadd.f32 %v6486, %v6556
    %6558 = vdwg.mxu0
    %v6561 = vcombine.low %v6555, %v6557
    %v6563 = vunpack.c.l.s4 1983009808
    %v6564 = vunpack.c.0.s8 %v6563
    %v6565 = vlaneseq
    %v6566 = vshrl.u32 %v6565, 7
    %v6567 = vsub.s32 %v6564, %v6566
    %v6568 = vrot.slane %v6561, %v6567
    %6570 = vst [vmem:[#allocation32] sm:$0xf] %v6568
    // Predicated region
    $region154: #{net_forward.1} parent=1 // pred_check
      _
    $region155: #{net_forward.1} parent=1 // pred_check_branch
      %6572 = sbr.rel (0) target = $region157
    $region156: #{net_forward.1} parent=1 // pred_region
      %s6574 = ssub.s32 64, 64
      %6575 = vsyncadd [#allocation4], %s6574
      %s6577 = sshll.u32 [#allocation32], 4
      %s6578 = int_to_ptr.vmem [resolvable:$true] %s6577
      %6580 = dma.vmem_to_hbm [thread:$0]  %s6578, 64, %s19, [#allocation4]
    $region157: #{net_forward.1} parent=1 // pred_fallthru
      _
    // Predicated region
    $region158: #{net_forward.1} parent=1 // pred_check
      _
    $region159: #{net_forward.1} parent=1 // pred_check_branch
      %6582 = sbr.rel (0) target = $region161
    $region160: #{net_forward.1} parent=1 // pred_region
      %6583 = dma.done [#allocation4], 64
    $region161: #{net_forward.1} parent=1 // pred_fallthru
      _
    %6584 = vsyncpa [#allocation3], 1
    %6585 = vsyncpa [#allocation6], 1
    %6586 = vsyncpa [#allocation9], 1
    %6587 = vsyncpa [#allocation12], 1
    %6588 = vsyncpa [#allocation15], 1
    %6589 = vsyncpa [#allocation18], 1
    %6590 = vsyncpa [#allocation21], 1
    %6591 = vsyncpa [#allocation24], 1
    %6592 = vsyncpa [#allocation27], 1
    %6593 = vsyncpa [#allocation30], 1
    %6594 = vsyncpa [#allocation4], 1

</llo_original>
